<compile_context>
chip_gen: v7x
topology: tpu7x:2x2x1
jax: 0.10.0
libtpu: 0.0.40
codegen_flags: <defaults>
</compile_context>

<pallas_src>
import functools

import jax
import jax.numpy as jnp
from jax.experimental import pallas as pl
from jax.experimental.pallas import tpu as pltpu


# ----------------------------------------------------------------------------
# In-kernel helpers (all operate on f32 values in (H*W, C) tokens-x-channels layout)
# ----------------------------------------------------------------------------

def _silu(x):
    return x * jax.nn.sigmoid(x)


def _conv3x3_im2col(xp_ref, x_sc, w_ref, b_ref, H, W):
    """3x3 conv, stride 1, pad 1, as a single im2col MXU matmul.

    xp_ref : (H+2, W+2, Cin) VMEM scratch whose 1-pixel border is already zero.
    x_sc   : (H*W, Cin) f32 activation.
    w_ref  : (9*Cin, Cout) im2col weight.    b_ref: (1, Cout).
    Returns (H*W, Cout) f32.
    """
    C = x_sc.shape[-1]
    xp_ref[1:H + 1, 1:W + 1, :] = x_sc.reshape(H, W, C)
    patch = jnp.concatenate(
        [xp_ref[dh:dh + H, dw:dw + W, :].reshape(H * W, C)
         for dh in range(3) for dw in range(3)],
        axis=-1)                                                      # (HW, 9*Cin)
    return (jnp.dot(patch, w_ref[...].astype(jnp.float32),
                    preferred_element_type=jnp.float32)
            + b_ref[...].astype(jnp.float32))


def _groupnorm_silu(h, gamma_ref, beta_ref, gmask, inv_n, eps, silu):
    """GroupNorm on (HW, C) without moving channels off the lanes.

    Per-channel sum / sum-of-squares over pixels (sublane reduction), then a tiny
    (1,C)@(C,C) matmul with a same-group mask combines channels of each group.
    Biased variance + eps inside rsqrt matches PyTorch GroupNorm.
    """
    s1 = jnp.sum(h, axis=0, keepdims=True)                            # (1, C)
    s2 = jnp.sum(h * h, axis=0, keepdims=True)                        # (1, C)
    mean = jnp.dot(s1, gmask, preferred_element_type=jnp.float32) * inv_n
    ex2 = jnp.dot(s2, gmask, preferred_element_type=jnp.float32) * inv_n
    var = ex2 - mean * mean
    y = (h - mean) * jax.lax.rsqrt(var + eps)
    y = y * gamma_ref[...].astype(jnp.float32) + beta_ref[...].astype(jnp.float32)
    return _silu(y) if silu else y


# ----------------------------------------------------------------------------
# Fused kernels (one grid step = one batch element, whole image resident in VMEM)
# ----------------------------------------------------------------------------

def residual_block_kernel(x_ref, temb_ref,
                          w1_ref, b1_ref, g1_ref, gb1_ref,
                          lw_ref, lb_ref,
                          w2_ref, b2_ref, g2_ref, gb2_ref,
                          gmask_ref,
                          o_ref, xp_ref, *, H, W, groups, eps):
    """Full ResidualBlock (input_channels == output_channels -> identity skip)."""
    x = x_ref[0].astype(jnp.float32)                                  # (HW, C)
    C = x.shape[-1]
    gmask = gmask_ref[...].astype(jnp.float32)
    inv_n = 1.0 / float((C // groups) * H * W)

    xp_ref[...] = jnp.zeros_like(xp_ref)      # zero halo border once per step

    # image_block: conv3x3 -> GroupNorm -> SiLU
    h = _conv3x3_im2col(xp_ref, x, w1_ref, b1_ref, H, W)
    h = _groupnorm_silu(h, g1_ref, gb1_ref, gmask, inv_n, eps, silu=True)

    # num_steps_block (fused time-MLP): SiLU -> Linear, broadcast over pixels
    te = _silu(temb_ref[0].astype(jnp.float32))                       # (1, T)
    h = h + (jnp.dot(te, lw_ref[...].astype(jnp.float32),
                     preferred_element_type=jnp.float32)
             + lb_ref[...].astype(jnp.float32))                       # (1, C) broadcast

    # out_block: conv3x3 -> GroupNorm -> SiLU, then residual add
    h = _conv3x3_im2col(xp_ref, h, w2_ref, b2_ref, H, W)
    h = _groupnorm_silu(h, g2_ref, gb2_ref, gmask, inv_n, eps, silu=True)

    o_ref[0] = (x + h).astype(o_ref.dtype)


def attention_block_kernel(x_ref, gg_ref, gb_ref, wqkv_ref, bqkv_ref,
                           wo_ref, bo_ref, o_ref, *, num_heads, eps):
    """AttentionBlock: x + W_O(MHA(W_QKV(GroupNorm_1group(x))))."""
    x = x_ref[0].astype(jnp.float32)                                  # (S, C)
    S, C = x.shape
    hs = C // num_heads

    # GroupNorm with a single group: one scalar mean / variance per image.
    inv_n = 1.0 / float(S * C)
    mean = jnp.sum(x, keepdims=True) * inv_n                          # (1, 1)
    var = jnp.sum(x * x, keepdims=True) * inv_n - mean * mean
    xn = (x - mean) * jax.lax.rsqrt(var + eps)
    xn = xn * gg_ref[...].astype(jnp.float32) + gb_ref[...].astype(jnp.float32)

    # QKV projection; heads batched via 3D einsums (no per-head matmul loop).
    qkv = (jnp.dot(xn, wqkv_ref[...].astype(jnp.float32),
                   preferred_element_type=jnp.float32)
           + bqkv_ref[...].astype(jnp.float32))                       # (S, 3C)
    q = jnp.stack([qkv[:, h * hs:(h + 1) * hs] for h in range(num_heads)], axis=0)
    k = jnp.stack([qkv[:, C + h * hs:C + (h + 1) * hs] for h in range(num_heads)], axis=0)
    v = jnp.stack([qkv[:, 2 * C + h * hs:2 * C + (h + 1) * hs] for h in range(num_heads)], axis=0)

    s = jnp.einsum('hqd,hkd->hqk', q, k,
                   preferred_element_type=jnp.float32) * (1.0 / float(hs) ** 0.5)
    s = s - jnp.max(s, axis=-1, keepdims=True)
    e = jnp.exp(s)
    p = e * pl.reciprocal(jnp.sum(e, axis=-1, keepdims=True), approx=True)
    av = jnp.einsum('hqk,hkd->hqd', p, v,
                    preferred_element_type=jnp.float32)               # (heads, S, hs)
    av = jnp.concatenate([av[h] for h in range(num_heads)], axis=-1)  # (S, C)

    out = (jnp.dot(av, wo_ref[...].astype(jnp.float32),
                   preferred_element_type=jnp.float32)
           + bo_ref[...].astype(jnp.float32))
    o_ref[0] = (x + out).astype(o_ref.dtype)


# ----------------------------------------------------------------------------
# Wrappers (layout conversion happens once, all params passed as resident blocks)
# ----------------------------------------------------------------------------

def _full_spec(shape):
    nd = len(shape)
    return pl.BlockSpec(shape, lambda b, _nd=nd: (0,) * _nd)


def _group_mask(C, groups):
    gid = jnp.arange(C) // (C // groups)
    return (gid[:, None] == gid[None, :]).astype(jnp.float32)


def _compiler_params():
    return pltpu.CompilerParams(dimension_semantics=("parallel",),
                                vmem_limit_bytes=32 * 1024 * 1024)


def fused_residual_block(x_bsc, step_emb, p, *, H, W, groups, eps=1e-5):
    B, HW, C = x_bsc.shape
    T = step_emb.shape[-1]
    w1 = p["conv1_w"].reshape(9 * C, C)          # im2col weight layout (9*Cin, Cout)
    w2 = p["conv2_w"].reshape(9 * C, C)
    gmask = _group_mask(C, groups)
    kernel = functools.partial(residual_block_kernel, H=H, W=W, groups=groups, eps=eps)
    return pl.pallas_call(
        kernel,
        out_shape=jax.ShapeDtypeStruct((B, HW, C), x_bsc.dtype),
        grid=(B,),
        in_specs=[
            pl.BlockSpec((1, HW, C), lambda b: (b, 0, 0)),
            pl.BlockSpec((1, 1, T), lambda b: (b, 0, 0)),
            _full_spec((9 * C, C)), _full_spec((1, C)),
            _full_spec((1, C)), _full_spec((1, C)),
            _full_spec((T, C)), _full_spec((1, C)),
            _full_spec((9 * C, C)), _full_spec((1, C)),
            _full_spec((1, C)), _full_spec((1, C)),
            _full_spec((C, C)),
        ],
        out_specs=pl.BlockSpec((1, HW, C), lambda b: (b, 0, 0)),
        scratch_shapes=[pltpu.VMEM((H + 2, W + 2, C), jnp.float32)],
        compiler_params=_compiler_params(),
    )(x_bsc, step_emb.reshape(B, 1, T),
      w1, p["conv1_b"].reshape(1, C),
      p["gn1_g"].reshape(1, C), p["gn1_b"].reshape(1, C),
      p["lin_w"], p["lin_b"].reshape(1, C),
      w2, p["conv2_b"].reshape(1, C),
      p["gn2_g"].reshape(1, C), p["gn2_b"].reshape(1, C),
      gmask)


def fused_attention_block(x_bsc, p, *, num_heads=4, eps=1e-5):
    B, S, C = x_bsc.shape
    kernel = functools.partial(attention_block_kernel, num_heads=num_heads, eps=eps)
    return pl.pallas_call(
        kernel,
        out_shape=jax.ShapeDtypeStruct((B, S, C), x_bsc.dtype),
        grid=(B,),
        in_specs=[
            pl.BlockSpec((1, S, C), lambda b: (b, 0, 0)),
            _full_spec((1, C)), _full_spec((1, C)),
            _full_spec((C, 3 * C)), _full_spec((1, 3 * C)),
            _full_spec((C, C)), _full_spec((1, C)),
        ],
        out_specs=pl.BlockSpec((1, S, C), lambda b: (b, 0, 0)),
        compiler_params=_compiler_params(),
    )(x_bsc,
      p["gn_g"].reshape(1, C), p["gn_b"].reshape(1, C),
      p["wqkv"], p["bqkv"].reshape(1, 3 * C),
      p["wo"], p["bo"].reshape(1, C))


def midblock_forward(x_nchw, step_emb, params, *, groups):
    B, C, H, W = x_nchw.shape
    # Single internal layout (B, H*W, C); convert only at the public NCHW boundary.
    h = jnp.transpose(x_nchw, (0, 2, 3, 1)).reshape(B, H * W, C)
    h = fused_residual_block(h, step_emb, params["res1"], H=H, W=W, groups=groups)
    h = fused_attention_block(h, params["attn"], num_heads=4)
    h = fused_residual_block(h, step_emb, params["res2"], H=H, W=W, groups=groups)
    return jnp.transpose(h.reshape(B, H, W, C), (0, 3, 1, 2))


# ----------------------------------------------------------------------------
# Deterministic parameter init (shapes follow the PyTorch module's __init__)
# ----------------------------------------------------------------------------

def _uniform(key, shape, scale):
    return jax.random.uniform(key, shape, jnp.float32, minval=-scale, maxval=scale)


def init_residual_params(key, C, step_dim):
    ks = jax.random.split(key, 6)
    sf_conv = 1.0 / (C * 9) ** 0.5
    sf_lin = 1.0 / step_dim ** 0.5
    return {
        "conv1_w": _uniform(ks[0], (3, 3, C, C), sf_conv),   # (kh, kw, Cin, Cout)
        "conv1_b": _uniform(ks[1], (C,), sf_conv),
        "gn1_g": jnp.ones((C,), jnp.float32),
        "gn1_b": jnp.zeros((C,), jnp.float32),
        "lin_w": _uniform(ks[2], (step_dim, C), sf_lin),
        "lin_b": _uniform(ks[3], (C,), sf_lin),
        "conv2_w": _uniform(ks[4], (3, 3, C, C), sf_conv),
        "conv2_b": _uniform(ks[5], (C,), sf_conv),
        "gn2_g": jnp.ones((C,), jnp.float32),
        "gn2_b": jnp.zeros((C,), jnp.float32),
    }


def init_attention_params(key, C):
    ks = jax.random.split(key, 4)
    sf = 1.0 / C ** 0.5
    return {
        "gn_g": jnp.ones((C,), jnp.float32),
        "gn_b": jnp.zeros((C,), jnp.float32),
        "wqkv": _uniform(ks[0], (C, 3 * C), sf),
        "bqkv": _uniform(ks[1], (3 * C,), sf),
        "wo": _uniform(ks[2], (C, C), sf),
        "bo": _uniform(ks[3], (C,), sf),
    }


def init_midblock_params(key, mid_dim, time_emb_dim):
    k1, k2, k3 = jax.random.split(key, 3)
    return {
        "res1": init_residual_params(k1, mid_dim, time_emb_dim),
        "attn": init_attention_params(k2, mid_dim),
        "res2": init_residual_params(k3, mid_dim, time_emb_dim),
    }


# ----------------------------------------------------------------------------
# Main
# ----------------------------------------------------------------------------

if __name__ == "__main__":
    B, C, H, W = 2, 128, 8, 8     # mid_dim=128 -> lane-dense channel-last layout
    T = 32                         # time_emb_dim
    GROUPS = 4                     # 128 % 4 == 0; heads=4 -> head size 32

    key = jax.random.PRNGKey(0)
    kx, kt, kp = jax.random.split(key, 3)
    x = jax.random.normal(kx, (B, C, H, W), jnp.float32)       # NCHW like PyTorch
    step_emb = jax.random.normal(kt, (B, T), jnp.float32)
    params = init_midblock_params(kp, C, T)

    fwd = jax.jit(functools.partial(midblock_forward, groups=GROUPS))
    out = fwd(x, step_emb, params)
    jax.block_until_ready(out)
    assert out.shape == (B, C, H, W)
    assert bool(jnp.all(jnp.isfinite(out)))
    print("KERNEL_OK")
</pallas_src>

<mosaic_0001>
module attributes {stable_mosaic.version = 11 : i64} {
  func.func @residual_block_kernel(%arg0: i32, %arg1: memref<1x64x128xf32, #tpu.memory_space<vmem>>, %arg2: memref<1x1x32xf32, #tpu.memory_space<vmem>>, %arg3: memref<1152x128xf32, #tpu.memory_space<vmem>>, %arg4: memref<1x128xf32, #tpu.memory_space<vmem>>, %arg5: memref<1x128xf32, #tpu.memory_space<vmem>>, %arg6: memref<1x128xf32, #tpu.memory_space<vmem>>, %arg7: memref<32x128xf32, #tpu.memory_space<vmem>>, %arg8: memref<1x128xf32, #tpu.memory_space<vmem>>, %arg9: memref<1152x128xf32, #tpu.memory_space<vmem>>, %arg10: memref<1x128xf32, #tpu.memory_space<vmem>>, %arg11: memref<1x128xf32, #tpu.memory_space<vmem>>, %arg12: memref<1x128xf32, #tpu.memory_space<vmem>>, %arg13: memref<128x128xf32, #tpu.memory_space<vmem>>, %arg14: memref<1x64x128xf32, #tpu.memory_space<vmem>>, %arg15: memref<10x10x128xf32, #tpu.memory_space<vmem>>) attributes {dimension_semantics = [#tpu.dimension_semantics<parallel>], iteration_bounds = array<i64: 2>, scalar_prefetch = 0 : i64, scratch_operands = 1 : i64, tpu.core_type = #tpu.core_type<tc>, window_params = [{transform_indices = @transform_0, window_bounds = array<i64: 1, 64, 128>}, {transform_indices = @transform_1, window_bounds = array<i64: 1, 1, 32>}, {pipeline_mode = #tpu.pipeline_mode<synchronous>, transform_indices = @transform_2, window_bounds = array<i64: 1152, 128>}, {pipeline_mode = #tpu.pipeline_mode<synchronous>, transform_indices = @transform_3, window_bounds = array<i64: 1, 128>}, {pipeline_mode = #tpu.pipeline_mode<synchronous>, transform_indices = @transform_4, window_bounds = array<i64: 1, 128>}, {pipeline_mode = #tpu.pipeline_mode<synchronous>, transform_indices = @transform_5, window_bounds = array<i64: 1, 128>}, {pipeline_mode = #tpu.pipeline_mode<synchronous>, transform_indices = @transform_6, window_bounds = array<i64: 32, 128>}, {pipeline_mode = #tpu.pipeline_mode<synchronous>, transform_indices = @transform_7, window_bounds = array<i64: 1, 128>}, {pipeline_mode = #tpu.pipeline_mode<synchronous>, transform_indices = @transform_8, window_bounds = array<i64: 1152, 128>}, {pipeline_mode = #tpu.pipeline_mode<synchronous>, transform_indices = @transform_9, window_bounds = array<i64: 1, 128>}, {pipeline_mode = #tpu.pipeline_mode<synchronous>, transform_indices = @transform_10, window_bounds = array<i64: 1, 128>}, {pipeline_mode = #tpu.pipeline_mode<synchronous>, transform_indices = @transform_11, window_bounds = array<i64: 1, 128>}, {pipeline_mode = #tpu.pipeline_mode<synchronous>, transform_indices = @transform_12, window_bounds = array<i64: 128, 128>}, {transform_indices = @transform_13, window_bounds = array<i64: 1, 64, 128>}]} {
    %c0 = arith.constant 0 : index
    %c0_0 = arith.constant 0 : index
    %c0_1 = arith.constant 0 : index
    %0 = vector.load %arg1[%c0, %c0_0, %c0_1] : memref<1x64x128xf32, #tpu.memory_space<vmem>>, vector<1x64x128xf32>
    %1 = vector.shape_cast %0 : vector<1x64x128xf32> to vector<64x128xf32>
    %c0_2 = arith.constant 0 : index
    %c0_3 = arith.constant 0 : index
    %2 = vector.load %arg13[%c0_2, %c0_3] : memref<128x128xf32, #tpu.memory_space<vmem>>, vector<128x128xf32>
    %cst = arith.constant 0.000000e+00 : f32
    %3 = vector.broadcast %cst : f32 to vector<10x10x128xf32>
    %c0_4 = arith.constant 0 : index
    %c0_5 = arith.constant 0 : index
    %c0_6 = arith.constant 0 : index
    %4 = vector.load %arg15[%c0_4, %c0_5, %c0_6] : memref<10x10x128xf32, #tpu.memory_space<vmem>>, vector<10x10x128xf32>
    tpu.vector_store %arg15[%c0_4, %c0_5, %c0_6], %3 {strides = array<i32>} : memref<10x10x128xf32, #tpu.memory_space<vmem>>, vector<10x10x128xf32>,
    %5 = vector.shape_cast %1 : vector<64x128xf32> to vector<8x8x128xf32>
    %c1 = arith.constant 1 : index
    %c1_7 = arith.constant 1 : index
    %c0_8 = arith.constant 0 : index
    %6 = vector.load %arg15[%c1, %c1_7, %c0_8] : memref<10x10x128xf32, #tpu.memory_space<vmem>>, vector<8x8x128xf32>
    tpu.vector_store %arg15[%c1, %c1_7, %c0_8], %5 {strides = array<i32>} : memref<10x10x128xf32, #tpu.memory_space<vmem>>, vector<8x8x128xf32>,
    %c0_9 = arith.constant 0 : index
    %c0_10 = arith.constant 0 : index
    %c0_11 = arith.constant 0 : index
    %7 = vector.load %arg15[%c0_9, %c0_10, %c0_11] : memref<10x10x128xf32, #tpu.memory_space<vmem>>, vector<8x8x128xf32>
    %8 = vector.shape_cast %7 : vector<8x8x128xf32> to vector<64x128xf32>
    %c0_12 = arith.constant 0 : index
    %c1_13 = arith.constant 1 : index
    %c0_14 = arith.constant 0 : index
    %9 = vector.load %arg15[%c0_12, %c1_13, %c0_14] : memref<10x10x128xf32, #tpu.memory_space<vmem>>, vector<8x8x128xf32>
    %10 = vector.shape_cast %9 : vector<8x8x128xf32> to vector<64x128xf32>
    %c0_15 = arith.constant 0 : index
    %c2 = arith.constant 2 : index
    %c0_16 = arith.constant 0 : index
    %11 = vector.load %arg15[%c0_15, %c2, %c0_16] : memref<10x10x128xf32, #tpu.memory_space<vmem>>, vector<8x8x128xf32>
    %12 = vector.shape_cast %11 : vector<8x8x128xf32> to vector<64x128xf32>
    %c1_17 = arith.constant 1 : index
    %c0_18 = arith.constant 0 : index
    %c0_19 = arith.constant 0 : index
    %13 = vector.load %arg15[%c1_17, %c0_18, %c0_19] : memref<10x10x128xf32, #tpu.memory_space<vmem>>, vector<8x8x128xf32>
    %14 = vector.shape_cast %13 : vector<8x8x128xf32> to vector<64x128xf32>
    %c1_20 = arith.constant 1 : index
    %c1_21 = arith.constant 1 : index
    %c0_22 = arith.constant 0 : index
    %15 = vector.load %arg15[%c1_20, %c1_21, %c0_22] : memref<10x10x128xf32, #tpu.memory_space<vmem>>, vector<8x8x128xf32>
    %16 = vector.shape_cast %15 : vector<8x8x128xf32> to vector<64x128xf32>
    %c1_23 = arith.constant 1 : index
    %c2_24 = arith.constant 2 : index
    %c0_25 = arith.constant 0 : index
    %17 = vector.load %arg15[%c1_23, %c2_24, %c0_25] : memref<10x10x128xf32, #tpu.memory_space<vmem>>, vector<8x8x128xf32>
    %18 = vector.shape_cast %17 : vector<8x8x128xf32> to vector<64x128xf32>
    %c2_26 = arith.constant 2 : index
    %c0_27 = arith.constant 0 : index
    %c0_28 = arith.constant 0 : index
    %19 = vector.load %arg15[%c2_26, %c0_27, %c0_28] : memref<10x10x128xf32, #tpu.memory_space<vmem>>, vector<8x8x128xf32>
    %20 = vector.shape_cast %19 : vector<8x8x128xf32> to vector<64x128xf32>
    %c2_29 = arith.constant 2 : index
    %c1_30 = arith.constant 1 : index
    %c0_31 = arith.constant 0 : index
    %21 = vector.load %arg15[%c2_29, %c1_30, %c0_31] : memref<10x10x128xf32, #tpu.memory_space<vmem>>, vector<8x8x128xf32>
    %22 = vector.shape_cast %21 : vector<8x8x128xf32> to vector<64x128xf32>
    %c2_32 = arith.constant 2 : index
    %c2_33 = arith.constant 2 : index
    %c0_34 = arith.constant 0 : index
    %23 = vector.load %arg15[%c2_32, %c2_33, %c0_34] : memref<10x10x128xf32, #tpu.memory_space<vmem>>, vector<8x8x128xf32>
    %24 = vector.shape_cast %23 : vector<8x8x128xf32> to vector<64x128xf32>
    %25 = tpu.concatenate %8, %10, %12, %14, %16, %18, %20, %22, %24 in 1 : vector<64x128xf32>, vector<64x128xf32>, vector<64x128xf32>, vector<64x128xf32>, vector<64x128xf32>, vector<64x128xf32>, vector<64x128xf32>, vector<64x128xf32>, vector<64x128xf32> -> vector<64x1152xf32>
    %c0_35 = arith.constant 0 : index
    %c0_36 = arith.constant 0 : index
    %26 = vector.load %arg3[%c0_35, %c0_36] : memref<1152x128xf32, #tpu.memory_space<vmem>>, vector<1152x128xf32>
    %cst_37 = arith.constant dense<0.000000e+00> : vector<64x128xf32>
    %27 = tpu.matmul %25, %26, %cst_37 {dimension_numbers = #tpu.dot_dimension_numbers<[1], [0], [0], [1], [0, 0, 1, 1], [], []>} : vector<64x1152xf32>, vector<1152x128xf32>, vector<64x128xf32> -> vector<64x128xf32>
    %c0_38 = arith.constant 0 : index
    %c0_39 = arith.constant 0 : index
    %28 = vector.load %arg4[%c0_38, %c0_39] : memref<1x128xf32, #tpu.memory_space<vmem>>, vector<1x128xf32>
    %29 = vector.broadcast %28 : vector<1x128xf32> to vector<64x128xf32>
    %30 = arith.addf %27, %29 : vector<64x128xf32>
    %cst_40 = arith.constant dense<0.000000e+00> : vector<128xf32>
    %31 = vector.multi_reduction <add>, %30, %cst_40 [0] : vector<64x128xf32> to vector<128xf32>
    %32 = vector.shape_cast %31 : vector<128xf32> to vector<1x128xf32>
    %33 = arith.mulf %30, %30 : vector<64x128xf32>
    %cst_41 = arith.constant dense<0.000000e+00> : vector<128xf32>
    %34 = vector.multi_reduction <add>, %33, %cst_41 [0] : vector<64x128xf32> to vector<128xf32>
    %35 = vector.shape_cast %34 : vector<128xf32> to vector<1x128xf32>
    %cst_42 = arith.constant dense<0.000000e+00> : vector<1x128xf32>
    %36 = tpu.matmul %32, %2, %cst_42 {dimension_numbers = #tpu.dot_dimension_numbers<[1], [0], [0], [1], [0, 0, 1, 1], [], []>} : vector<1x128xf32>, vector<128x128xf32>, vector<1x128xf32> -> vector<1x128xf32>
    %cst_43 = arith.constant 4.8828125E-4 : f32
    %37 = vector.broadcast %cst_43 : f32 to vector<1x128xf32>
    %38 = arith.mulf %36, %37 : vector<1x128xf32>
    %cst_44 = arith.constant dense<0.000000e+00> : vector<1x128xf32>
    %39 = tpu.matmul %35, %2, %cst_44 {dimension_numbers = #tpu.dot_dimension_numbers<[1], [0], [0], [1], [0, 0, 1, 1], [], []>} : vector<1x128xf32>, vector<128x128xf32>, vector<1x128xf32> -> vector<1x128xf32>
    %cst_45 = arith.constant 4.8828125E-4 : f32
    %40 = vector.broadcast %cst_45 : f32 to vector<1x128xf32>
    %41 = arith.mulf %39, %40 : vector<1x128xf32>
    %42 = arith.mulf %38, %38 : vector<1x128xf32>
    %43 = arith.subf %41, %42 : vector<1x128xf32>
    %44 = vector.broadcast %38 : vector<1x128xf32> to vector<64x128xf32>
    %45 = arith.subf %30, %44 : vector<64x128xf32>
    %cst_46 = arith.constant 9.99999974E-6 : f32
    %46 = vector.broadcast %cst_46 : f32 to vector<1x128xf32>
    %47 = arith.addf %43, %46 : vector<1x128xf32>
    %48 = math.rsqrt %47 : vector<1x128xf32>
    %49 = vector.broadcast %48 : vector<1x128xf32> to vector<64x128xf32>
    %50 = arith.mulf %45, %49 : vector<64x128xf32>
    %c0_47 = arith.constant 0 : index
    %c0_48 = arith.constant 0 : index
    %51 = vector.load %arg5[%c0_47, %c0_48] : memref<1x128xf32, #tpu.memory_space<vmem>>, vector<1x128xf32>
    %52 = vector.broadcast %51 : vector<1x128xf32> to vector<64x128xf32>
    %53 = arith.mulf %50, %52 : vector<64x128xf32>
    %c0_49 = arith.constant 0 : index
    %c0_50 = arith.constant 0 : index
    %54 = vector.load %arg6[%c0_49, %c0_50] : memref<1x128xf32, #tpu.memory_space<vmem>>, vector<1x128xf32>
    %55 = vector.broadcast %54 : vector<1x128xf32> to vector<64x128xf32>
    %56 = arith.addf %53, %55 : vector<64x128xf32>
    %57 = arith.negf %56 : vector<64x128xf32>
    %58 = math.exp %57 : vector<64x128xf32>
    %cst_51 = arith.constant 1.000000e+00 : f32
    %59 = vector.broadcast %cst_51 : f32 to vector<64x128xf32>
    %60 = arith.addf %59, %58 : vector<64x128xf32>
    %61 = arith.divf %59, %60 : vector<64x128xf32>
    %62 = arith.mulf %56, %61 : vector<64x128xf32>
    %c0_52 = arith.constant 0 : index
    %c0_53 = arith.constant 0 : index
    %c0_54 = arith.constant 0 : index
    %63 = vector.load %arg2[%c0_52, %c0_53, %c0_54] : memref<1x1x32xf32, #tpu.memory_space<vmem>>, vector<1x1x32xf32>
    %64 = vector.shape_cast %63 : vector<1x1x32xf32> to vector<1x32xf32>
    %65 = arith.negf %64 : vector<1x32xf32>
    %66 = math.exp %65 : vector<1x32xf32>
    %cst_55 = arith.constant 1.000000e+00 : f32
    %67 = vector.broadcast %cst_55 : f32 to vector<1x32xf32>
    %68 = arith.addf %67, %66 : vector<1x32xf32>
    %69 = arith.divf %67, %68 : vector<1x32xf32>
    %70 = arith.mulf %64, %69 : vector<1x32xf32>
    %c0_56 = arith.constant 0 : index
    %c0_57 = arith.constant 0 : index
    %71 = vector.load %arg7[%c0_56, %c0_57] : memref<32x128xf32, #tpu.memory_space<vmem>>, vector<32x128xf32>
    %cst_58 = arith.constant dense<0.000000e+00> : vector<1x128xf32>
    %72 = tpu.matmul %70, %71, %cst_58 {dimension_numbers = #tpu.dot_dimension_numbers<[1], [0], [0], [1], [0, 0, 1, 1], [], []>} : vector<1x32xf32>, vector<32x128xf32>, vector<1x128xf32> -> vector<1x128xf32>
    %c0_59 = arith.constant 0 : index
    %c0_60 = arith.constant 0 : index
    %73 = vector.load %arg8[%c0_59, %c0_60] : memref<1x128xf32, #tpu.memory_space<vmem>>, vector<1x128xf32>
    %74 = arith.addf %72, %73 : vector<1x128xf32>
    %75 = vector.broadcast %74 : vector<1x128xf32> to vector<64x128xf32>
    %76 = arith.addf %62, %75 : vector<64x128xf32>
    %77 = vector.shape_cast %76 : vector<64x128xf32> to vector<8x8x128xf32>
    %c1_61 = arith.constant 1 : index
    %c1_62 = arith.constant 1 : index
    %c0_63 = arith.constant 0 : index
    %78 = vector.load %arg15[%c1_61, %c1_62, %c0_63] : memref<10x10x128xf32, #tpu.memory_space<vmem>>, vector<8x8x128xf32>
    tpu.vector_store %arg15[%c1_61, %c1_62, %c0_63], %77 {strides = array<i32>} : memref<10x10x128xf32, #tpu.memory_space<vmem>>, vector<8x8x128xf32>,
    %c0_64 = arith.constant 0 : index
    %c0_65 = arith.constant 0 : index
    %c0_66 = arith.constant 0 : index
    %79 = vector.load %arg15[%c0_64, %c0_65, %c0_66] : memref<10x10x128xf32, #tpu.memory_space<vmem>>, vector<8x8x128xf32>
    %80 = vector.shape_cast %79 : vector<8x8x128xf32> to vector<64x128xf32>
    %c0_67 = arith.constant 0 : index
    %c1_68 = arith.constant 1 : index
    %c0_69 = arith.constant 0 : index
    %81 = vector.load %arg15[%c0_67, %c1_68, %c0_69] : memref<10x10x128xf32, #tpu.memory_space<vmem>>, vector<8x8x128xf32>
    %82 = vector.shape_cast %81 : vector<8x8x128xf32> to vector<64x128xf32>
    %c0_70 = arith.constant 0 : index
    %c2_71 = arith.constant 2 : index
    %c0_72 = arith.constant 0 : index
    %83 = vector.load %arg15[%c0_70, %c2_71, %c0_72] : memref<10x10x128xf32, #tpu.memory_space<vmem>>, vector<8x8x128xf32>
    %84 = vector.shape_cast %83 : vector<8x8x128xf32> to vector<64x128xf32>
    %c1_73 = arith.constant 1 : index
    %c0_74 = arith.constant 0 : index
    %c0_75 = arith.constant 0 : index
    %85 = vector.load %arg15[%c1_73, %c0_74, %c0_75] : memref<10x10x128xf32, #tpu.memory_space<vmem>>, vector<8x8x128xf32>
    %86 = vector.shape_cast %85 : vector<8x8x128xf32> to vector<64x128xf32>
    %c1_76 = arith.constant 1 : index
    %c1_77 = arith.constant 1 : index
    %c0_78 = arith.constant 0 : index
    %87 = vector.load %arg15[%c1_76, %c1_77, %c0_78] : memref<10x10x128xf32, #tpu.memory_space<vmem>>, vector<8x8x128xf32>
    %88 = vector.shape_cast %87 : vector<8x8x128xf32> to vector<64x128xf32>
    %c1_79 = arith.constant 1 : index
    %c2_80 = arith.constant 2 : index
    %c0_81 = arith.constant 0 : index
    %89 = vector.load %arg15[%c1_79, %c2_80, %c0_81] : memref<10x10x128xf32, #tpu.memory_space<vmem>>, vector<8x8x128xf32>
    %90 = vector.shape_cast %89 : vector<8x8x128xf32> to vector<64x128xf32>
    %c2_82 = arith.constant 2 : index
    %c0_83 = arith.constant 0 : index
    %c0_84 = arith.constant 0 : index
    %91 = vector.load %arg15[%c2_82, %c0_83, %c0_84] : memref<10x10x128xf32, #tpu.memory_space<vmem>>, vector<8x8x128xf32>
    %92 = vector.shape_cast %91 : vector<8x8x128xf32> to vector<64x128xf32>
    %c2_85 = arith.constant 2 : index
    %c1_86 = arith.constant 1 : index
    %c0_87 = arith.constant 0 : index
    %93 = vector.load %arg15[%c2_85, %c1_86, %c0_87] : memref<10x10x128xf32, #tpu.memory_space<vmem>>, vector<8x8x128xf32>
    %94 = vector.shape_cast %93 : vector<8x8x128xf32> to vector<64x128xf32>
    %c2_88 = arith.constant 2 : index
    %c2_89 = arith.constant 2 : index
    %c0_90 = arith.constant 0 : index
    %95 = vector.load %arg15[%c2_88, %c2_89, %c0_90] : memref<10x10x128xf32, #tpu.memory_space<vmem>>, vector<8x8x128xf32>
    %96 = vector.shape_cast %95 : vector<8x8x128xf32> to vector<64x128xf32>
    %97 = tpu.concatenate %80, %82, %84, %86, %88, %90, %92, %94, %96 in 1 : vector<64x128xf32>, vector<64x128xf32>, vector<64x128xf32>, vector<64x128xf32>, vector<64x128xf32>, vector<64x128xf32>, vector<64x128xf32>, vector<64x128xf32>, vector<64x128xf32> -> vector<64x1152xf32>
    %c0_91 = arith.constant 0 : index
    %c0_92 = arith.constant 0 : index
    %98 = vector.load %arg9[%c0_91, %c0_92] : memref<1152x128xf32, #tpu.memory_space<vmem>>, vector<1152x128xf32>
    %cst_93 = arith.constant dense<0.000000e+00> : vector<64x128xf32>
    %99 = tpu.matmul %97, %98, %cst_93 {dimension_numbers = #tpu.dot_dimension_numbers<[1], [0], [0], [1], [0, 0, 1, 1], [], []>} : vector<64x1152xf32>, vector<1152x128xf32>, vector<64x128xf32> -> vector<64x128xf32>
    %c0_94 = arith.constant 0 : index
    %c0_95 = arith.constant 0 : index
    %100 = vector.load %arg10[%c0_94, %c0_95] : memref<1x128xf32, #tpu.memory_space<vmem>>, vector<1x128xf32>
    %101 = vector.broadcast %100 : vector<1x128xf32> to vector<64x128xf32>
    %102 = arith.addf %99, %101 : vector<64x128xf32>
    %cst_96 = arith.constant dense<0.000000e+00> : vector<128xf32>
    %103 = vector.multi_reduction <add>, %102, %cst_96 [0] : vector<64x128xf32> to vector<128xf32>
    %104 = vector.shape_cast %103 : vector<128xf32> to vector<1x128xf32>
    %105 = arith.mulf %102, %102 : vector<64x128xf32>
    %cst_97 = arith.constant dense<0.000000e+00> : vector<128xf32>
    %106 = vector.multi_reduction <add>, %105, %cst_97 [0] : vector<64x128xf32> to vector<128xf32>
    %107 = vector.shape_cast %106 : vector<128xf32> to vector<1x128xf32>
    %cst_98 = arith.constant dense<0.000000e+00> : vector<1x128xf32>
    %108 = tpu.matmul %104, %2, %cst_98 {dimension_numbers = #tpu.dot_dimension_numbers<[1], [0], [0], [1], [0, 0, 1, 1], [], []>} : vector<1x128xf32>, vector<128x128xf32>, vector<1x128xf32> -> vector<1x128xf32>
    %cst_99 = arith.constant 4.8828125E-4 : f32
    %109 = vector.broadcast %cst_99 : f32 to vector<1x128xf32>
    %110 = arith.mulf %108, %109 : vector<1x128xf32>
    %cst_100 = arith.constant dense<0.000000e+00> : vector<1x128xf32>
    %111 = tpu.matmul %107, %2, %cst_100 {dimension_numbers = #tpu.dot_dimension_numbers<[1], [0], [0], [1], [0, 0, 1, 1], [], []>} : vector<1x128xf32>, vector<128x128xf32>, vector<1x128xf32> -> vector<1x128xf32>
    %cst_101 = arith.constant 4.8828125E-4 : f32
    %112 = vector.broadcast %cst_101 : f32 to vector<1x128xf32>
    %113 = arith.mulf %111, %112 : vector<1x128xf32>
    %114 = arith.mulf %110, %110 : vector<1x128xf32>
    %115 = arith.subf %113, %114 : vector<1x128xf32>
    %116 = vector.broadcast %110 : vector<1x128xf32> to vector<64x128xf32>
    %117 = arith.subf %102, %116 : vector<64x128xf32>
    %cst_102 = arith.constant 9.99999974E-6 : f32
    %118 = vector.broadcast %cst_102 : f32 to vector<1x128xf32>
    %119 = arith.addf %115, %118 : vector<1x128xf32>
    %120 = math.rsqrt %119 : vector<1x128xf32>
    %121 = vector.broadcast %120 : vector<1x128xf32> to vector<64x128xf32>
    %122 = arith.mulf %117, %121 : vector<64x128xf32>
    %c0_103 = arith.constant 0 : index
    %c0_104 = arith.constant 0 : index
    %123 = vector.load %arg11[%c0_103, %c0_104] : memref<1x128xf32, #tpu.memory_space<vmem>>, vector<1x128xf32>
    %124 = vector.broadcast %123 : vector<1x128xf32> to vector<64x128xf32>
    %125 = arith.mulf %122, %124 : vector<64x128xf32>
    %c0_105 = arith.constant 0 : index
    %c0_106 = arith.constant 0 : index
    %126 = vector.load %arg12[%c0_105, %c0_106] : memref<1x128xf32, #tpu.memory_space<vmem>>, vector<1x128xf32>
    %127 = vector.broadcast %126 : vector<1x128xf32> to vector<64x128xf32>
    %128 = arith.addf %125, %127 : vector<64x128xf32>
    %129 = arith.negf %128 : vector<64x128xf32>
    %130 = math.exp %129 : vector<64x128xf32>
    %cst_107 = arith.constant 1.000000e+00 : f32
    %131 = vector.broadcast %cst_107 : f32 to vector<64x128xf32>
    %132 = arith.addf %131, %130 : vector<64x128xf32>
    %133 = arith.divf %131, %132 : vector<64x128xf32>
    %134 = arith.mulf %128, %133 : vector<64x128xf32>
    %135 = arith.addf %1, %134 : vector<64x128xf32>
    %c0_108 = arith.constant 0 : index
    %c0_109 = arith.constant 0 : index
    %c0_110 = arith.constant 0 : index
    %136 = vector.load %arg14[%c0_108, %c0_109, %c0_110] : memref<1x64x128xf32, #tpu.memory_space<vmem>>, vector<1x64x128xf32>
    %137 = vector.shape_cast %136 : vector<1x64x128xf32> to vector<64x128xf32>
    %138 = vector.shape_cast %135 : vector<64x128xf32> to vector<1x64x128xf32>
    tpu.vector_store %arg14[%c0_108, %c0_109, %c0_110], %138 {strides = array<i32>} : memref<1x64x128xf32, #tpu.memory_space<vmem>>, vector<1x64x128xf32>,
    return
  }
  func.func @transform_0(%arg0: i32) -> (i32, i32, i32) {
    %c0_i32 = arith.constant 0 : i32
    %c0_i32_0 = arith.constant 0 : i32
    %c0_i32_1 = arith.constant 0 : i32
    return %arg0, %c0_i32, %c0_i32_0 : i32, i32, i32
  }
  func.func @transform_1(%arg0: i32) -> (i32, i32, i32) {
    %c0_i32 = arith.constant 0 : i32
    %c0_i32_0 = arith.constant 0 : i32
    %c0_i32_1 = arith.constant 0 : i32
    return %arg0, %c0_i32, %c0_i32_0 : i32, i32, i32
  }
  func.func @transform_2(%arg0: i32) -> (i32, i32) {
    %c0_i32 = arith.constant 0 : i32
    %c0_i32_0 = arith.constant 0 : i32
    %c0_i32_1 = arith.constant 0 : i32
    return %c0_i32, %c0_i32_0 : i32, i32
  }
  func.func @transform_3(%arg0: i32) -> (i32, i32) {
    %c0_i32 = arith.constant 0 : i32
    %c0_i32_0 = arith.constant 0 : i32
    %c0_i32_1 = arith.constant 0 : i32
    return %c0_i32, %c0_i32_0 : i32, i32
  }
  func.func @transform_4(%arg0: i32) -> (i32, i32) {
    %c0_i32 = arith.constant 0 : i32
    %c0_i32_0 = arith.constant 0 : i32
    %c0_i32_1 = arith.constant 0 : i32
    return %c0_i32, %c0_i32_0 : i32, i32
  }
  func.func @transform_5(%arg0: i32) -> (i32, i32) {
    %c0_i32 = arith.constant 0 : i32
    %c0_i32_0 = arith.constant 0 : i32
    %c0_i32_1 = arith.constant 0 : i32
    return %c0_i32, %c0_i32_0 : i32, i32
  }
  func.func @transform_6(%arg0: i32) -> (i32, i32) {
    %c0_i32 = arith.constant 0 : i32
    %c0_i32_0 = arith.constant 0 : i32
    %c0_i32_1 = arith.constant 0 : i32
    return %c0_i32, %c0_i32_0 : i32, i32
  }
  func.func @transform_7(%arg0: i32) -> (i32, i32) {
    %c0_i32 = arith.constant 0 : i32
    %c0_i32_0 = arith.constant 0 : i32
    %c0_i32_1 = arith.constant 0 : i32
    return %c0_i32, %c0_i32_0 : i32, i32
  }
  func.func @transform_8(%arg0: i32) -> (i32, i32) {
    %c0_i32 = arith.constant 0 : i32
    %c0_i32_0 = arith.constant 0 : i32
    %c0_i32_1 = arith.constant 0 : i32
    return %c0_i32, %c0_i32_0 : i32, i32
  }
  func.func @transform_9(%arg0: i32) -> (i32, i32) {
    %c0_i32 = arith.constant 0 : i32
    %c0_i32_0 = arith.constant 0 : i32
    %c0_i32_1 = arith.constant 0 : i32
    return %c0_i32, %c0_i32_0 : i32, i32
  }
  func.func @transform_10(%arg0: i32) -> (i32, i32) {
    %c0_i32 = arith.constant 0 : i32
    %c0_i32_0 = arith.constant 0 : i32
    %c0_i32_1 = arith.constant 0 : i32
    return %c0_i32, %c0_i32_0 : i32, i32
  }
  func.func @transform_11(%arg0: i32) -> (i32, i32) {
    %c0_i32 = arith.constant 0 : i32
    %c0_i32_0 = arith.constant 0 : i32
    %c0_i32_1 = arith.constant 0 : i32
    return %c0_i32, %c0_i32_0 : i32, i32
  }
  func.func @transform_12(%arg0: i32) -> (i32, i32) {
    %c0_i32 = arith.constant 0 : i32
    %c0_i32_0 = arith.constant 0 : i32
    %c0_i32_1 = arith.constant 0 : i32
    return %c0_i32, %c0_i32_0 : i32, i32
  }
  func.func @transform_13(%arg0: i32) -> (i32, i32, i32) {
    %c0_i32 = arith.constant 0 : i32
    %c0_i32_0 = arith.constant 0 : i32
    %c0_i32_1 = arith.constant 0 : i32
    return %arg0, %c0_i32, %c0_i32_0 : i32, i32, i32
  }
}

module attributes {stable_mosaic.version = 11 : i64} {
  func.func @attention_block_kernel(%arg0: i32, %arg1: memref<1x64x128xf32, #tpu.memory_space<vmem>>, %arg2: memref<1x128xf32, #tpu.memory_space<vmem>>, %arg3: memref<1x128xf32, #tpu.memory_space<vmem>>, %arg4: memref<128x384xf32, #tpu.memory_space<vmem>>, %arg5: memref<1x384xf32, #tpu.memory_space<vmem>>, %arg6: memref<128x128xf32, #tpu.memory_space<vmem>>, %arg7: memref<1x128xf32, #tpu.memory_space<vmem>>, %arg8: memref<1x64x128xf32, #tpu.memory_space<vmem>>) attributes {dimension_semantics = [#tpu.dimension_semantics<parallel>], iteration_bounds = array<i64: 2>, scalar_prefetch = 0 : i64, scratch_operands = 0 : i64, tpu.core_type = #tpu.core_type<tc>, window_params = [{transform_indices = @transform_0, window_bounds = array<i64: 1, 64, 128>}, {pipeline_mode = #tpu.pipeline_mode<synchronous>, transform_indices = @transform_1, window_bounds = array<i64: 1, 128>}, {pipeline_mode = #tpu.pipeline_mode<synchronous>, transform_indices = @transform_2, window_bounds = array<i64: 1, 128>}, {pipeline_mode = #tpu.pipeline_mode<synchronous>, transform_indices = @transform_3, window_bounds = array<i64: 128, 384>}, {pipeline_mode = #tpu.pipeline_mode<synchronous>, transform_indices = @transform_4, window_bounds = array<i64: 1, 384>}, {pipeline_mode = #tpu.pipeline_mode<synchronous>, transform_indices = @transform_5, window_bounds = array<i64: 128, 128>}, {pipeline_mode = #tpu.pipeline_mode<synchronous>, transform_indices = @transform_6, window_bounds = array<i64: 1, 128>}, {transform_indices = @transform_7, window_bounds = array<i64: 1, 64, 128>}]} {
    %c0 = arith.constant 0 : index
    %c0_0 = arith.constant 0 : index
    %c0_1 = arith.constant 0 : index
    %0 = vector.load %arg1[%c0, %c0_0, %c0_1] : memref<1x64x128xf32, #tpu.memory_space<vmem>>, vector<1x64x128xf32>
    %1 = vector.shape_cast %0 : vector<1x64x128xf32> to vector<64x128xf32>
    %2 = vector.shape_cast %1 : vector<64x128xf32> to vector<1x64x128xf32>
    %cst = arith.constant dense<0.000000e+00> : vector<1xf32>
    %3 = vector.multi_reduction <add>, %2, %cst [1, 2] : vector<1x64x128xf32> to vector<1xf32>
    %4 = vector.shape_cast %3 : vector<1xf32> to vector<1x1x1xf32>
    %5 = vector.extract %4[0, 0, 0] : f32 from vector<1x1x1xf32>
    %6 = vector.broadcast %5 : f32 to vector<1x1xf32>
    %cst_2 = arith.constant 1.22070313E-4 : f32
    %7 = vector.broadcast %cst_2 : f32 to vector<1x1xf32>
    %8 = arith.mulf %6, %7 : vector<1x1xf32>
    %9 = arith.mulf %1, %1 : vector<64x128xf32>
    %10 = vector.shape_cast %9 : vector<64x128xf32> to vector<1x64x128xf32>
    %cst_3 = arith.constant dense<0.000000e+00> : vector<1xf32>
    %11 = vector.multi_reduction <add>, %10, %cst_3 [1, 2] : vector<1x64x128xf32> to vector<1xf32>
    %12 = vector.shape_cast %11 : vector<1xf32> to vector<1x1x1xf32>
    %13 = vector.extract %12[0, 0, 0] : f32 from vector<1x1x1xf32>
    %14 = vector.broadcast %13 : f32 to vector<1x1xf32>
    %cst_4 = arith.constant 1.22070313E-4 : f32
    %15 = vector.broadcast %cst_4 : f32 to vector<1x1xf32>
    %16 = arith.mulf %14, %15 : vector<1x1xf32>
    %17 = arith.mulf %8, %8 : vector<1x1xf32>
    %18 = arith.subf %16, %17 : vector<1x1xf32>
    %19 = vector.broadcast %8 : vector<1x1xf32> to vector<64x128xf32>
    %20 = arith.subf %1, %19 : vector<64x128xf32>
    %cst_5 = arith.constant 9.99999974E-6 : f32
    %21 = vector.broadcast %cst_5 : f32 to vector<1x1xf32>
    %22 = arith.addf %18, %21 : vector<1x1xf32>
    %23 = math.rsqrt %22 : vector<1x1xf32>
    %24 = vector.broadcast %23 : vector<1x1xf32> to vector<64x128xf32>
    %25 = arith.mulf %20, %24 : vector<64x128xf32>
    %c0_6 = arith.constant 0 : index
    %c0_7 = arith.constant 0 : index
    %26 = vector.load %arg2[%c0_6, %c0_7] : memref<1x128xf32, #tpu.memory_space<vmem>>, vector<1x128xf32>
    %27 = vector.broadcast %26 : vector<1x128xf32> to vector<64x128xf32>
    %28 = arith.mulf %25, %27 : vector<64x128xf32>
    %c0_8 = arith.constant 0 : index
    %c0_9 = arith.constant 0 : index
    %29 = vector.load %arg3[%c0_8, %c0_9] : memref<1x128xf32, #tpu.memory_space<vmem>>, vector<1x128xf32>
    %30 = vector.broadcast %29 : vector<1x128xf32> to vector<64x128xf32>
    %31 = arith.addf %28, %30 : vector<64x128xf32>
    %c0_10 = arith.constant 0 : index
    %c0_11 = arith.constant 0 : index
    %32 = vector.load %arg4[%c0_10, %c0_11] : memref<128x384xf32, #tpu.memory_space<vmem>>, vector<128x384xf32>
    %cst_12 = arith.constant dense<0.000000e+00> : vector<64x384xf32>
    %33 = tpu.matmul %31, %32, %cst_12 {dimension_numbers = #tpu.dot_dimension_numbers<[1], [0], [0], [1], [0, 0, 1, 1], [], []>} : vector<64x128xf32>, vector<128x384xf32>, vector<64x384xf32> -> vector<64x384xf32>
    %c0_13 = arith.constant 0 : index
    %c0_14 = arith.constant 0 : index
    %34 = vector.load %arg5[%c0_13, %c0_14] : memref<1x384xf32, #tpu.memory_space<vmem>>, vector<1x384xf32>
    %35 = vector.broadcast %34 : vector<1x384xf32> to vector<64x384xf32>
    %36 = arith.addf %33, %35 : vector<64x384xf32>
    %37 = vector.extract_strided_slice %36 {offsets = [0, 0], sizes = [64, 32], strides = [1, 1]} : vector<64x384xf32> to vector<64x32xf32>
    %38 = vector.extract_strided_slice %36 {offsets = [0, 32], sizes = [64, 32], strides = [1, 1]} : vector<64x384xf32> to vector<64x32xf32>
    %39 = vector.extract_strided_slice %36 {offsets = [0, 64], sizes = [64, 32], strides = [1, 1]} : vector<64x384xf32> to vector<64x32xf32>
    %40 = vector.extract_strided_slice %36 {offsets = [0, 96], sizes = [64, 32], strides = [1, 1]} : vector<64x384xf32> to vector<64x32xf32>
    %41 = vector.shape_cast %37 : vector<64x32xf32> to vector<1x64x32xf32>
    %42 = vector.shape_cast %38 : vector<64x32xf32> to vector<1x64x32xf32>
    %43 = vector.shape_cast %39 : vector<64x32xf32> to vector<1x64x32xf32>
    %44 = vector.shape_cast %40 : vector<64x32xf32> to vector<1x64x32xf32>
    %45 = tpu.concatenate %41, %42, %43, %44 in 0 : vector<1x64x32xf32>, vector<1x64x32xf32>, vector<1x64x32xf32>, vector<1x64x32xf32> -> vector<4x64x32xf32>
    %46 = vector.extract_strided_slice %36 {offsets = [0, 128], sizes = [64, 32], strides = [1, 1]} : vector<64x384xf32> to vector<64x32xf32>
    %47 = vector.extract_strided_slice %36 {offsets = [0, 160], sizes = [64, 32], strides = [1, 1]} : vector<64x384xf32> to vector<64x32xf32>
    %48 = vector.extract_strided_slice %36 {offsets = [0, 192], sizes = [64, 32], strides = [1, 1]} : vector<64x384xf32> to vector<64x32xf32>
    %49 = vector.extract_strided_slice %36 {offsets = [0, 224], sizes = [64, 32], strides = [1, 1]} : vector<64x384xf32> to vector<64x32xf32>
    %50 = vector.shape_cast %46 : vector<64x32xf32> to vector<1x64x32xf32>
    %51 = vector.shape_cast %47 : vector<64x32xf32> to vector<1x64x32xf32>
    %52 = vector.shape_cast %48 : vector<64x32xf32> to vector<1x64x32xf32>
    %53 = vector.shape_cast %49 : vector<64x32xf32> to vector<1x64x32xf32>
    %54 = tpu.concatenate %50, %51, %52, %53 in 0 : vector<1x64x32xf32>, vector<1x64x32xf32>, vector<1x64x32xf32>, vector<1x64x32xf32> -> vector<4x64x32xf32>
    %55 = vector.extract_strided_slice %36 {offsets = [0, 256], sizes = [64, 32], strides = [1, 1]} : vector<64x384xf32> to vector<64x32xf32>
    %56 = vector.extract_strided_slice %36 {offsets = [0, 288], sizes = [64, 32], strides = [1, 1]} : vector<64x384xf32> to vector<64x32xf32>
    %57 = vector.extract_strided_slice %36 {offsets = [0, 320], sizes = [64, 32], strides = [1, 1]} : vector<64x384xf32> to vector<64x32xf32>
    %58 = vector.extract_strided_slice %36 {offsets = [0, 352], sizes = [64, 32], strides = [1, 1]} : vector<64x384xf32> to vector<64x32xf32>
    %59 = vector.shape_cast %55 : vector<64x32xf32> to vector<1x64x32xf32>
    %60 = vector.shape_cast %56 : vector<64x32xf32> to vector<1x64x32xf32>
    %61 = vector.shape_cast %57 : vector<64x32xf32> to vector<1x64x32xf32>
    %62 = vector.shape_cast %58 : vector<64x32xf32> to vector<1x64x32xf32>
    %63 = tpu.concatenate %59, %60, %61, %62 in 0 : vector<1x64x32xf32>, vector<1x64x32xf32>, vector<1x64x32xf32>, vector<1x64x32xf32> -> vector<4x64x32xf32>
    "tpu.trace_start"() <{level = 10 : i32, message = "hqd,hkd->hqk"}> : () -> ()
    %cst_15 = arith.constant dense<0.000000e+00> : vector<4x64x64xf32>
    %64 = tpu.matmul %45, %54, %cst_15 {dimension_numbers = #tpu.dot_dimension_numbers<[2], [2], [1], [1], [0, 0, 0, 1, 1, 1], [0], [0]>} : vector<4x64x32xf32>, vector<4x64x32xf32>, vector<4x64x64xf32> -> vector<4x64x64xf32>
    "tpu.trace_stop"() : () -> ()
    %cst_16 = arith.constant 0.176776692 : f32
    %65 = vector.broadcast %cst_16 : f32 to vector<4x64x64xf32>
    %66 = arith.mulf %64, %65 : vector<4x64x64xf32>
    %cst_17 = arith.constant dense<0xFF800000> : vector<4x64xf32>
    %67 = vector.multi_reduction <maximumf>, %66, %cst_17 [2] : vector<4x64x64xf32> to vector<4x64xf32>
    %68 = vector.shape_cast %67 : vector<4x64xf32> to vector<4x64x1xf32>
    %69 = vector.broadcast %68 : vector<4x64x1xf32> to vector<4x64x64xf32>
    %70 = arith.subf %66, %69 : vector<4x64x64xf32>
    %71 = math.exp %70 : vector<4x64x64xf32>
    %cst_18 = arith.constant dense<0.000000e+00> : vector<4x64xf32>
    %72 = vector.multi_reduction <add>, %71, %cst_18 [2] : vector<4x64x64xf32> to vector<4x64xf32>
    %73 = vector.shape_cast %72 : vector<4x64xf32> to vector<4x64x1xf32>
    %74 = tpu.reciprocal %73 {approx = true} : vector<4x64x1xf32> -> vector<4x64x1xf32>
    %75 = vector.broadcast %74 : vector<4x64x1xf32> to vector<4x64x64xf32>
    %76 = arith.mulf %71, %75 : vector<4x64x64xf32>
    "tpu.trace_start"() <{level = 10 : i32, message = "hqk,hkd->hqd"}> : () -> ()
    %cst_19 = arith.constant dense<0.000000e+00> : vector<4x64x32xf32>
    %77 = tpu.matmul %76, %63, %cst_19 {dimension_numbers = #tpu.dot_dimension_numbers<[2], [1], [1], [2], [0, 0, 0, 1, 1, 2], [0], [0]>} : vector<4x64x64xf32>, vector<4x64x32xf32>, vector<4x64x32xf32> -> vector<4x64x32xf32>
    "tpu.trace_stop"() : () -> ()
    %78 = vector.extract_strided_slice %77 {offsets = [0, 0, 0], sizes = [1, 64, 32], strides = [1, 1, 1]} : vector<4x64x32xf32> to vector<1x64x32xf32>
    %79 = vector.shape_cast %78 : vector<1x64x32xf32> to vector<64x32xf32>
    %80 = vector.extract_strided_slice %77 {offsets = [1, 0, 0], sizes = [1, 64, 32], strides = [1, 1, 1]} : vector<4x64x32xf32> to vector<1x64x32xf32>
    %81 = vector.shape_cast %80 : vector<1x64x32xf32> to vector<64x32xf32>
    %82 = vector.extract_strided_slice %77 {offsets = [2, 0, 0], sizes = [1, 64, 32], strides = [1, 1, 1]} : vector<4x64x32xf32> to vector<1x64x32xf32>
    %83 = vector.shape_cast %82 : vector<1x64x32xf32> to vector<64x32xf32>
    %84 = vector.extract_strided_slice %77 {offsets = [3, 0, 0], sizes = [1, 64, 32], strides = [1, 1, 1]} : vector<4x64x32xf32> to vector<1x64x32xf32>
    %85 = vector.shape_cast %84 : vector<1x64x32xf32> to vector<64x32xf32>
    %86 = tpu.concatenate %79, %81, %83, %85 in 1 : vector<64x32xf32>, vector<64x32xf32>, vector<64x32xf32>, vector<64x32xf32> -> vector<64x128xf32>
    %c0_20 = arith.constant 0 : index
    %c0_21 = arith.constant 0 : index
    %87 = vector.load %arg6[%c0_20, %c0_21] : memref<128x128xf32, #tpu.memory_space<vmem>>, vector<128x128xf32>
    %cst_22 = arith.constant dense<0.000000e+00> : vector<64x128xf32>
    %88 = tpu.matmul %86, %87, %cst_22 {dimension_numbers = #tpu.dot_dimension_numbers<[1], [0], [0], [1], [0, 0, 1, 1], [], []>} : vector<64x128xf32>, vector<128x128xf32>, vector<64x128xf32> -> vector<64x128xf32>
    %c0_23 = arith.constant 0 : index
    %c0_24 = arith.constant 0 : index
    %89 = vector.load %arg7[%c0_23, %c0_24] : memref<1x128xf32, #tpu.memory_space<vmem>>, vector<1x128xf32>
    %90 = vector.broadcast %89 : vector<1x128xf32> to vector<64x128xf32>
    %91 = arith.addf %88, %90 : vector<64x128xf32>
    %92 = arith.addf %1, %91 : vector<64x128xf32>
    %c0_25 = arith.constant 0 : index
    %c0_26 = arith.constant 0 : index
    %c0_27 = arith.constant 0 : index
    %93 = vector.load %arg8[%c0_25, %c0_26, %c0_27] : memref<1x64x128xf32, #tpu.memory_space<vmem>>, vector<1x64x128xf32>
    %94 = vector.shape_cast %93 : vector<1x64x128xf32> to vector<64x128xf32>
    %95 = vector.shape_cast %92 : vector<64x128xf32> to vector<1x64x128xf32>
    tpu.vector_store %arg8[%c0_25, %c0_26, %c0_27], %95 {strides = array<i32>} : memref<1x64x128xf32, #tpu.memory_space<vmem>>, vector<1x64x128xf32>,
    return
  }
  func.func @transform_0(%arg0: i32) -> (i32, i32, i32) {
    %c0_i32 = arith.constant 0 : i32
    %c0_i32_0 = arith.constant 0 : i32
    %c0_i32_1 = arith.constant 0 : i32
    return %arg0, %c0_i32, %c0_i32_0 : i32, i32, i32
  }
  func.func @transform_1(%arg0: i32) -> (i32, i32) {
    %c0_i32 = arith.constant 0 : i32
    %c0_i32_0 = arith.constant 0 : i32
    %c0_i32_1 = arith.constant 0 : i32
    return %c0_i32, %c0_i32_0 : i32, i32
  }
  func.func @transform_2(%arg0: i32) -> (i32, i32) {
    %c0_i32 = arith.constant 0 : i32
    %c0_i32_0 = arith.constant 0 : i32
    %c0_i32_1 = arith.constant 0 : i32
    return %c0_i32, %c0_i32_0 : i32, i32
  }
  func.func @transform_3(%arg0: i32) -> (i32, i32) {
    %c0_i32 = arith.constant 0 : i32
    %c0_i32_0 = arith.constant 0 : i32
    %c0_i32_1 = arith.constant 0 : i32
    return %c0_i32, %c0_i32_0 : i32, i32
  }
  func.func @transform_4(%arg0: i32) -> (i32, i32) {
    %c0_i32 = arith.constant 0 : i32
    %c0_i32_0 = arith.constant 0 : i32
    %c0_i32_1 = arith.constant 0 : i32
    return %c0_i32, %c0_i32_0 : i32, i32
  }
  func.func @transform_5(%arg0: i32) -> (i32, i32) {
    %c0_i32 = arith.constant 0 : i32
    %c0_i32_0 = arith.constant 0 : i32
    %c0_i32_1 = arith.constant 0 : i32
    return %c0_i32, %c0_i32_0 : i32, i32
  }
  func.func @transform_6(%arg0: i32) -> (i32, i32) {
    %c0_i32 = arith.constant 0 : i32
    %c0_i32_0 = arith.constant 0 : i32
    %c0_i32_1 = arith.constant 0 : i32
    return %c0_i32, %c0_i32_0 : i32, i32
  }
  func.func @transform_7(%arg0: i32) -> (i32, i32, i32) {
    %c0_i32 = arith.constant 0 : i32
    %c0_i32_0 = arith.constant 0 : i32
    %c0_i32_1 = arith.constant 0 : i32
    return %arg0, %c0_i32, %c0_i32_0 : i32, i32, i32
  }
}

module attributes {stable_mosaic.version = 11 : i64} {
  func.func @residual_block_kernel(%arg0: i32, %arg1: memref<1x64x128xf32, #tpu.memory_space<vmem>>, %arg2: memref<1x1x32xf32, #tpu.memory_space<vmem>>, %arg3: memref<1152x128xf32, #tpu.memory_space<vmem>>, %arg4: memref<1x128xf32, #tpu.memory_space<vmem>>, %arg5: memref<1x128xf32, #tpu.memory_space<vmem>>, %arg6: memref<1x128xf32, #tpu.memory_space<vmem>>, %arg7: memref<32x128xf32, #tpu.memory_space<vmem>>, %arg8: memref<1x128xf32, #tpu.memory_space<vmem>>, %arg9: memref<1152x128xf32, #tpu.memory_space<vmem>>, %arg10: memref<1x128xf32, #tpu.memory_space<vmem>>, %arg11: memref<1x128xf32, #tpu.memory_space<vmem>>, %arg12: memref<1x128xf32, #tpu.memory_space<vmem>>, %arg13: memref<128x128xf32, #tpu.memory_space<vmem>>, %arg14: memref<1x64x128xf32, #tpu.memory_space<vmem>>, %arg15: memref<10x10x128xf32, #tpu.memory_space<vmem>>) attributes {dimension_semantics = [#tpu.dimension_semantics<parallel>], iteration_bounds = array<i64: 2>, scalar_prefetch = 0 : i64, scratch_operands = 1 : i64, tpu.core_type = #tpu.core_type<tc>, window_params = [{transform_indices = @transform_0, window_bounds = array<i64: 1, 64, 128>}, {transform_indices = @transform_1, window_bounds = array<i64: 1, 1, 32>}, {pipeline_mode = #tpu.pipeline_mode<synchronous>, transform_indices = @transform_2, window_bounds = array<i64: 1152, 128>}, {pipeline_mode = #tpu.pipeline_mode<synchronous>, transform_indices = @transform_3, window_bounds = array<i64: 1, 128>}, {pipeline_mode = #tpu.pipeline_mode<synchronous>, transform_indices = @transform_4, window_bounds = array<i64: 1, 128>}, {pipeline_mode = #tpu.pipeline_mode<synchronous>, transform_indices = @transform_5, window_bounds = array<i64: 1, 128>}, {pipeline_mode = #tpu.pipeline_mode<synchronous>, transform_indices = @transform_6, window_bounds = array<i64: 32, 128>}, {pipeline_mode = #tpu.pipeline_mode<synchronous>, transform_indices = @transform_7, window_bounds = array<i64: 1, 128>}, {pipeline_mode = #tpu.pipeline_mode<synchronous>, transform_indices = @transform_8, window_bounds = array<i64: 1152, 128>}, {pipeline_mode = #tpu.pipeline_mode<synchronous>, transform_indices = @transform_9, window_bounds = array<i64: 1, 128>}, {pipeline_mode = #tpu.pipeline_mode<synchronous>, transform_indices = @transform_10, window_bounds = array<i64: 1, 128>}, {pipeline_mode = #tpu.pipeline_mode<synchronous>, transform_indices = @transform_11, window_bounds = array<i64: 1, 128>}, {pipeline_mode = #tpu.pipeline_mode<synchronous>, transform_indices = @transform_12, window_bounds = array<i64: 128, 128>}, {transform_indices = @transform_13, window_bounds = array<i64: 1, 64, 128>}]} {
    %c0 = arith.constant 0 : index
    %c0_0 = arith.constant 0 : index
    %c0_1 = arith.constant 0 : index
    %0 = vector.load %arg1[%c0, %c0_0, %c0_1] : memref<1x64x128xf32, #tpu.memory_space<vmem>>, vector<1x64x128xf32>
    %1 = vector.shape_cast %0 : vector<1x64x128xf32> to vector<64x128xf32>
    %c0_2 = arith.constant 0 : index
    %c0_3 = arith.constant 0 : index
    %2 = vector.load %arg13[%c0_2, %c0_3] : memref<128x128xf32, #tpu.memory_space<vmem>>, vector<128x128xf32>
    %cst = arith.constant 0.000000e+00 : f32
    %3 = vector.broadcast %cst : f32 to vector<10x10x128xf32>
    %c0_4 = arith.constant 0 : index
    %c0_5 = arith.constant 0 : index
    %c0_6 = arith.constant 0 : index
    %4 = vector.load %arg15[%c0_4, %c0_5, %c0_6] : memref<10x10x128xf32, #tpu.memory_space<vmem>>, vector<10x10x128xf32>
    tpu.vector_store %arg15[%c0_4, %c0_5, %c0_6], %3 {strides = array<i32>} : memref<10x10x128xf32, #tpu.memory_space<vmem>>, vector<10x10x128xf32>,
    %5 = vector.shape_cast %1 : vector<64x128xf32> to vector<8x8x128xf32>
    %c1 = arith.constant 1 : index
    %c1_7 = arith.constant 1 : index
    %c0_8 = arith.constant 0 : index
    %6 = vector.load %arg15[%c1, %c1_7, %c0_8] : memref<10x10x128xf32, #tpu.memory_space<vmem>>, vector<8x8x128xf32>
    tpu.vector_store %arg15[%c1, %c1_7, %c0_8], %5 {strides = array<i32>} : memref<10x10x128xf32, #tpu.memory_space<vmem>>, vector<8x8x128xf32>,
    %c0_9 = arith.constant 0 : index
    %c0_10 = arith.constant 0 : index
    %c0_11 = arith.constant 0 : index
    %7 = vector.load %arg15[%c0_9, %c0_10, %c0_11] : memref<10x10x128xf32, #tpu.memory_space<vmem>>, vector<8x8x128xf32>
    %8 = vector.shape_cast %7 : vector<8x8x128xf32> to vector<64x128xf32>
    %c0_12 = arith.constant 0 : index
    %c1_13 = arith.constant 1 : index
    %c0_14 = arith.constant 0 : index
    %9 = vector.load %arg15[%c0_12, %c1_13, %c0_14] : memref<10x10x128xf32, #tpu.memory_space<vmem>>, vector<8x8x128xf32>
    %10 = vector.shape_cast %9 : vector<8x8x128xf32> to vector<64x128xf32>
    %c0_15 = arith.constant 0 : index
    %c2 = arith.constant 2 : index
    %c0_16 = arith.constant 0 : index
    %11 = vector.load %arg15[%c0_15, %c2, %c0_16] : memref<10x10x128xf32, #tpu.memory_space<vmem>>, vector<8x8x128xf32>
    %12 = vector.shape_cast %11 : vector<8x8x128xf32> to vector<64x128xf32>
    %c1_17 = arith.constant 1 : index
    %c0_18 = arith.constant 0 : index
    %c0_19 = arith.constant 0 : index
    %13 = vector.load %arg15[%c1_17, %c0_18, %c0_19] : memref<10x10x128xf32, #tpu.memory_space<vmem>>, vector<8x8x128xf32>
    %14 = vector.shape_cast %13 : vector<8x8x128xf32> to vector<64x128xf32>
    %c1_20 = arith.constant 1 : index
    %c1_21 = arith.constant 1 : index
    %c0_22 = arith.constant 0 : index
    %15 = vector.load %arg15[%c1_20, %c1_21, %c0_22] : memref<10x10x128xf32, #tpu.memory_space<vmem>>, vector<8x8x128xf32>
    %16 = vector.shape_cast %15 : vector<8x8x128xf32> to vector<64x128xf32>
    %c1_23 = arith.constant 1 : index
    %c2_24 = arith.constant 2 : index
    %c0_25 = arith.constant 0 : index
    %17 = vector.load %arg15[%c1_23, %c2_24, %c0_25] : memref<10x10x128xf32, #tpu.memory_space<vmem>>, vector<8x8x128xf32>
    %18 = vector.shape_cast %17 : vector<8x8x128xf32> to vector<64x128xf32>
    %c2_26 = arith.constant 2 : index
    %c0_27 = arith.constant 0 : index
    %c0_28 = arith.constant 0 : index
    %19 = vector.load %arg15[%c2_26, %c0_27, %c0_28] : memref<10x10x128xf32, #tpu.memory_space<vmem>>, vector<8x8x128xf32>
    %20 = vector.shape_cast %19 : vector<8x8x128xf32> to vector<64x128xf32>
    %c2_29 = arith.constant 2 : index
    %c1_30 = arith.constant 1 : index
    %c0_31 = arith.constant 0 : index
    %21 = vector.load %arg15[%c2_29, %c1_30, %c0_31] : memref<10x10x128xf32, #tpu.memory_space<vmem>>, vector<8x8x128xf32>
    %22 = vector.shape_cast %21 : vector<8x8x128xf32> to vector<64x128xf32>
    %c2_32 = arith.constant 2 : index
    %c2_33 = arith.constant 2 : index
    %c0_34 = arith.constant 0 : index
    %23 = vector.load %arg15[%c2_32, %c2_33, %c0_34] : memref<10x10x128xf32, #tpu.memory_space<vmem>>, vector<8x8x128xf32>
    %24 = vector.shape_cast %23 : vector<8x8x128xf32> to vector<64x128xf32>
    %25 = tpu.concatenate %8, %10, %12, %14, %16, %18, %20, %22, %24 in 1 : vector<64x128xf32>, vector<64x128xf32>, vector<64x128xf32>, vector<64x128xf32>, vector<64x128xf32>, vector<64x128xf32>, vector<64x128xf32>, vector<64x128xf32>, vector<64x128xf32> -> vector<64x1152xf32>
    %c0_35 = arith.constant 0 : index
    %c0_36 = arith.constant 0 : index
    %26 = vector.load %arg3[%c0_35, %c0_36] : memref<1152x128xf32, #tpu.memory_space<vmem>>, vector<1152x128xf32>
    %cst_37 = arith.constant dense<0.000000e+00> : vector<64x128xf32>
    %27 = tpu.matmul %25, %26, %cst_37 {dimension_numbers = #tpu.dot_dimension_numbers<[1], [0], [0], [1], [0, 0, 1, 1], [], []>} : vector<64x1152xf32>, vector<1152x128xf32>, vector<64x128xf32> -> vector<64x128xf32>
    %c0_38 = arith.constant 0 : index
    %c0_39 = arith.constant 0 : index
    %28 = vector.load %arg4[%c0_38, %c0_39] : memref<1x128xf32, #tpu.memory_space<vmem>>, vector<1x128xf32>
    %29 = vector.broadcast %28 : vector<1x128xf32> to vector<64x128xf32>
    %30 = arith.addf %27, %29 : vector<64x128xf32>
    %cst_40 = arith.constant dense<0.000000e+00> : vector<128xf32>
    %31 = vector.multi_reduction <add>, %30, %cst_40 [0] : vector<64x128xf32> to vector<128xf32>
    %32 = vector.shape_cast %31 : vector<128xf32> to vector<1x128xf32>
    %33 = arith.mulf %30, %30 : vector<64x128xf32>
    %cst_41 = arith.constant dense<0.000000e+00> : vector<128xf32>
    %34 = vector.multi_reduction <add>, %33, %cst_41 [0] : vector<64x128xf32> to vector<128xf32>
    %35 = vector.shape_cast %34 : vector<128xf32> to vector<1x128xf32>
    %cst_42 = arith.constant dense<0.000000e+00> : vector<1x128xf32>
    %36 = tpu.matmul %32, %2, %cst_42 {dimension_numbers = #tpu.dot_dimension_numbers<[1], [0], [0], [1], [0, 0, 1, 1], [], []>} : vector<1x128xf32>, vector<128x128xf32>, vector<1x128xf32> -> vector<1x128xf32>
    %cst_43 = arith.constant 4.8828125E-4 : f32
    %37 = vector.broadcast %cst_43 : f32 to vector<1x128xf32>
    %38 = arith.mulf %36, %37 : vector<1x128xf32>
    %cst_44 = arith.constant dense<0.000000e+00> : vector<1x128xf32>
    %39 = tpu.matmul %35, %2, %cst_44 {dimension_numbers = #tpu.dot_dimension_numbers<[1], [0], [0], [1], [0, 0, 1, 1], [], []>} : vector<1x128xf32>, vector<128x128xf32>, vector<1x128xf32> -> vector<1x128xf32>
    %cst_45 = arith.constant 4.8828125E-4 : f32
    %40 = vector.broadcast %cst_45 : f32 to vector<1x128xf32>
    %41 = arith.mulf %39, %40 : vector<1x128xf32>
    %42 = arith.mulf %38, %38 : vector<1x128xf32>
    %43 = arith.subf %41, %42 : vector<1x128xf32>
    %44 = vector.broadcast %38 : vector<1x128xf32> to vector<64x128xf32>
    %45 = arith.subf %30, %44 : vector<64x128xf32>
    %cst_46 = arith.constant 9.99999974E-6 : f32
    %46 = vector.broadcast %cst_46 : f32 to vector<1x128xf32>
    %47 = arith.addf %43, %46 : vector<1x128xf32>
    %48 = math.rsqrt %47 : vector<1x128xf32>
    %49 = vector.broadcast %48 : vector<1x128xf32> to vector<64x128xf32>
    %50 = arith.mulf %45, %49 : vector<64x128xf32>
    %c0_47 = arith.constant 0 : index
    %c0_48 = arith.constant 0 : index
    %51 = vector.load %arg5[%c0_47, %c0_48] : memref<1x128xf32, #tpu.memory_space<vmem>>, vector<1x128xf32>
    %52 = vector.broadcast %51 : vector<1x128xf32> to vector<64x128xf32>
    %53 = arith.mulf %50, %52 : vector<64x128xf32>
    %c0_49 = arith.constant 0 : index
    %c0_50 = arith.constant 0 : index
    %54 = vector.load %arg6[%c0_49, %c0_50] : memref<1x128xf32, #tpu.memory_space<vmem>>, vector<1x128xf32>
    %55 = vector.broadcast %54 : vector<1x128xf32> to vector<64x128xf32>
    %56 = arith.addf %53, %55 : vector<64x128xf32>
    %57 = arith.negf %56 : vector<64x128xf32>
    %58 = math.exp %57 : vector<64x128xf32>
    %cst_51 = arith.constant 1.000000e+00 : f32
    %59 = vector.broadcast %cst_51 : f32 to vector<64x128xf32>
    %60 = arith.addf %59, %58 : vector<64x128xf32>
    %61 = arith.divf %59, %60 : vector<64x128xf32>
    %62 = arith.mulf %56, %61 : vector<64x128xf32>
    %c0_52 = arith.constant 0 : index
    %c0_53 = arith.constant 0 : index
    %c0_54 = arith.constant 0 : index
    %63 = vector.load %arg2[%c0_52, %c0_53, %c0_54] : memref<1x1x32xf32, #tpu.memory_space<vmem>>, vector<1x1x32xf32>
    %64 = vector.shape_cast %63 : vector<1x1x32xf32> to vector<1x32xf32>
    %65 = arith.negf %64 : vector<1x32xf32>
    %66 = math.exp %65 : vector<1x32xf32>
    %cst_55 = arith.constant 1.000000e+00 : f32
    %67 = vector.broadcast %cst_55 : f32 to vector<1x32xf32>
    %68 = arith.addf %67, %66 : vector<1x32xf32>
    %69 = arith.divf %67, %68 : vector<1x32xf32>
    %70 = arith.mulf %64, %69 : vector<1x32xf32>
    %c0_56 = arith.constant 0 : index
    %c0_57 = arith.constant 0 : index
    %71 = vector.load %arg7[%c0_56, %c0_57] : memref<32x128xf32, #tpu.memory_space<vmem>>, vector<32x128xf32>
    %cst_58 = arith.constant dense<0.000000e+00> : vector<1x128xf32>
    %72 = tpu.matmul %70, %71, %cst_58 {dimension_numbers = #tpu.dot_dimension_numbers<[1], [0], [0], [1], [0, 0, 1, 1], [], []>} : vector<1x32xf32>, vector<32x128xf32>, vector<1x128xf32> -> vector<1x128xf32>
    %c0_59 = arith.constant 0 : index
    %c0_60 = arith.constant 0 : index
    %73 = vector.load %arg8[%c0_59, %c0_60] : memref<1x128xf32, #tpu.memory_space<vmem>>, vector<1x128xf32>
    %74 = arith.addf %72, %73 : vector<1x128xf32>
    %75 = vector.broadcast %74 : vector<1x128xf32> to vector<64x128xf32>
    %76 = arith.addf %62, %75 : vector<64x128xf32>
    %77 = vector.shape_cast %76 : vector<64x128xf32> to vector<8x8x128xf32>
    %c1_61 = arith.constant 1 : index
    %c1_62 = arith.constant 1 : index
    %c0_63 = arith.constant 0 : index
    %78 = vector.load %arg15[%c1_61, %c1_62, %c0_63] : memref<10x10x128xf32, #tpu.memory_space<vmem>>, vector<8x8x128xf32>
    tpu.vector_store %arg15[%c1_61, %c1_62, %c0_63], %77 {strides = array<i32>} : memref<10x10x128xf32, #tpu.memory_space<vmem>>, vector<8x8x128xf32>,
    %c0_64 = arith.constant 0 : index
    %c0_65 = arith.constant 0 : index
    %c0_66 = arith.constant 0 : index
    %79 = vector.load %arg15[%c0_64, %c0_65, %c0_66] : memref<10x10x128xf32, #tpu.memory_space<vmem>>, vector<8x8x128xf32>
    %80 = vector.shape_cast %79 : vector<8x8x128xf32> to vector<64x128xf32>
    %c0_67 = arith.constant 0 : index
    %c1_68 = arith.constant 1 : index
    %c0_69 = arith.constant 0 : index
    %81 = vector.load %arg15[%c0_67, %c1_68, %c0_69] : memref<10x10x128xf32, #tpu.memory_space<vmem>>, vector<8x8x128xf32>
    %82 = vector.shape_cast %81 : vector<8x8x128xf32> to vector<64x128xf32>
    %c0_70 = arith.constant 0 : index
    %c2_71 = arith.constant 2 : index
    %c0_72 = arith.constant 0 : index
    %83 = vector.load %arg15[%c0_70, %c2_71, %c0_72] : memref<10x10x128xf32, #tpu.memory_space<vmem>>, vector<8x8x128xf32>
    %84 = vector.shape_cast %83 : vector<8x8x128xf32> to vector<64x128xf32>
    %c1_73 = arith.constant 1 : index
    %c0_74 = arith.constant 0 : index
    %c0_75 = arith.constant 0 : index
    %85 = vector.load %arg15[%c1_73, %c0_74, %c0_75] : memref<10x10x128xf32, #tpu.memory_space<vmem>>, vector<8x8x128xf32>
    %86 = vector.shape_cast %85 : vector<8x8x128xf32> to vector<64x128xf32>
    %c1_76 = arith.constant 1 : index
    %c1_77 = arith.constant 1 : index
    %c0_78 = arith.constant 0 : index
    %87 = vector.load %arg15[%c1_76, %c1_77, %c0_78] : memref<10x10x128xf32, #tpu.memory_space<vmem>>, vector<8x8x128xf32>
    %88 = vector.shape_cast %87 : vector<8x8x128xf32> to vector<64x128xf32>
    %c1_79 = arith.constant 1 : index
    %c2_80 = arith.constant 2 : index
    %c0_81 = arith.constant 0 : index
    %89 = vector.load %arg15[%c1_79, %c2_80, %c0_81] : memref<10x10x128xf32, #tpu.memory_space<vmem>>, vector<8x8x128xf32>
    %90 = vector.shape_cast %89 : vector<8x8x128xf32> to vector<64x128xf32>
    %c2_82 = arith.constant 2 : index
    %c0_83 = arith.constant 0 : index
    %c0_84 = arith.constant 0 : index
    %91 = vector.load %arg15[%c2_82, %c0_83, %c0_84] : memref<10x10x128xf32, #tpu.memory_space<vmem>>, vector<8x8x128xf32>
    %92 = vector.shape_cast %91 : vector<8x8x128xf32> to vector<64x128xf32>
    %c2_85 = arith.constant 2 : index
    %c1_86 = arith.constant 1 : index
    %c0_87 = arith.constant 0 : index
    %93 = vector.load %arg15[%c2_85, %c1_86, %c0_87] : memref<10x10x128xf32, #tpu.memory_space<vmem>>, vector<8x8x128xf32>
    %94 = vector.shape_cast %93 : vector<8x8x128xf32> to vector<64x128xf32>
    %c2_88 = arith.constant 2 : index
    %c2_89 = arith.constant 2 : index
    %c0_90 = arith.constant 0 : index
    %95 = vector.load %arg15[%c2_88, %c2_89, %c0_90] : memref<10x10x128xf32, #tpu.memory_space<vmem>>, vector<8x8x128xf32>
    %96 = vector.shape_cast %95 : vector<8x8x128xf32> to vector<64x128xf32>
    %97 = tpu.concatenate %80, %82, %84, %86, %88, %90, %92, %94, %96 in 1 : vector<64x128xf32>, vector<64x128xf32>, vector<64x128xf32>, vector<64x128xf32>, vector<64x128xf32>, vector<64x128xf32>, vector<64x128xf32>, vector<64x128xf32>, vector<64x128xf32> -> vector<64x1152xf32>
    %c0_91 = arith.constant 0 : index
    %c0_92 = arith.constant 0 : index
    %98 = vector.load %arg9[%c0_91, %c0_92] : memref<1152x128xf32, #tpu.memory_space<vmem>>, vector<1152x128xf32>
    %cst_93 = arith.constant dense<0.000000e+00> : vector<64x128xf32>
    %99 = tpu.matmul %97, %98, %cst_93 {dimension_numbers = #tpu.dot_dimension_numbers<[1], [0], [0], [1], [0, 0, 1, 1], [], []>} : vector<64x1152xf32>, vector<1152x128xf32>, vector<64x128xf32> -> vector<64x128xf32>
    %c0_94 = arith.constant 0 : index
    %c0_95 = arith.constant 0 : index
    %100 = vector.load %arg10[%c0_94, %c0_95] : memref<1x128xf32, #tpu.memory_space<vmem>>, vector<1x128xf32>
    %101 = vector.broadcast %100 : vector<1x128xf32> to vector<64x128xf32>
    %102 = arith.addf %99, %101 : vector<64x128xf32>
    %cst_96 = arith.constant dense<0.000000e+00> : vector<128xf32>
    %103 = vector.multi_reduction <add>, %102, %cst_96 [0] : vector<64x128xf32> to vector<128xf32>
    %104 = vector.shape_cast %103 : vector<128xf32> to vector<1x128xf32>
    %105 = arith.mulf %102, %102 : vector<64x128xf32>
    %cst_97 = arith.constant dense<0.000000e+00> : vector<128xf32>
    %106 = vector.multi_reduction <add>, %105, %cst_97 [0] : vector<64x128xf32> to vector<128xf32>
    %107 = vector.shape_cast %106 : vector<128xf32> to vector<1x128xf32>
    %cst_98 = arith.constant dense<0.000000e+00> : vector<1x128xf32>
    %108 = tpu.matmul %104, %2, %cst_98 {dimension_numbers = #tpu.dot_dimension_numbers<[1], [0], [0], [1], [0, 0, 1, 1], [], []>} : vector<1x128xf32>, vector<128x128xf32>, vector<1x128xf32> -> vector<1x128xf32>
    %cst_99 = arith.constant 4.8828125E-4 : f32
    %109 = vector.broadcast %cst_99 : f32 to vector<1x128xf32>
    %110 = arith.mulf %108, %109 : vector<1x128xf32>
    %cst_100 = arith.constant dense<0.000000e+00> : vector<1x128xf32>
    %111 = tpu.matmul %107, %2, %cst_100 {dimension_numbers = #tpu.dot_dimension_numbers<[1], [0], [0], [1], [0, 0, 1, 1], [], []>} : vector<1x128xf32>, vector<128x128xf32>, vector<1x128xf32> -> vector<1x128xf32>
    %cst_101 = arith.constant 4.8828125E-4 : f32
    %112 = vector.broadcast %cst_101 : f32 to vector<1x128xf32>
    %113 = arith.mulf %111, %112 : vector<1x128xf32>
    %114 = arith.mulf %110, %110 : vector<1x128xf32>
    %115 = arith.subf %113, %114 : vector<1x128xf32>
    %116 = vector.broadcast %110 : vector<1x128xf32> to vector<64x128xf32>
    %117 = arith.subf %102, %116 : vector<64x128xf32>
    %cst_102 = arith.constant 9.99999974E-6 : f32
    %118 = vector.broadcast %cst_102 : f32 to vector<1x128xf32>
    %119 = arith.addf %115, %118 : vector<1x128xf32>
    %120 = math.rsqrt %119 : vector<1x128xf32>
    %121 = vector.broadcast %120 : vector<1x128xf32> to vector<64x128xf32>
    %122 = arith.mulf %117, %121 : vector<64x128xf32>
    %c0_103 = arith.constant 0 : index
    %c0_104 = arith.constant 0 : index
    %123 = vector.load %arg11[%c0_103, %c0_104] : memref<1x128xf32, #tpu.memory_space<vmem>>, vector<1x128xf32>
    %124 = vector.broadcast %123 : vector<1x128xf32> to vector<64x128xf32>
    %125 = arith.mulf %122, %124 : vector<64x128xf32>
    %c0_105 = arith.constant 0 : index
    %c0_106 = arith.constant 0 : index
    %126 = vector.load %arg12[%c0_105, %c0_106] : memref<1x128xf32, #tpu.memory_space<vmem>>, vector<1x128xf32>
    %127 = vector.broadcast %126 : vector<1x128xf32> to vector<64x128xf32>
    %128 = arith.addf %125, %127 : vector<64x128xf32>
    %129 = arith.negf %128 : vector<64x128xf32>
    %130 = math.exp %129 : vector<64x128xf32>
    %cst_107 = arith.constant 1.000000e+00 : f32
    %131 = vector.broadcast %cst_107 : f32 to vector<64x128xf32>
    %132 = arith.addf %131, %130 : vector<64x128xf32>
    %133 = arith.divf %131, %132 : vector<64x128xf32>
    %134 = arith.mulf %128, %133 : vector<64x128xf32>
    %135 = arith.addf %1, %134 : vector<64x128xf32>
    %c0_108 = arith.constant 0 : index
    %c0_109 = arith.constant 0 : index
    %c0_110 = arith.constant 0 : index
    %136 = vector.load %arg14[%c0_108, %c0_109, %c0_110] : memref<1x64x128xf32, #tpu.memory_space<vmem>>, vector<1x64x128xf32>
    %137 = vector.shape_cast %136 : vector<1x64x128xf32> to vector<64x128xf32>
    %138 = vector.shape_cast %135 : vector<64x128xf32> to vector<1x64x128xf32>
    tpu.vector_store %arg14[%c0_108, %c0_109, %c0_110], %138 {strides = array<i32>} : memref<1x64x128xf32, #tpu.memory_space<vmem>>, vector<1x64x128xf32>,
    return
  }
  func.func @transform_0(%arg0: i32) -> (i32, i32, i32) {
    %c0_i32 = arith.constant 0 : i32
    %c0_i32_0 = arith.constant 0 : i32
    %c0_i32_1 = arith.constant 0 : i32
    return %arg0, %c0_i32, %c0_i32_0 : i32, i32, i32
  }
  func.func @transform_1(%arg0: i32) -> (i32, i32, i32) {
    %c0_i32 = arith.constant 0 : i32
    %c0_i32_0 = arith.constant 0 : i32
    %c0_i32_1 = arith.constant 0 : i32
    return %arg0, %c0_i32, %c0_i32_0 : i32, i32, i32
  }
  func.func @transform_2(%arg0: i32) -> (i32, i32) {
    %c0_i32 = arith.constant 0 : i32
    %c0_i32_0 = arith.constant 0 : i32
    %c0_i32_1 = arith.constant 0 : i32
    return %c0_i32, %c0_i32_0 : i32, i32
  }
  func.func @transform_3(%arg0: i32) -> (i32, i32) {
    %c0_i32 = arith.constant 0 : i32
    %c0_i32_0 = arith.constant 0 : i32
    %c0_i32_1 = arith.constant 0 : i32
    return %c0_i32, %c0_i32_0 : i32, i32
  }
  func.func @transform_4(%arg0: i32) -> (i32, i32) {
    %c0_i32 = arith.constant 0 : i32
    %c0_i32_0 = arith.constant 0 : i32
    %c0_i32_1 = arith.constant 0 : i32
    return %c0_i32, %c0_i32_0 : i32, i32
  }
  func.func @transform_5(%arg0: i32) -> (i32, i32) {
    %c0_i32 = arith.constant 0 : i32
    %c0_i32_0 = arith.constant 0 : i32
    %c0_i32_1 = arith.constant 0 : i32
    return %c0_i32, %c0_i32_0 : i32, i32
  }
  func.func @transform_6(%arg0: i32) -> (i32, i32) {
    %c0_i32 = arith.constant 0 : i32
    %c0_i32_0 = arith.constant 0 : i32
    %c0_i32_1 = arith.constant 0 : i32
    return %c0_i32, %c0_i32_0 : i32, i32
  }
  func.func @transform_7(%arg0: i32) -> (i32, i32) {
    %c0_i32 = arith.constant 0 : i32
    %c0_i32_0 = arith.constant 0 : i32
    %c0_i32_1 = arith.constant 0 : i32
    return %c0_i32, %c0_i32_0 : i32, i32
  }
  func.func @transform_8(%arg0: i32) -> (i32, i32) {
    %c0_i32 = arith.constant 0 : i32
    %c0_i32_0 = arith.constant 0 : i32
    %c0_i32_1 = arith.constant 0 : i32
    return %c0_i32, %c0_i32_0 : i32, i32
  }
  func.func @transform_9(%arg0: i32) -> (i32, i32) {
    %c0_i32 = arith.constant 0 : i32
    %c0_i32_0 = arith.constant 0 : i32
    %c0_i32_1 = arith.constant 0 : i32
    return %c0_i32, %c0_i32_0 : i32, i32
  }
  func.func @transform_10(%arg0: i32) -> (i32, i32) {
    %c0_i32 = arith.constant 0 : i32
    %c0_i32_0 = arith.constant 0 : i32
    %c0_i32_1 = arith.constant 0 : i32
    return %c0_i32, %c0_i32_0 : i32, i32
  }
  func.func @transform_11(%arg0: i32) -> (i32, i32) {
    %c0_i32 = arith.constant 0 : i32
    %c0_i32_0 = arith.constant 0 : i32
    %c0_i32_1 = arith.constant 0 : i32
    return %c0_i32, %c0_i32_0 : i32, i32
  }
  func.func @transform_12(%arg0: i32) -> (i32, i32) {
    %c0_i32 = arith.constant 0 : i32
    %c0_i32_0 = arith.constant 0 : i32
    %c0_i32_1 = arith.constant 0 : i32
    return %c0_i32, %c0_i32_0 : i32, i32
  }
  func.func @transform_13(%arg0: i32) -> (i32, i32, i32) {
    %c0_i32 = arith.constant 0 : i32
    %c0_i32_0 = arith.constant 0 : i32
    %c0_i32_1 = arith.constant 0 : i32
    return %arg0, %c0_i32, %c0_i32_0 : i32, i32, i32
  }
}

</mosaic_0001>

<llo_original>
// kernel: midblock_forward.4
$region0: #{midblock_forward.4}
  #allocation0 [shape = 'u32[]', space=smem, size = 0x4, offset = 0x4, fixed_abs, tag = 'smem constant byte address 0x4 - core index']
  #allocation1 [shape = 'u32[144,128]{1,0:T(1,128)}', space=vmem, size = 0x12000, scoped, tag = 'internal scratch']
  %s0 = inlined_call_operand.vmem [shape: f32[2,64,128], index: 0, kind: input, shape index: {}]
  %s1 = inlined_call_operand.hbm [shape: f32[1,128], index: 1, kind: input, shape index: {}]
  %s2 = inlined_call_operand.hbm [shape: f32[1,128], index: 2, kind: input, shape index: {}]
  %s3 = inlined_call_operand.vmem [shape: f32[128,384], index: 3, kind: input, shape index: {}]
  %s4 = inlined_call_operand.vmem [shape: f32[1,384], index: 4, kind: input, shape index: {}]
  %s5 = inlined_call_operand.vmem [shape: f32[128,128], index: 5, kind: input, shape index: {}]
  %s6 = inlined_call_operand.hbm [shape: f32[1,128], index: 6, kind: input, shape index: {}]
  %s7 = inlined_call_operand.vmem [shape: f32[2,64,128], index: 7, kind: output, shape index: {}]
  %s8 = sld [smem:[#allocation0]]
  $region73: #{midblock_forward.4} parent=0
    _
  %s10 = ssub.s32 1, %s8
  %s11 = scalar_select 0, %s10, %s8
  $region1: #{midblock_forward.4} parent=0
    #allocation2 [shape = 'u8[512]{0}', space=vmem, size = 0x400, scoped, tag = 'input window, operand 1, single buffered']
    #allocation3 [shape = 's32[2]{0}', space=sflag, size = 0x8, scoped, tag = 'scoped memory for midblock_forward.4']
    #allocation4 [shape = 'u8[512]{0}', space=vmem, size = 0x400, scoped, tag = 'input window, operand 2, single buffered']
    #allocation5 [shape = 's32[1]{0}', space=sflag, size = 0x4, scoped, tag = 'scoped memory for midblock_forward.4']
    #allocation6 [shape = 'u8[512]{0}', space=vmem, size = 0x400, scoped, tag = 'input window, operand 6, single buffered']
    %12 = vsyncpa [#allocation3], 0
    %13 = vsyncpa [#allocation5], 0
    loop: start=0, step=1, limit=4
    $region2: #{midblock_forward.4} parent=1 // loop_pre_header
      _
    $region3: #{midblock_forward.4} parent=1 // loop_header
      %s15 = sphi 0, %s19
      %p16 = scmp.ge.s32.totalorder %s15, 4
      %s25 = sphi 0, %s27
      %s28 = sphi 0, %s25
      %s29 = sphi 0, %s28
      %s45 = sphi 0, %s29
      %s49 = sphi 0, %s49
      %s51 = sphi 0, %s49
      %s52 = sphi 0, %s51
      %s66 = sphi 0, %s52
      %s70 = sphi 0, %s70
      %s72 = sphi 0, %s70
      %s73 = sphi 0, %s72
      %s87 = sphi 0, %s73
      %s91 = sphi 0, %s91
      %s93 = sphi 0, %s91
      %s94 = sphi 0, %s93
      %s108 = sphi 0, %s94
      %s112 = sphi 0, %s112
      %s114 = sphi 0, %s112
      %s115 = sphi 0, %s114
      %s129 = sphi 0, %s115
      %s133 = sphi 0, %s133
      %s135 = sphi 0, %s133
      %s136 = sphi 0, %s135
      %s150 = sphi 0, %s136
      %s154 = sphi 0, %s154
      %s156 = sphi 0, %s154
      %s157 = sphi 0, %s156
      %s171 = sphi 0, %s157
      %s177 = sphi 0, %s179
      %s180 = sphi 0, %s177
      %s181 = sphi 0, %s180
      %s197 = sphi 0, %s181
    $region4: #{midblock_forward.4} parent=1 // loop_header_branch
      %18 = sbr.rel (%p16) target = $region8
    $region5: #{midblock_forward.4} parent=1 // loop_body
      %s20 = ssub.s32 %s15, 1
      %s21 = ssub.s32 %s15, 2
      %s22 = sadd.s32 %s15, 1
      %s23 = ssub.s32 %s15, %s22
      %p24 = scmp.eq.s32.totalorder %s23, 0
      %s26 = sadd.s32 %s25, 1
      %s27 = scalar_select %p24, %s25, %s26
      %p30 = pneg %p24
      %p31 = scmp.eq.s32.totalorder %s15, 1
      %p32 = por %p30, %p31
      %p33 = scmp.ne.s32.totalorder %s25, %s28
      %p34 = scmp.eq.s32.totalorder %s15, 0
      %p35 = por %p33, %p34
      %p36 = scmp.ne.s32.totalorder %s25, %s28
      %p37 = scmp.eq.s32.totalorder %s20, 1
      %p38 = por %p36, %p37
      %p39 = scmp.ne.s32.totalorder %s28, %s29
      %p40 = scmp.eq.s32.totalorder %s20, 0
      %p41 = por %p39, %p40
      %p42 = scmp.ne.s32.totalorder %s28, %s29
      %p43 = scmp.eq.s32.totalorder %s21, 1
      %p44 = por %p42, %p43
      %p46 = scmp.ne.s32.totalorder %s29, %s45
      %p47 = scmp.eq.s32.totalorder %s21, 0
      %p48 = por %p46, %p47
      %s50 = sadd.s32 %s49, 1
      %p53 = scmp.eq.s32.totalorder %s15, 1
      %p54 = scmp.ne.s32.totalorder %s49, %s51
      %p55 = scmp.eq.s32.totalorder %s15, 0
      %p56 = por %p54, %p55
      %p57 = scmp.ne.s32.totalorder %s49, %s51
      %p58 = scmp.eq.s32.totalorder %s20, 1
      %p59 = por %p57, %p58
      %p60 = scmp.ne.s32.totalorder %s51, %s52
      %p61 = scmp.eq.s32.totalorder %s20, 0
      %p62 = por %p60, %p61
      %p63 = scmp.ne.s32.totalorder %s51, %s52
      %p64 = scmp.eq.s32.totalorder %s21, 1
      %p65 = por %p63, %p64
      %p67 = scmp.ne.s32.totalorder %s52, %s66
      %p68 = scmp.eq.s32.totalorder %s21, 0
      %p69 = por %p67, %p68
      %s71 = sadd.s32 %s70, 1
      %p74 = scmp.eq.s32.totalorder %s15, 1
      %p75 = scmp.ne.s32.totalorder %s70, %s72
      %p76 = scmp.eq.s32.totalorder %s15, 0
      %p77 = por %p75, %p76
      %p78 = scmp.ne.s32.totalorder %s70, %s72
      %p79 = scmp.eq.s32.totalorder %s20, 1
      %p80 = por %p78, %p79
      %p81 = scmp.ne.s32.totalorder %s72, %s73
      %p82 = scmp.eq.s32.totalorder %s20, 0
      %p83 = por %p81, %p82
      %p84 = scmp.ne.s32.totalorder %s72, %s73
      %p85 = scmp.eq.s32.totalorder %s21, 1
      %p86 = por %p84, %p85
      %p88 = scmp.ne.s32.totalorder %s73, %s87
      %p89 = scmp.eq.s32.totalorder %s21, 0
      %p90 = por %p88, %p89
      %s92 = sadd.s32 %s91, 1
      %p95 = scmp.eq.s32.totalorder %s15, 1
      %p96 = scmp.ne.s32.totalorder %s91, %s93
      %p97 = scmp.eq.s32.totalorder %s15, 0
      %p98 = por %p96, %p97
      %p99 = scmp.ne.s32.totalorder %s91, %s93
      %p100 = scmp.eq.s32.totalorder %s20, 1
      %p101 = por %p99, %p100
      %p102 = scmp.ne.s32.totalorder %s93, %s94
      %p103 = scmp.eq.s32.totalorder %s20, 0
      %p104 = por %p102, %p103
      %p105 = scmp.ne.s32.totalorder %s93, %s94
      %p106 = scmp.eq.s32.totalorder %s21, 1
      %p107 = por %p105, %p106
      %p109 = scmp.ne.s32.totalorder %s94, %s108
      %p110 = scmp.eq.s32.totalorder %s21, 0
      %p111 = por %p109, %p110
      %s113 = sadd.s32 %s112, 1
      %p116 = scmp.eq.s32.totalorder %s15, 1
      %p117 = scmp.ne.s32.totalorder %s112, %s114
      %p118 = scmp.eq.s32.totalorder %s15, 0
      %p119 = por %p117, %p118
      %p120 = scmp.ne.s32.totalorder %s112, %s114
      %p121 = scmp.eq.s32.totalorder %s20, 1
      %p122 = por %p120, %p121
      %p123 = scmp.ne.s32.totalorder %s114, %s115
      %p124 = scmp.eq.s32.totalorder %s20, 0
      %p125 = por %p123, %p124
      %p126 = scmp.ne.s32.totalorder %s114, %s115
      %p127 = scmp.eq.s32.totalorder %s21, 1
      %p128 = por %p126, %p127
      %p130 = scmp.ne.s32.totalorder %s115, %s129
      %p131 = scmp.eq.s32.totalorder %s21, 0
      %p132 = por %p130, %p131
      %s134 = sadd.s32 %s133, 1
      %p137 = scmp.eq.s32.totalorder %s15, 1
      %p138 = scmp.ne.s32.totalorder %s133, %s135
      %p139 = scmp.eq.s32.totalorder %s15, 0
      %p140 = por %p138, %p139
      %p141 = scmp.ne.s32.totalorder %s133, %s135
      %p142 = scmp.eq.s32.totalorder %s20, 1
      %p143 = por %p141, %p142
      %p144 = scmp.ne.s32.totalorder %s135, %s136
      %p145 = scmp.eq.s32.totalorder %s20, 0
      %p146 = por %p144, %p145
      %p147 = scmp.ne.s32.totalorder %s135, %s136
      %p148 = scmp.eq.s32.totalorder %s21, 1
      %p149 = por %p147, %p148
      %p151 = scmp.ne.s32.totalorder %s136, %s150
      %p152 = scmp.eq.s32.totalorder %s21, 0
      %p153 = por %p151, %p152
      %s155 = sadd.s32 %s154, 1
      %p158 = scmp.eq.s32.totalorder %s15, 1
      %p159 = scmp.ne.s32.totalorder %s154, %s156
      %p160 = scmp.eq.s32.totalorder %s15, 0
      %p161 = por %p159, %p160
      %p162 = scmp.ne.s32.totalorder %s154, %s156
      %p163 = scmp.eq.s32.totalorder %s20, 1
      %p164 = por %p162, %p163
      %p165 = scmp.ne.s32.totalorder %s156, %s157
      %p166 = scmp.eq.s32.totalorder %s20, 0
      %p167 = por %p165, %p166
      %p168 = scmp.ne.s32.totalorder %s156, %s157
      %p169 = scmp.eq.s32.totalorder %s21, 1
      %p170 = por %p168, %p169
      %p172 = scmp.ne.s32.totalorder %s157, %s171
      %p173 = scmp.eq.s32.totalorder %s21, 0
      %p174 = por %p172, %p173
      %s175 = ssub.s32 %s15, %s22
      %p176 = scmp.eq.s32.totalorder %s175, 0
      %s178 = sadd.s32 %s177, 1
      %s179 = scalar_select %p176, %s177, %s178
      %p182 = pneg %p176
      %p183 = scmp.eq.s32.totalorder %s15, 1
      %p184 = por %p182, %p183
      %p185 = scmp.ne.s32.totalorder %s177, %s180
      %p186 = scmp.eq.s32.totalorder %s15, 0
      %p187 = por %p185, %p186
      %p188 = scmp.ne.s32.totalorder %s177, %s180
      %p189 = scmp.eq.s32.totalorder %s20, 1
      %p190 = por %p188, %p189
      %p191 = scmp.ne.s32.totalorder %s180, %s181
      %p192 = scmp.eq.s32.totalorder %s20, 0
      %p193 = por %p191, %p192
      %p194 = scmp.ne.s32.totalorder %s180, %s181
      %p195 = scmp.eq.s32.totalorder %s21, 1
      %p196 = por %p194, %p195
      %p198 = scmp.ne.s32.totalorder %s181, %s197
      %p199 = scmp.eq.s32.totalorder %s21, 0
      %p200 = por %p198, %p199
      %p201 = scmp.le.s32.totalorder 1, %s15
      %p202 = scmp.lt.s32.totalorder %s15, 3
      %p203 = pnand %p201, %p202
      %p204 = pneg %p203
      // Predicated region
      $region9: #{midblock_forward.4} parent=5 // pred_check
        _
      $region10: #{midblock_forward.4} parent=5 // pred_check_branch
        %206 = sbr.rel (%p203) target = $region12
      $region11: #{midblock_forward.4} parent=5 // pred_region
        %s207 = ssub.s32 %s15, 1
        // Predicated region
        $region13: #{midblock_forward.4} parent=11 // pred_check
          %p208 = pneg %p62
        $region14: #{midblock_forward.4} parent=11 // pred_check_branch
          %210 = sbr.rel (%p208) target = $region16
        $region15: #{midblock_forward.4} parent=11 // pred_region
          %s212 = ssub.s32 16, 16
          %213 = vsyncadd [#allocation3], %s212
          %s215 = sshll.u32 [#allocation2], 4
          %s216 = int_to_ptr.vmem [resolvable:$true] %s215
          %218 = dma.hbm_to_vmem [thread:$0]  %s1, 16, %s216, [#allocation3]
        $region16: #{midblock_forward.4} parent=11 // pred_fallthru
          _
        // Predicated region
        $region17: #{midblock_forward.4} parent=11 // pred_check
          %p219 = pneg %p83
        $region18: #{midblock_forward.4} parent=11 // pred_check_branch
          %221 = sbr.rel (%p219) target = $region20
        $region19: #{midblock_forward.4} parent=11 // pred_region
          %s223 = ssub.s32 16, 16
          %224 = vsyncadd [#allocation5], %s223
          %s226 = sshll.u32 [#allocation4], 4
          %s227 = int_to_ptr.vmem [resolvable:$true] %s226
          %229 = dma.hbm_to_vmem [thread:$0]  %s2, 16, %s227, [#allocation5]
        $region20: #{midblock_forward.4} parent=11 // pred_fallthru
          _
        // Predicated region
        $region21: #{midblock_forward.4} parent=11 // pred_check
          %p230 = pneg %p104
        $region22: #{midblock_forward.4} parent=11 // pred_check_branch
          %232 = sbr.rel (%p230) target = $region24
        $region23: #{midblock_forward.4} parent=11 // pred_region
          _
        $region24: #{midblock_forward.4} parent=11 // pred_fallthru
          _
        // Predicated region
        $region25: #{midblock_forward.4} parent=11 // pred_check
          %p233 = pneg %p125
        $region26: #{midblock_forward.4} parent=11 // pred_check_branch
          %235 = sbr.rel (%p233) target = $region28
        $region27: #{midblock_forward.4} parent=11 // pred_region
          _
        $region28: #{midblock_forward.4} parent=11 // pred_fallthru
          _
        // Predicated region
        $region29: #{midblock_forward.4} parent=11 // pred_check
          %p236 = pneg %p146
        $region30: #{midblock_forward.4} parent=11 // pred_check_branch
          %238 = sbr.rel (%p236) target = $region32
        $region31: #{midblock_forward.4} parent=11 // pred_region
          _
        $region32: #{midblock_forward.4} parent=11 // pred_fallthru
          _
        // Predicated region
        $region33: #{midblock_forward.4} parent=11 // pred_check
          %p239 = pneg %p167
        $region34: #{midblock_forward.4} parent=11 // pred_check_branch
          %241 = sbr.rel (%p239) target = $region36
        $region35: #{midblock_forward.4} parent=11 // pred_region
          %s243 = ssub.s32 16, 16
          %244 = vsyncadd [#allocation5], %s243
          %s246 = sshll.u32 [#allocation6], 4
          %s247 = int_to_ptr.vmem [resolvable:$true] %s246
          %249 = dma.hbm_to_vmem [thread:$0]  %s6, 16, %s247, [#allocation5]
        $region36: #{midblock_forward.4} parent=11 // pred_fallthru
          _
      $region12: #{midblock_forward.4} parent=5 // pred_fallthru
        _
      %p250 = scmp.lt.s32.totalorder %s15, 2
      // Predicated region
      $region37: #{midblock_forward.4} parent=5 // pred_check
        %p251 = pneg %p250
      $region38: #{midblock_forward.4} parent=5 // pred_check_branch
        %253 = sbr.rel (%p251) target = $region40
      $region39: #{midblock_forward.4} parent=5 // pred_region
        // Predicated region
        $region41: #{midblock_forward.4} parent=39 // pred_check
          %p254 = pneg %p35
        $region42: #{midblock_forward.4} parent=39 // pred_check_branch
          %256 = sbr.rel (%p254) target = $region44
        $region43: #{midblock_forward.4} parent=39 // pred_region
          %p257 = scmp.lt.s32.totalorder %s15, 1
          %s258 = scalar_select %p257, %s15, 1
          %s259 = smul.addr %s258, 8
          %s260 = smul.addr %s259, 8
          %s261 = scalar_lea.vmem %s0, %s260
        $region44: #{midblock_forward.4} parent=39 // pred_fallthru
          _
      $region40: #{midblock_forward.4} parent=5 // pred_fallthru
        _
      %p262 = scmp.le.s32.totalorder 1, %s15
      %p263 = scmp.lt.s32.totalorder %s15, 3
      %p264 = pnand %p262, %p263
      %p265 = pneg %p264
      // Predicated region
      $region45: #{midblock_forward.4} parent=5 // pred_check
        _
      $region46: #{midblock_forward.4} parent=5 // pred_check_branch
        %267 = sbr.rel (%p264) target = $region48
      $region47: #{midblock_forward.4} parent=5 // pred_region
        %s268 = ssub.s32 %s15, 1
        // Predicated region
        $region49: #{midblock_forward.4} parent=47 // pred_check
          %p269 = pneg %p62
        $region50: #{midblock_forward.4} parent=47 // pred_check_branch
          %271 = sbr.rel (%p269) target = $region52
        $region51: #{midblock_forward.4} parent=47 // pred_region
          %272 = dma.done [#allocation3], 16
        $region52: #{midblock_forward.4} parent=47 // pred_fallthru
          _
        // Predicated region
        $region53: #{midblock_forward.4} parent=47 // pred_check
          %p273 = pneg %p83
        $region54: #{midblock_forward.4} parent=47 // pred_check_branch
          %275 = sbr.rel (%p273) target = $region56
        $region55: #{midblock_forward.4} parent=47 // pred_region
          %276 = dma.done [#allocation5], 16
        $region56: #{midblock_forward.4} parent=47 // pred_fallthru
          _
        // Predicated region
        $region57: #{midblock_forward.4} parent=47 // pred_check
          %p277 = pneg %p167
        $region58: #{midblock_forward.4} parent=47 // pred_check_branch
          %279 = sbr.rel (%p277) target = $region60
        $region59: #{midblock_forward.4} parent=47 // pred_region
          %280 = dma.done [#allocation5], 16
        $region60: #{midblock_forward.4} parent=47 // pred_fallthru
          _
        %p281 = scmp.lt.s32.totalorder %s20, 1
        %s282 = scalar_select %p281, %s20, 1
        %s283 = smul.addr %s282, 8
        %s284 = smul.addr %s283, 8
        %s285 = scalar_lea.vmem %s0, %s284
        %p286 = pneg %p41
        %p287 = pneg %p38
        %p288 = pneg %p62
        %p289 = pneg %p59
        %p290 = pneg %p83
        %p291 = pneg %p80
        %p292 = pneg %p104
        %p293 = pneg %p101
        %p294 = pneg %p125
        %p295 = pneg %p122
        %p296 = pneg %p146
        %p297 = pneg %p143
        %p298 = pneg %p167
        %p299 = pneg %p164
        %p300 = pneg %p193
        %p301 = pneg %p190
        %p302 = scmp.lt.s32.totalorder %s20, 1
        %s303 = scalar_select %p302, %s20, 1
        %s304 = smul.addr %s303, 8
        %s305 = smul.addr %s304, 8
        %s306 = scalar_lea.vmem %s7, %s305
        %p307 = scmp.lt.s32.totalorder %s20, 1
        %s308 = scalar_select %p307, %s20, 1
        %s309 = smul.addr %s308, 8
        %s310 = smul.addr %s309, 8
        %s311 = scalar_lea.vmem %s0, %s310
        %p312 = scmp.lt.s32.totalorder %s20, 1
        %s313 = scalar_select %p312, %s20, 1
        %s314 = smul.addr %s313, 8
        %s315 = smul.addr %s314, 8
        %s316 = scalar_lea.vmem %s7, %s315
        %v317 = vld [vmem:[%s311] sm:$0xff]
        %v318 = vld [vmem:[%s311 + $0x8] sm:$0xff]
        %v319 = vld [vmem:[%s311 + $0x10] sm:$0xff]
        %v320 = vld [vmem:[%s311 + $0x18] sm:$0xff]
        %v321 = vld [vmem:[%s311 + $0x20] sm:$0xff]
        %v322 = vld [vmem:[%s311 + $0x28] sm:$0xff]
        %v323 = vld [vmem:[%s311 + $0x30] sm:$0xff]
        %v324 = vld [vmem:[%s311 + $0x38] sm:$0xff]
        %v325 = vadd.f32 %v317, %v318
        %v326 = vadd.f32 %v325, %v319
        %v327 = vadd.f32 %v326, %v320
        %v328 = vadd.f32 %v327, %v321
        %v329 = vadd.f32 %v328, %v322
        %v330 = vadd.f32 %v329, %v323
        %v331 = vadd.f32 %v330, %v324
        %332 = vadd.xlane.f32.xlu0 %v331
        %v333 = vpop.xlane.xlu0 %332
        %v334 = vrot.slane %v333, 4
        %v335 = vadd.f32 %v333, %v334
        %v336 = vrot.slane %v335, 2
        %v337 = vadd.f32 %v335, %v336
        %v338 = vrot.slane %v337, 1
        %v339 = vadd.f32 %v337, %v338
        %s340 = vtos %v339
        %v341 = vstv %s340
        %v342 = vmul.f32 %v341, 0.00012207031
        %v343 = vmul.f32 %v317, %v317
        %v344 = vmul.f32 %v318, %v318
        %v345 = vmul.f32 %v319, %v319
        %v346 = vmul.f32 %v320, %v320
        %v347 = vmul.f32 %v321, %v321
        %v348 = vmul.f32 %v322, %v322
        %v349 = vmul.f32 %v323, %v323
        %v350 = vmul.f32 %v324, %v324
        %v351 = vadd.f32 %v343, %v344
        %v352 = vadd.f32 %v351, %v345
        %v353 = vadd.f32 %v352, %v346
        %v354 = vadd.f32 %v353, %v347
        %v355 = vadd.f32 %v354, %v348
        %v356 = vadd.f32 %v355, %v349
        %v357 = vadd.f32 %v356, %v350
        %358 = vadd.xlane.f32.xlu0 %v357
        %v359 = vpop.xlane.xlu0 %358
        %v360 = vrot.slane %v359, 4
        %v361 = vadd.f32 %v359, %v360
        %v362 = vrot.slane %v361, 2
        %v363 = vadd.f32 %v361, %v362
        %v364 = vrot.slane %v363, 1
        %v365 = vadd.f32 %v363, %v364
        %s366 = vtos %v365
        %v367 = vstv %s366
        %v368 = vmul.f32 %v367, 0.00012207031
        %v369 = vmul.f32 %v342, %v342
        %v370 = vsub.f32 %v368, %v369
        %v371 = vsub.f32 %v317, %v342
        %v372 = vsub.f32 %v318, %v342
        %v373 = vsub.f32 %v319, %v342
        %v374 = vsub.f32 %v320, %v342
        %v375 = vsub.f32 %v321, %v342
        %v376 = vsub.f32 %v322, %v342
        %v377 = vsub.f32 %v323, %v342
        %v378 = vsub.f32 %v324, %v342
        %v379 = vadd.f32 %v370, 1e-05
        %v380 = vrsqrt.pop %v379
        %v381 = vmul.f32 %v371, %v380
        %v382 = vmul.f32 %v372, %v380
        %v383 = vmul.f32 %v373, %v380
        %v384 = vmul.f32 %v374, %v380
        %v385 = vmul.f32 %v375, %v380
        %v386 = vmul.f32 %v376, %v380
        %v387 = vmul.f32 %v377, %v380
        %v388 = vmul.f32 %v378, %v380
        %v389 = vld [vmem:[#allocation2] sm:$0x1]
        %v391 = vlaneseq
        %v392 = vshrl.u32 %v391, 7
        %v393 = vsub.s32 0, %v392
        %v394 = vrot.slane %v389, %v393
        %v396 = vmul.f32 %v381, %v394
        %v397 = vmul.f32 %v382, %v394
        %v398 = vmul.f32 %v383, %v394
        %v399 = vmul.f32 %v384, %v394
        %v400 = vmul.f32 %v385, %v394
        %v401 = vmul.f32 %v386, %v394
        %v402 = vmul.f32 %v387, %v394
        %v403 = vmul.f32 %v388, %v394
        %v404 = vld [vmem:[#allocation4] sm:$0x1]
        %v406 = vlaneseq
        %v407 = vshrl.u32 %v406, 7
        %v408 = vsub.s32 0, %v407
        %v409 = vrot.slane %v404, %v408
        %v411 = vadd.f32 %v396, %v409
        %v412 = vadd.f32 %v397, %v409
        %v413 = vadd.f32 %v398, %v409
        %v414 = vadd.f32 %v399, %v409
        %v415 = vadd.f32 %v400, %v409
        %v416 = vadd.f32 %v401, %v409
        %v417 = vadd.f32 %v402, %v409
        %v418 = vadd.f32 %v403, %v409
        %v419 = vld [vmem:[%s3] sm:$0xff]
        %v420 = vld [vmem:[%s3 + $0x8] sm:$0xff]
        %v421 = vld [vmem:[%s3 + $0x10] sm:$0xff]
        %v422 = vld [vmem:[%s3 + $0x18] sm:$0xff]
        %v423 = vld [vmem:[%s3 + $0x20] sm:$0xff]
        %v424 = vld [vmem:[%s3 + $0x28] sm:$0xff]
        %v425 = vld [vmem:[%s3 + $0x30] sm:$0xff]
        %v426 = vld [vmem:[%s3 + $0x38] sm:$0xff]
        %v427 = vld [vmem:[%s3 + $0x40] sm:$0xff]
        %v428 = vld [vmem:[%s3 + $0x48] sm:$0xff]
        %v429 = vld [vmem:[%s3 + $0x50] sm:$0xff]
        %v430 = vld [vmem:[%s3 + $0x58] sm:$0xff]
        %v431 = vld [vmem:[%s3 + $0x60] sm:$0xff]
        %v432 = vld [vmem:[%s3 + $0x68] sm:$0xff]
        %v433 = vld [vmem:[%s3 + $0x70] sm:$0xff]
        %v434 = vld [vmem:[%s3 + $0x78] sm:$0xff]
        %v435 = vld [vmem:[%s3 + $0x80] sm:$0xff]
        %v436 = vld [vmem:[%s3 + $0x88] sm:$0xff]
        %v437 = vld [vmem:[%s3 + $0x90] sm:$0xff]
        %v438 = vld [vmem:[%s3 + $0x98] sm:$0xff]
        %v439 = vld [vmem:[%s3 + $0xa0] sm:$0xff]
        %v440 = vld [vmem:[%s3 + $0xa8] sm:$0xff]
        %v441 = vld [vmem:[%s3 + $0xb0] sm:$0xff]
        %v442 = vld [vmem:[%s3 + $0xb8] sm:$0xff]
        %v443 = vld [vmem:[%s3 + $0xc0] sm:$0xff]
        %v444 = vld [vmem:[%s3 + $0xc8] sm:$0xff]
        %v445 = vld [vmem:[%s3 + $0xd0] sm:$0xff]
        %v446 = vld [vmem:[%s3 + $0xd8] sm:$0xff]
        %v447 = vld [vmem:[%s3 + $0xe0] sm:$0xff]
        %v448 = vld [vmem:[%s3 + $0xe8] sm:$0xff]
        %v449 = vld [vmem:[%s3 + $0xf0] sm:$0xff]
        %v450 = vld [vmem:[%s3 + $0xf8] sm:$0xff]
        %v451 = vld [vmem:[%s3 + $0x100] sm:$0xff]
        %v452 = vld [vmem:[%s3 + $0x108] sm:$0xff]
        %v453 = vld [vmem:[%s3 + $0x110] sm:$0xff]
        %v454 = vld [vmem:[%s3 + $0x118] sm:$0xff]
        %v455 = vld [vmem:[%s3 + $0x120] sm:$0xff]
        %v456 = vld [vmem:[%s3 + $0x128] sm:$0xff]
        %v457 = vld [vmem:[%s3 + $0x130] sm:$0xff]
        %v458 = vld [vmem:[%s3 + $0x138] sm:$0xff]
        %v459 = vld [vmem:[%s3 + $0x140] sm:$0xff]
        %v460 = vld [vmem:[%s3 + $0x148] sm:$0xff]
        %v461 = vld [vmem:[%s3 + $0x150] sm:$0xff]
        %v462 = vld [vmem:[%s3 + $0x158] sm:$0xff]
        %v463 = vld [vmem:[%s3 + $0x160] sm:$0xff]
        %v464 = vld [vmem:[%s3 + $0x168] sm:$0xff]
        %v465 = vld [vmem:[%s3 + $0x170] sm:$0xff]
        %v466 = vld [vmem:[%s3 + $0x178] sm:$0xff]
        %v467 = vld [vmem:[%s4] sm:$0x7]
        %v469 = vlaneseq
        %v470 = vshrl.u32 %v469, 7
        %v471 = vsub.s32 0, %v470
        %v472 = vrot.slane %v467, %v471
        %v473 = vlaneseq
        %v474 = vshrl.u32 %v473, 7
        %v475 = vsub.s32 1, %v474
        %v476 = vrot.slane %v467, %v475
        %v477 = vlaneseq
        %v478 = vshrl.u32 %v477, 7
        %v479 = vsub.s32 2, %v478
        %v480 = vrot.slane %v467, %v479
        %484 = vmatprep.subr.mxu0 %v420
        %485 = vmatpush1.msra.mxu0 %v419
        %486 = vmatprep.subr.mxu0 %v423
        %487 = vmatpush1.msra.mxu0 %v422
        %488 = vmatprep.subr.mxu0 %v426
        %489 = vmatpush1.msra.mxu0 %v425
        %490 = vmatprep.subr.mxu0 %v429
        %491 = vmatpush1.msra.mxu0 %v428
        %492 = vmatprep.subr.mxu0 %v432
        %493 = vmatpush1.msra.mxu0 %v431
        %494 = vmatprep.subr.mxu0 %v435
        %495 = vmatpush1.msra.mxu0 %v434
        %496 = vmatprep.subr.mxu0 %v438
        %497 = vmatpush1.msra.mxu0 %v437
        %498 = vmatprep.subr.mxu0 %v441
        %499 = vmatpush1.msra.mxu0 %v440
        %500 = vmatprep.subr.mxu0 %v444
        %501 = vmatpush1.msra.mxu0 %v443
        %502 = vmatprep.subr.mxu0 %v447
        %503 = vmatpush1.msra.mxu0 %v446
        %504 = vmatprep.subr.mxu0 %v450
        %505 = vmatpush1.msra.mxu0 %v449
        %506 = vmatprep.subr.mxu0 %v453
        %507 = vmatpush1.msra.mxu0 %v452
        %508 = vmatprep.subr.mxu0 %v456
        %509 = vmatpush1.msra.mxu0 %v455
        %510 = vmatprep.subr.mxu0 %v459
        %511 = vmatpush1.msra.mxu0 %v458
        %512 = vmatprep.subr.mxu0 %v462
        %513 = vmatpush1.msra.mxu0 %v461
        %514 = vmatprep.subr.mxu0 %v465
        %515 = vmatpush1.msra.mxu0 %v464
        %516 = vmatprep.subr.mxu0 0.0
        %517 = vmatpush1.msra.mxu0 0.0
        %518 = vmatprep.subr.mxu0 0.0
        %519 = vmatpush1.msra.mxu0 0.0
        %520 = vmatprep.subr.mxu0 0.0
        %521 = vmatpush1.msra.mxu0 0.0
        %522 = vmatprep.subr.mxu0 0.0
        %523 = vmatpush1.msra.mxu0 0.0
        %524 = vmatprep.subr.mxu0 0.0
        %525 = vmatpush1.msra.mxu0 0.0
        %526 = vmatprep.subr.mxu0 0.0
        %527 = vmatpush1.msra.mxu0 0.0
        %528 = vmatprep.subr.mxu0 0.0
        %529 = vmatpush1.msra.mxu0 0.0
        %530 = vmatprep.subr.mxu0 0.0
        %531 = vmatpush1.msra.mxu0 0.0
        %532 = vmatprep.subr.mxu0 0.0
        %533 = vmatpush1.msra.mxu0 0.0
        %534 = vmatprep.subr.mxu0 0.0
        %535 = vmatpush1.msra.mxu0 0.0
        %536 = vmatprep.subr.mxu0 0.0
        %537 = vmatpush1.msra.mxu0 0.0
        %538 = vmatprep.subr.mxu0 0.0
        %539 = vmatpush1.msra.mxu0 0.0
        %540 = vmatprep.subr.mxu0 0.0
        %541 = vmatpush1.msra.mxu0 0.0
        %542 = vmatprep.subr.mxu0 0.0
        %543 = vmatpush1.msra.mxu0 0.0
        %544 = vmatprep.subr.mxu0 0.0
        %545 = vmatpush1.msra.mxu0 0.0
        %546 = vmatprep.subr.mxu0 0.0
        %547 = vmatpush1.msra.mxu0 0.0
        %548 = vmatprep.mubr.f32.mxu0 0.0
        %549 = vmatmul.mubr.f32.gmra.mrb[0].mxu0 %v411
        %v550 = vpop.f32.mrb[0].mxu0
        %v551 = vadd.f32 %v472, %v550
        %v552 = vpop.f32.mrb[0].mxu0
        %v553 = vadd.f32 %v476, %v552
        %554 = vmatprep.mubr.f32.mxu0 0.0
        %555 = vmatmul.mubr.f32.gmra.mrb[0].mxu0 %v412
        %v556 = vpop.f32.mrb[0].mxu0
        %v557 = vadd.f32 %v472, %v556
        %v558 = vpop.f32.mrb[0].mxu0
        %v559 = vadd.f32 %v476, %v558
        %560 = vmatprep.mubr.f32.mxu0 0.0
        %561 = vmatmul.mubr.f32.gmra.mrb[0].mxu0 %v413
        %v562 = vpop.f32.mrb[0].mxu0
        %v563 = vadd.f32 %v472, %v562
        %v564 = vpop.f32.mrb[0].mxu0
        %v565 = vadd.f32 %v476, %v564
        %566 = vmatprep.mubr.f32.mxu0 0.0
        %567 = vmatmul.mubr.f32.gmra.mrb[0].mxu0 %v414
        %v568 = vpop.f32.mrb[0].mxu0
        %v569 = vadd.f32 %v472, %v568
        %v570 = vpop.f32.mrb[0].mxu0
        %v571 = vadd.f32 %v476, %v570
        %572 = vmatprep.mubr.f32.mxu0 0.0
        %573 = vmatmul.mubr.f32.gmra.mrb[0].mxu0 %v415
        %v574 = vpop.f32.mrb[0].mxu0
        %v575 = vadd.f32 %v472, %v574
        %v576 = vpop.f32.mrb[0].mxu0
        %v577 = vadd.f32 %v476, %v576
        %578 = vmatprep.mubr.f32.mxu0 0.0
        %579 = vmatmul.mubr.f32.gmra.mrb[0].mxu0 %v416
        %v580 = vpop.f32.mrb[0].mxu0
        %v581 = vadd.f32 %v472, %v580
        %v582 = vpop.f32.mrb[0].mxu0
        %v583 = vadd.f32 %v476, %v582
        %584 = vmatprep.mubr.f32.mxu0 0.0
        %585 = vmatmul.mubr.f32.gmra.mrb[0].mxu0 %v417
        %v586 = vpop.f32.mrb[0].mxu0
        %v587 = vadd.f32 %v472, %v586
        %v588 = vpop.f32.mrb[0].mxu0
        %v589 = vadd.f32 %v476, %v588
        %590 = vmatprep.mubr.f32.mxu0 0.0
        %591 = vmatmul.mubr.f32.gmra.mrb[0].mxu0 %v418
        %v592 = vpop.f32.mrb[0].mxu0
        %v593 = vadd.f32 %v472, %v592
        %v594 = vpop.f32.mrb[0].mxu0
        %v595 = vadd.f32 %v476, %v594
        %596 = vdwg.mxu0
        %597 = vmatprep.subr.mxu0 0.0
        %598 = vmatpush1.msra.mxu0 %v421
        %599 = vmatprep.subr.mxu0 0.0
        %600 = vmatpush1.msra.mxu0 %v424
        %601 = vmatprep.subr.mxu0 0.0
        %602 = vmatpush1.msra.mxu0 %v427
        %603 = vmatprep.subr.mxu0 0.0
        %604 = vmatpush1.msra.mxu0 %v430
        %605 = vmatprep.subr.mxu0 0.0
        %606 = vmatpush1.msra.mxu0 %v433
        %607 = vmatprep.subr.mxu0 0.0
        %608 = vmatpush1.msra.mxu0 %v436
        %609 = vmatprep.subr.mxu0 0.0
        %610 = vmatpush1.msra.mxu0 %v439
        %611 = vmatprep.subr.mxu0 0.0
        %612 = vmatpush1.msra.mxu0 %v442
        %613 = vmatprep.subr.mxu0 0.0
        %614 = vmatpush1.msra.mxu0 %v445
        %615 = vmatprep.subr.mxu0 0.0
        %616 = vmatpush1.msra.mxu0 %v448
        %617 = vmatprep.subr.mxu0 0.0
        %618 = vmatpush1.msra.mxu0 %v451
        %619 = vmatprep.subr.mxu0 0.0
        %620 = vmatpush1.msra.mxu0 %v454
        %621 = vmatprep.subr.mxu0 0.0
        %622 = vmatpush1.msra.mxu0 %v457
        %623 = vmatprep.subr.mxu0 0.0
        %624 = vmatpush1.msra.mxu0 %v460
        %625 = vmatprep.subr.mxu0 0.0
        %626 = vmatpush1.msra.mxu0 %v463
        %627 = vmatprep.subr.mxu0 0.0
        %628 = vmatpush1.msra.mxu0 %v466
        %629 = vmatprep.subr.mxu0 0.0
        %630 = vmatpush1.msra.mxu0 0.0
        %631 = vmatprep.subr.mxu0 0.0
        %632 = vmatpush1.msra.mxu0 0.0
        %633 = vmatprep.subr.mxu0 0.0
        %634 = vmatpush1.msra.mxu0 0.0
        %635 = vmatprep.subr.mxu0 0.0
        %636 = vmatpush1.msra.mxu0 0.0
        %637 = vmatprep.subr.mxu0 0.0
        %638 = vmatpush1.msra.mxu0 0.0
        %639 = vmatprep.subr.mxu0 0.0
        %640 = vmatpush1.msra.mxu0 0.0
        %641 = vmatprep.subr.mxu0 0.0
        %642 = vmatpush1.msra.mxu0 0.0
        %643 = vmatprep.subr.mxu0 0.0
        %644 = vmatpush1.msra.mxu0 0.0
        %645 = vmatprep.subr.mxu0 0.0
        %646 = vmatpush1.msra.mxu0 0.0
        %647 = vmatprep.subr.mxu0 0.0
        %648 = vmatpush1.msra.mxu0 0.0
        %649 = vmatprep.subr.mxu0 0.0
        %650 = vmatpush1.msra.mxu0 0.0
        %651 = vmatprep.subr.mxu0 0.0
        %652 = vmatpush1.msra.mxu0 0.0
        %653 = vmatprep.subr.mxu0 0.0
        %654 = vmatpush1.msra.mxu0 0.0
        %655 = vmatprep.subr.mxu0 0.0
        %656 = vmatpush1.msra.mxu0 0.0
        %657 = vmatprep.subr.mxu0 0.0
        %658 = vmatpush1.msra.mxu0 0.0
        %659 = vmatprep.subr.mxu0 0.0
        %660 = vmatpush1.msra.mxu0 0.0
        %661 = vmatprep.mubr.f32.mxu0 0.0
        %662 = vmatmul.mubr.f32.gmra.mrb[0].mxu0 %v411
        %v663 = vpop.f32.mrb[0].mxu0
        %v664 = vadd.f32 %v480, %v663
        %v665 = vpop.f32.mrb[0].mxu0
        %666 = vmatprep.mubr.f32.mxu0 0.0
        %667 = vmatmul.mubr.f32.gmra.mrb[0].mxu0 %v412
        %v668 = vpop.f32.mrb[0].mxu0
        %v669 = vadd.f32 %v480, %v668
        %v670 = vpop.f32.mrb[0].mxu0
        %671 = vmatprep.mubr.f32.mxu0 0.0
        %672 = vmatmul.mubr.f32.gmra.mrb[0].mxu0 %v413
        %v673 = vpop.f32.mrb[0].mxu0
        %v674 = vadd.f32 %v480, %v673
        %v675 = vpop.f32.mrb[0].mxu0
        %676 = vmatprep.mubr.f32.mxu0 0.0
        %677 = vmatmul.mubr.f32.gmra.mrb[0].mxu0 %v414
        %v678 = vpop.f32.mrb[0].mxu0
        %v679 = vadd.f32 %v480, %v678
        %v680 = vpop.f32.mrb[0].mxu0
        %681 = vmatprep.mubr.f32.mxu0 0.0
        %682 = vmatmul.mubr.f32.gmra.mrb[0].mxu0 %v415
        %v683 = vpop.f32.mrb[0].mxu0
        %v684 = vadd.f32 %v480, %v683
        %v685 = vpop.f32.mrb[0].mxu0
        %686 = vmatprep.mubr.f32.mxu0 0.0
        %687 = vmatmul.mubr.f32.gmra.mrb[0].mxu0 %v416
        %v688 = vpop.f32.mrb[0].mxu0
        %v689 = vadd.f32 %v480, %v688
        %v690 = vpop.f32.mrb[0].mxu0
        %691 = vmatprep.mubr.f32.mxu0 0.0
        %692 = vmatmul.mubr.f32.gmra.mrb[0].mxu0 %v417
        %v693 = vpop.f32.mrb[0].mxu0
        %v694 = vadd.f32 %v480, %v693
        %v695 = vpop.f32.mrb[0].mxu0
        %696 = vmatprep.mubr.f32.mxu0 0.0
        %697 = vmatmul.mubr.f32.gmra.mrb[0].mxu0 %v418
        %v698 = vpop.f32.mrb[0].mxu0
        %v699 = vadd.f32 %v480, %v698
        %v700 = vpop.f32.mrb[0].mxu0
        %701 = vdwg.mxu0
        %710 = vrot.lane.b32.xlu0 %v551, 96
        %v711 = vpop.permute.xlu0 %710
        %712 = vrot.lane.b32.xlu0 %v557, 96
        %v713 = vpop.permute.xlu0 %712
        %714 = vrot.lane.b32.xlu0 %v563, 96
        %v715 = vpop.permute.xlu0 %714
        %716 = vrot.lane.b32.xlu0 %v569, 96
        %v717 = vpop.permute.xlu0 %716
        %718 = vrot.lane.b32.xlu0 %v575, 96
        %v719 = vpop.permute.xlu0 %718
        %720 = vrot.lane.b32.xlu0 %v581, 96
        %v721 = vpop.permute.xlu0 %720
        %722 = vrot.lane.b32.xlu0 %v587, 96
        %v723 = vpop.permute.xlu0 %722
        %724 = vrot.lane.b32.xlu0 %v593, 96
        %v725 = vpop.permute.xlu0 %724
        %726 = vrot.lane.b32.xlu0 %v551, 64
        %v727 = vpop.permute.xlu0 %726
        %728 = vrot.lane.b32.xlu0 %v557, 64
        %v729 = vpop.permute.xlu0 %728
        %730 = vrot.lane.b32.xlu0 %v563, 64
        %v731 = vpop.permute.xlu0 %730
        %732 = vrot.lane.b32.xlu0 %v569, 64
        %v733 = vpop.permute.xlu0 %732
        %734 = vrot.lane.b32.xlu0 %v575, 64
        %v735 = vpop.permute.xlu0 %734
        %736 = vrot.lane.b32.xlu0 %v581, 64
        %v737 = vpop.permute.xlu0 %736
        %738 = vrot.lane.b32.xlu0 %v587, 64
        %v739 = vpop.permute.xlu0 %738
        %740 = vrot.lane.b32.xlu0 %v593, 64
        %v741 = vpop.permute.xlu0 %740
        %742 = vrot.lane.b32.xlu0 %v551, 32
        %v743 = vpop.permute.xlu0 %742
        %744 = vrot.lane.b32.xlu0 %v557, 32
        %v745 = vpop.permute.xlu0 %744
        %746 = vrot.lane.b32.xlu0 %v563, 32
        %v747 = vpop.permute.xlu0 %746
        %748 = vrot.lane.b32.xlu0 %v569, 32
        %v749 = vpop.permute.xlu0 %748
        %750 = vrot.lane.b32.xlu0 %v575, 32
        %v751 = vpop.permute.xlu0 %750
        %752 = vrot.lane.b32.xlu0 %v581, 32
        %v753 = vpop.permute.xlu0 %752
        %754 = vrot.lane.b32.xlu0 %v587, 32
        %v755 = vpop.permute.xlu0 %754
        %756 = vrot.lane.b32.xlu0 %v593, 32
        %v757 = vpop.permute.xlu0 %756
        %766 = vrot.lane.b32.xlu0 %v553, 96
        %v767 = vpop.permute.xlu0 %766
        %768 = vrot.lane.b32.xlu0 %v559, 96
        %v769 = vpop.permute.xlu0 %768
        %770 = vrot.lane.b32.xlu0 %v565, 96
        %v771 = vpop.permute.xlu0 %770
        %772 = vrot.lane.b32.xlu0 %v571, 96
        %v773 = vpop.permute.xlu0 %772
        %774 = vrot.lane.b32.xlu0 %v577, 96
        %v775 = vpop.permute.xlu0 %774
        %776 = vrot.lane.b32.xlu0 %v583, 96
        %v777 = vpop.permute.xlu0 %776
        %778 = vrot.lane.b32.xlu0 %v589, 96
        %v779 = vpop.permute.xlu0 %778
        %780 = vrot.lane.b32.xlu0 %v595, 96
        %v781 = vpop.permute.xlu0 %780
        %782 = vrot.lane.b32.xlu0 %v553, 64
        %v783 = vpop.permute.xlu0 %782
        %784 = vrot.lane.b32.xlu0 %v559, 64
        %v785 = vpop.permute.xlu0 %784
        %786 = vrot.lane.b32.xlu0 %v565, 64
        %v787 = vpop.permute.xlu0 %786
        %788 = vrot.lane.b32.xlu0 %v571, 64
        %v789 = vpop.permute.xlu0 %788
        %790 = vrot.lane.b32.xlu0 %v577, 64
        %v791 = vpop.permute.xlu0 %790
        %792 = vrot.lane.b32.xlu0 %v583, 64
        %v793 = vpop.permute.xlu0 %792
        %794 = vrot.lane.b32.xlu0 %v589, 64
        %v795 = vpop.permute.xlu0 %794
        %796 = vrot.lane.b32.xlu0 %v595, 64
        %v797 = vpop.permute.xlu0 %796
        %798 = vrot.lane.b32.xlu0 %v553, 32
        %v799 = vpop.permute.xlu0 %798
        %800 = vrot.lane.b32.xlu0 %v559, 32
        %v801 = vpop.permute.xlu0 %800
        %802 = vrot.lane.b32.xlu0 %v565, 32
        %v803 = vpop.permute.xlu0 %802
        %804 = vrot.lane.b32.xlu0 %v571, 32
        %v805 = vpop.permute.xlu0 %804
        %806 = vrot.lane.b32.xlu0 %v577, 32
        %v807 = vpop.permute.xlu0 %806
        %808 = vrot.lane.b32.xlu0 %v583, 32
        %v809 = vpop.permute.xlu0 %808
        %810 = vrot.lane.b32.xlu0 %v589, 32
        %v811 = vpop.permute.xlu0 %810
        %812 = vrot.lane.b32.xlu0 %v595, 32
        %v813 = vpop.permute.xlu0 %812
        %822 = vrot.lane.b32.xlu0 %v664, 96
        %v823 = vpop.permute.xlu0 %822
        %824 = vrot.lane.b32.xlu0 %v669, 96
        %v825 = vpop.permute.xlu0 %824
        %826 = vrot.lane.b32.xlu0 %v674, 96
        %v827 = vpop.permute.xlu0 %826
        %828 = vrot.lane.b32.xlu0 %v679, 96
        %v829 = vpop.permute.xlu0 %828
        %830 = vrot.lane.b32.xlu0 %v684, 96
        %v831 = vpop.permute.xlu0 %830
        %832 = vrot.lane.b32.xlu0 %v689, 96
        %v833 = vpop.permute.xlu0 %832
        %834 = vrot.lane.b32.xlu0 %v694, 96
        %v835 = vpop.permute.xlu0 %834
        %836 = vrot.lane.b32.xlu0 %v699, 96
        %v837 = vpop.permute.xlu0 %836
        %846 = vrot.lane.b32.xlu0 %v664, 64
        %v847 = vpop.permute.xlu0 %846
        %848 = vrot.lane.b32.xlu0 %v669, 64
        %v849 = vpop.permute.xlu0 %848
        %850 = vrot.lane.b32.xlu0 %v674, 64
        %v851 = vpop.permute.xlu0 %850
        %852 = vrot.lane.b32.xlu0 %v679, 64
        %v853 = vpop.permute.xlu0 %852
        %854 = vrot.lane.b32.xlu0 %v684, 64
        %v855 = vpop.permute.xlu0 %854
        %856 = vrot.lane.b32.xlu0 %v689, 64
        %v857 = vpop.permute.xlu0 %856
        %858 = vrot.lane.b32.xlu0 %v694, 64
        %v859 = vpop.permute.xlu0 %858
        %860 = vrot.lane.b32.xlu0 %v699, 64
        %v861 = vpop.permute.xlu0 %860
        %870 = vrot.lane.b32.xlu0 %v664, 32
        %v871 = vpop.permute.xlu0 %870
        %872 = vrot.lane.b32.xlu0 %v669, 32
        %v873 = vpop.permute.xlu0 %872
        %874 = vrot.lane.b32.xlu0 %v674, 32
        %v875 = vpop.permute.xlu0 %874
        %876 = vrot.lane.b32.xlu0 %v679, 32
        %v877 = vpop.permute.xlu0 %876
        %878 = vrot.lane.b32.xlu0 %v684, 32
        %v879 = vpop.permute.xlu0 %878
        %880 = vrot.lane.b32.xlu0 %v689, 32
        %v881 = vpop.permute.xlu0 %880
        %882 = vrot.lane.b32.xlu0 %v694, 32
        %v883 = vpop.permute.xlu0 %882
        %884 = vrot.lane.b32.xlu0 %v699, 32
        %v885 = vpop.permute.xlu0 %884
        %vm894 = vcmask 261120
        %v895 = vsel %vm894, %v551, 0
        %v897 = vsel %vm894, %v557, 0
        %v899 = vsel %vm894, %v563, 0
        %v901 = vsel %vm894, %v569, 0
        %v903 = vsel %vm894, %v575, 0
        %v905 = vsel %vm894, %v581, 0
        %v907 = vsel %vm894, %v587, 0
        %v909 = vsel %vm894, %v593, 0
        %v911 = vsel %vm894, %v553, 0
        %v913 = vsel %vm894, %v559, 0
        %v915 = vsel %vm894, %v565, 0
        %v917 = vsel %vm894, %v571, 0
        %v919 = vsel %vm894, %v577, 0
        %v921 = vsel %vm894, %v583, 0
        %v923 = vsel %vm894, %v589, 0
        %v925 = vsel %vm894, %v595, 0
        %927 = vmatprep.subr.mxu0 0.0
        %928 = vmatpush1.xpose.msra.mxu0 %v911
        %929 = vmatprep.subr.mxu0 0.0
        %930 = vmatpush1.xpose.msra.mxu0 %v913
        %931 = vmatprep.subr.mxu0 0.0
        %932 = vmatpush1.xpose.msra.mxu0 %v915
        %933 = vmatprep.subr.mxu0 0.0
        %934 = vmatpush1.xpose.msra.mxu0 %v917
        %935 = vmatprep.subr.mxu0 0.0
        %936 = vmatpush1.xpose.msra.mxu0 %v919
        %937 = vmatprep.subr.mxu0 0.0
        %938 = vmatpush1.xpose.msra.mxu0 %v921
        %939 = vmatprep.subr.mxu0 0.0
        %940 = vmatpush1.xpose.msra.mxu0 %v923
        %941 = vmatprep.subr.mxu0 0.0
        %942 = vmatpush1.xpose.msra.mxu0 %v925
        %943 = vmatprep.subr.mxu0 0.0
        %944 = vmatpush1.xpose.msra.mxu0 0.0
        %945 = vmatprep.subr.mxu0 0.0
        %946 = vmatpush1.xpose.msra.mxu0 0.0
        %947 = vmatprep.subr.mxu0 0.0
        %948 = vmatpush1.xpose.msra.mxu0 0.0
        %949 = vmatprep.subr.mxu0 0.0
        %950 = vmatpush1.xpose.msra.mxu0 0.0
        %951 = vmatprep.subr.mxu0 0.0
        %952 = vmatpush1.xpose.msra.mxu0 0.0
        %953 = vmatprep.subr.mxu0 0.0
        %954 = vmatpush1.xpose.msra.mxu0 0.0
        %955 = vmatprep.subr.mxu0 0.0
        %956 = vmatpush1.xpose.msra.mxu0 0.0
        %957 = vmatprep.subr.mxu0 0.0
        %958 = vmatpush1.xpose.msra.mxu0 0.0
        %959 = vmatprep.subr.mxu0 0.0
        %960 = vmatpush1.xpose.msra.mxu0 0.0
        %961 = vmatprep.subr.mxu0 0.0
        %962 = vmatpush1.xpose.msra.mxu0 0.0
        %963 = vmatprep.subr.mxu0 0.0
        %964 = vmatpush1.xpose.msra.mxu0 0.0
        %965 = vmatprep.subr.mxu0 0.0
        %966 = vmatpush1.xpose.msra.mxu0 0.0
        %967 = vmatprep.subr.mxu0 0.0
        %968 = vmatpush1.xpose.msra.mxu0 0.0
        %969 = vmatprep.subr.mxu0 0.0
        %970 = vmatpush1.xpose.msra.mxu0 0.0
        %971 = vmatprep.subr.mxu0 0.0
        %972 = vmatpush1.xpose.msra.mxu0 0.0
        %973 = vmatprep.subr.mxu0 0.0
        %974 = vmatpush1.xpose.msra.mxu0 0.0
        %975 = vmatprep.subr.mxu0 0.0
        %976 = vmatpush1.xpose.msra.mxu0 0.0
        %977 = vmatprep.subr.mxu0 0.0
        %978 = vmatpush1.xpose.msra.mxu0 0.0
        %979 = vmatprep.subr.mxu0 0.0
        %980 = vmatpush1.xpose.msra.mxu0 0.0
        %981 = vmatprep.subr.mxu0 0.0
        %982 = vmatpush1.xpose.msra.mxu0 0.0
        %983 = vmatprep.subr.mxu0 0.0
        %984 = vmatpush1.xpose.msra.mxu0 0.0
        %985 = vmatprep.subr.mxu0 0.0
        %986 = vmatpush1.xpose.msra.mxu0 0.0
        %987 = vmatprep.subr.mxu0 0.0
        %988 = vmatpush1.xpose.msra.mxu0 0.0
        %989 = vmatprep.subr.mxu0 0.0
        %990 = vmatpush1.xpose.msra.mxu0 0.0
        %991 = vmatprep.mubr.f32.mxu0 0.0
        %992 = vmatmul.mubr.f32.gmra.mrb[0].mxu0 %v895
        %v993 = vpop.f32.mrb[0].mxu0
        %v994 = vadd.f32 0.0, %v993
        %v995 = vpop.f32.mrb[0].mxu0
        %996 = vmatprep.mubr.f32.mxu0 0.0
        %997 = vmatmul.mubr.f32.gmra.mrb[0].mxu0 %v897
        %v998 = vpop.f32.mrb[0].mxu0
        %v999 = vadd.f32 0.0, %v998
        %v1000 = vpop.f32.mrb[0].mxu0
        %1001 = vmatprep.mubr.f32.mxu0 0.0
        %1002 = vmatmul.mubr.f32.gmra.mrb[0].mxu0 %v899
        %v1003 = vpop.f32.mrb[0].mxu0
        %v1004 = vadd.f32 0.0, %v1003
        %v1005 = vpop.f32.mrb[0].mxu0
        %1006 = vmatprep.mubr.f32.mxu0 0.0
        %1007 = vmatmul.mubr.f32.gmra.mrb[0].mxu0 %v901
        %v1008 = vpop.f32.mrb[0].mxu0
        %v1009 = vadd.f32 0.0, %v1008
        %v1010 = vpop.f32.mrb[0].mxu0
        %1011 = vmatprep.mubr.f32.mxu0 0.0
        %1012 = vmatmul.mubr.f32.gmra.mrb[0].mxu0 %v903
        %v1013 = vpop.f32.mrb[0].mxu0
        %v1014 = vadd.f32 0.0, %v1013
        %v1015 = vpop.f32.mrb[0].mxu0
        %1016 = vmatprep.mubr.f32.mxu0 0.0
        %1017 = vmatmul.mubr.f32.gmra.mrb[0].mxu0 %v905
        %v1018 = vpop.f32.mrb[0].mxu0
        %v1019 = vadd.f32 0.0, %v1018
        %v1020 = vpop.f32.mrb[0].mxu0
        %1021 = vmatprep.mubr.f32.mxu0 0.0
        %1022 = vmatmul.mubr.f32.gmra.mrb[0].mxu0 %v907
        %v1023 = vpop.f32.mrb[0].mxu0
        %v1024 = vadd.f32 0.0, %v1023
        %v1025 = vpop.f32.mrb[0].mxu0
        %1026 = vmatprep.mubr.f32.mxu0 0.0
        %1027 = vmatmul.mubr.f32.gmra.mrb[0].mxu0 %v909
        %v1028 = vpop.f32.mrb[0].mxu0
        %v1029 = vadd.f32 0.0, %v1028
        %v1030 = vpop.f32.mrb[0].mxu0
        %1031 = vdwg.mxu0
        %v1032 = vsel %vm894, %v711, 0
        %v1034 = vsel %vm894, %v713, 0
        %v1036 = vsel %vm894, %v715, 0
        %v1038 = vsel %vm894, %v717, 0
        %v1040 = vsel %vm894, %v719, 0
        %v1042 = vsel %vm894, %v721, 0
        %v1044 = vsel %vm894, %v723, 0
        %v1046 = vsel %vm894, %v725, 0
        %v1048 = vsel %vm894, %v767, 0
        %v1050 = vsel %vm894, %v769, 0
        %v1052 = vsel %vm894, %v771, 0
        %v1054 = vsel %vm894, %v773, 0
        %v1056 = vsel %vm894, %v775, 0
        %v1058 = vsel %vm894, %v777, 0
        %v1060 = vsel %vm894, %v779, 0
        %v1062 = vsel %vm894, %v781, 0
        %1064 = vmatprep.subr.mxu0 0.0
        %1065 = vmatpush1.xpose.msra.mxu0 %v1048
        %1066 = vmatprep.subr.mxu0 0.0
        %1067 = vmatpush1.xpose.msra.mxu0 %v1050
        %1068 = vmatprep.subr.mxu0 0.0
        %1069 = vmatpush1.xpose.msra.mxu0 %v1052
        %1070 = vmatprep.subr.mxu0 0.0
        %1071 = vmatpush1.xpose.msra.mxu0 %v1054
        %1072 = vmatprep.subr.mxu0 0.0
        %1073 = vmatpush1.xpose.msra.mxu0 %v1056
        %1074 = vmatprep.subr.mxu0 0.0
        %1075 = vmatpush1.xpose.msra.mxu0 %v1058
        %1076 = vmatprep.subr.mxu0 0.0
        %1077 = vmatpush1.xpose.msra.mxu0 %v1060
        %1078 = vmatprep.subr.mxu0 0.0
        %1079 = vmatpush1.xpose.msra.mxu0 %v1062
        %1080 = vmatprep.subr.mxu0 0.0
        %1081 = vmatpush1.xpose.msra.mxu0 0.0
        %1082 = vmatprep.subr.mxu0 0.0
        %1083 = vmatpush1.xpose.msra.mxu0 0.0
        %1084 = vmatprep.subr.mxu0 0.0
        %1085 = vmatpush1.xpose.msra.mxu0 0.0
        %1086 = vmatprep.subr.mxu0 0.0
        %1087 = vmatpush1.xpose.msra.mxu0 0.0
        %1088 = vmatprep.subr.mxu0 0.0
        %1089 = vmatpush1.xpose.msra.mxu0 0.0
        %1090 = vmatprep.subr.mxu0 0.0
        %1091 = vmatpush1.xpose.msra.mxu0 0.0
        %1092 = vmatprep.subr.mxu0 0.0
        %1093 = vmatpush1.xpose.msra.mxu0 0.0
        %1094 = vmatprep.subr.mxu0 0.0
        %1095 = vmatpush1.xpose.msra.mxu0 0.0
        %1096 = vmatprep.subr.mxu0 0.0
        %1097 = vmatpush1.xpose.msra.mxu0 0.0
        %1098 = vmatprep.subr.mxu0 0.0
        %1099 = vmatpush1.xpose.msra.mxu0 0.0
        %1100 = vmatprep.subr.mxu0 0.0
        %1101 = vmatpush1.xpose.msra.mxu0 0.0
        %1102 = vmatprep.subr.mxu0 0.0
        %1103 = vmatpush1.xpose.msra.mxu0 0.0
        %1104 = vmatprep.subr.mxu0 0.0
        %1105 = vmatpush1.xpose.msra.mxu0 0.0
        %1106 = vmatprep.subr.mxu0 0.0
        %1107 = vmatpush1.xpose.msra.mxu0 0.0
        %1108 = vmatprep.subr.mxu0 0.0
        %1109 = vmatpush1.xpose.msra.mxu0 0.0
        %1110 = vmatprep.subr.mxu0 0.0
        %1111 = vmatpush1.xpose.msra.mxu0 0.0
        %1112 = vmatprep.subr.mxu0 0.0
        %1113 = vmatpush1.xpose.msra.mxu0 0.0
        %1114 = vmatprep.subr.mxu0 0.0
        %1115 = vmatpush1.xpose.msra.mxu0 0.0
        %1116 = vmatprep.subr.mxu0 0.0
        %1117 = vmatpush1.xpose.msra.mxu0 0.0
        %1118 = vmatprep.subr.mxu0 0.0
        %1119 = vmatpush1.xpose.msra.mxu0 0.0
        %1120 = vmatprep.subr.mxu0 0.0
        %1121 = vmatpush1.xpose.msra.mxu0 0.0
        %1122 = vmatprep.subr.mxu0 0.0
        %1123 = vmatpush1.xpose.msra.mxu0 0.0
        %1124 = vmatprep.subr.mxu0 0.0
        %1125 = vmatpush1.xpose.msra.mxu0 0.0
        %1126 = vmatprep.subr.mxu0 0.0
        %1127 = vmatpush1.xpose.msra.mxu0 0.0
        %1128 = vmatprep.mubr.f32.mxu0 0.0
        %1129 = vmatmul.mubr.f32.gmra.mrb[0].mxu0 %v1032
        %v1130 = vpop.f32.mrb[0].mxu0
        %v1131 = vadd.f32 0.0, %v1130
        %v1132 = vpop.f32.mrb[0].mxu0
        %1133 = vmatprep.mubr.f32.mxu0 0.0
        %1134 = vmatmul.mubr.f32.gmra.mrb[0].mxu0 %v1034
        %v1135 = vpop.f32.mrb[0].mxu0
        %v1136 = vadd.f32 0.0, %v1135
        %v1137 = vpop.f32.mrb[0].mxu0
        %1138 = vmatprep.mubr.f32.mxu0 0.0
        %1139 = vmatmul.mubr.f32.gmra.mrb[0].mxu0 %v1036
        %v1140 = vpop.f32.mrb[0].mxu0
        %v1141 = vadd.f32 0.0, %v1140
        %v1142 = vpop.f32.mrb[0].mxu0
        %1143 = vmatprep.mubr.f32.mxu0 0.0
        %1144 = vmatmul.mubr.f32.gmra.mrb[0].mxu0 %v1038
        %v1145 = vpop.f32.mrb[0].mxu0
        %v1146 = vadd.f32 0.0, %v1145
        %v1147 = vpop.f32.mrb[0].mxu0
        %1148 = vmatprep.mubr.f32.mxu0 0.0
        %1149 = vmatmul.mubr.f32.gmra.mrb[0].mxu0 %v1040
        %v1150 = vpop.f32.mrb[0].mxu0
        %v1151 = vadd.f32 0.0, %v1150
        %v1152 = vpop.f32.mrb[0].mxu0
        %1153 = vmatprep.mubr.f32.mxu0 0.0
        %1154 = vmatmul.mubr.f32.gmra.mrb[0].mxu0 %v1042
        %v1155 = vpop.f32.mrb[0].mxu0
        %v1156 = vadd.f32 0.0, %v1155
        %v1157 = vpop.f32.mrb[0].mxu0
        %1158 = vmatprep.mubr.f32.mxu0 0.0
        %1159 = vmatmul.mubr.f32.gmra.mrb[0].mxu0 %v1044
        %v1160 = vpop.f32.mrb[0].mxu0
        %v1161 = vadd.f32 0.0, %v1160
        %v1162 = vpop.f32.mrb[0].mxu0
        %1163 = vmatprep.mubr.f32.mxu0 0.0
        %1164 = vmatmul.mubr.f32.gmra.mrb[0].mxu0 %v1046
        %v1165 = vpop.f32.mrb[0].mxu0
        %v1166 = vadd.f32 0.0, %v1165
        %v1167 = vpop.f32.mrb[0].mxu0
        %1168 = vdwg.mxu0
        %v1169 = vsel %vm894, %v727, 0
        %v1171 = vsel %vm894, %v729, 0
        %v1173 = vsel %vm894, %v731, 0
        %v1175 = vsel %vm894, %v733, 0
        %v1177 = vsel %vm894, %v735, 0
        %v1179 = vsel %vm894, %v737, 0
        %v1181 = vsel %vm894, %v739, 0
        %v1183 = vsel %vm894, %v741, 0
        %v1185 = vsel %vm894, %v783, 0
        %v1187 = vsel %vm894, %v785, 0
        %v1189 = vsel %vm894, %v787, 0
        %v1191 = vsel %vm894, %v789, 0
        %v1193 = vsel %vm894, %v791, 0
        %v1195 = vsel %vm894, %v793, 0
        %v1197 = vsel %vm894, %v795, 0
        %v1199 = vsel %vm894, %v797, 0
        %1201 = vmatprep.subr.mxu0 0.0
        %1202 = vmatpush1.xpose.msra.mxu0 %v1185
        %1203 = vmatprep.subr.mxu0 0.0
        %1204 = vmatpush1.xpose.msra.mxu0 %v1187
        %1205 = vmatprep.subr.mxu0 0.0
        %1206 = vmatpush1.xpose.msra.mxu0 %v1189
        %1207 = vmatprep.subr.mxu0 0.0
        %1208 = vmatpush1.xpose.msra.mxu0 %v1191
        %1209 = vmatprep.subr.mxu0 0.0
        %1210 = vmatpush1.xpose.msra.mxu0 %v1193
        %1211 = vmatprep.subr.mxu0 0.0
        %1212 = vmatpush1.xpose.msra.mxu0 %v1195
        %1213 = vmatprep.subr.mxu0 0.0
        %1214 = vmatpush1.xpose.msra.mxu0 %v1197
        %1215 = vmatprep.subr.mxu0 0.0
        %1216 = vmatpush1.xpose.msra.mxu0 %v1199
        %1217 = vmatprep.subr.mxu0 0.0
        %1218 = vmatpush1.xpose.msra.mxu0 0.0
        %1219 = vmatprep.subr.mxu0 0.0
        %1220 = vmatpush1.xpose.msra.mxu0 0.0
        %1221 = vmatprep.subr.mxu0 0.0
        %1222 = vmatpush1.xpose.msra.mxu0 0.0
        %1223 = vmatprep.subr.mxu0 0.0
        %1224 = vmatpush1.xpose.msra.mxu0 0.0
        %1225 = vmatprep.subr.mxu0 0.0
        %1226 = vmatpush1.xpose.msra.mxu0 0.0
        %1227 = vmatprep.subr.mxu0 0.0
        %1228 = vmatpush1.xpose.msra.mxu0 0.0
        %1229 = vmatprep.subr.mxu0 0.0
        %1230 = vmatpush1.xpose.msra.mxu0 0.0
        %1231 = vmatprep.subr.mxu0 0.0
        %1232 = vmatpush1.xpose.msra.mxu0 0.0
        %1233 = vmatprep.subr.mxu0 0.0
        %1234 = vmatpush1.xpose.msra.mxu0 0.0
        %1235 = vmatprep.subr.mxu0 0.0
        %1236 = vmatpush1.xpose.msra.mxu0 0.0
        %1237 = vmatprep.subr.mxu0 0.0
        %1238 = vmatpush1.xpose.msra.mxu0 0.0
        %1239 = vmatprep.subr.mxu0 0.0
        %1240 = vmatpush1.xpose.msra.mxu0 0.0
        %1241 = vmatprep.subr.mxu0 0.0
        %1242 = vmatpush1.xpose.msra.mxu0 0.0
        %1243 = vmatprep.subr.mxu0 0.0
        %1244 = vmatpush1.xpose.msra.mxu0 0.0
        %1245 = vmatprep.subr.mxu0 0.0
        %1246 = vmatpush1.xpose.msra.mxu0 0.0
        %1247 = vmatprep.subr.mxu0 0.0
        %1248 = vmatpush1.xpose.msra.mxu0 0.0
        %1249 = vmatprep.subr.mxu0 0.0
        %1250 = vmatpush1.xpose.msra.mxu0 0.0
        %1251 = vmatprep.subr.mxu0 0.0
        %1252 = vmatpush1.xpose.msra.mxu0 0.0
        %1253 = vmatprep.subr.mxu0 0.0
        %1254 = vmatpush1.xpose.msra.mxu0 0.0
        %1255 = vmatprep.subr.mxu0 0.0
        %1256 = vmatpush1.xpose.msra.mxu0 0.0
        %1257 = vmatprep.subr.mxu0 0.0
        %1258 = vmatpush1.xpose.msra.mxu0 0.0
        %1259 = vmatprep.subr.mxu0 0.0
        %1260 = vmatpush1.xpose.msra.mxu0 0.0
        %1261 = vmatprep.subr.mxu0 0.0
        %1262 = vmatpush1.xpose.msra.mxu0 0.0
        %1263 = vmatprep.subr.mxu0 0.0
        %1264 = vmatpush1.xpose.msra.mxu0 0.0
        %1265 = vmatprep.mubr.f32.mxu0 0.0
        %1266 = vmatmul.mubr.f32.gmra.mrb[0].mxu0 %v1169
        %v1267 = vpop.f32.mrb[0].mxu0
        %v1268 = vadd.f32 0.0, %v1267
        %v1269 = vpop.f32.mrb[0].mxu0
        %1270 = vmatprep.mubr.f32.mxu0 0.0
        %1271 = vmatmul.mubr.f32.gmra.mrb[0].mxu0 %v1171
        %v1272 = vpop.f32.mrb[0].mxu0
        %v1273 = vadd.f32 0.0, %v1272
        %v1274 = vpop.f32.mrb[0].mxu0
        %1275 = vmatprep.mubr.f32.mxu0 0.0
        %1276 = vmatmul.mubr.f32.gmra.mrb[0].mxu0 %v1173
        %v1277 = vpop.f32.mrb[0].mxu0
        %v1278 = vadd.f32 0.0, %v1277
        %v1279 = vpop.f32.mrb[0].mxu0
        %1280 = vmatprep.mubr.f32.mxu0 0.0
        %1281 = vmatmul.mubr.f32.gmra.mrb[0].mxu0 %v1175
        %v1282 = vpop.f32.mrb[0].mxu0
        %v1283 = vadd.f32 0.0, %v1282
        %v1284 = vpop.f32.mrb[0].mxu0
        %1285 = vmatprep.mubr.f32.mxu0 0.0
        %1286 = vmatmul.mubr.f32.gmra.mrb[0].mxu0 %v1177
        %v1287 = vpop.f32.mrb[0].mxu0
        %v1288 = vadd.f32 0.0, %v1287
        %v1289 = vpop.f32.mrb[0].mxu0
        %1290 = vmatprep.mubr.f32.mxu0 0.0
        %1291 = vmatmul.mubr.f32.gmra.mrb[0].mxu0 %v1179
        %v1292 = vpop.f32.mrb[0].mxu0
        %v1293 = vadd.f32 0.0, %v1292
        %v1294 = vpop.f32.mrb[0].mxu0
        %1295 = vmatprep.mubr.f32.mxu0 0.0
        %1296 = vmatmul.mubr.f32.gmra.mrb[0].mxu0 %v1181
        %v1297 = vpop.f32.mrb[0].mxu0
        %v1298 = vadd.f32 0.0, %v1297
        %v1299 = vpop.f32.mrb[0].mxu0
        %1300 = vmatprep.mubr.f32.mxu0 0.0
        %1301 = vmatmul.mubr.f32.gmra.mrb[0].mxu0 %v1183
        %v1302 = vpop.f32.mrb[0].mxu0
        %v1303 = vadd.f32 0.0, %v1302
        %v1304 = vpop.f32.mrb[0].mxu0
        %1305 = vdwg.mxu0
        %v1306 = vsel %vm894, %v743, 0
        %v1308 = vsel %vm894, %v745, 0
        %v1310 = vsel %vm894, %v747, 0
        %v1312 = vsel %vm894, %v749, 0
        %v1314 = vsel %vm894, %v751, 0
        %v1316 = vsel %vm894, %v753, 0
        %v1318 = vsel %vm894, %v755, 0
        %v1320 = vsel %vm894, %v757, 0
        %v1322 = vsel %vm894, %v799, 0
        %v1324 = vsel %vm894, %v801, 0
        %v1326 = vsel %vm894, %v803, 0
        %v1328 = vsel %vm894, %v805, 0
        %v1330 = vsel %vm894, %v807, 0
        %v1332 = vsel %vm894, %v809, 0
        %v1334 = vsel %vm894, %v811, 0
        %v1336 = vsel %vm894, %v813, 0
        %1338 = vmatprep.subr.mxu0 0.0
        %1339 = vmatpush1.xpose.msra.mxu0 %v1322
        %1340 = vmatprep.subr.mxu0 0.0
        %1341 = vmatpush1.xpose.msra.mxu0 %v1324
        %1342 = vmatprep.subr.mxu0 0.0
        %1343 = vmatpush1.xpose.msra.mxu0 %v1326
        %1344 = vmatprep.subr.mxu0 0.0
        %1345 = vmatpush1.xpose.msra.mxu0 %v1328
        %1346 = vmatprep.subr.mxu0 0.0
        %1347 = vmatpush1.xpose.msra.mxu0 %v1330
        %1348 = vmatprep.subr.mxu0 0.0
        %1349 = vmatpush1.xpose.msra.mxu0 %v1332
        %1350 = vmatprep.subr.mxu0 0.0
        %1351 = vmatpush1.xpose.msra.mxu0 %v1334
        %1352 = vmatprep.subr.mxu0 0.0
        %1353 = vmatpush1.xpose.msra.mxu0 %v1336
        %1354 = vmatprep.subr.mxu0 0.0
        %1355 = vmatpush1.xpose.msra.mxu0 0.0
        %1356 = vmatprep.subr.mxu0 0.0
        %1357 = vmatpush1.xpose.msra.mxu0 0.0
        %1358 = vmatprep.subr.mxu0 0.0
        %1359 = vmatpush1.xpose.msra.mxu0 0.0
        %1360 = vmatprep.subr.mxu0 0.0
        %1361 = vmatpush1.xpose.msra.mxu0 0.0
        %1362 = vmatprep.subr.mxu0 0.0
        %1363 = vmatpush1.xpose.msra.mxu0 0.0
        %1364 = vmatprep.subr.mxu0 0.0
        %1365 = vmatpush1.xpose.msra.mxu0 0.0
        %1366 = vmatprep.subr.mxu0 0.0
        %1367 = vmatpush1.xpose.msra.mxu0 0.0
        %1368 = vmatprep.subr.mxu0 0.0
        %1369 = vmatpush1.xpose.msra.mxu0 0.0
        %1370 = vmatprep.subr.mxu0 0.0
        %1371 = vmatpush1.xpose.msra.mxu0 0.0
        %1372 = vmatprep.subr.mxu0 0.0
        %1373 = vmatpush1.xpose.msra.mxu0 0.0
        %1374 = vmatprep.subr.mxu0 0.0
        %1375 = vmatpush1.xpose.msra.mxu0 0.0
        %1376 = vmatprep.subr.mxu0 0.0
        %1377 = vmatpush1.xpose.msra.mxu0 0.0
        %1378 = vmatprep.subr.mxu0 0.0
        %1379 = vmatpush1.xpose.msra.mxu0 0.0
        %1380 = vmatprep.subr.mxu0 0.0
        %1381 = vmatpush1.xpose.msra.mxu0 0.0
        %1382 = vmatprep.subr.mxu0 0.0
        %1383 = vmatpush1.xpose.msra.mxu0 0.0
        %1384 = vmatprep.subr.mxu0 0.0
        %1385 = vmatpush1.xpose.msra.mxu0 0.0
        %1386 = vmatprep.subr.mxu0 0.0
        %1387 = vmatpush1.xpose.msra.mxu0 0.0
        %1388 = vmatprep.subr.mxu0 0.0
        %1389 = vmatpush1.xpose.msra.mxu0 0.0
        %1390 = vmatprep.subr.mxu0 0.0
        %1391 = vmatpush1.xpose.msra.mxu0 0.0
        %1392 = vmatprep.subr.mxu0 0.0
        %1393 = vmatpush1.xpose.msra.mxu0 0.0
        %1394 = vmatprep.subr.mxu0 0.0
        %1395 = vmatpush1.xpose.msra.mxu0 0.0
        %1396 = vmatprep.subr.mxu0 0.0
        %1397 = vmatpush1.xpose.msra.mxu0 0.0
        %1398 = vmatprep.subr.mxu0 0.0
        %1399 = vmatpush1.xpose.msra.mxu0 0.0
        %1400 = vmatprep.subr.mxu0 0.0
        %1401 = vmatpush1.xpose.msra.mxu0 0.0
        %1402 = vmatprep.mubr.f32.mxu0 0.0
        %1403 = vmatmul.mubr.f32.gmra.mrb[0].mxu0 %v1306
        %v1404 = vpop.f32.mrb[0].mxu0
        %v1405 = vadd.f32 0.0, %v1404
        %v1406 = vpop.f32.mrb[0].mxu0
        %1407 = vmatprep.mubr.f32.mxu0 0.0
        %1408 = vmatmul.mubr.f32.gmra.mrb[0].mxu0 %v1308
        %v1409 = vpop.f32.mrb[0].mxu0
        %v1410 = vadd.f32 0.0, %v1409
        %v1411 = vpop.f32.mrb[0].mxu0
        %1412 = vmatprep.mubr.f32.mxu0 0.0
        %1413 = vmatmul.mubr.f32.gmra.mrb[0].mxu0 %v1310
        %v1414 = vpop.f32.mrb[0].mxu0
        %v1415 = vadd.f32 0.0, %v1414
        %v1416 = vpop.f32.mrb[0].mxu0
        %1417 = vmatprep.mubr.f32.mxu0 0.0
        %1418 = vmatmul.mubr.f32.gmra.mrb[0].mxu0 %v1312
        %v1419 = vpop.f32.mrb[0].mxu0
        %v1420 = vadd.f32 0.0, %v1419
        %v1421 = vpop.f32.mrb[0].mxu0
        %1422 = vmatprep.mubr.f32.mxu0 0.0
        %1423 = vmatmul.mubr.f32.gmra.mrb[0].mxu0 %v1314
        %v1424 = vpop.f32.mrb[0].mxu0
        %v1425 = vadd.f32 0.0, %v1424
        %v1426 = vpop.f32.mrb[0].mxu0
        %1427 = vmatprep.mubr.f32.mxu0 0.0
        %1428 = vmatmul.mubr.f32.gmra.mrb[0].mxu0 %v1316
        %v1429 = vpop.f32.mrb[0].mxu0
        %v1430 = vadd.f32 0.0, %v1429
        %v1431 = vpop.f32.mrb[0].mxu0
        %1432 = vmatprep.mubr.f32.mxu0 0.0
        %1433 = vmatmul.mubr.f32.gmra.mrb[0].mxu0 %v1318
        %v1434 = vpop.f32.mrb[0].mxu0
        %v1435 = vadd.f32 0.0, %v1434
        %v1436 = vpop.f32.mrb[0].mxu0
        %1437 = vmatprep.mubr.f32.mxu0 0.0
        %1438 = vmatmul.mubr.f32.gmra.mrb[0].mxu0 %v1320
        %v1439 = vpop.f32.mrb[0].mxu0
        %v1440 = vadd.f32 0.0, %v1439
        %v1441 = vpop.f32.mrb[0].mxu0
        %1442 = vdwg.mxu0
        %v1443 = vmul.f32 %v994, 0.17677669
        %v1444 = vmul.f32 %v999, 0.17677669
        %v1445 = vmul.f32 %v1004, 0.17677669
        %v1446 = vmul.f32 %v1009, 0.17677669
        %v1447 = vmul.f32 %v1014, 0.17677669
        %v1448 = vmul.f32 %v1019, 0.17677669
        %v1449 = vmul.f32 %v1024, 0.17677669
        %v1450 = vmul.f32 %v1029, 0.17677669
        %v1451 = vmul.f32 %v1131, 0.17677669
        %v1452 = vmul.f32 %v1136, 0.17677669
        %v1453 = vmul.f32 %v1141, 0.17677669
        %v1454 = vmul.f32 %v1146, 0.17677669
        %v1455 = vmul.f32 %v1151, 0.17677669
        %v1456 = vmul.f32 %v1156, 0.17677669
        %v1457 = vmul.f32 %v1161, 0.17677669
        %v1458 = vmul.f32 %v1166, 0.17677669
        %v1459 = vmul.f32 %v1268, 0.17677669
        %v1460 = vmul.f32 %v1273, 0.17677669
        %v1461 = vmul.f32 %v1278, 0.17677669
        %v1462 = vmul.f32 %v1283, 0.17677669
        %v1463 = vmul.f32 %v1288, 0.17677669
        %v1464 = vmul.f32 %v1293, 0.17677669
        %v1465 = vmul.f32 %v1298, 0.17677669
        %v1466 = vmul.f32 %v1303, 0.17677669
        %v1467 = vmul.f32 %v1405, 0.17677669
        %v1468 = vmul.f32 %v1410, 0.17677669
        %v1469 = vmul.f32 %v1415, 0.17677669
        %v1470 = vmul.f32 %v1420, 0.17677669
        %v1471 = vmul.f32 %v1425, 0.17677669
        %v1472 = vmul.f32 %v1430, 0.17677669
        %v1473 = vmul.f32 %v1435, 0.17677669
        %v1474 = vmul.f32 %v1440, 0.17677669
        %vm1475 = vcmask 523264
        %v1476 = vsel %vm1475, %v1443, -inf
        %1477 = vmax.xlane.f32.xlu0 %v1476
        %v1478 = vpop.xlane.xlu0 %1477
        %v1479 = vsel %vm1475, %v1444, -inf
        %1480 = vmax.xlane.f32.xlu0 %v1479
        %v1481 = vpop.xlane.xlu0 %1480
        %v1482 = vsel %vm1475, %v1445, -inf
        %1483 = vmax.xlane.f32.xlu0 %v1482
        %v1484 = vpop.xlane.xlu0 %1483
        %v1485 = vsel %vm1475, %v1446, -inf
        %1486 = vmax.xlane.f32.xlu0 %v1485
        %v1487 = vpop.xlane.xlu0 %1486
        %v1488 = vsel %vm1475, %v1447, -inf
        %1489 = vmax.xlane.f32.xlu0 %v1488
        %v1490 = vpop.xlane.xlu0 %1489
        %v1491 = vsel %vm1475, %v1448, -inf
        %1492 = vmax.xlane.f32.xlu0 %v1491
        %v1493 = vpop.xlane.xlu0 %1492
        %v1494 = vsel %vm1475, %v1449, -inf
        %1495 = vmax.xlane.f32.xlu0 %v1494
        %v1496 = vpop.xlane.xlu0 %1495
        %v1497 = vsel %vm1475, %v1450, -inf
        %1498 = vmax.xlane.f32.xlu0 %v1497
        %v1499 = vpop.xlane.xlu0 %1498
        %v1500 = vsel %vm1475, %v1451, -inf
        %1501 = vmax.xlane.f32.xlu0 %v1500
        %v1502 = vpop.xlane.xlu0 %1501
        %v1503 = vsel %vm1475, %v1452, -inf
        %1504 = vmax.xlane.f32.xlu0 %v1503
        %v1505 = vpop.xlane.xlu0 %1504
        %v1506 = vsel %vm1475, %v1453, -inf
        %1507 = vmax.xlane.f32.xlu0 %v1506
        %v1508 = vpop.xlane.xlu0 %1507
        %v1509 = vsel %vm1475, %v1454, -inf
        %1510 = vmax.xlane.f32.xlu0 %v1509
        %v1511 = vpop.xlane.xlu0 %1510
        %v1512 = vsel %vm1475, %v1455, -inf
        %1513 = vmax.xlane.f32.xlu0 %v1512
        %v1514 = vpop.xlane.xlu0 %1513
        %v1515 = vsel %vm1475, %v1456, -inf
        %1516 = vmax.xlane.f32.xlu0 %v1515
        %v1517 = vpop.xlane.xlu0 %1516
        %v1518 = vsel %vm1475, %v1457, -inf
        %1519 = vmax.xlane.f32.xlu0 %v1518
        %v1520 = vpop.xlane.xlu0 %1519
        %v1521 = vsel %vm1475, %v1458, -inf
        %1522 = vmax.xlane.f32.xlu0 %v1521
        %v1523 = vpop.xlane.xlu0 %1522
        %v1524 = vsel %vm1475, %v1459, -inf
        %1525 = vmax.xlane.f32.xlu0 %v1524
        %v1526 = vpop.xlane.xlu0 %1525
        %v1527 = vsel %vm1475, %v1460, -inf
        %1528 = vmax.xlane.f32.xlu0 %v1527
        %v1529 = vpop.xlane.xlu0 %1528
        %v1530 = vsel %vm1475, %v1461, -inf
        %1531 = vmax.xlane.f32.xlu0 %v1530
        %v1532 = vpop.xlane.xlu0 %1531
        %v1533 = vsel %vm1475, %v1462, -inf
        %1534 = vmax.xlane.f32.xlu0 %v1533
        %v1535 = vpop.xlane.xlu0 %1534
        %v1536 = vsel %vm1475, %v1463, -inf
        %1537 = vmax.xlane.f32.xlu0 %v1536
        %v1538 = vpop.xlane.xlu0 %1537
        %v1539 = vsel %vm1475, %v1464, -inf
        %1540 = vmax.xlane.f32.xlu0 %v1539
        %v1541 = vpop.xlane.xlu0 %1540
        %v1542 = vsel %vm1475, %v1465, -inf
        %1543 = vmax.xlane.f32.xlu0 %v1542
        %v1544 = vpop.xlane.xlu0 %1543
        %v1545 = vsel %vm1475, %v1466, -inf
        %1546 = vmax.xlane.f32.xlu0 %v1545
        %v1547 = vpop.xlane.xlu0 %1546
        %v1548 = vsel %vm1475, %v1467, -inf
        %1549 = vmax.xlane.f32.xlu0 %v1548
        %v1550 = vpop.xlane.xlu0 %1549
        %v1551 = vsel %vm1475, %v1468, -inf
        %1552 = vmax.xlane.f32.xlu0 %v1551
        %v1553 = vpop.xlane.xlu0 %1552
        %v1554 = vsel %vm1475, %v1469, -inf
        %1555 = vmax.xlane.f32.xlu0 %v1554
        %v1556 = vpop.xlane.xlu0 %1555
        %v1557 = vsel %vm1475, %v1470, -inf
        %1558 = vmax.xlane.f32.xlu0 %v1557
        %v1559 = vpop.xlane.xlu0 %1558
        %v1560 = vsel %vm1475, %v1471, -inf
        %1561 = vmax.xlane.f32.xlu0 %v1560
        %v1562 = vpop.xlane.xlu0 %1561
        %v1563 = vsel %vm1475, %v1472, -inf
        %1564 = vmax.xlane.f32.xlu0 %v1563
        %v1565 = vpop.xlane.xlu0 %1564
        %v1566 = vsel %vm1475, %v1473, -inf
        %1567 = vmax.xlane.f32.xlu0 %v1566
        %v1568 = vpop.xlane.xlu0 %1567
        %v1569 = vsel %vm1475, %v1474, -inf
        %1570 = vmax.xlane.f32.xlu0 %v1569
        %v1571 = vpop.xlane.xlu0 %1570
        %v1572 = vsub.f32 %v1443, %v1478
        %v1573 = vsub.f32 %v1444, %v1481
        %v1574 = vsub.f32 %v1445, %v1484
        %v1575 = vsub.f32 %v1446, %v1487
        %v1576 = vsub.f32 %v1447, %v1490
        %v1577 = vsub.f32 %v1448, %v1493
        %v1578 = vsub.f32 %v1449, %v1496
        %v1579 = vsub.f32 %v1450, %v1499
        %v1580 = vsub.f32 %v1451, %v1502
        %v1581 = vsub.f32 %v1452, %v1505
        %v1582 = vsub.f32 %v1453, %v1508
        %v1583 = vsub.f32 %v1454, %v1511
        %v1584 = vsub.f32 %v1455, %v1514
        %v1585 = vsub.f32 %v1456, %v1517
        %v1586 = vsub.f32 %v1457, %v1520
        %v1587 = vsub.f32 %v1458, %v1523
        %v1588 = vsub.f32 %v1459, %v1526
        %v1589 = vsub.f32 %v1460, %v1529
        %v1590 = vsub.f32 %v1461, %v1532
        %v1591 = vsub.f32 %v1462, %v1535
        %v1592 = vsub.f32 %v1463, %v1538
        %v1593 = vsub.f32 %v1464, %v1541
        %v1594 = vsub.f32 %v1465, %v1544
        %v1595 = vsub.f32 %v1466, %v1547
        %v1596 = vsub.f32 %v1467, %v1550
        %v1597 = vsub.f32 %v1468, %v1553
        %v1598 = vsub.f32 %v1469, %v1556
        %v1599 = vsub.f32 %v1470, %v1559
        %v1600 = vsub.f32 %v1471, %v1562
        %v1601 = vsub.f32 %v1472, %v1565
        %v1602 = vsub.f32 %v1473, %v1568
        %v1603 = vsub.f32 %v1474, %v1571
        %v1604 = vmul.f32 %v1572, 1.442695
        %v1605 = vpow.pop %v1604
        %v1606 = vmul.f32 %v1573, 1.442695
        %v1607 = vpow.pop %v1606
        %v1608 = vmul.f32 %v1574, 1.442695
        %v1609 = vpow.pop %v1608
        %v1610 = vmul.f32 %v1575, 1.442695
        %v1611 = vpow.pop %v1610
        %v1612 = vmul.f32 %v1576, 1.442695
        %v1613 = vpow.pop %v1612
        %v1614 = vmul.f32 %v1577, 1.442695
        %v1615 = vpow.pop %v1614
        %v1616 = vmul.f32 %v1578, 1.442695
        %v1617 = vpow.pop %v1616
        %v1618 = vmul.f32 %v1579, 1.442695
        %v1619 = vpow.pop %v1618
        %v1620 = vmul.f32 %v1580, 1.442695
        %v1621 = vpow.pop %v1620
        %v1622 = vmul.f32 %v1581, 1.442695
        %v1623 = vpow.pop %v1622
        %v1624 = vmul.f32 %v1582, 1.442695
        %v1625 = vpow.pop %v1624
        %v1626 = vmul.f32 %v1583, 1.442695
        %v1627 = vpow.pop %v1626
        %v1628 = vmul.f32 %v1584, 1.442695
        %v1629 = vpow.pop %v1628
        %v1630 = vmul.f32 %v1585, 1.442695
        %v1631 = vpow.pop %v1630
        %v1632 = vmul.f32 %v1586, 1.442695
        %v1633 = vpow.pop %v1632
        %v1634 = vmul.f32 %v1587, 1.442695
        %v1635 = vpow.pop %v1634
        %v1636 = vmul.f32 %v1588, 1.442695
        %v1637 = vpow.pop %v1636
        %v1638 = vmul.f32 %v1589, 1.442695
        %v1639 = vpow.pop %v1638
        %v1640 = vmul.f32 %v1590, 1.442695
        %v1641 = vpow.pop %v1640
        %v1642 = vmul.f32 %v1591, 1.442695
        %v1643 = vpow.pop %v1642
        %v1644 = vmul.f32 %v1592, 1.442695
        %v1645 = vpow.pop %v1644
        %v1646 = vmul.f32 %v1593, 1.442695
        %v1647 = vpow.pop %v1646
        %v1648 = vmul.f32 %v1594, 1.442695
        %v1649 = vpow.pop %v1648
        %v1650 = vmul.f32 %v1595, 1.442695
        %v1651 = vpow.pop %v1650
        %v1652 = vmul.f32 %v1596, 1.442695
        %v1653 = vpow.pop %v1652
        %v1654 = vmul.f32 %v1597, 1.442695
        %v1655 = vpow.pop %v1654
        %v1656 = vmul.f32 %v1598, 1.442695
        %v1657 = vpow.pop %v1656
        %v1658 = vmul.f32 %v1599, 1.442695
        %v1659 = vpow.pop %v1658
        %v1660 = vmul.f32 %v1600, 1.442695
        %v1661 = vpow.pop %v1660
        %v1662 = vmul.f32 %v1601, 1.442695
        %v1663 = vpow.pop %v1662
        %v1664 = vmul.f32 %v1602, 1.442695
        %v1665 = vpow.pop %v1664
        %v1666 = vmul.f32 %v1603, 1.442695
        %v1667 = vpow.pop %v1666
        %v1668 = vsel %vm1475, %v1605, 0.0
        %1669 = vadd.xlane.f32.xlu0 %v1668
        %v1670 = vpop.xlane.xlu0 %1669
        %v1671 = vsel %vm1475, %v1607, 0.0
        %1672 = vadd.xlane.f32.xlu0 %v1671
        %v1673 = vpop.xlane.xlu0 %1672
        %v1674 = vsel %vm1475, %v1609, 0.0
        %1675 = vadd.xlane.f32.xlu0 %v1674
        %v1676 = vpop.xlane.xlu0 %1675
        %v1677 = vsel %vm1475, %v1611, 0.0
        %1678 = vadd.xlane.f32.xlu0 %v1677
        %v1679 = vpop.xlane.xlu0 %1678
        %v1680 = vsel %vm1475, %v1613, 0.0
        %1681 = vadd.xlane.f32.xlu0 %v1680
        %v1682 = vpop.xlane.xlu0 %1681
        %v1683 = vsel %vm1475, %v1615, 0.0
        %1684 = vadd.xlane.f32.xlu0 %v1683
        %v1685 = vpop.xlane.xlu0 %1684
        %v1686 = vsel %vm1475, %v1617, 0.0
        %1687 = vadd.xlane.f32.xlu0 %v1686
        %v1688 = vpop.xlane.xlu0 %1687
        %v1689 = vsel %vm1475, %v1619, 0.0
        %1690 = vadd.xlane.f32.xlu0 %v1689
        %v1691 = vpop.xlane.xlu0 %1690
        %v1692 = vsel %vm1475, %v1621, 0.0
        %1693 = vadd.xlane.f32.xlu0 %v1692
        %v1694 = vpop.xlane.xlu0 %1693
        %v1695 = vsel %vm1475, %v1623, 0.0
        %1696 = vadd.xlane.f32.xlu0 %v1695
        %v1697 = vpop.xlane.xlu0 %1696
        %v1698 = vsel %vm1475, %v1625, 0.0
        %1699 = vadd.xlane.f32.xlu0 %v1698
        %v1700 = vpop.xlane.xlu0 %1699
        %v1701 = vsel %vm1475, %v1627, 0.0
        %1702 = vadd.xlane.f32.xlu0 %v1701
        %v1703 = vpop.xlane.xlu0 %1702
        %v1704 = vsel %vm1475, %v1629, 0.0
        %1705 = vadd.xlane.f32.xlu0 %v1704
        %v1706 = vpop.xlane.xlu0 %1705
        %v1707 = vsel %vm1475, %v1631, 0.0
        %1708 = vadd.xlane.f32.xlu0 %v1707
        %v1709 = vpop.xlane.xlu0 %1708
        %v1710 = vsel %vm1475, %v1633, 0.0
        %1711 = vadd.xlane.f32.xlu0 %v1710
        %v1712 = vpop.xlane.xlu0 %1711
        %v1713 = vsel %vm1475, %v1635, 0.0
        %1714 = vadd.xlane.f32.xlu0 %v1713
        %v1715 = vpop.xlane.xlu0 %1714
        %v1716 = vsel %vm1475, %v1637, 0.0
        %1717 = vadd.xlane.f32.xlu0 %v1716
        %v1718 = vpop.xlane.xlu0 %1717
        %v1719 = vsel %vm1475, %v1639, 0.0
        %1720 = vadd.xlane.f32.xlu0 %v1719
        %v1721 = vpop.xlane.xlu0 %1720
        %v1722 = vsel %vm1475, %v1641, 0.0
        %1723 = vadd.xlane.f32.xlu0 %v1722
        %v1724 = vpop.xlane.xlu0 %1723
        %v1725 = vsel %vm1475, %v1643, 0.0
        %1726 = vadd.xlane.f32.xlu0 %v1725
        %v1727 = vpop.xlane.xlu0 %1726
        %v1728 = vsel %vm1475, %v1645, 0.0
        %1729 = vadd.xlane.f32.xlu0 %v1728
        %v1730 = vpop.xlane.xlu0 %1729
        %v1731 = vsel %vm1475, %v1647, 0.0
        %1732 = vadd.xlane.f32.xlu0 %v1731
        %v1733 = vpop.xlane.xlu0 %1732
        %v1734 = vsel %vm1475, %v1649, 0.0
        %1735 = vadd.xlane.f32.xlu0 %v1734
        %v1736 = vpop.xlane.xlu0 %1735
        %v1737 = vsel %vm1475, %v1651, 0.0
        %1738 = vadd.xlane.f32.xlu0 %v1737
        %v1739 = vpop.xlane.xlu0 %1738
        %v1740 = vsel %vm1475, %v1653, 0.0
        %1741 = vadd.xlane.f32.xlu0 %v1740
        %v1742 = vpop.xlane.xlu0 %1741
        %v1743 = vsel %vm1475, %v1655, 0.0
        %1744 = vadd.xlane.f32.xlu0 %v1743
        %v1745 = vpop.xlane.xlu0 %1744
        %v1746 = vsel %vm1475, %v1657, 0.0
        %1747 = vadd.xlane.f32.xlu0 %v1746
        %v1748 = vpop.xlane.xlu0 %1747
        %v1749 = vsel %vm1475, %v1659, 0.0
        %1750 = vadd.xlane.f32.xlu0 %v1749
        %v1751 = vpop.xlane.xlu0 %1750
        %v1752 = vsel %vm1475, %v1661, 0.0
        %1753 = vadd.xlane.f32.xlu0 %v1752
        %v1754 = vpop.xlane.xlu0 %1753
        %v1755 = vsel %vm1475, %v1663, 0.0
        %1756 = vadd.xlane.f32.xlu0 %v1755
        %v1757 = vpop.xlane.xlu0 %1756
        %v1758 = vsel %vm1475, %v1665, 0.0
        %1759 = vadd.xlane.f32.xlu0 %v1758
        %v1760 = vpop.xlane.xlu0 %1759
        %v1761 = vsel %vm1475, %v1667, 0.0
        %1762 = vadd.xlane.f32.xlu0 %v1761
        %v1763 = vpop.xlane.xlu0 %1762
        %v1764 = vrcp.pop %v1670
        %v1765 = vrcp.pop %v1673
        %v1766 = vrcp.pop %v1676
        %v1767 = vrcp.pop %v1679
        %v1768 = vrcp.pop %v1682
        %v1769 = vrcp.pop %v1685
        %v1770 = vrcp.pop %v1688
        %v1771 = vrcp.pop %v1691
        %v1772 = vrcp.pop %v1694
        %v1773 = vrcp.pop %v1697
        %v1774 = vrcp.pop %v1700
        %v1775 = vrcp.pop %v1703
        %v1776 = vrcp.pop %v1706
        %v1777 = vrcp.pop %v1709
        %v1778 = vrcp.pop %v1712
        %v1779 = vrcp.pop %v1715
        %v1780 = vrcp.pop %v1718
        %v1781 = vrcp.pop %v1721
        %v1782 = vrcp.pop %v1724
        %v1783 = vrcp.pop %v1727
        %v1784 = vrcp.pop %v1730
        %v1785 = vrcp.pop %v1733
        %v1786 = vrcp.pop %v1736
        %v1787 = vrcp.pop %v1739
        %v1788 = vrcp.pop %v1742
        %v1789 = vrcp.pop %v1745
        %v1790 = vrcp.pop %v1748
        %v1791 = vrcp.pop %v1751
        %v1792 = vrcp.pop %v1754
        %v1793 = vrcp.pop %v1757
        %v1794 = vrcp.pop %v1760
        %v1795 = vrcp.pop %v1763
        %v1796 = vmul.f32 %v1605, %v1764
        %v1797 = vmul.f32 %v1607, %v1765
        %v1798 = vmul.f32 %v1609, %v1766
        %v1799 = vmul.f32 %v1611, %v1767
        %v1800 = vmul.f32 %v1613, %v1768
        %v1801 = vmul.f32 %v1615, %v1769
        %v1802 = vmul.f32 %v1617, %v1770
        %v1803 = vmul.f32 %v1619, %v1771
        %v1804 = vmul.f32 %v1621, %v1772
        %v1805 = vmul.f32 %v1623, %v1773
        %v1806 = vmul.f32 %v1625, %v1774
        %v1807 = vmul.f32 %v1627, %v1775
        %v1808 = vmul.f32 %v1629, %v1776
        %v1809 = vmul.f32 %v1631, %v1777
        %v1810 = vmul.f32 %v1633, %v1778
        %v1811 = vmul.f32 %v1635, %v1779
        %v1812 = vmul.f32 %v1637, %v1780
        %v1813 = vmul.f32 %v1639, %v1781
        %v1814 = vmul.f32 %v1641, %v1782
        %v1815 = vmul.f32 %v1643, %v1783
        %v1816 = vmul.f32 %v1645, %v1784
        %v1817 = vmul.f32 %v1647, %v1785
        %v1818 = vmul.f32 %v1649, %v1786
        %v1819 = vmul.f32 %v1651, %v1787
        %v1820 = vmul.f32 %v1653, %v1788
        %v1821 = vmul.f32 %v1655, %v1789
        %v1822 = vmul.f32 %v1657, %v1790
        %v1823 = vmul.f32 %v1659, %v1791
        %v1824 = vmul.f32 %v1661, %v1792
        %v1825 = vmul.f32 %v1663, %v1793
        %v1826 = vmul.f32 %v1665, %v1794
        %v1827 = vmul.f32 %v1667, %v1795
        %v1829 = vsel %vm1475, %v1796, 0
        %v1832 = vsel %vm1475, %v1797, 0
        %v1835 = vsel %vm1475, %v1798, 0
        %v1838 = vsel %vm1475, %v1799, 0
        %v1841 = vsel %vm1475, %v1800, 0
        %v1844 = vsel %vm1475, %v1801, 0
        %v1847 = vsel %vm1475, %v1802, 0
        %v1850 = vsel %vm1475, %v1803, 0
        %1852 = vmatprep.subr.mxu0 0.0
        %1853 = vmatpush1.msra.mxu0 %v664
        %1854 = vmatprep.subr.mxu0 0.0
        %1855 = vmatpush1.msra.mxu0 %v669
        %1856 = vmatprep.subr.mxu0 0.0
        %1857 = vmatpush1.msra.mxu0 %v674
        %1858 = vmatprep.subr.mxu0 0.0
        %1859 = vmatpush1.msra.mxu0 %v679
        %1860 = vmatprep.subr.mxu0 0.0
        %1861 = vmatpush1.msra.mxu0 %v684
        %1862 = vmatprep.subr.mxu0 0.0
        %1863 = vmatpush1.msra.mxu0 %v689
        %1864 = vmatprep.subr.mxu0 0.0
        %1865 = vmatpush1.msra.mxu0 %v694
        %1866 = vmatprep.subr.mxu0 0.0
        %1867 = vmatpush1.msra.mxu0 %v699
        %1868 = vmatprep.subr.mxu0 0.0
        %1869 = vmatpush1.msra.mxu0 0.0
        %1870 = vmatprep.subr.mxu0 0.0
        %1871 = vmatpush1.msra.mxu0 0.0
        %1872 = vmatprep.subr.mxu0 0.0
        %1873 = vmatpush1.msra.mxu0 0.0
        %1874 = vmatprep.subr.mxu0 0.0
        %1875 = vmatpush1.msra.mxu0 0.0
        %1876 = vmatprep.subr.mxu0 0.0
        %1877 = vmatpush1.msra.mxu0 0.0
        %1878 = vmatprep.subr.mxu0 0.0
        %1879 = vmatpush1.msra.mxu0 0.0
        %1880 = vmatprep.subr.mxu0 0.0
        %1881 = vmatpush1.msra.mxu0 0.0
        %1882 = vmatprep.subr.mxu0 0.0
        %1883 = vmatpush1.msra.mxu0 0.0
        %1884 = vmatprep.subr.mxu0 0.0
        %1885 = vmatpush1.msra.mxu0 0.0
        %1886 = vmatprep.subr.mxu0 0.0
        %1887 = vmatpush1.msra.mxu0 0.0
        %1888 = vmatprep.subr.mxu0 0.0
        %1889 = vmatpush1.msra.mxu0 0.0
        %1890 = vmatprep.subr.mxu0 0.0
        %1891 = vmatpush1.msra.mxu0 0.0
        %1892 = vmatprep.subr.mxu0 0.0
        %1893 = vmatpush1.msra.mxu0 0.0
        %1894 = vmatprep.subr.mxu0 0.0
        %1895 = vmatpush1.msra.mxu0 0.0
        %1896 = vmatprep.subr.mxu0 0.0
        %1897 = vmatpush1.msra.mxu0 0.0
        %1898 = vmatprep.subr.mxu0 0.0
        %1899 = vmatpush1.msra.mxu0 0.0
        %1900 = vmatprep.subr.mxu0 0.0
        %1901 = vmatpush1.msra.mxu0 0.0
        %1902 = vmatprep.subr.mxu0 0.0
        %1903 = vmatpush1.msra.mxu0 0.0
        %1904 = vmatprep.subr.mxu0 0.0
        %1905 = vmatpush1.msra.mxu0 0.0
        %1906 = vmatprep.subr.mxu0 0.0
        %1907 = vmatpush1.msra.mxu0 0.0
        %1908 = vmatprep.subr.mxu0 0.0
        %1909 = vmatpush1.msra.mxu0 0.0
        %1910 = vmatprep.subr.mxu0 0.0
        %1911 = vmatpush1.msra.mxu0 0.0
        %1912 = vmatprep.subr.mxu0 0.0
        %1913 = vmatpush1.msra.mxu0 0.0
        %1914 = vmatprep.subr.mxu0 0.0
        %1915 = vmatpush1.msra.mxu0 0.0
        %1916 = vmatprep.mubr.f32.mxu0 0.0
        %1917 = vmatmul.mubr.f32.gmra.mrb[0].mxu0 %v1829
        %v1918 = vpop.f32.mrb[0].mxu0
        %v1919 = vadd.f32 0.0, %v1918
        %v1920 = vpop.f32.mrb[0].mxu0
        %1921 = vmatprep.mubr.f32.mxu0 0.0
        %1922 = vmatmul.mubr.f32.gmra.mrb[0].mxu0 %v1832
        %v1923 = vpop.f32.mrb[0].mxu0
        %v1924 = vadd.f32 0.0, %v1923
        %v1925 = vpop.f32.mrb[0].mxu0
        %1926 = vmatprep.mubr.f32.mxu0 0.0
        %1927 = vmatmul.mubr.f32.gmra.mrb[0].mxu0 %v1835
        %v1928 = vpop.f32.mrb[0].mxu0
        %v1929 = vadd.f32 0.0, %v1928
        %v1930 = vpop.f32.mrb[0].mxu0
        %1931 = vmatprep.mubr.f32.mxu0 0.0
        %1932 = vmatmul.mubr.f32.gmra.mrb[0].mxu0 %v1838
        %v1933 = vpop.f32.mrb[0].mxu0
        %v1934 = vadd.f32 0.0, %v1933
        %v1935 = vpop.f32.mrb[0].mxu0
        %1936 = vmatprep.mubr.f32.mxu0 0.0
        %1937 = vmatmul.mubr.f32.gmra.mrb[0].mxu0 %v1841
        %v1938 = vpop.f32.mrb[0].mxu0
        %v1939 = vadd.f32 0.0, %v1938
        %v1940 = vpop.f32.mrb[0].mxu0
        %1941 = vmatprep.mubr.f32.mxu0 0.0
        %1942 = vmatmul.mubr.f32.gmra.mrb[0].mxu0 %v1844
        %v1943 = vpop.f32.mrb[0].mxu0
        %v1944 = vadd.f32 0.0, %v1943
        %v1945 = vpop.f32.mrb[0].mxu0
        %1946 = vmatprep.mubr.f32.mxu0 0.0
        %1947 = vmatmul.mubr.f32.gmra.mrb[0].mxu0 %v1847
        %v1948 = vpop.f32.mrb[0].mxu0
        %v1949 = vadd.f32 0.0, %v1948
        %v1950 = vpop.f32.mrb[0].mxu0
        %1951 = vmatprep.mubr.f32.mxu0 0.0
        %1952 = vmatmul.mubr.f32.gmra.mrb[0].mxu0 %v1850
        %v1953 = vpop.f32.mrb[0].mxu0
        %v1954 = vadd.f32 0.0, %v1953
        %v1955 = vpop.f32.mrb[0].mxu0
        %1956 = vdwg.mxu0
        %v1958 = vsel %vm1475, %v1804, 0
        %v1961 = vsel %vm1475, %v1805, 0
        %v1964 = vsel %vm1475, %v1806, 0
        %v1967 = vsel %vm1475, %v1807, 0
        %v1970 = vsel %vm1475, %v1808, 0
        %v1973 = vsel %vm1475, %v1809, 0
        %v1976 = vsel %vm1475, %v1810, 0
        %v1979 = vsel %vm1475, %v1811, 0
        %1981 = vmatprep.subr.mxu0 0.0
        %1982 = vmatpush1.msra.mxu0 %v823
        %1983 = vmatprep.subr.mxu0 0.0
        %1984 = vmatpush1.msra.mxu0 %v825
        %1985 = vmatprep.subr.mxu0 0.0
        %1986 = vmatpush1.msra.mxu0 %v827
        %1987 = vmatprep.subr.mxu0 0.0
        %1988 = vmatpush1.msra.mxu0 %v829
        %1989 = vmatprep.subr.mxu0 0.0
        %1990 = vmatpush1.msra.mxu0 %v831
        %1991 = vmatprep.subr.mxu0 0.0
        %1992 = vmatpush1.msra.mxu0 %v833
        %1993 = vmatprep.subr.mxu0 0.0
        %1994 = vmatpush1.msra.mxu0 %v835
        %1995 = vmatprep.subr.mxu0 0.0
        %1996 = vmatpush1.msra.mxu0 %v837
        %1997 = vmatprep.subr.mxu0 0.0
        %1998 = vmatpush1.msra.mxu0 0.0
        %1999 = vmatprep.subr.mxu0 0.0
        %2000 = vmatpush1.msra.mxu0 0.0
        %2001 = vmatprep.subr.mxu0 0.0
        %2002 = vmatpush1.msra.mxu0 0.0
        %2003 = vmatprep.subr.mxu0 0.0
        %2004 = vmatpush1.msra.mxu0 0.0
        %2005 = vmatprep.subr.mxu0 0.0
        %2006 = vmatpush1.msra.mxu0 0.0
        %2007 = vmatprep.subr.mxu0 0.0
        %2008 = vmatpush1.msra.mxu0 0.0
        %2009 = vmatprep.subr.mxu0 0.0
        %2010 = vmatpush1.msra.mxu0 0.0
        %2011 = vmatprep.subr.mxu0 0.0
        %2012 = vmatpush1.msra.mxu0 0.0
        %2013 = vmatprep.subr.mxu0 0.0
        %2014 = vmatpush1.msra.mxu0 0.0
        %2015 = vmatprep.subr.mxu0 0.0
        %2016 = vmatpush1.msra.mxu0 0.0
        %2017 = vmatprep.subr.mxu0 0.0
        %2018 = vmatpush1.msra.mxu0 0.0
        %2019 = vmatprep.subr.mxu0 0.0
        %2020 = vmatpush1.msra.mxu0 0.0
        %2021 = vmatprep.subr.mxu0 0.0
        %2022 = vmatpush1.msra.mxu0 0.0
        %2023 = vmatprep.subr.mxu0 0.0
        %2024 = vmatpush1.msra.mxu0 0.0
        %2025 = vmatprep.subr.mxu0 0.0
        %2026 = vmatpush1.msra.mxu0 0.0
        %2027 = vmatprep.subr.mxu0 0.0
        %2028 = vmatpush1.msra.mxu0 0.0
        %2029 = vmatprep.subr.mxu0 0.0
        %2030 = vmatpush1.msra.mxu0 0.0
        %2031 = vmatprep.subr.mxu0 0.0
        %2032 = vmatpush1.msra.mxu0 0.0
        %2033 = vmatprep.subr.mxu0 0.0
        %2034 = vmatpush1.msra.mxu0 0.0
        %2035 = vmatprep.subr.mxu0 0.0
        %2036 = vmatpush1.msra.mxu0 0.0
        %2037 = vmatprep.subr.mxu0 0.0
        %2038 = vmatpush1.msra.mxu0 0.0
        %2039 = vmatprep.subr.mxu0 0.0
        %2040 = vmatpush1.msra.mxu0 0.0
        %2041 = vmatprep.subr.mxu0 0.0
        %2042 = vmatpush1.msra.mxu0 0.0
        %2043 = vmatprep.subr.mxu0 0.0
        %2044 = vmatpush1.msra.mxu0 0.0
        %2045 = vmatprep.mubr.f32.mxu0 0.0
        %2046 = vmatmul.mubr.f32.gmra.mrb[0].mxu0 %v1958
        %v2047 = vpop.f32.mrb[0].mxu0
        %v2048 = vadd.f32 0.0, %v2047
        %v2049 = vpop.f32.mrb[0].mxu0
        %2050 = vmatprep.mubr.f32.mxu0 0.0
        %2051 = vmatmul.mubr.f32.gmra.mrb[0].mxu0 %v1961
        %v2052 = vpop.f32.mrb[0].mxu0
        %v2053 = vadd.f32 0.0, %v2052
        %v2054 = vpop.f32.mrb[0].mxu0
        %2055 = vmatprep.mubr.f32.mxu0 0.0
        %2056 = vmatmul.mubr.f32.gmra.mrb[0].mxu0 %v1964
        %v2057 = vpop.f32.mrb[0].mxu0
        %v2058 = vadd.f32 0.0, %v2057
        %v2059 = vpop.f32.mrb[0].mxu0
        %2060 = vmatprep.mubr.f32.mxu0 0.0
        %2061 = vmatmul.mubr.f32.gmra.mrb[0].mxu0 %v1967
        %v2062 = vpop.f32.mrb[0].mxu0
        %v2063 = vadd.f32 0.0, %v2062
        %v2064 = vpop.f32.mrb[0].mxu0
        %2065 = vmatprep.mubr.f32.mxu0 0.0
        %2066 = vmatmul.mubr.f32.gmra.mrb[0].mxu0 %v1970
        %v2067 = vpop.f32.mrb[0].mxu0
        %v2068 = vadd.f32 0.0, %v2067
        %v2069 = vpop.f32.mrb[0].mxu0
        %2070 = vmatprep.mubr.f32.mxu0 0.0
        %2071 = vmatmul.mubr.f32.gmra.mrb[0].mxu0 %v1973
        %v2072 = vpop.f32.mrb[0].mxu0
        %v2073 = vadd.f32 0.0, %v2072
        %v2074 = vpop.f32.mrb[0].mxu0
        %2075 = vmatprep.mubr.f32.mxu0 0.0
        %2076 = vmatmul.mubr.f32.gmra.mrb[0].mxu0 %v1976
        %v2077 = vpop.f32.mrb[0].mxu0
        %v2078 = vadd.f32 0.0, %v2077
        %v2079 = vpop.f32.mrb[0].mxu0
        %2080 = vmatprep.mubr.f32.mxu0 0.0
        %2081 = vmatmul.mubr.f32.gmra.mrb[0].mxu0 %v1979
        %v2082 = vpop.f32.mrb[0].mxu0
        %v2083 = vadd.f32 0.0, %v2082
        %v2084 = vpop.f32.mrb[0].mxu0
        %2085 = vdwg.mxu0
        %v2087 = vsel %vm1475, %v1812, 0
        %v2090 = vsel %vm1475, %v1813, 0
        %v2093 = vsel %vm1475, %v1814, 0
        %v2096 = vsel %vm1475, %v1815, 0
        %v2099 = vsel %vm1475, %v1816, 0
        %v2102 = vsel %vm1475, %v1817, 0
        %v2105 = vsel %vm1475, %v1818, 0
        %v2108 = vsel %vm1475, %v1819, 0
        %2110 = vmatprep.subr.mxu0 0.0
        %2111 = vmatpush1.msra.mxu0 %v847
        %2112 = vmatprep.subr.mxu0 0.0
        %2113 = vmatpush1.msra.mxu0 %v849
        %2114 = vmatprep.subr.mxu0 0.0
        %2115 = vmatpush1.msra.mxu0 %v851
        %2116 = vmatprep.subr.mxu0 0.0
        %2117 = vmatpush1.msra.mxu0 %v853
        %2118 = vmatprep.subr.mxu0 0.0
        %2119 = vmatpush1.msra.mxu0 %v855
        %2120 = vmatprep.subr.mxu0 0.0
        %2121 = vmatpush1.msra.mxu0 %v857
        %2122 = vmatprep.subr.mxu0 0.0
        %2123 = vmatpush1.msra.mxu0 %v859
        %2124 = vmatprep.subr.mxu0 0.0
        %2125 = vmatpush1.msra.mxu0 %v861
        %2126 = vmatprep.subr.mxu0 0.0
        %2127 = vmatpush1.msra.mxu0 0.0
        %2128 = vmatprep.subr.mxu0 0.0
        %2129 = vmatpush1.msra.mxu0 0.0
        %2130 = vmatprep.subr.mxu0 0.0
        %2131 = vmatpush1.msra.mxu0 0.0
        %2132 = vmatprep.subr.mxu0 0.0
        %2133 = vmatpush1.msra.mxu0 0.0
        %2134 = vmatprep.subr.mxu0 0.0
        %2135 = vmatpush1.msra.mxu0 0.0
        %2136 = vmatprep.subr.mxu0 0.0
        %2137 = vmatpush1.msra.mxu0 0.0
        %2138 = vmatprep.subr.mxu0 0.0
        %2139 = vmatpush1.msra.mxu0 0.0
        %2140 = vmatprep.subr.mxu0 0.0
        %2141 = vmatpush1.msra.mxu0 0.0
        %2142 = vmatprep.subr.mxu0 0.0
        %2143 = vmatpush1.msra.mxu0 0.0
        %2144 = vmatprep.subr.mxu0 0.0
        %2145 = vmatpush1.msra.mxu0 0.0
        %2146 = vmatprep.subr.mxu0 0.0
        %2147 = vmatpush1.msra.mxu0 0.0
        %2148 = vmatprep.subr.mxu0 0.0
        %2149 = vmatpush1.msra.mxu0 0.0
        %2150 = vmatprep.subr.mxu0 0.0
        %2151 = vmatpush1.msra.mxu0 0.0
        %2152 = vmatprep.subr.mxu0 0.0
        %2153 = vmatpush1.msra.mxu0 0.0
        %2154 = vmatprep.subr.mxu0 0.0
        %2155 = vmatpush1.msra.mxu0 0.0
        %2156 = vmatprep.subr.mxu0 0.0
        %2157 = vmatpush1.msra.mxu0 0.0
        %2158 = vmatprep.subr.mxu0 0.0
        %2159 = vmatpush1.msra.mxu0 0.0
        %2160 = vmatprep.subr.mxu0 0.0
        %2161 = vmatpush1.msra.mxu0 0.0
        %2162 = vmatprep.subr.mxu0 0.0
        %2163 = vmatpush1.msra.mxu0 0.0
        %2164 = vmatprep.subr.mxu0 0.0
        %2165 = vmatpush1.msra.mxu0 0.0
        %2166 = vmatprep.subr.mxu0 0.0
        %2167 = vmatpush1.msra.mxu0 0.0
        %2168 = vmatprep.subr.mxu0 0.0
        %2169 = vmatpush1.msra.mxu0 0.0
        %2170 = vmatprep.subr.mxu0 0.0
        %2171 = vmatpush1.msra.mxu0 0.0
        %2172 = vmatprep.subr.mxu0 0.0
        %2173 = vmatpush1.msra.mxu0 0.0
        %2174 = vmatprep.mubr.f32.mxu0 0.0
        %2175 = vmatmul.mubr.f32.gmra.mrb[0].mxu0 %v2087
        %v2176 = vpop.f32.mrb[0].mxu0
        %v2177 = vadd.f32 0.0, %v2176
        %v2178 = vpop.f32.mrb[0].mxu0
        %2179 = vmatprep.mubr.f32.mxu0 0.0
        %2180 = vmatmul.mubr.f32.gmra.mrb[0].mxu0 %v2090
        %v2181 = vpop.f32.mrb[0].mxu0
        %v2182 = vadd.f32 0.0, %v2181
        %v2183 = vpop.f32.mrb[0].mxu0
        %2184 = vmatprep.mubr.f32.mxu0 0.0
        %2185 = vmatmul.mubr.f32.gmra.mrb[0].mxu0 %v2093
        %v2186 = vpop.f32.mrb[0].mxu0
        %v2187 = vadd.f32 0.0, %v2186
        %v2188 = vpop.f32.mrb[0].mxu0
        %2189 = vmatprep.mubr.f32.mxu0 0.0
        %2190 = vmatmul.mubr.f32.gmra.mrb[0].mxu0 %v2096
        %v2191 = vpop.f32.mrb[0].mxu0
        %v2192 = vadd.f32 0.0, %v2191
        %v2193 = vpop.f32.mrb[0].mxu0
        %2194 = vmatprep.mubr.f32.mxu0 0.0
        %2195 = vmatmul.mubr.f32.gmra.mrb[0].mxu0 %v2099
        %v2196 = vpop.f32.mrb[0].mxu0
        %v2197 = vadd.f32 0.0, %v2196
        %v2198 = vpop.f32.mrb[0].mxu0
        %2199 = vmatprep.mubr.f32.mxu0 0.0
        %2200 = vmatmul.mubr.f32.gmra.mrb[0].mxu0 %v2102
        %v2201 = vpop.f32.mrb[0].mxu0
        %v2202 = vadd.f32 0.0, %v2201
        %v2203 = vpop.f32.mrb[0].mxu0
        %2204 = vmatprep.mubr.f32.mxu0 0.0
        %2205 = vmatmul.mubr.f32.gmra.mrb[0].mxu0 %v2105
        %v2206 = vpop.f32.mrb[0].mxu0
        %v2207 = vadd.f32 0.0, %v2206
        %v2208 = vpop.f32.mrb[0].mxu0
        %2209 = vmatprep.mubr.f32.mxu0 0.0
        %2210 = vmatmul.mubr.f32.gmra.mrb[0].mxu0 %v2108
        %v2211 = vpop.f32.mrb[0].mxu0
        %v2212 = vadd.f32 0.0, %v2211
        %v2213 = vpop.f32.mrb[0].mxu0
        %2214 = vdwg.mxu0
        %v2216 = vsel %vm1475, %v1820, 0
        %v2219 = vsel %vm1475, %v1821, 0
        %v2222 = vsel %vm1475, %v1822, 0
        %v2225 = vsel %vm1475, %v1823, 0
        %v2228 = vsel %vm1475, %v1824, 0
        %v2231 = vsel %vm1475, %v1825, 0
        %v2234 = vsel %vm1475, %v1826, 0
        %v2237 = vsel %vm1475, %v1827, 0
        %2239 = vmatprep.subr.mxu0 0.0
        %2240 = vmatpush1.msra.mxu0 %v871
        %2241 = vmatprep.subr.mxu0 0.0
        %2242 = vmatpush1.msra.mxu0 %v873
        %2243 = vmatprep.subr.mxu0 0.0
        %2244 = vmatpush1.msra.mxu0 %v875
        %2245 = vmatprep.subr.mxu0 0.0
        %2246 = vmatpush1.msra.mxu0 %v877
        %2247 = vmatprep.subr.mxu0 0.0
        %2248 = vmatpush1.msra.mxu0 %v879
        %2249 = vmatprep.subr.mxu0 0.0
        %2250 = vmatpush1.msra.mxu0 %v881
        %2251 = vmatprep.subr.mxu0 0.0
        %2252 = vmatpush1.msra.mxu0 %v883
        %2253 = vmatprep.subr.mxu0 0.0
        %2254 = vmatpush1.msra.mxu0 %v885
        %2255 = vmatprep.subr.mxu0 0.0
        %2256 = vmatpush1.msra.mxu0 0.0
        %2257 = vmatprep.subr.mxu0 0.0
        %2258 = vmatpush1.msra.mxu0 0.0
        %2259 = vmatprep.subr.mxu0 0.0
        %2260 = vmatpush1.msra.mxu0 0.0
        %2261 = vmatprep.subr.mxu0 0.0
        %2262 = vmatpush1.msra.mxu0 0.0
        %2263 = vmatprep.subr.mxu0 0.0
        %2264 = vmatpush1.msra.mxu0 0.0
        %2265 = vmatprep.subr.mxu0 0.0
        %2266 = vmatpush1.msra.mxu0 0.0
        %2267 = vmatprep.subr.mxu0 0.0
        %2268 = vmatpush1.msra.mxu0 0.0
        %2269 = vmatprep.subr.mxu0 0.0
        %2270 = vmatpush1.msra.mxu0 0.0
        %2271 = vmatprep.subr.mxu0 0.0
        %2272 = vmatpush1.msra.mxu0 0.0
        %2273 = vmatprep.subr.mxu0 0.0
        %2274 = vmatpush1.msra.mxu0 0.0
        %2275 = vmatprep.subr.mxu0 0.0
        %2276 = vmatpush1.msra.mxu0 0.0
        %2277 = vmatprep.subr.mxu0 0.0
        %2278 = vmatpush1.msra.mxu0 0.0
        %2279 = vmatprep.subr.mxu0 0.0
        %2280 = vmatpush1.msra.mxu0 0.0
        %2281 = vmatprep.subr.mxu0 0.0
        %2282 = vmatpush1.msra.mxu0 0.0
        %2283 = vmatprep.subr.mxu0 0.0
        %2284 = vmatpush1.msra.mxu0 0.0
        %2285 = vmatprep.subr.mxu0 0.0
        %2286 = vmatpush1.msra.mxu0 0.0
        %2287 = vmatprep.subr.mxu0 0.0
        %2288 = vmatpush1.msra.mxu0 0.0
        %2289 = vmatprep.subr.mxu0 0.0
        %2290 = vmatpush1.msra.mxu0 0.0
        %2291 = vmatprep.subr.mxu0 0.0
        %2292 = vmatpush1.msra.mxu0 0.0
        %2293 = vmatprep.subr.mxu0 0.0
        %2294 = vmatpush1.msra.mxu0 0.0
        %2295 = vmatprep.subr.mxu0 0.0
        %2296 = vmatpush1.msra.mxu0 0.0
        %2297 = vmatprep.subr.mxu0 0.0
        %2298 = vmatpush1.msra.mxu0 0.0
        %2299 = vmatprep.subr.mxu0 0.0
        %2300 = vmatpush1.msra.mxu0 0.0
        %2301 = vmatprep.subr.mxu0 0.0
        %2302 = vmatpush1.msra.mxu0 0.0
        %2303 = vmatprep.mubr.f32.mxu0 0.0
        %2304 = vmatmul.mubr.f32.gmra.mrb[0].mxu0 %v2216
        %v2305 = vpop.f32.mrb[0].mxu0
        %v2306 = vadd.f32 0.0, %v2305
        %v2307 = vpop.f32.mrb[0].mxu0
        %2308 = vmatprep.mubr.f32.mxu0 0.0
        %2309 = vmatmul.mubr.f32.gmra.mrb[0].mxu0 %v2219
        %v2310 = vpop.f32.mrb[0].mxu0
        %v2311 = vadd.f32 0.0, %v2310
        %v2312 = vpop.f32.mrb[0].mxu0
        %2313 = vmatprep.mubr.f32.mxu0 0.0
        %2314 = vmatmul.mubr.f32.gmra.mrb[0].mxu0 %v2222
        %v2315 = vpop.f32.mrb[0].mxu0
        %v2316 = vadd.f32 0.0, %v2315
        %v2317 = vpop.f32.mrb[0].mxu0
        %2318 = vmatprep.mubr.f32.mxu0 0.0
        %2319 = vmatmul.mubr.f32.gmra.mrb[0].mxu0 %v2225
        %v2320 = vpop.f32.mrb[0].mxu0
        %v2321 = vadd.f32 0.0, %v2320
        %v2322 = vpop.f32.mrb[0].mxu0
        %2323 = vmatprep.mubr.f32.mxu0 0.0
        %2324 = vmatmul.mubr.f32.gmra.mrb[0].mxu0 %v2228
        %v2325 = vpop.f32.mrb[0].mxu0
        %v2326 = vadd.f32 0.0, %v2325
        %v2327 = vpop.f32.mrb[0].mxu0
        %2328 = vmatprep.mubr.f32.mxu0 0.0
        %2329 = vmatmul.mubr.f32.gmra.mrb[0].mxu0 %v2231
        %v2330 = vpop.f32.mrb[0].mxu0
        %v2331 = vadd.f32 0.0, %v2330
        %v2332 = vpop.f32.mrb[0].mxu0
        %2333 = vmatprep.mubr.f32.mxu0 0.0
        %2334 = vmatmul.mubr.f32.gmra.mrb[0].mxu0 %v2234
        %v2335 = vpop.f32.mrb[0].mxu0
        %v2336 = vadd.f32 0.0, %v2335
        %v2337 = vpop.f32.mrb[0].mxu0
        %2338 = vmatprep.mubr.f32.mxu0 0.0
        %2339 = vmatmul.mubr.f32.gmra.mrb[0].mxu0 %v2237
        %v2340 = vpop.f32.mrb[0].mxu0
        %v2341 = vadd.f32 0.0, %v2340
        %v2342 = vpop.f32.mrb[0].mxu0
        %2343 = vdwg.mxu0
        %2352 = vrot.lane.b32.xlu0 %v2048, 32
        %v2353 = vpop.permute.xlu0 %2352
        %2354 = vrot.lane.b32.xlu0 %v2053, 32
        %v2355 = vpop.permute.xlu0 %2354
        %2356 = vrot.lane.b32.xlu0 %v2058, 32
        %v2357 = vpop.permute.xlu0 %2356
        %2358 = vrot.lane.b32.xlu0 %v2063, 32
        %v2359 = vpop.permute.xlu0 %2358
        %2360 = vrot.lane.b32.xlu0 %v2068, 32
        %v2361 = vpop.permute.xlu0 %2360
        %2362 = vrot.lane.b32.xlu0 %v2073, 32
        %v2363 = vpop.permute.xlu0 %2362
        %2364 = vrot.lane.b32.xlu0 %v2078, 32
        %v2365 = vpop.permute.xlu0 %2364
        %2366 = vrot.lane.b32.xlu0 %v2083, 32
        %v2367 = vpop.permute.xlu0 %2366
        %2384 = vrot.lane.b32.xlu0 %v2177, 64
        %v2385 = vpop.permute.xlu0 %2384
        %2386 = vrot.lane.b32.xlu0 %v2182, 64
        %v2387 = vpop.permute.xlu0 %2386
        %2388 = vrot.lane.b32.xlu0 %v2187, 64
        %v2389 = vpop.permute.xlu0 %2388
        %2390 = vrot.lane.b32.xlu0 %v2192, 64
        %v2391 = vpop.permute.xlu0 %2390
        %2392 = vrot.lane.b32.xlu0 %v2197, 64
        %v2393 = vpop.permute.xlu0 %2392
        %2394 = vrot.lane.b32.xlu0 %v2202, 64
        %v2395 = vpop.permute.xlu0 %2394
        %2396 = vrot.lane.b32.xlu0 %v2207, 64
        %v2397 = vpop.permute.xlu0 %2396
        %2398 = vrot.lane.b32.xlu0 %v2212, 64
        %v2399 = vpop.permute.xlu0 %2398
        %2416 = vrot.lane.b32.xlu0 %v2306, 96
        %v2417 = vpop.permute.xlu0 %2416
        %2418 = vrot.lane.b32.xlu0 %v2311, 96
        %v2419 = vpop.permute.xlu0 %2418
        %2420 = vrot.lane.b32.xlu0 %v2316, 96
        %v2421 = vpop.permute.xlu0 %2420
        %2422 = vrot.lane.b32.xlu0 %v2321, 96
        %v2423 = vpop.permute.xlu0 %2422
        %2424 = vrot.lane.b32.xlu0 %v2326, 96
        %v2425 = vpop.permute.xlu0 %2424
        %2426 = vrot.lane.b32.xlu0 %v2331, 96
        %v2427 = vpop.permute.xlu0 %2426
        %2428 = vrot.lane.b32.xlu0 %v2336, 96
        %v2429 = vpop.permute.xlu0 %2428
        %2430 = vrot.lane.b32.xlu0 %v2341, 96
        %v2431 = vpop.permute.xlu0 %2430
        %v2440 = vsel %vm894, %v1919, %v2353
        %v2441 = vsel %vm894, %v1924, %v2355
        %v2442 = vsel %vm894, %v1929, %v2357
        %v2443 = vsel %vm894, %v1934, %v2359
        %v2444 = vsel %vm894, %v1939, %v2361
        %v2445 = vsel %vm894, %v1944, %v2363
        %v2446 = vsel %vm894, %v1949, %v2365
        %v2447 = vsel %vm894, %v1954, %v2367
        %v2448 = vsel %vm1475, %v2440, %v2385
        %v2449 = vsel %vm1475, %v2441, %v2387
        %v2450 = vsel %vm1475, %v2442, %v2389
        %v2451 = vsel %vm1475, %v2443, %v2391
        %v2452 = vsel %vm1475, %v2444, %v2393
        %v2453 = vsel %vm1475, %v2445, %v2395
        %v2454 = vsel %vm1475, %v2446, %v2397
        %v2455 = vsel %vm1475, %v2447, %v2399
        %vm2456 = vcmask 785408
        %v2457 = vsel %vm2456, %v2448, %v2417
        %v2458 = vsel %vm2456, %v2449, %v2419
        %v2459 = vsel %vm2456, %v2450, %v2421
        %v2460 = vsel %vm2456, %v2451, %v2423
        %v2461 = vsel %vm2456, %v2452, %v2425
        %v2462 = vsel %vm2456, %v2453, %v2427
        %v2463 = vsel %vm2456, %v2454, %v2429
        %v2464 = vsel %vm2456, %v2455, %v2431
        %v2465 = vld [vmem:[%s5] sm:$0xff]
        %v2466 = vld [vmem:[%s5 + $0x8] sm:$0xff]
        %v2467 = vld [vmem:[%s5 + $0x10] sm:$0xff]
        %v2468 = vld [vmem:[%s5 + $0x18] sm:$0xff]
        %v2469 = vld [vmem:[%s5 + $0x20] sm:$0xff]
        %v2470 = vld [vmem:[%s5 + $0x28] sm:$0xff]
        %v2471 = vld [vmem:[%s5 + $0x30] sm:$0xff]
        %v2472 = vld [vmem:[%s5 + $0x38] sm:$0xff]
        %v2473 = vld [vmem:[%s5 + $0x40] sm:$0xff]
        %v2474 = vld [vmem:[%s5 + $0x48] sm:$0xff]
        %v2475 = vld [vmem:[%s5 + $0x50] sm:$0xff]
        %v2476 = vld [vmem:[%s5 + $0x58] sm:$0xff]
        %v2477 = vld [vmem:[%s5 + $0x60] sm:$0xff]
        %v2478 = vld [vmem:[%s5 + $0x68] sm:$0xff]
        %v2479 = vld [vmem:[%s5 + $0x70] sm:$0xff]
        %v2480 = vld [vmem:[%s5 + $0x78] sm:$0xff]
        %v2481 = vld [vmem:[#allocation6] sm:$0x1]
        %v2483 = vlaneseq
        %v2484 = vshrl.u32 %v2483, 7
        %v2485 = vsub.s32 0, %v2484
        %v2486 = vrot.slane %v2481, %v2485
        %2488 = vmatprep.subr.mxu0 0.0
        %2489 = vmatpush1.msra.mxu0 %v2465
        %2490 = vmatprep.subr.mxu0 0.0
        %2491 = vmatpush1.msra.mxu0 %v2466
        %2492 = vmatprep.subr.mxu0 0.0
        %2493 = vmatpush1.msra.mxu0 %v2467
        %2494 = vmatprep.subr.mxu0 0.0
        %2495 = vmatpush1.msra.mxu0 %v2468
        %2496 = vmatprep.subr.mxu0 0.0
        %2497 = vmatpush1.msra.mxu0 %v2469
        %2498 = vmatprep.subr.mxu0 0.0
        %2499 = vmatpush1.msra.mxu0 %v2470
        %2500 = vmatprep.subr.mxu0 0.0
        %2501 = vmatpush1.msra.mxu0 %v2471
        %2502 = vmatprep.subr.mxu0 0.0
        %2503 = vmatpush1.msra.mxu0 %v2472
        %2504 = vmatprep.subr.mxu0 0.0
        %2505 = vmatpush1.msra.mxu0 %v2473
        %2506 = vmatprep.subr.mxu0 0.0
        %2507 = vmatpush1.msra.mxu0 %v2474
        %2508 = vmatprep.subr.mxu0 0.0
        %2509 = vmatpush1.msra.mxu0 %v2475
        %2510 = vmatprep.subr.mxu0 0.0
        %2511 = vmatpush1.msra.mxu0 %v2476
        %2512 = vmatprep.subr.mxu0 0.0
        %2513 = vmatpush1.msra.mxu0 %v2477
        %2514 = vmatprep.subr.mxu0 0.0
        %2515 = vmatpush1.msra.mxu0 %v2478
        %2516 = vmatprep.subr.mxu0 0.0
        %2517 = vmatpush1.msra.mxu0 %v2479
        %2518 = vmatprep.subr.mxu0 0.0
        %2519 = vmatpush1.msra.mxu0 %v2480
        %2520 = vmatprep.subr.mxu0 0.0
        %2521 = vmatpush1.msra.mxu0 0.0
        %2522 = vmatprep.subr.mxu0 0.0
        %2523 = vmatpush1.msra.mxu0 0.0
        %2524 = vmatprep.subr.mxu0 0.0
        %2525 = vmatpush1.msra.mxu0 0.0
        %2526 = vmatprep.subr.mxu0 0.0
        %2527 = vmatpush1.msra.mxu0 0.0
        %2528 = vmatprep.subr.mxu0 0.0
        %2529 = vmatpush1.msra.mxu0 0.0
        %2530 = vmatprep.subr.mxu0 0.0
        %2531 = vmatpush1.msra.mxu0 0.0
        %2532 = vmatprep.subr.mxu0 0.0
        %2533 = vmatpush1.msra.mxu0 0.0
        %2534 = vmatprep.subr.mxu0 0.0
        %2535 = vmatpush1.msra.mxu0 0.0
        %2536 = vmatprep.subr.mxu0 0.0
        %2537 = vmatpush1.msra.mxu0 0.0
        %2538 = vmatprep.subr.mxu0 0.0
        %2539 = vmatpush1.msra.mxu0 0.0
        %2540 = vmatprep.subr.mxu0 0.0
        %2541 = vmatpush1.msra.mxu0 0.0
        %2542 = vmatprep.subr.mxu0 0.0
        %2543 = vmatpush1.msra.mxu0 0.0
        %2544 = vmatprep.subr.mxu0 0.0
        %2545 = vmatpush1.msra.mxu0 0.0
        %2546 = vmatprep.subr.mxu0 0.0
        %2547 = vmatpush1.msra.mxu0 0.0
        %2548 = vmatprep.subr.mxu0 0.0
        %2549 = vmatpush1.msra.mxu0 0.0
        %2550 = vmatprep.subr.mxu0 0.0
        %2551 = vmatpush1.msra.mxu0 0.0
        %2552 = vmatprep.mubr.f32.mxu0 0.0
        %2553 = vmatmul.mubr.f32.gmra.mrb[0].mxu0 %v2457
        %v2554 = vpop.f32.mrb[0].mxu0
        %v2555 = vadd.f32 %v2486, %v2554
        %v2556 = vpop.f32.mrb[0].mxu0
        %2557 = vmatprep.mubr.f32.mxu0 0.0
        %2558 = vmatmul.mubr.f32.gmra.mrb[0].mxu0 %v2458
        %v2559 = vpop.f32.mrb[0].mxu0
        %v2560 = vadd.f32 %v2486, %v2559
        %v2561 = vpop.f32.mrb[0].mxu0
        %2562 = vmatprep.mubr.f32.mxu0 0.0
        %2563 = vmatmul.mubr.f32.gmra.mrb[0].mxu0 %v2459
        %v2564 = vpop.f32.mrb[0].mxu0
        %v2565 = vadd.f32 %v2486, %v2564
        %v2566 = vpop.f32.mrb[0].mxu0
        %2567 = vmatprep.mubr.f32.mxu0 0.0
        %2568 = vmatmul.mubr.f32.gmra.mrb[0].mxu0 %v2460
        %v2569 = vpop.f32.mrb[0].mxu0
        %v2570 = vadd.f32 %v2486, %v2569
        %v2571 = vpop.f32.mrb[0].mxu0
        %2572 = vmatprep.mubr.f32.mxu0 0.0
        %2573 = vmatmul.mubr.f32.gmra.mrb[0].mxu0 %v2461
        %v2574 = vpop.f32.mrb[0].mxu0
        %v2575 = vadd.f32 %v2486, %v2574
        %v2576 = vpop.f32.mrb[0].mxu0
        %2577 = vmatprep.mubr.f32.mxu0 0.0
        %2578 = vmatmul.mubr.f32.gmra.mrb[0].mxu0 %v2462
        %v2579 = vpop.f32.mrb[0].mxu0
        %v2580 = vadd.f32 %v2486, %v2579
        %v2581 = vpop.f32.mrb[0].mxu0
        %2582 = vmatprep.mubr.f32.mxu0 0.0
        %2583 = vmatmul.mubr.f32.gmra.mrb[0].mxu0 %v2463
        %v2584 = vpop.f32.mrb[0].mxu0
        %v2585 = vadd.f32 %v2486, %v2584
        %v2586 = vpop.f32.mrb[0].mxu0
        %2587 = vmatprep.mubr.f32.mxu0 0.0
        %2588 = vmatmul.mubr.f32.gmra.mrb[0].mxu0 %v2464
        %v2589 = vpop.f32.mrb[0].mxu0
        %v2590 = vadd.f32 %v2486, %v2589
        %v2591 = vpop.f32.mrb[0].mxu0
        %2592 = vdwg.mxu0
        %v2593 = vadd.f32 %v317, %v2555
        %v2594 = vadd.f32 %v318, %v2560
        %v2595 = vadd.f32 %v319, %v2565
        %v2596 = vadd.f32 %v320, %v2570
        %v2597 = vadd.f32 %v321, %v2575
        %v2598 = vadd.f32 %v322, %v2580
        %v2599 = vadd.f32 %v323, %v2585
        %v2600 = vadd.f32 %v324, %v2590
        %2601 = vst [vmem:[%s316] sm:$0xff] %v2593
        %2602 = vst [vmem:[%s316 + $0x8] sm:$0xff] %v2594
        %2603 = vst [vmem:[%s316 + $0x10] sm:$0xff] %v2595
        %2604 = vst [vmem:[%s316 + $0x18] sm:$0xff] %v2596
        %2605 = vst [vmem:[%s316 + $0x20] sm:$0xff] %v2597
        %2606 = vst [vmem:[%s316 + $0x28] sm:$0xff] %v2598
        %2607 = vst [vmem:[%s316 + $0x30] sm:$0xff] %v2599
        %2608 = vst [vmem:[%s316 + $0x38] sm:$0xff] %v2600
        %p2609 = scmp.lt.s32.totalorder %s20, 1
        %s2610 = scalar_select %p2609, %s20, 1
        %s2611 = smul.addr %s2610, 8
        %s2612 = smul.addr %s2611, 8
        %s2613 = scalar_lea.vmem %s7, %s2612
        // Predicated region
        $region61: #{midblock_forward.4} parent=47 // pred_check
          %p2614 = pneg %p190
        $region62: #{midblock_forward.4} parent=47 // pred_check_branch
          %2616 = sbr.rel (%p2614) target = $region64
        $region63: #{midblock_forward.4} parent=47 // pred_region
          _
        $region64: #{midblock_forward.4} parent=47 // pred_fallthru
          _
      $region48: #{midblock_forward.4} parent=5 // pred_fallthru
        _
      %p2617 = scmp.le.s32.totalorder 2, %s15
      // Predicated region
      $region65: #{midblock_forward.4} parent=5 // pred_check
        %p2618 = pneg %p2617
      $region66: #{midblock_forward.4} parent=5 // pred_check_branch
        %2620 = sbr.rel (%p2618) target = $region68
      $region67: #{midblock_forward.4} parent=5 // pred_region
        %s2621 = ssub.s32 %s15, 2
        // Predicated region
        $region69: #{midblock_forward.4} parent=67 // pred_check
          %p2622 = pneg %p196
        $region70: #{midblock_forward.4} parent=67 // pred_check_branch
          %2624 = sbr.rel (%p2622) target = $region72
        $region71: #{midblock_forward.4} parent=67 // pred_region
          %p2625 = scmp.lt.s32.totalorder %s21, 1
          %s2626 = scalar_select %p2625, %s21, 1
          %s2627 = smul.addr %s2626, 8
          %s2628 = smul.addr %s2627, 8
          %s2629 = scalar_lea.vmem %s7, %s2628
        $region72: #{midblock_forward.4} parent=67 // pred_fallthru
          _
      $region68: #{midblock_forward.4} parent=5 // pred_fallthru
        _
    $region6: #{midblock_forward.4} parent=1 // loop_footer
      %s19 = sadd.s32 1, %s15
    $region7: #{midblock_forward.4} parent=1 // loop_footer_branch
      %14 = sbr.rel target = $region3
    $region8: #{midblock_forward.4} parent=1 // loop_exit
      _
    %2630 = vsyncpa [#allocation3], 1
    %s2631 = scalar_lea.sflag [#allocation3], 1
    %2632 = vsyncpa %s2631, 1
    %2633 = vsyncpa [#allocation5], 1

// kernel: midblock_forward.3
$region0: #{midblock_forward.3}
  #allocation0 [shape = 'u32[]', space=smem, size = 0x4, offset = 0x4, fixed_abs, tag = 'smem constant byte address 0x4 - core index']
  #allocation1 [shape = 'u32[144,128]{1,0:T(1,128)}', space=vmem, size = 0x12000, scoped, tag = 'internal scratch']
  #allocation2 [shape = 'f32[10,10,128]{2,1,0:T(8,128)}', space=vmem, size = 0x14000, scoped, tag = 'scratch operand']
  %s0 = inlined_call_operand.vmem [shape: f32[2,64,128], index: 0, kind: input, shape index: {}]
  %s1 = inlined_call_operand.vmem [shape: f32[2,1,32], index: 1, kind: input, shape index: {}]
  %s2 = inlined_call_operand.hbm [shape: f32[1152,128], index: 2, kind: input, shape index: {}]
  %s3 = inlined_call_operand.vmem [shape: f32[1,128], index: 3, kind: input, shape index: {}]
  %s4 = inlined_call_operand.vmem [shape: f32[1,128], index: 4, kind: input, shape index: {}]
  %s5 = inlined_call_operand.vmem [shape: f32[1,128], index: 5, kind: input, shape index: {}]
  %s6 = inlined_call_operand.vmem [shape: f32[32,128], index: 6, kind: input, shape index: {}]
  %s7 = inlined_call_operand.vmem [shape: f32[1,128], index: 7, kind: input, shape index: {}]
  %s8 = inlined_call_operand.hbm [shape: f32[1152,128], index: 8, kind: input, shape index: {}]
  %s9 = inlined_call_operand.vmem [shape: f32[1,128], index: 9, kind: input, shape index: {}]
  %s10 = inlined_call_operand.vmem [shape: f32[1,128], index: 10, kind: input, shape index: {}]
  %s11 = inlined_call_operand.vmem [shape: f32[1,128], index: 11, kind: input, shape index: {}]
  %s12 = inlined_call_operand.vmem [shape: f32[128,128], index: 12, kind: input, shape index: {}]
  %s13 = inlined_call_operand.vmem [shape: f32[2,64,128], index: 13, kind: output, shape index: {}]
  %s14 = sld [smem:[#allocation0]]
  $region93: #{midblock_forward.3} parent=0
    _
  %s16 = ssub.s32 1, %s14
  %s17 = scalar_select 0, %s16, %s14
  $region1: #{midblock_forward.3} parent=0
    #allocation3 [shape = 'u8[589824]{0}', space=vmem, size = 0x90000, scoped, tag = 'input window, operand 2, single buffered']
    #allocation4 [shape = 's32[2]{0}', space=sflag, size = 0x8, scoped, tag = 'scoped memory for midblock_forward.3']
    #allocation5 [shape = 'u8[589824]{0}', space=vmem, size = 0x90000, scoped, tag = 'input window, operand 8, single buffered']
    #allocation6 [shape = 's32[1]{0}', space=sflag, size = 0x4, scoped, tag = 'scoped memory for midblock_forward.3']
    %18 = vsyncpa [#allocation4], 0
    %19 = vsyncpa [#allocation6], 0
    loop: start=0, step=1, limit=4
    $region2: #{midblock_forward.3} parent=1 // loop_pre_header
      _
    $region3: #{midblock_forward.3} parent=1 // loop_header
      %s21 = sphi 0, %s25
      %p22 = scmp.ge.s32.totalorder %s21, 4
      %s31 = sphi 0, %s33
      %s34 = sphi 0, %s31
      %s35 = sphi 0, %s34
      %s51 = sphi 0, %s35
      %s57 = sphi 0, %s59
      %s60 = sphi 0, %s57
      %s61 = sphi 0, %s60
      %s77 = sphi 0, %s61
      %s81 = sphi 0, %s81
      %s83 = sphi 0, %s81
      %s84 = sphi 0, %s83
      %s98 = sphi 0, %s84
      %s102 = sphi 0, %s102
      %s104 = sphi 0, %s102
      %s105 = sphi 0, %s104
      %s119 = sphi 0, %s105
      %s123 = sphi 0, %s123
      %s125 = sphi 0, %s123
      %s126 = sphi 0, %s125
      %s140 = sphi 0, %s126
      %s144 = sphi 0, %s144
      %s146 = sphi 0, %s144
      %s147 = sphi 0, %s146
      %s161 = sphi 0, %s147
      %s165 = sphi 0, %s165
      %s167 = sphi 0, %s165
      %s168 = sphi 0, %s167
      %s182 = sphi 0, %s168
      %s186 = sphi 0, %s186
      %s188 = sphi 0, %s186
      %s189 = sphi 0, %s188
      %s203 = sphi 0, %s189
      %s207 = sphi 0, %s207
      %s209 = sphi 0, %s207
      %s210 = sphi 0, %s209
      %s224 = sphi 0, %s210
      %s228 = sphi 0, %s228
      %s230 = sphi 0, %s228
      %s231 = sphi 0, %s230
      %s245 = sphi 0, %s231
      %s249 = sphi 0, %s249
      %s251 = sphi 0, %s249
      %s252 = sphi 0, %s251
      %s266 = sphi 0, %s252
      %s270 = sphi 0, %s270
      %s272 = sphi 0, %s270
      %s273 = sphi 0, %s272
      %s287 = sphi 0, %s273
      %s291 = sphi 0, %s291
      %s293 = sphi 0, %s291
      %s294 = sphi 0, %s293
      %s308 = sphi 0, %s294
      %s314 = sphi 0, %s316
      %s317 = sphi 0, %s314
      %s318 = sphi 0, %s317
      %s334 = sphi 0, %s318
    $region4: #{midblock_forward.3} parent=1 // loop_header_branch
      %24 = sbr.rel (%p22) target = $region8
    $region5: #{midblock_forward.3} parent=1 // loop_body
      %s26 = ssub.s32 %s21, 1
      %s27 = ssub.s32 %s21, 2
      %s28 = sadd.s32 %s21, 1
      %s29 = ssub.s32 %s21, %s28
      %p30 = scmp.eq.s32.totalorder %s29, 0
      %s32 = sadd.s32 %s31, 1
      %s33 = scalar_select %p30, %s31, %s32
      %p36 = pneg %p30
      %p37 = scmp.eq.s32.totalorder %s21, 1
      %p38 = por %p36, %p37
      %p39 = scmp.ne.s32.totalorder %s31, %s34
      %p40 = scmp.eq.s32.totalorder %s21, 0
      %p41 = por %p39, %p40
      %p42 = scmp.ne.s32.totalorder %s31, %s34
      %p43 = scmp.eq.s32.totalorder %s26, 1
      %p44 = por %p42, %p43
      %p45 = scmp.ne.s32.totalorder %s34, %s35
      %p46 = scmp.eq.s32.totalorder %s26, 0
      %p47 = por %p45, %p46
      %p48 = scmp.ne.s32.totalorder %s34, %s35
      %p49 = scmp.eq.s32.totalorder %s27, 1
      %p50 = por %p48, %p49
      %p52 = scmp.ne.s32.totalorder %s35, %s51
      %p53 = scmp.eq.s32.totalorder %s27, 0
      %p54 = por %p52, %p53
      %s55 = ssub.s32 %s21, %s28
      %p56 = scmp.eq.s32.totalorder %s55, 0
      %s58 = sadd.s32 %s57, 1
      %s59 = scalar_select %p56, %s57, %s58
      %p62 = pneg %p56
      %p63 = scmp.eq.s32.totalorder %s21, 1
      %p64 = por %p62, %p63
      %p65 = scmp.ne.s32.totalorder %s57, %s60
      %p66 = scmp.eq.s32.totalorder %s21, 0
      %p67 = por %p65, %p66
      %p68 = scmp.ne.s32.totalorder %s57, %s60
      %p69 = scmp.eq.s32.totalorder %s26, 1
      %p70 = por %p68, %p69
      %p71 = scmp.ne.s32.totalorder %s60, %s61
      %p72 = scmp.eq.s32.totalorder %s26, 0
      %p73 = por %p71, %p72
      %p74 = scmp.ne.s32.totalorder %s60, %s61
      %p75 = scmp.eq.s32.totalorder %s27, 1
      %p76 = por %p74, %p75
      %p78 = scmp.ne.s32.totalorder %s61, %s77
      %p79 = scmp.eq.s32.totalorder %s27, 0
      %p80 = por %p78, %p79
      %s82 = sadd.s32 %s81, 1
      %p85 = scmp.eq.s32.totalorder %s21, 1
      %p86 = scmp.ne.s32.totalorder %s81, %s83
      %p87 = scmp.eq.s32.totalorder %s21, 0
      %p88 = por %p86, %p87
      %p89 = scmp.ne.s32.totalorder %s81, %s83
      %p90 = scmp.eq.s32.totalorder %s26, 1
      %p91 = por %p89, %p90
      %p92 = scmp.ne.s32.totalorder %s83, %s84
      %p93 = scmp.eq.s32.totalorder %s26, 0
      %p94 = por %p92, %p93
      %p95 = scmp.ne.s32.totalorder %s83, %s84
      %p96 = scmp.eq.s32.totalorder %s27, 1
      %p97 = por %p95, %p96
      %p99 = scmp.ne.s32.totalorder %s84, %s98
      %p100 = scmp.eq.s32.totalorder %s27, 0
      %p101 = por %p99, %p100
      %s103 = sadd.s32 %s102, 1
      %p106 = scmp.eq.s32.totalorder %s21, 1
      %p107 = scmp.ne.s32.totalorder %s102, %s104
      %p108 = scmp.eq.s32.totalorder %s21, 0
      %p109 = por %p107, %p108
      %p110 = scmp.ne.s32.totalorder %s102, %s104
      %p111 = scmp.eq.s32.totalorder %s26, 1
      %p112 = por %p110, %p111
      %p113 = scmp.ne.s32.totalorder %s104, %s105
      %p114 = scmp.eq.s32.totalorder %s26, 0
      %p115 = por %p113, %p114
      %p116 = scmp.ne.s32.totalorder %s104, %s105
      %p117 = scmp.eq.s32.totalorder %s27, 1
      %p118 = por %p116, %p117
      %p120 = scmp.ne.s32.totalorder %s105, %s119
      %p121 = scmp.eq.s32.totalorder %s27, 0
      %p122 = por %p120, %p121
      %s124 = sadd.s32 %s123, 1
      %p127 = scmp.eq.s32.totalorder %s21, 1
      %p128 = scmp.ne.s32.totalorder %s123, %s125
      %p129 = scmp.eq.s32.totalorder %s21, 0
      %p130 = por %p128, %p129
      %p131 = scmp.ne.s32.totalorder %s123, %s125
      %p132 = scmp.eq.s32.totalorder %s26, 1
      %p133 = por %p131, %p132
      %p134 = scmp.ne.s32.totalorder %s125, %s126
      %p135 = scmp.eq.s32.totalorder %s26, 0
      %p136 = por %p134, %p135
      %p137 = scmp.ne.s32.totalorder %s125, %s126
      %p138 = scmp.eq.s32.totalorder %s27, 1
      %p139 = por %p137, %p138
      %p141 = scmp.ne.s32.totalorder %s126, %s140
      %p142 = scmp.eq.s32.totalorder %s27, 0
      %p143 = por %p141, %p142
      %s145 = sadd.s32 %s144, 1
      %p148 = scmp.eq.s32.totalorder %s21, 1
      %p149 = scmp.ne.s32.totalorder %s144, %s146
      %p150 = scmp.eq.s32.totalorder %s21, 0
      %p151 = por %p149, %p150
      %p152 = scmp.ne.s32.totalorder %s144, %s146
      %p153 = scmp.eq.s32.totalorder %s26, 1
      %p154 = por %p152, %p153
      %p155 = scmp.ne.s32.totalorder %s146, %s147
      %p156 = scmp.eq.s32.totalorder %s26, 0
      %p157 = por %p155, %p156
      %p158 = scmp.ne.s32.totalorder %s146, %s147
      %p159 = scmp.eq.s32.totalorder %s27, 1
      %p160 = por %p158, %p159
      %p162 = scmp.ne.s32.totalorder %s147, %s161
      %p163 = scmp.eq.s32.totalorder %s27, 0
      %p164 = por %p162, %p163
      %s166 = sadd.s32 %s165, 1
      %p169 = scmp.eq.s32.totalorder %s21, 1
      %p170 = scmp.ne.s32.totalorder %s165, %s167
      %p171 = scmp.eq.s32.totalorder %s21, 0
      %p172 = por %p170, %p171
      %p173 = scmp.ne.s32.totalorder %s165, %s167
      %p174 = scmp.eq.s32.totalorder %s26, 1
      %p175 = por %p173, %p174
      %p176 = scmp.ne.s32.totalorder %s167, %s168
      %p177 = scmp.eq.s32.totalorder %s26, 0
      %p178 = por %p176, %p177
      %p179 = scmp.ne.s32.totalorder %s167, %s168
      %p180 = scmp.eq.s32.totalorder %s27, 1
      %p181 = por %p179, %p180
      %p183 = scmp.ne.s32.totalorder %s168, %s182
      %p184 = scmp.eq.s32.totalorder %s27, 0
      %p185 = por %p183, %p184
      %s187 = sadd.s32 %s186, 1
      %p190 = scmp.eq.s32.totalorder %s21, 1
      %p191 = scmp.ne.s32.totalorder %s186, %s188
      %p192 = scmp.eq.s32.totalorder %s21, 0
      %p193 = por %p191, %p192
      %p194 = scmp.ne.s32.totalorder %s186, %s188
      %p195 = scmp.eq.s32.totalorder %s26, 1
      %p196 = por %p194, %p195
      %p197 = scmp.ne.s32.totalorder %s188, %s189
      %p198 = scmp.eq.s32.totalorder %s26, 0
      %p199 = por %p197, %p198
      %p200 = scmp.ne.s32.totalorder %s188, %s189
      %p201 = scmp.eq.s32.totalorder %s27, 1
      %p202 = por %p200, %p201
      %p204 = scmp.ne.s32.totalorder %s189, %s203
      %p205 = scmp.eq.s32.totalorder %s27, 0
      %p206 = por %p204, %p205
      %s208 = sadd.s32 %s207, 1
      %p211 = scmp.eq.s32.totalorder %s21, 1
      %p212 = scmp.ne.s32.totalorder %s207, %s209
      %p213 = scmp.eq.s32.totalorder %s21, 0
      %p214 = por %p212, %p213
      %p215 = scmp.ne.s32.totalorder %s207, %s209
      %p216 = scmp.eq.s32.totalorder %s26, 1
      %p217 = por %p215, %p216
      %p218 = scmp.ne.s32.totalorder %s209, %s210
      %p219 = scmp.eq.s32.totalorder %s26, 0
      %p220 = por %p218, %p219
      %p221 = scmp.ne.s32.totalorder %s209, %s210
      %p222 = scmp.eq.s32.totalorder %s27, 1
      %p223 = por %p221, %p222
      %p225 = scmp.ne.s32.totalorder %s210, %s224
      %p226 = scmp.eq.s32.totalorder %s27, 0
      %p227 = por %p225, %p226
      %s229 = sadd.s32 %s228, 1
      %p232 = scmp.eq.s32.totalorder %s21, 1
      %p233 = scmp.ne.s32.totalorder %s228, %s230
      %p234 = scmp.eq.s32.totalorder %s21, 0
      %p235 = por %p233, %p234
      %p236 = scmp.ne.s32.totalorder %s228, %s230
      %p237 = scmp.eq.s32.totalorder %s26, 1
      %p238 = por %p236, %p237
      %p239 = scmp.ne.s32.totalorder %s230, %s231
      %p240 = scmp.eq.s32.totalorder %s26, 0
      %p241 = por %p239, %p240
      %p242 = scmp.ne.s32.totalorder %s230, %s231
      %p243 = scmp.eq.s32.totalorder %s27, 1
      %p244 = por %p242, %p243
      %p246 = scmp.ne.s32.totalorder %s231, %s245
      %p247 = scmp.eq.s32.totalorder %s27, 0
      %p248 = por %p246, %p247
      %s250 = sadd.s32 %s249, 1
      %p253 = scmp.eq.s32.totalorder %s21, 1
      %p254 = scmp.ne.s32.totalorder %s249, %s251
      %p255 = scmp.eq.s32.totalorder %s21, 0
      %p256 = por %p254, %p255
      %p257 = scmp.ne.s32.totalorder %s249, %s251
      %p258 = scmp.eq.s32.totalorder %s26, 1
      %p259 = por %p257, %p258
      %p260 = scmp.ne.s32.totalorder %s251, %s252
      %p261 = scmp.eq.s32.totalorder %s26, 0
      %p262 = por %p260, %p261
      %p263 = scmp.ne.s32.totalorder %s251, %s252
      %p264 = scmp.eq.s32.totalorder %s27, 1
      %p265 = por %p263, %p264
      %p267 = scmp.ne.s32.totalorder %s252, %s266
      %p268 = scmp.eq.s32.totalorder %s27, 0
      %p269 = por %p267, %p268
      %s271 = sadd.s32 %s270, 1
      %p274 = scmp.eq.s32.totalorder %s21, 1
      %p275 = scmp.ne.s32.totalorder %s270, %s272
      %p276 = scmp.eq.s32.totalorder %s21, 0
      %p277 = por %p275, %p276
      %p278 = scmp.ne.s32.totalorder %s270, %s272
      %p279 = scmp.eq.s32.totalorder %s26, 1
      %p280 = por %p278, %p279
      %p281 = scmp.ne.s32.totalorder %s272, %s273
      %p282 = scmp.eq.s32.totalorder %s26, 0
      %p283 = por %p281, %p282
      %p284 = scmp.ne.s32.totalorder %s272, %s273
      %p285 = scmp.eq.s32.totalorder %s27, 1
      %p286 = por %p284, %p285
      %p288 = scmp.ne.s32.totalorder %s273, %s287
      %p289 = scmp.eq.s32.totalorder %s27, 0
      %p290 = por %p288, %p289
      %s292 = sadd.s32 %s291, 1
      %p295 = scmp.eq.s32.totalorder %s21, 1
      %p296 = scmp.ne.s32.totalorder %s291, %s293
      %p297 = scmp.eq.s32.totalorder %s21, 0
      %p298 = por %p296, %p297
      %p299 = scmp.ne.s32.totalorder %s291, %s293
      %p300 = scmp.eq.s32.totalorder %s26, 1
      %p301 = por %p299, %p300
      %p302 = scmp.ne.s32.totalorder %s293, %s294
      %p303 = scmp.eq.s32.totalorder %s26, 0
      %p304 = por %p302, %p303
      %p305 = scmp.ne.s32.totalorder %s293, %s294
      %p306 = scmp.eq.s32.totalorder %s27, 1
      %p307 = por %p305, %p306
      %p309 = scmp.ne.s32.totalorder %s294, %s308
      %p310 = scmp.eq.s32.totalorder %s27, 0
      %p311 = por %p309, %p310
      %s312 = ssub.s32 %s21, %s28
      %p313 = scmp.eq.s32.totalorder %s312, 0
      %s315 = sadd.s32 %s314, 1
      %s316 = scalar_select %p313, %s314, %s315
      %p319 = pneg %p313
      %p320 = scmp.eq.s32.totalorder %s21, 1
      %p321 = por %p319, %p320
      %p322 = scmp.ne.s32.totalorder %s314, %s317
      %p323 = scmp.eq.s32.totalorder %s21, 0
      %p324 = por %p322, %p323
      %p325 = scmp.ne.s32.totalorder %s314, %s317
      %p326 = scmp.eq.s32.totalorder %s26, 1
      %p327 = por %p325, %p326
      %p328 = scmp.ne.s32.totalorder %s317, %s318
      %p329 = scmp.eq.s32.totalorder %s26, 0
      %p330 = por %p328, %p329
      %p331 = scmp.ne.s32.totalorder %s317, %s318
      %p332 = scmp.eq.s32.totalorder %s27, 1
      %p333 = por %p331, %p332
      %p335 = scmp.ne.s32.totalorder %s318, %s334
      %p336 = scmp.eq.s32.totalorder %s27, 0
      %p337 = por %p335, %p336
      %p338 = scmp.le.s32.totalorder 1, %s21
      %p339 = scmp.lt.s32.totalorder %s21, 3
      %p340 = pnand %p338, %p339
      %p341 = pneg %p340
      // Predicated region
      $region9: #{midblock_forward.3} parent=5 // pred_check
        _
      $region10: #{midblock_forward.3} parent=5 // pred_check_branch
        %343 = sbr.rel (%p340) target = $region12
      $region11: #{midblock_forward.3} parent=5 // pred_region
        %s344 = ssub.s32 %s21, 1
        // Predicated region
        $region13: #{midblock_forward.3} parent=11 // pred_check
          %p345 = pneg %p94
        $region14: #{midblock_forward.3} parent=11 // pred_check_branch
          %347 = sbr.rel (%p345) target = $region16
        $region15: #{midblock_forward.3} parent=11 // pred_region
          %s349 = ssub.s32 18432, 18432
          %350 = vsyncadd [#allocation4], %s349
          %s351 = sshll.u32 [#allocation3], 4
          %s352 = int_to_ptr.vmem [resolvable:$true] %s351
          %357 = dma.hbm_to_vmem [thread:$0]  %s2, 18432, %s352, [#allocation4], 128, 128, 8
        $region16: #{midblock_forward.3} parent=11 // pred_fallthru
          _
        // Predicated region
        $region17: #{midblock_forward.3} parent=11 // pred_check
          %p358 = pneg %p115
        $region18: #{midblock_forward.3} parent=11 // pred_check_branch
          %360 = sbr.rel (%p358) target = $region20
        $region19: #{midblock_forward.3} parent=11 // pred_region
          _
        $region20: #{midblock_forward.3} parent=11 // pred_fallthru
          _
        // Predicated region
        $region21: #{midblock_forward.3} parent=11 // pred_check
          %p361 = pneg %p136
        $region22: #{midblock_forward.3} parent=11 // pred_check_branch
          %363 = sbr.rel (%p361) target = $region24
        $region23: #{midblock_forward.3} parent=11 // pred_region
          _
        $region24: #{midblock_forward.3} parent=11 // pred_fallthru
          _
        // Predicated region
        $region25: #{midblock_forward.3} parent=11 // pred_check
          %p364 = pneg %p157
        $region26: #{midblock_forward.3} parent=11 // pred_check_branch
          %366 = sbr.rel (%p364) target = $region28
        $region27: #{midblock_forward.3} parent=11 // pred_region
          _
        $region28: #{midblock_forward.3} parent=11 // pred_fallthru
          _
        // Predicated region
        $region29: #{midblock_forward.3} parent=11 // pred_check
          %p367 = pneg %p178
        $region30: #{midblock_forward.3} parent=11 // pred_check_branch
          %369 = sbr.rel (%p367) target = $region32
        $region31: #{midblock_forward.3} parent=11 // pred_region
          _
        $region32: #{midblock_forward.3} parent=11 // pred_fallthru
          _
        // Predicated region
        $region33: #{midblock_forward.3} parent=11 // pred_check
          %p370 = pneg %p199
        $region34: #{midblock_forward.3} parent=11 // pred_check_branch
          %372 = sbr.rel (%p370) target = $region36
        $region35: #{midblock_forward.3} parent=11 // pred_region
          _
        $region36: #{midblock_forward.3} parent=11 // pred_fallthru
          _
        // Predicated region
        $region37: #{midblock_forward.3} parent=11 // pred_check
          %p373 = pneg %p220
        $region38: #{midblock_forward.3} parent=11 // pred_check_branch
          %375 = sbr.rel (%p373) target = $region40
        $region39: #{midblock_forward.3} parent=11 // pred_region
          %s377 = ssub.s32 18432, 18432
          %378 = vsyncadd [#allocation6], %s377
          %s379 = sshll.u32 [#allocation5], 4
          %s380 = int_to_ptr.vmem [resolvable:$true] %s379
          %385 = dma.hbm_to_vmem [thread:$0]  %s8, 18432, %s380, [#allocation6], 128, 128, 8
        $region40: #{midblock_forward.3} parent=11 // pred_fallthru
          _
        // Predicated region
        $region41: #{midblock_forward.3} parent=11 // pred_check
          %p386 = pneg %p241
        $region42: #{midblock_forward.3} parent=11 // pred_check_branch
          %388 = sbr.rel (%p386) target = $region44
        $region43: #{midblock_forward.3} parent=11 // pred_region
          _
        $region44: #{midblock_forward.3} parent=11 // pred_fallthru
          _
        // Predicated region
        $region45: #{midblock_forward.3} parent=11 // pred_check
          %p389 = pneg %p262
        $region46: #{midblock_forward.3} parent=11 // pred_check_branch
          %391 = sbr.rel (%p389) target = $region48
        $region47: #{midblock_forward.3} parent=11 // pred_region
          _
        $region48: #{midblock_forward.3} parent=11 // pred_fallthru
          _
        // Predicated region
        $region49: #{midblock_forward.3} parent=11 // pred_check
          %p392 = pneg %p283
        $region50: #{midblock_forward.3} parent=11 // pred_check_branch
          %394 = sbr.rel (%p392) target = $region52
        $region51: #{midblock_forward.3} parent=11 // pred_region
          _
        $region52: #{midblock_forward.3} parent=11 // pred_fallthru
          _
        // Predicated region
        $region53: #{midblock_forward.3} parent=11 // pred_check
          %p395 = pneg %p304
        $region54: #{midblock_forward.3} parent=11 // pred_check_branch
          %397 = sbr.rel (%p395) target = $region56
        $region55: #{midblock_forward.3} parent=11 // pred_region
          _
        $region56: #{midblock_forward.3} parent=11 // pred_fallthru
          _
      $region12: #{midblock_forward.3} parent=5 // pred_fallthru
        _
      %p398 = scmp.lt.s32.totalorder %s21, 2
      // Predicated region
      $region57: #{midblock_forward.3} parent=5 // pred_check
        %p399 = pneg %p398
      $region58: #{midblock_forward.3} parent=5 // pred_check_branch
        %401 = sbr.rel (%p399) target = $region60
      $region59: #{midblock_forward.3} parent=5 // pred_region
        // Predicated region
        $region61: #{midblock_forward.3} parent=59 // pred_check
          %p402 = pneg %p41
        $region62: #{midblock_forward.3} parent=59 // pred_check_branch
          %404 = sbr.rel (%p402) target = $region64
        $region63: #{midblock_forward.3} parent=59 // pred_region
          %p405 = scmp.lt.s32.totalorder %s21, 1
          %s406 = scalar_select %p405, %s21, 1
          %s407 = smul.addr %s406, 8
          %s408 = smul.addr %s407, 8
          %s409 = scalar_lea.vmem %s0, %s408
        $region64: #{midblock_forward.3} parent=59 // pred_fallthru
          _
        // Predicated region
        $region65: #{midblock_forward.3} parent=59 // pred_check
          %p410 = pneg %p67
        $region66: #{midblock_forward.3} parent=59 // pred_check_branch
          %412 = sbr.rel (%p410) target = $region68
        $region67: #{midblock_forward.3} parent=59 // pred_region
          %p413 = scmp.lt.s32.totalorder %s21, 1
          %s414 = scalar_select %p413, %s21, 1
          %s415 = scalar_lea.vmem %s1, %s414
        $region68: #{midblock_forward.3} parent=59 // pred_fallthru
          _
      $region60: #{midblock_forward.3} parent=5 // pred_fallthru
        _
      %p416 = scmp.le.s32.totalorder 1, %s21
      %p417 = scmp.lt.s32.totalorder %s21, 3
      %p418 = pnand %p416, %p417
      %p419 = pneg %p418
      // Predicated region
      $region69: #{midblock_forward.3} parent=5 // pred_check
        _
      $region70: #{midblock_forward.3} parent=5 // pred_check_branch
        %421 = sbr.rel (%p418) target = $region72
      $region71: #{midblock_forward.3} parent=5 // pred_region
        %s422 = ssub.s32 %s21, 1
        // Predicated region
        $region73: #{midblock_forward.3} parent=71 // pred_check
          %p423 = pneg %p94
        $region74: #{midblock_forward.3} parent=71 // pred_check_branch
          %425 = sbr.rel (%p423) target = $region76
        $region75: #{midblock_forward.3} parent=71 // pred_region
          %426 = dma.done [#allocation4], 18432
        $region76: #{midblock_forward.3} parent=71 // pred_fallthru
          _
        // Predicated region
        $region77: #{midblock_forward.3} parent=71 // pred_check
          %p427 = pneg %p220
        $region78: #{midblock_forward.3} parent=71 // pred_check_branch
          %429 = sbr.rel (%p427) target = $region80
        $region79: #{midblock_forward.3} parent=71 // pred_region
          %430 = dma.done [#allocation6], 18432
        $region80: #{midblock_forward.3} parent=71 // pred_fallthru
          _
        %p431 = scmp.lt.s32.totalorder %s26, 1
        %s432 = scalar_select %p431, %s26, 1
        %s433 = smul.addr %s432, 8
        %s434 = smul.addr %s433, 8
        %s435 = scalar_lea.vmem %s0, %s434
        %p436 = pneg %p47
        %p437 = pneg %p44
        %p438 = scmp.lt.s32.totalorder %s26, 1
        %s439 = scalar_select %p438, %s26, 1
        %s440 = scalar_lea.vmem %s1, %s439
        %p441 = pneg %p73
        %p442 = pneg %p70
        %p443 = pneg %p94
        %p444 = pneg %p91
        %p445 = pneg %p115
        %p446 = pneg %p112
        %p447 = pneg %p136
        %p448 = pneg %p133
        %p449 = pneg %p157
        %p450 = pneg %p154
        %p451 = pneg %p178
        %p452 = pneg %p175
        %p453 = pneg %p199
        %p454 = pneg %p196
        %p455 = pneg %p220
        %p456 = pneg %p217
        %p457 = pneg %p241
        %p458 = pneg %p238
        %p459 = pneg %p262
        %p460 = pneg %p259
        %p461 = pneg %p283
        %p462 = pneg %p280
        %p463 = pneg %p304
        %p464 = pneg %p301
        %p465 = pneg %p330
        %p466 = pneg %p327
        %p467 = scmp.lt.s32.totalorder %s26, 1
        %s468 = scalar_select %p467, %s26, 1
        %s469 = smul.addr %s468, 8
        %s470 = smul.addr %s469, 8
        %s471 = scalar_lea.vmem %s13, %s470
        %p472 = scmp.lt.s32.totalorder %s26, 1
        %s473 = scalar_select %p472, %s26, 1
        %s474 = smul.addr %s473, 8
        %s475 = smul.addr %s474, 8
        %s476 = scalar_lea.vmem %s0, %s475
        %p477 = scmp.lt.s32.totalorder %s26, 1
        %s478 = scalar_select %p477, %s26, 1
        %s479 = scalar_lea.vmem %s1, %s478
        %p480 = scmp.lt.s32.totalorder %s26, 1
        %s481 = scalar_select %p480, %s26, 1
        %s482 = smul.addr %s481, 8
        %s483 = smul.addr %s482, 8
        %s484 = scalar_lea.vmem %s13, %s483
        %v485 = vld [vmem:[%s476] sm:$0xff]
        %v486 = vld [vmem:[%s476 + $0x8] sm:$0xff]
        %v487 = vld [vmem:[%s476 + $0x10] sm:$0xff]
        %v488 = vld [vmem:[%s476 + $0x18] sm:$0xff]
        %v489 = vld [vmem:[%s476 + $0x20] sm:$0xff]
        %v490 = vld [vmem:[%s476 + $0x28] sm:$0xff]
        %v491 = vld [vmem:[%s476 + $0x30] sm:$0xff]
        %v492 = vld [vmem:[%s476 + $0x38] sm:$0xff]
        %v493 = vld [vmem:[%s12] sm:$0xff]
        %v494 = vld [vmem:[%s12 + $0x8] sm:$0xff]
        %v495 = vld [vmem:[%s12 + $0x10] sm:$0xff]
        %v496 = vld [vmem:[%s12 + $0x18] sm:$0xff]
        %v497 = vld [vmem:[%s12 + $0x20] sm:$0xff]
        %v498 = vld [vmem:[%s12 + $0x28] sm:$0xff]
        %v499 = vld [vmem:[%s12 + $0x30] sm:$0xff]
        %v500 = vld [vmem:[%s12 + $0x38] sm:$0xff]
        %v501 = vld [vmem:[%s12 + $0x40] sm:$0xff]
        %v502 = vld [vmem:[%s12 + $0x48] sm:$0xff]
        %v503 = vld [vmem:[%s12 + $0x50] sm:$0xff]
        %v504 = vld [vmem:[%s12 + $0x58] sm:$0xff]
        %v505 = vld [vmem:[%s12 + $0x60] sm:$0xff]
        %v506 = vld [vmem:[%s12 + $0x68] sm:$0xff]
        %v507 = vld [vmem:[%s12 + $0x70] sm:$0xff]
        %v508 = vld [vmem:[%s12 + $0x78] sm:$0xff]
        %509 = vst [vmem:[#allocation2] sm:$0xff] 0.0
        %510 = vst [vmem:[#allocation2 + $0x8] sm:$0x3] 0.0
        %511 = vst [vmem:[#allocation2 + $0x10] sm:$0xff] 0.0
        %512 = vst [vmem:[#allocation2 + $0x18] sm:$0x3] 0.0
        %513 = vst [vmem:[#allocation2 + $0x20] sm:$0xff] 0.0
        %514 = vst [vmem:[#allocation2 + $0x28] sm:$0x3] 0.0
        %515 = vst [vmem:[#allocation2 + $0x30] sm:$0xff] 0.0
        %516 = vst [vmem:[#allocation2 + $0x38] sm:$0x3] 0.0
        %517 = vst [vmem:[#allocation2 + $0x40] sm:$0xff] 0.0
        %518 = vst [vmem:[#allocation2 + $0x48] sm:$0x3] 0.0
        %519 = vst [vmem:[#allocation2 + $0x50] sm:$0xff] 0.0
        %520 = vst [vmem:[#allocation2 + $0x58] sm:$0x3] 0.0
        %521 = vst [vmem:[#allocation2 + $0x60] sm:$0xff] 0.0
        %522 = vst [vmem:[#allocation2 + $0x68] sm:$0x3] 0.0
        %523 = vst [vmem:[#allocation2 + $0x70] sm:$0xff] 0.0
        %524 = vst [vmem:[#allocation2 + $0x78] sm:$0x3] 0.0
        %525 = vst [vmem:[#allocation2 + $0x80] sm:$0xff] 0.0
        %526 = vst [vmem:[#allocation2 + $0x88] sm:$0x3] 0.0
        %527 = vst [vmem:[#allocation2 + $0x90] sm:$0xff] 0.0
        %528 = vst [vmem:[#allocation2 + $0x98] sm:$0x3] 0.0
        %s529 = scalar_lea.vmem [#allocation2], 16
        %530 = vst [vmem:[%s529 + $0x1] sm:$0xff] %v485
        %531 = vst [vmem:[%s529 + $0x11] sm:$0xff] %v486
        %532 = vst [vmem:[%s529 + $0x21] sm:$0xff] %v487
        %533 = vst [vmem:[%s529 + $0x31] sm:$0xff] %v488
        %534 = vst [vmem:[%s529 + $0x41] sm:$0xff] %v489
        %535 = vst [vmem:[%s529 + $0x51] sm:$0xff] %v490
        %536 = vst [vmem:[%s529 + $0x61] sm:$0xff] %v491
        %537 = vst [vmem:[%s529 + $0x71] sm:$0xff] %v492
        %v538 = vld [vmem:[#allocation2] sm:$0xff]
        %v539 = vld [vmem:[#allocation2 + $0x10] sm:$0xff]
        %v540 = vld [vmem:[#allocation2 + $0x20] sm:$0xff]
        %v541 = vld [vmem:[#allocation2 + $0x30] sm:$0xff]
        %v542 = vld [vmem:[#allocation2 + $0x40] sm:$0xff]
        %v543 = vld [vmem:[#allocation2 + $0x50] sm:$0xff]
        %v544 = vld [vmem:[#allocation2 + $0x60] sm:$0xff]
        %v545 = vld [vmem:[#allocation2 + $0x70] sm:$0xff]
        %v546 = vld [vmem:[#allocation2 + $0x1] sm:$0xff]
        %v547 = vld [vmem:[#allocation2 + $0x11] sm:$0xff]
        %v548 = vld [vmem:[#allocation2 + $0x21] sm:$0xff]
        %v549 = vld [vmem:[#allocation2 + $0x31] sm:$0xff]
        %v550 = vld [vmem:[#allocation2 + $0x41] sm:$0xff]
        %v551 = vld [vmem:[#allocation2 + $0x51] sm:$0xff]
        %v552 = vld [vmem:[#allocation2 + $0x61] sm:$0xff]
        %v553 = vld [vmem:[#allocation2 + $0x71] sm:$0xff]
        %v554 = vld [vmem:[#allocation2 + $0x2] sm:$0xff]
        %v555 = vld [vmem:[#allocation2 + $0x12] sm:$0xff]
        %v556 = vld [vmem:[#allocation2 + $0x22] sm:$0xff]
        %v557 = vld [vmem:[#allocation2 + $0x32] sm:$0xff]
        %v558 = vld [vmem:[#allocation2 + $0x42] sm:$0xff]
        %v559 = vld [vmem:[#allocation2 + $0x52] sm:$0xff]
        %v560 = vld [vmem:[#allocation2 + $0x62] sm:$0xff]
        %v561 = vld [vmem:[#allocation2 + $0x72] sm:$0xff]
        %v562 = vld [vmem:[%s529] sm:$0xff]
        %v563 = vld [vmem:[%s529 + $0x10] sm:$0xff]
        %v564 = vld [vmem:[%s529 + $0x20] sm:$0xff]
        %v565 = vld [vmem:[%s529 + $0x30] sm:$0xff]
        %v566 = vld [vmem:[%s529 + $0x40] sm:$0xff]
        %v567 = vld [vmem:[%s529 + $0x50] sm:$0xff]
        %v568 = vld [vmem:[%s529 + $0x60] sm:$0xff]
        %v569 = vld [vmem:[%s529 + $0x70] sm:$0xff]
        %v570 = vld [vmem:[%s529 + $0x1] sm:$0xff]
        %v571 = vld [vmem:[%s529 + $0x11] sm:$0xff]
        %v572 = vld [vmem:[%s529 + $0x21] sm:$0xff]
        %v573 = vld [vmem:[%s529 + $0x31] sm:$0xff]
        %v574 = vld [vmem:[%s529 + $0x41] sm:$0xff]
        %v575 = vld [vmem:[%s529 + $0x51] sm:$0xff]
        %v576 = vld [vmem:[%s529 + $0x61] sm:$0xff]
        %v577 = vld [vmem:[%s529 + $0x71] sm:$0xff]
        %v578 = vld [vmem:[%s529 + $0x2] sm:$0xff]
        %v579 = vld [vmem:[%s529 + $0x12] sm:$0xff]
        %v580 = vld [vmem:[%s529 + $0x22] sm:$0xff]
        %v581 = vld [vmem:[%s529 + $0x32] sm:$0xff]
        %v582 = vld [vmem:[%s529 + $0x42] sm:$0xff]
        %v583 = vld [vmem:[%s529 + $0x52] sm:$0xff]
        %v584 = vld [vmem:[%s529 + $0x62] sm:$0xff]
        %v585 = vld [vmem:[%s529 + $0x72] sm:$0xff]
        %s586 = scalar_lea.vmem [#allocation2], 32
        %v587 = vld [vmem:[%s586] sm:$0xff]
        %v588 = vld [vmem:[%s586 + $0x10] sm:$0xff]
        %v589 = vld [vmem:[%s586 + $0x20] sm:$0xff]
        %v590 = vld [vmem:[%s586 + $0x30] sm:$0xff]
        %v591 = vld [vmem:[%s586 + $0x40] sm:$0xff]
        %v592 = vld [vmem:[%s586 + $0x50] sm:$0xff]
        %v593 = vld [vmem:[%s586 + $0x60] sm:$0xff]
        %v594 = vld [vmem:[%s586 + $0x70] sm:$0xff]
        %v595 = vld [vmem:[%s586 + $0x1] sm:$0xff]
        %v596 = vld [vmem:[%s586 + $0x11] sm:$0xff]
        %v597 = vld [vmem:[%s586 + $0x21] sm:$0xff]
        %v598 = vld [vmem:[%s586 + $0x31] sm:$0xff]
        %v599 = vld [vmem:[%s586 + $0x41] sm:$0xff]
        %v600 = vld [vmem:[%s586 + $0x51] sm:$0xff]
        %v601 = vld [vmem:[%s586 + $0x61] sm:$0xff]
        %v602 = vld [vmem:[%s586 + $0x71] sm:$0xff]
        %v603 = vld [vmem:[%s586 + $0x2] sm:$0xff]
        %v604 = vld [vmem:[%s586 + $0x12] sm:$0xff]
        %v605 = vld [vmem:[%s586 + $0x22] sm:$0xff]
        %v606 = vld [vmem:[%s586 + $0x32] sm:$0xff]
        %v607 = vld [vmem:[%s586 + $0x42] sm:$0xff]
        %v608 = vld [vmem:[%s586 + $0x52] sm:$0xff]
        %v609 = vld [vmem:[%s586 + $0x62] sm:$0xff]
        %v610 = vld [vmem:[%s586 + $0x72] sm:$0xff]
        %v611 = vld [vmem:[#allocation3] sm:$0xff]
        %v612 = vld [vmem:[#allocation3 + $0x8] sm:$0xff]
        %v613 = vld [vmem:[#allocation3 + $0x10] sm:$0xff]
        %v614 = vld [vmem:[#allocation3 + $0x18] sm:$0xff]
        %v615 = vld [vmem:[#allocation3 + $0x20] sm:$0xff]
        %v616 = vld [vmem:[#allocation3 + $0x28] sm:$0xff]
        %v617 = vld [vmem:[#allocation3 + $0x30] sm:$0xff]
        %v618 = vld [vmem:[#allocation3 + $0x38] sm:$0xff]
        %v619 = vld [vmem:[#allocation3 + $0x40] sm:$0xff]
        %v620 = vld [vmem:[#allocation3 + $0x48] sm:$0xff]
        %v621 = vld [vmem:[#allocation3 + $0x50] sm:$0xff]
        %v622 = vld [vmem:[#allocation3 + $0x58] sm:$0xff]
        %v623 = vld [vmem:[#allocation3 + $0x60] sm:$0xff]
        %v624 = vld [vmem:[#allocation3 + $0x68] sm:$0xff]
        %v625 = vld [vmem:[#allocation3 + $0x70] sm:$0xff]
        %v626 = vld [vmem:[#allocation3 + $0x78] sm:$0xff]
        %v627 = vld [vmem:[#allocation3 + $0x80] sm:$0xff]
        %v628 = vld [vmem:[#allocation3 + $0x88] sm:$0xff]
        %v629 = vld [vmem:[#allocation3 + $0x90] sm:$0xff]
        %v630 = vld [vmem:[#allocation3 + $0x98] sm:$0xff]
        %v631 = vld [vmem:[#allocation3 + $0xa0] sm:$0xff]
        %v632 = vld [vmem:[#allocation3 + $0xa8] sm:$0xff]
        %v633 = vld [vmem:[#allocation3 + $0xb0] sm:$0xff]
        %v634 = vld [vmem:[#allocation3 + $0xb8] sm:$0xff]
        %v635 = vld [vmem:[#allocation3 + $0xc0] sm:$0xff]
        %v636 = vld [vmem:[#allocation3 + $0xc8] sm:$0xff]
        %v637 = vld [vmem:[#allocation3 + $0xd0] sm:$0xff]
        %v638 = vld [vmem:[#allocation3 + $0xd8] sm:$0xff]
        %v639 = vld [vmem:[#allocation3 + $0xe0] sm:$0xff]
        %v640 = vld [vmem:[#allocation3 + $0xe8] sm:$0xff]
        %v641 = vld [vmem:[#allocation3 + $0xf0] sm:$0xff]
        %v642 = vld [vmem:[#allocation3 + $0xf8] sm:$0xff]
        %v643 = vld [vmem:[#allocation3 + $0x100] sm:$0xff]
        %v644 = vld [vmem:[#allocation3 + $0x108] sm:$0xff]
        %v645 = vld [vmem:[#allocation3 + $0x110] sm:$0xff]
        %v646 = vld [vmem:[#allocation3 + $0x118] sm:$0xff]
        %v647 = vld [vmem:[#allocation3 + $0x120] sm:$0xff]
        %v648 = vld [vmem:[#allocation3 + $0x128] sm:$0xff]
        %v649 = vld [vmem:[#allocation3 + $0x130] sm:$0xff]
        %v650 = vld [vmem:[#allocation3 + $0x138] sm:$0xff]
        %v651 = vld [vmem:[#allocation3 + $0x140] sm:$0xff]
        %v652 = vld [vmem:[#allocation3 + $0x148] sm:$0xff]
        %v653 = vld [vmem:[#allocation3 + $0x150] sm:$0xff]
        %v654 = vld [vmem:[#allocation3 + $0x158] sm:$0xff]
        %v655 = vld [vmem:[#allocation3 + $0x160] sm:$0xff]
        %v656 = vld [vmem:[#allocation3 + $0x168] sm:$0xff]
        %v657 = vld [vmem:[#allocation3 + $0x170] sm:$0xff]
        %v658 = vld [vmem:[#allocation3 + $0x178] sm:$0xff]
        %v659 = vld [vmem:[#allocation3 + $0x180] sm:$0xff]
        %v660 = vld [vmem:[#allocation3 + $0x188] sm:$0xff]
        %v661 = vld [vmem:[#allocation3 + $0x190] sm:$0xff]
        %v662 = vld [vmem:[#allocation3 + $0x198] sm:$0xff]
        %v663 = vld [vmem:[#allocation3 + $0x1a0] sm:$0xff]
        %v664 = vld [vmem:[#allocation3 + $0x1a8] sm:$0xff]
        %v665 = vld [vmem:[#allocation3 + $0x1b0] sm:$0xff]
        %v666 = vld [vmem:[#allocation3 + $0x1b8] sm:$0xff]
        %v667 = vld [vmem:[#allocation3 + $0x1c0] sm:$0xff]
        %v668 = vld [vmem:[#allocation3 + $0x1c8] sm:$0xff]
        %v669 = vld [vmem:[#allocation3 + $0x1d0] sm:$0xff]
        %v670 = vld [vmem:[#allocation3 + $0x1d8] sm:$0xff]
        %v671 = vld [vmem:[#allocation3 + $0x1e0] sm:$0xff]
        %v672 = vld [vmem:[#allocation3 + $0x1e8] sm:$0xff]
        %v673 = vld [vmem:[#allocation3 + $0x1f0] sm:$0xff]
        %v674 = vld [vmem:[#allocation3 + $0x1f8] sm:$0xff]
        %v675 = vld [vmem:[#allocation3 + $0x200] sm:$0xff]
        %v676 = vld [vmem:[#allocation3 + $0x208] sm:$0xff]
        %v677 = vld [vmem:[#allocation3 + $0x210] sm:$0xff]
        %v678 = vld [vmem:[#allocation3 + $0x218] sm:$0xff]
        %v679 = vld [vmem:[#allocation3 + $0x220] sm:$0xff]
        %v680 = vld [vmem:[#allocation3 + $0x228] sm:$0xff]
        %v681 = vld [vmem:[#allocation3 + $0x230] sm:$0xff]
        %v682 = vld [vmem:[#allocation3 + $0x238] sm:$0xff]
        %v683 = vld [vmem:[#allocation3 + $0x240] sm:$0xff]
        %v684 = vld [vmem:[#allocation3 + $0x248] sm:$0xff]
        %v685 = vld [vmem:[#allocation3 + $0x250] sm:$0xff]
        %v686 = vld [vmem:[#allocation3 + $0x258] sm:$0xff]
        %v687 = vld [vmem:[#allocation3 + $0x260] sm:$0xff]
        %v688 = vld [vmem:[#allocation3 + $0x268] sm:$0xff]
        %v689 = vld [vmem:[#allocation3 + $0x270] sm:$0xff]
        %v690 = vld [vmem:[#allocation3 + $0x278] sm:$0xff]
        %v691 = vld [vmem:[#allocation3 + $0x280] sm:$0xff]
        %v692 = vld [vmem:[#allocation3 + $0x288] sm:$0xff]
        %v693 = vld [vmem:[#allocation3 + $0x290] sm:$0xff]
        %v694 = vld [vmem:[#allocation3 + $0x298] sm:$0xff]
        %v695 = vld [vmem:[#allocation3 + $0x2a0] sm:$0xff]
        %v696 = vld [vmem:[#allocation3 + $0x2a8] sm:$0xff]
        %v697 = vld [vmem:[#allocation3 + $0x2b0] sm:$0xff]
        %v698 = vld [vmem:[#allocation3 + $0x2b8] sm:$0xff]
        %v699 = vld [vmem:[#allocation3 + $0x2c0] sm:$0xff]
        %v700 = vld [vmem:[#allocation3 + $0x2c8] sm:$0xff]
        %v701 = vld [vmem:[#allocation3 + $0x2d0] sm:$0xff]
        %v702 = vld [vmem:[#allocation3 + $0x2d8] sm:$0xff]
        %v703 = vld [vmem:[#allocation3 + $0x2e0] sm:$0xff]
        %v704 = vld [vmem:[#allocation3 + $0x2e8] sm:$0xff]
        %v705 = vld [vmem:[#allocation3 + $0x2f0] sm:$0xff]
        %v706 = vld [vmem:[#allocation3 + $0x2f8] sm:$0xff]
        %v707 = vld [vmem:[#allocation3 + $0x300] sm:$0xff]
        %v708 = vld [vmem:[#allocation3 + $0x308] sm:$0xff]
        %v709 = vld [vmem:[#allocation3 + $0x310] sm:$0xff]
        %v710 = vld [vmem:[#allocation3 + $0x318] sm:$0xff]
        %v711 = vld [vmem:[#allocation3 + $0x320] sm:$0xff]
        %v712 = vld [vmem:[#allocation3 + $0x328] sm:$0xff]
        %v713 = vld [vmem:[#allocation3 + $0x330] sm:$0xff]
        %v714 = vld [vmem:[#allocation3 + $0x338] sm:$0xff]
        %v715 = vld [vmem:[#allocation3 + $0x340] sm:$0xff]
        %v716 = vld [vmem:[#allocation3 + $0x348] sm:$0xff]
        %v717 = vld [vmem:[#allocation3 + $0x350] sm:$0xff]
        %v718 = vld [vmem:[#allocation3 + $0x358] sm:$0xff]
        %v719 = vld [vmem:[#allocation3 + $0x360] sm:$0xff]
        %v720 = vld [vmem:[#allocation3 + $0x368] sm:$0xff]
        %v721 = vld [vmem:[#allocation3 + $0x370] sm:$0xff]
        %v722 = vld [vmem:[#allocation3 + $0x378] sm:$0xff]
        %v723 = vld [vmem:[#allocation3 + $0x380] sm:$0xff]
        %v724 = vld [vmem:[#allocation3 + $0x388] sm:$0xff]
        %v725 = vld [vmem:[#allocation3 + $0x390] sm:$0xff]
        %v726 = vld [vmem:[#allocation3 + $0x398] sm:$0xff]
        %v727 = vld [vmem:[#allocation3 + $0x3a0] sm:$0xff]
        %v728 = vld [vmem:[#allocation3 + $0x3a8] sm:$0xff]
        %v729 = vld [vmem:[#allocation3 + $0x3b0] sm:$0xff]
        %v730 = vld [vmem:[#allocation3 + $0x3b8] sm:$0xff]
        %v731 = vld [vmem:[#allocation3 + $0x3c0] sm:$0xff]
        %v732 = vld [vmem:[#allocation3 + $0x3c8] sm:$0xff]
        %v733 = vld [vmem:[#allocation3 + $0x3d0] sm:$0xff]
        %v734 = vld [vmem:[#allocation3 + $0x3d8] sm:$0xff]
        %v735 = vld [vmem:[#allocation3 + $0x3e0] sm:$0xff]
        %v736 = vld [vmem:[#allocation3 + $0x3e8] sm:$0xff]
        %v737 = vld [vmem:[#allocation3 + $0x3f0] sm:$0xff]
        %v738 = vld [vmem:[#allocation3 + $0x3f8] sm:$0xff]
        %v739 = vld [vmem:[#allocation3 + $0x400] sm:$0xff]
        %v740 = vld [vmem:[#allocation3 + $0x408] sm:$0xff]
        %v741 = vld [vmem:[#allocation3 + $0x410] sm:$0xff]
        %v742 = vld [vmem:[#allocation3 + $0x418] sm:$0xff]
        %v743 = vld [vmem:[#allocation3 + $0x420] sm:$0xff]
        %v744 = vld [vmem:[#allocation3 + $0x428] sm:$0xff]
        %v745 = vld [vmem:[#allocation3 + $0x430] sm:$0xff]
        %v746 = vld [vmem:[#allocation3 + $0x438] sm:$0xff]
        %v747 = vld [vmem:[#allocation3 + $0x440] sm:$0xff]
        %v748 = vld [vmem:[#allocation3 + $0x448] sm:$0xff]
        %v749 = vld [vmem:[#allocation3 + $0x450] sm:$0xff]
        %v750 = vld [vmem:[#allocation3 + $0x458] sm:$0xff]
        %v751 = vld [vmem:[#allocation3 + $0x460] sm:$0xff]
        %v752 = vld [vmem:[#allocation3 + $0x468] sm:$0xff]
        %v753 = vld [vmem:[#allocation3 + $0x470] sm:$0xff]
        %v754 = vld [vmem:[#allocation3 + $0x478] sm:$0xff]
        %v755 = vld [vmem:[%s3] sm:$0x1]
        %v757 = vlaneseq
        %v758 = vshrl.u32 %v757, 7
        %v759 = vsub.s32 0, %v758
        %v760 = vrot.slane %v755, %v759
        %762 = vmatprep.subr.mxu0 0.0
        %763 = vmatpush1.msra.mxu0 %v611
        %764 = vmatprep.subr.mxu0 0.0
        %765 = vmatpush1.msra.mxu0 %v612
        %766 = vmatprep.subr.mxu0 0.0
        %767 = vmatpush1.msra.mxu0 %v613
        %768 = vmatprep.subr.mxu0 0.0
        %769 = vmatpush1.msra.mxu0 %v614
        %770 = vmatprep.subr.mxu0 0.0
        %771 = vmatpush1.msra.mxu0 %v615
        %772 = vmatprep.subr.mxu0 0.0
        %773 = vmatpush1.msra.mxu0 %v616
        %774 = vmatprep.subr.mxu0 0.0
        %775 = vmatpush1.msra.mxu0 %v617
        %776 = vmatprep.subr.mxu0 0.0
        %777 = vmatpush1.msra.mxu0 %v618
        %778 = vmatprep.subr.mxu0 0.0
        %779 = vmatpush1.msra.mxu0 %v619
        %780 = vmatprep.subr.mxu0 0.0
        %781 = vmatpush1.msra.mxu0 %v620
        %782 = vmatprep.subr.mxu0 0.0
        %783 = vmatpush1.msra.mxu0 %v621
        %784 = vmatprep.subr.mxu0 0.0
        %785 = vmatpush1.msra.mxu0 %v622
        %786 = vmatprep.subr.mxu0 0.0
        %787 = vmatpush1.msra.mxu0 %v623
        %788 = vmatprep.subr.mxu0 0.0
        %789 = vmatpush1.msra.mxu0 %v624
        %790 = vmatprep.subr.mxu0 0.0
        %791 = vmatpush1.msra.mxu0 %v625
        %792 = vmatprep.subr.mxu0 0.0
        %793 = vmatpush1.msra.mxu0 %v626
        %794 = vmatprep.subr.mxu0 0.0
        %795 = vmatpush1.msra.mxu0 %v627
        %796 = vmatprep.subr.mxu0 0.0
        %797 = vmatpush1.msra.mxu0 %v628
        %798 = vmatprep.subr.mxu0 0.0
        %799 = vmatpush1.msra.mxu0 %v629
        %800 = vmatprep.subr.mxu0 0.0
        %801 = vmatpush1.msra.mxu0 %v630
        %802 = vmatprep.subr.mxu0 0.0
        %803 = vmatpush1.msra.mxu0 %v631
        %804 = vmatprep.subr.mxu0 0.0
        %805 = vmatpush1.msra.mxu0 %v632
        %806 = vmatprep.subr.mxu0 0.0
        %807 = vmatpush1.msra.mxu0 %v633
        %808 = vmatprep.subr.mxu0 0.0
        %809 = vmatpush1.msra.mxu0 %v634
        %810 = vmatprep.subr.mxu0 0.0
        %811 = vmatpush1.msra.mxu0 %v635
        %812 = vmatprep.subr.mxu0 0.0
        %813 = vmatpush1.msra.mxu0 %v636
        %814 = vmatprep.subr.mxu0 0.0
        %815 = vmatpush1.msra.mxu0 %v637
        %816 = vmatprep.subr.mxu0 0.0
        %817 = vmatpush1.msra.mxu0 %v638
        %818 = vmatprep.subr.mxu0 0.0
        %819 = vmatpush1.msra.mxu0 %v639
        %820 = vmatprep.subr.mxu0 0.0
        %821 = vmatpush1.msra.mxu0 %v640
        %822 = vmatprep.subr.mxu0 0.0
        %823 = vmatpush1.msra.mxu0 %v641
        %824 = vmatprep.subr.mxu0 0.0
        %825 = vmatpush1.msra.mxu0 %v642
        %826 = vmatprep.mubr.f32.mxu0 %v546
        %827 = vmatmul.mubr.f32.gmra.mrb[0].mxu0 %v538
        %v828 = vpop.f32.mrb[0].mxu0
        %v829 = vadd.f32 %v760, %v828
        %v830 = vpop.f32.mrb[0].mxu0
        %831 = vmatprep.mubr.f32.mxu0 %v547
        %832 = vmatmul.mubr.f32.gmra.mrb[0].mxu0 %v539
        %v833 = vpop.f32.mrb[0].mxu0
        %v834 = vadd.f32 %v760, %v833
        %v835 = vpop.f32.mrb[0].mxu0
        %836 = vmatprep.mubr.f32.mxu0 %v548
        %837 = vmatmul.mubr.f32.gmra.mrb[0].mxu0 %v540
        %v838 = vpop.f32.mrb[0].mxu0
        %v839 = vadd.f32 %v760, %v838
        %v840 = vpop.f32.mrb[0].mxu0
        %841 = vmatprep.mubr.f32.mxu0 %v549
        %842 = vmatmul.mubr.f32.gmra.mrb[0].mxu0 %v541
        %v843 = vpop.f32.mrb[0].mxu0
        %v844 = vadd.f32 %v760, %v843
        %v845 = vpop.f32.mrb[0].mxu0
        %846 = vmatprep.mubr.f32.mxu0 %v550
        %847 = vmatmul.mubr.f32.gmra.mrb[0].mxu0 %v542
        %v848 = vpop.f32.mrb[0].mxu0
        %v849 = vadd.f32 %v760, %v848
        %v850 = vpop.f32.mrb[0].mxu0
        %851 = vmatprep.mubr.f32.mxu0 %v551
        %852 = vmatmul.mubr.f32.gmra.mrb[0].mxu0 %v543
        %v853 = vpop.f32.mrb[0].mxu0
        %v854 = vadd.f32 %v760, %v853
        %v855 = vpop.f32.mrb[0].mxu0
        %856 = vmatprep.mubr.f32.mxu0 %v552
        %857 = vmatmul.mubr.f32.gmra.mrb[0].mxu0 %v544
        %v858 = vpop.f32.mrb[0].mxu0
        %v859 = vadd.f32 %v760, %v858
        %v860 = vpop.f32.mrb[0].mxu0
        %861 = vmatprep.mubr.f32.mxu0 %v553
        %862 = vmatmul.mubr.f32.gmra.mrb[0].mxu0 %v545
        %v863 = vpop.f32.mrb[0].mxu0
        %v864 = vadd.f32 %v760, %v863
        %v865 = vpop.f32.mrb[0].mxu0
        %866 = vdwg.mxu0
        %867 = vmatprep.subr.mxu0 0.0
        %868 = vmatpush1.msra.mxu0 %v643
        %869 = vmatprep.subr.mxu0 0.0
        %870 = vmatpush1.msra.mxu0 %v644
        %871 = vmatprep.subr.mxu0 0.0
        %872 = vmatpush1.msra.mxu0 %v645
        %873 = vmatprep.subr.mxu0 0.0
        %874 = vmatpush1.msra.mxu0 %v646
        %875 = vmatprep.subr.mxu0 0.0
        %876 = vmatpush1.msra.mxu0 %v647
        %877 = vmatprep.subr.mxu0 0.0
        %878 = vmatpush1.msra.mxu0 %v648
        %879 = vmatprep.subr.mxu0 0.0
        %880 = vmatpush1.msra.mxu0 %v649
        %881 = vmatprep.subr.mxu0 0.0
        %882 = vmatpush1.msra.mxu0 %v650
        %883 = vmatprep.subr.mxu0 0.0
        %884 = vmatpush1.msra.mxu0 %v651
        %885 = vmatprep.subr.mxu0 0.0
        %886 = vmatpush1.msra.mxu0 %v652
        %887 = vmatprep.subr.mxu0 0.0
        %888 = vmatpush1.msra.mxu0 %v653
        %889 = vmatprep.subr.mxu0 0.0
        %890 = vmatpush1.msra.mxu0 %v654
        %891 = vmatprep.subr.mxu0 0.0
        %892 = vmatpush1.msra.mxu0 %v655
        %893 = vmatprep.subr.mxu0 0.0
        %894 = vmatpush1.msra.mxu0 %v656
        %895 = vmatprep.subr.mxu0 0.0
        %896 = vmatpush1.msra.mxu0 %v657
        %897 = vmatprep.subr.mxu0 0.0
        %898 = vmatpush1.msra.mxu0 %v658
        %899 = vmatprep.subr.mxu0 0.0
        %900 = vmatpush1.msra.mxu0 %v659
        %901 = vmatprep.subr.mxu0 0.0
        %902 = vmatpush1.msra.mxu0 %v660
        %903 = vmatprep.subr.mxu0 0.0
        %904 = vmatpush1.msra.mxu0 %v661
        %905 = vmatprep.subr.mxu0 0.0
        %906 = vmatpush1.msra.mxu0 %v662
        %907 = vmatprep.subr.mxu0 0.0
        %908 = vmatpush1.msra.mxu0 %v663
        %909 = vmatprep.subr.mxu0 0.0
        %910 = vmatpush1.msra.mxu0 %v664
        %911 = vmatprep.subr.mxu0 0.0
        %912 = vmatpush1.msra.mxu0 %v665
        %913 = vmatprep.subr.mxu0 0.0
        %914 = vmatpush1.msra.mxu0 %v666
        %915 = vmatprep.subr.mxu0 0.0
        %916 = vmatpush1.msra.mxu0 %v667
        %917 = vmatprep.subr.mxu0 0.0
        %918 = vmatpush1.msra.mxu0 %v668
        %919 = vmatprep.subr.mxu0 0.0
        %920 = vmatpush1.msra.mxu0 %v669
        %921 = vmatprep.subr.mxu0 0.0
        %922 = vmatpush1.msra.mxu0 %v670
        %923 = vmatprep.subr.mxu0 0.0
        %924 = vmatpush1.msra.mxu0 %v671
        %925 = vmatprep.subr.mxu0 0.0
        %926 = vmatpush1.msra.mxu0 %v672
        %927 = vmatprep.subr.mxu0 0.0
        %928 = vmatpush1.msra.mxu0 %v673
        %929 = vmatprep.subr.mxu0 0.0
        %930 = vmatpush1.msra.mxu0 %v674
        %931 = vmatprep.mubr.f32.mxu0 %v562
        %932 = vmatmul.mubr.f32.gmra.mrb[0].mxu0 %v554
        %v933 = vpop.f32.mrb[0].mxu0
        %v934 = vadd.f32 %v829, %v933
        %v935 = vpop.f32.mrb[0].mxu0
        %936 = vmatprep.mubr.f32.mxu0 %v563
        %937 = vmatmul.mubr.f32.gmra.mrb[0].mxu0 %v555
        %v938 = vpop.f32.mrb[0].mxu0
        %v939 = vadd.f32 %v834, %v938
        %v940 = vpop.f32.mrb[0].mxu0
        %941 = vmatprep.mubr.f32.mxu0 %v564
        %942 = vmatmul.mubr.f32.gmra.mrb[0].mxu0 %v556
        %v943 = vpop.f32.mrb[0].mxu0
        %v944 = vadd.f32 %v839, %v943
        %v945 = vpop.f32.mrb[0].mxu0
        %946 = vmatprep.mubr.f32.mxu0 %v565
        %947 = vmatmul.mubr.f32.gmra.mrb[0].mxu0 %v557
        %v948 = vpop.f32.mrb[0].mxu0
        %v949 = vadd.f32 %v844, %v948
        %v950 = vpop.f32.mrb[0].mxu0
        %951 = vmatprep.mubr.f32.mxu0 %v566
        %952 = vmatmul.mubr.f32.gmra.mrb[0].mxu0 %v558
        %v953 = vpop.f32.mrb[0].mxu0
        %v954 = vadd.f32 %v849, %v953
        %v955 = vpop.f32.mrb[0].mxu0
        %956 = vmatprep.mubr.f32.mxu0 %v567
        %957 = vmatmul.mubr.f32.gmra.mrb[0].mxu0 %v559
        %v958 = vpop.f32.mrb[0].mxu0
        %v959 = vadd.f32 %v854, %v958
        %v960 = vpop.f32.mrb[0].mxu0
        %961 = vmatprep.mubr.f32.mxu0 %v568
        %962 = vmatmul.mubr.f32.gmra.mrb[0].mxu0 %v560
        %v963 = vpop.f32.mrb[0].mxu0
        %v964 = vadd.f32 %v859, %v963
        %v965 = vpop.f32.mrb[0].mxu0
        %966 = vmatprep.mubr.f32.mxu0 %v569
        %967 = vmatmul.mubr.f32.gmra.mrb[0].mxu0 %v561
        %v968 = vpop.f32.mrb[0].mxu0
        %v969 = vadd.f32 %v864, %v968
        %v970 = vpop.f32.mrb[0].mxu0
        %971 = vdwg.mxu0
        %972 = vmatprep.subr.mxu0 0.0
        %973 = vmatpush1.msra.mxu0 %v675
        %974 = vmatprep.subr.mxu0 0.0
        %975 = vmatpush1.msra.mxu0 %v676
        %976 = vmatprep.subr.mxu0 0.0
        %977 = vmatpush1.msra.mxu0 %v677
        %978 = vmatprep.subr.mxu0 0.0
        %979 = vmatpush1.msra.mxu0 %v678
        %980 = vmatprep.subr.mxu0 0.0
        %981 = vmatpush1.msra.mxu0 %v679
        %982 = vmatprep.subr.mxu0 0.0
        %983 = vmatpush1.msra.mxu0 %v680
        %984 = vmatprep.subr.mxu0 0.0
        %985 = vmatpush1.msra.mxu0 %v681
        %986 = vmatprep.subr.mxu0 0.0
        %987 = vmatpush1.msra.mxu0 %v682
        %988 = vmatprep.subr.mxu0 0.0
        %989 = vmatpush1.msra.mxu0 %v683
        %990 = vmatprep.subr.mxu0 0.0
        %991 = vmatpush1.msra.mxu0 %v684
        %992 = vmatprep.subr.mxu0 0.0
        %993 = vmatpush1.msra.mxu0 %v685
        %994 = vmatprep.subr.mxu0 0.0
        %995 = vmatpush1.msra.mxu0 %v686
        %996 = vmatprep.subr.mxu0 0.0
        %997 = vmatpush1.msra.mxu0 %v687
        %998 = vmatprep.subr.mxu0 0.0
        %999 = vmatpush1.msra.mxu0 %v688
        %1000 = vmatprep.subr.mxu0 0.0
        %1001 = vmatpush1.msra.mxu0 %v689
        %1002 = vmatprep.subr.mxu0 0.0
        %1003 = vmatpush1.msra.mxu0 %v690
        %1004 = vmatprep.subr.mxu0 0.0
        %1005 = vmatpush1.msra.mxu0 %v691
        %1006 = vmatprep.subr.mxu0 0.0
        %1007 = vmatpush1.msra.mxu0 %v692
        %1008 = vmatprep.subr.mxu0 0.0
        %1009 = vmatpush1.msra.mxu0 %v693
        %1010 = vmatprep.subr.mxu0 0.0
        %1011 = vmatpush1.msra.mxu0 %v694
        %1012 = vmatprep.subr.mxu0 0.0
        %1013 = vmatpush1.msra.mxu0 %v695
        %1014 = vmatprep.subr.mxu0 0.0
        %1015 = vmatpush1.msra.mxu0 %v696
        %1016 = vmatprep.subr.mxu0 0.0
        %1017 = vmatpush1.msra.mxu0 %v697
        %1018 = vmatprep.subr.mxu0 0.0
        %1019 = vmatpush1.msra.mxu0 %v698
        %1020 = vmatprep.subr.mxu0 0.0
        %1021 = vmatpush1.msra.mxu0 %v699
        %1022 = vmatprep.subr.mxu0 0.0
        %1023 = vmatpush1.msra.mxu0 %v700
        %1024 = vmatprep.subr.mxu0 0.0
        %1025 = vmatpush1.msra.mxu0 %v701
        %1026 = vmatprep.subr.mxu0 0.0
        %1027 = vmatpush1.msra.mxu0 %v702
        %1028 = vmatprep.subr.mxu0 0.0
        %1029 = vmatpush1.msra.mxu0 %v703
        %1030 = vmatprep.subr.mxu0 0.0
        %1031 = vmatpush1.msra.mxu0 %v704
        %1032 = vmatprep.subr.mxu0 0.0
        %1033 = vmatpush1.msra.mxu0 %v705
        %1034 = vmatprep.subr.mxu0 0.0
        %1035 = vmatpush1.msra.mxu0 %v706
        %1036 = vmatprep.mubr.f32.mxu0 %v578
        %1037 = vmatmul.mubr.f32.gmra.mrb[0].mxu0 %v570
        %v1038 = vpop.f32.mrb[0].mxu0
        %v1039 = vadd.f32 %v934, %v1038
        %v1040 = vpop.f32.mrb[0].mxu0
        %1041 = vmatprep.mubr.f32.mxu0 %v579
        %1042 = vmatmul.mubr.f32.gmra.mrb[0].mxu0 %v571
        %v1043 = vpop.f32.mrb[0].mxu0
        %v1044 = vadd.f32 %v939, %v1043
        %v1045 = vpop.f32.mrb[0].mxu0
        %1046 = vmatprep.mubr.f32.mxu0 %v580
        %1047 = vmatmul.mubr.f32.gmra.mrb[0].mxu0 %v572
        %v1048 = vpop.f32.mrb[0].mxu0
        %v1049 = vadd.f32 %v944, %v1048
        %v1050 = vpop.f32.mrb[0].mxu0
        %1051 = vmatprep.mubr.f32.mxu0 %v581
        %1052 = vmatmul.mubr.f32.gmra.mrb[0].mxu0 %v573
        %v1053 = vpop.f32.mrb[0].mxu0
        %v1054 = vadd.f32 %v949, %v1053
        %v1055 = vpop.f32.mrb[0].mxu0
        %1056 = vmatprep.mubr.f32.mxu0 %v582
        %1057 = vmatmul.mubr.f32.gmra.mrb[0].mxu0 %v574
        %v1058 = vpop.f32.mrb[0].mxu0
        %v1059 = vadd.f32 %v954, %v1058
        %v1060 = vpop.f32.mrb[0].mxu0
        %1061 = vmatprep.mubr.f32.mxu0 %v583
        %1062 = vmatmul.mubr.f32.gmra.mrb[0].mxu0 %v575
        %v1063 = vpop.f32.mrb[0].mxu0
        %v1064 = vadd.f32 %v959, %v1063
        %v1065 = vpop.f32.mrb[0].mxu0
        %1066 = vmatprep.mubr.f32.mxu0 %v584
        %1067 = vmatmul.mubr.f32.gmra.mrb[0].mxu0 %v576
        %v1068 = vpop.f32.mrb[0].mxu0
        %v1069 = vadd.f32 %v964, %v1068
        %v1070 = vpop.f32.mrb[0].mxu0
        %1071 = vmatprep.mubr.f32.mxu0 %v585
        %1072 = vmatmul.mubr.f32.gmra.mrb[0].mxu0 %v577
        %v1073 = vpop.f32.mrb[0].mxu0
        %v1074 = vadd.f32 %v969, %v1073
        %v1075 = vpop.f32.mrb[0].mxu0
        %1076 = vdwg.mxu0
        %1077 = vmatprep.subr.mxu0 0.0
        %1078 = vmatpush1.msra.mxu0 %v707
        %1079 = vmatprep.subr.mxu0 0.0
        %1080 = vmatpush1.msra.mxu0 %v708
        %1081 = vmatprep.subr.mxu0 0.0
        %1082 = vmatpush1.msra.mxu0 %v709
        %1083 = vmatprep.subr.mxu0 0.0
        %1084 = vmatpush1.msra.mxu0 %v710
        %1085 = vmatprep.subr.mxu0 0.0
        %1086 = vmatpush1.msra.mxu0 %v711
        %1087 = vmatprep.subr.mxu0 0.0
        %1088 = vmatpush1.msra.mxu0 %v712
        %1089 = vmatprep.subr.mxu0 0.0
        %1090 = vmatpush1.msra.mxu0 %v713
        %1091 = vmatprep.subr.mxu0 0.0
        %1092 = vmatpush1.msra.mxu0 %v714
        %1093 = vmatprep.subr.mxu0 0.0
        %1094 = vmatpush1.msra.mxu0 %v715
        %1095 = vmatprep.subr.mxu0 0.0
        %1096 = vmatpush1.msra.mxu0 %v716
        %1097 = vmatprep.subr.mxu0 0.0
        %1098 = vmatpush1.msra.mxu0 %v717
        %1099 = vmatprep.subr.mxu0 0.0
        %1100 = vmatpush1.msra.mxu0 %v718
        %1101 = vmatprep.subr.mxu0 0.0
        %1102 = vmatpush1.msra.mxu0 %v719
        %1103 = vmatprep.subr.mxu0 0.0
        %1104 = vmatpush1.msra.mxu0 %v720
        %1105 = vmatprep.subr.mxu0 0.0
        %1106 = vmatpush1.msra.mxu0 %v721
        %1107 = vmatprep.subr.mxu0 0.0
        %1108 = vmatpush1.msra.mxu0 %v722
        %1109 = vmatprep.subr.mxu0 0.0
        %1110 = vmatpush1.msra.mxu0 %v723
        %1111 = vmatprep.subr.mxu0 0.0
        %1112 = vmatpush1.msra.mxu0 %v724
        %1113 = vmatprep.subr.mxu0 0.0
        %1114 = vmatpush1.msra.mxu0 %v725
        %1115 = vmatprep.subr.mxu0 0.0
        %1116 = vmatpush1.msra.mxu0 %v726
        %1117 = vmatprep.subr.mxu0 0.0
        %1118 = vmatpush1.msra.mxu0 %v727
        %1119 = vmatprep.subr.mxu0 0.0
        %1120 = vmatpush1.msra.mxu0 %v728
        %1121 = vmatprep.subr.mxu0 0.0
        %1122 = vmatpush1.msra.mxu0 %v729
        %1123 = vmatprep.subr.mxu0 0.0
        %1124 = vmatpush1.msra.mxu0 %v730
        %1125 = vmatprep.subr.mxu0 0.0
        %1126 = vmatpush1.msra.mxu0 %v731
        %1127 = vmatprep.subr.mxu0 0.0
        %1128 = vmatpush1.msra.mxu0 %v732
        %1129 = vmatprep.subr.mxu0 0.0
        %1130 = vmatpush1.msra.mxu0 %v733
        %1131 = vmatprep.subr.mxu0 0.0
        %1132 = vmatpush1.msra.mxu0 %v734
        %1133 = vmatprep.subr.mxu0 0.0
        %1134 = vmatpush1.msra.mxu0 %v735
        %1135 = vmatprep.subr.mxu0 0.0
        %1136 = vmatpush1.msra.mxu0 %v736
        %1137 = vmatprep.subr.mxu0 0.0
        %1138 = vmatpush1.msra.mxu0 %v737
        %1139 = vmatprep.subr.mxu0 0.0
        %1140 = vmatpush1.msra.mxu0 %v738
        %1141 = vmatprep.mubr.f32.mxu0 %v595
        %1142 = vmatmul.mubr.f32.gmra.mrb[0].mxu0 %v587
        %v1143 = vpop.f32.mrb[0].mxu0
        %v1144 = vadd.f32 %v1039, %v1143
        %v1145 = vpop.f32.mrb[0].mxu0
        %1146 = vmatprep.mubr.f32.mxu0 %v596
        %1147 = vmatmul.mubr.f32.gmra.mrb[0].mxu0 %v588
        %v1148 = vpop.f32.mrb[0].mxu0
        %v1149 = vadd.f32 %v1044, %v1148
        %v1150 = vpop.f32.mrb[0].mxu0
        %1151 = vmatprep.mubr.f32.mxu0 %v597
        %1152 = vmatmul.mubr.f32.gmra.mrb[0].mxu0 %v589
        %v1153 = vpop.f32.mrb[0].mxu0
        %v1154 = vadd.f32 %v1049, %v1153
        %v1155 = vpop.f32.mrb[0].mxu0
        %1156 = vmatprep.mubr.f32.mxu0 %v598
        %1157 = vmatmul.mubr.f32.gmra.mrb[0].mxu0 %v590
        %v1158 = vpop.f32.mrb[0].mxu0
        %v1159 = vadd.f32 %v1054, %v1158
        %v1160 = vpop.f32.mrb[0].mxu0
        %1161 = vmatprep.mubr.f32.mxu0 %v599
        %1162 = vmatmul.mubr.f32.gmra.mrb[0].mxu0 %v591
        %v1163 = vpop.f32.mrb[0].mxu0
        %v1164 = vadd.f32 %v1059, %v1163
        %v1165 = vpop.f32.mrb[0].mxu0
        %1166 = vmatprep.mubr.f32.mxu0 %v600
        %1167 = vmatmul.mubr.f32.gmra.mrb[0].mxu0 %v592
        %v1168 = vpop.f32.mrb[0].mxu0
        %v1169 = vadd.f32 %v1064, %v1168
        %v1170 = vpop.f32.mrb[0].mxu0
        %1171 = vmatprep.mubr.f32.mxu0 %v601
        %1172 = vmatmul.mubr.f32.gmra.mrb[0].mxu0 %v593
        %v1173 = vpop.f32.mrb[0].mxu0
        %v1174 = vadd.f32 %v1069, %v1173
        %v1175 = vpop.f32.mrb[0].mxu0
        %1176 = vmatprep.mubr.f32.mxu0 %v602
        %1177 = vmatmul.mubr.f32.gmra.mrb[0].mxu0 %v594
        %v1178 = vpop.f32.mrb[0].mxu0
        %v1179 = vadd.f32 %v1074, %v1178
        %v1180 = vpop.f32.mrb[0].mxu0
        %1181 = vdwg.mxu0
        %1182 = vmatprep.subr.mxu0 0.0
        %1183 = vmatpush1.msra.mxu0 %v739
        %1184 = vmatprep.subr.mxu0 0.0
        %1185 = vmatpush1.msra.mxu0 %v740
        %1186 = vmatprep.subr.mxu0 0.0
        %1187 = vmatpush1.msra.mxu0 %v741
        %1188 = vmatprep.subr.mxu0 0.0
        %1189 = vmatpush1.msra.mxu0 %v742
        %1190 = vmatprep.subr.mxu0 0.0
        %1191 = vmatpush1.msra.mxu0 %v743
        %1192 = vmatprep.subr.mxu0 0.0
        %1193 = vmatpush1.msra.mxu0 %v744
        %1194 = vmatprep.subr.mxu0 0.0
        %1195 = vmatpush1.msra.mxu0 %v745
        %1196 = vmatprep.subr.mxu0 0.0
        %1197 = vmatpush1.msra.mxu0 %v746
        %1198 = vmatprep.subr.mxu0 0.0
        %1199 = vmatpush1.msra.mxu0 %v747
        %1200 = vmatprep.subr.mxu0 0.0
        %1201 = vmatpush1.msra.mxu0 %v748
        %1202 = vmatprep.subr.mxu0 0.0
        %1203 = vmatpush1.msra.mxu0 %v749
        %1204 = vmatprep.subr.mxu0 0.0
        %1205 = vmatpush1.msra.mxu0 %v750
        %1206 = vmatprep.subr.mxu0 0.0
        %1207 = vmatpush1.msra.mxu0 %v751
        %1208 = vmatprep.subr.mxu0 0.0
        %1209 = vmatpush1.msra.mxu0 %v752
        %1210 = vmatprep.subr.mxu0 0.0
        %1211 = vmatpush1.msra.mxu0 %v753
        %1212 = vmatprep.subr.mxu0 0.0
        %1213 = vmatpush1.msra.mxu0 %v754
        %1214 = vmatprep.subr.mxu0 0.0
        %1215 = vmatpush1.msra.mxu0 0.0
        %1216 = vmatprep.subr.mxu0 0.0
        %1217 = vmatpush1.msra.mxu0 0.0
        %1218 = vmatprep.subr.mxu0 0.0
        %1219 = vmatpush1.msra.mxu0 0.0
        %1220 = vmatprep.subr.mxu0 0.0
        %1221 = vmatpush1.msra.mxu0 0.0
        %1222 = vmatprep.subr.mxu0 0.0
        %1223 = vmatpush1.msra.mxu0 0.0
        %1224 = vmatprep.subr.mxu0 0.0
        %1225 = vmatpush1.msra.mxu0 0.0
        %1226 = vmatprep.subr.mxu0 0.0
        %1227 = vmatpush1.msra.mxu0 0.0
        %1228 = vmatprep.subr.mxu0 0.0
        %1229 = vmatpush1.msra.mxu0 0.0
        %1230 = vmatprep.subr.mxu0 0.0
        %1231 = vmatpush1.msra.mxu0 0.0
        %1232 = vmatprep.subr.mxu0 0.0
        %1233 = vmatpush1.msra.mxu0 0.0
        %1234 = vmatprep.subr.mxu0 0.0
        %1235 = vmatpush1.msra.mxu0 0.0
        %1236 = vmatprep.subr.mxu0 0.0
        %1237 = vmatpush1.msra.mxu0 0.0
        %1238 = vmatprep.subr.mxu0 0.0
        %1239 = vmatpush1.msra.mxu0 0.0
        %1240 = vmatprep.subr.mxu0 0.0
        %1241 = vmatpush1.msra.mxu0 0.0
        %1242 = vmatprep.subr.mxu0 0.0
        %1243 = vmatpush1.msra.mxu0 0.0
        %1244 = vmatprep.subr.mxu0 0.0
        %1245 = vmatpush1.msra.mxu0 0.0
        %1246 = vmatprep.mubr.f32.mxu0 0.0
        %1247 = vmatmul.mubr.f32.gmra.mrb[0].mxu0 %v603
        %v1248 = vpop.f32.mrb[0].mxu0
        %v1249 = vadd.f32 %v1144, %v1248
        %v1250 = vpop.f32.mrb[0].mxu0
        %1251 = vmatprep.mubr.f32.mxu0 0.0
        %1252 = vmatmul.mubr.f32.gmra.mrb[0].mxu0 %v604
        %v1253 = vpop.f32.mrb[0].mxu0
        %v1254 = vadd.f32 %v1149, %v1253
        %v1255 = vpop.f32.mrb[0].mxu0
        %1256 = vmatprep.mubr.f32.mxu0 0.0
        %1257 = vmatmul.mubr.f32.gmra.mrb[0].mxu0 %v605
        %v1258 = vpop.f32.mrb[0].mxu0
        %v1259 = vadd.f32 %v1154, %v1258
        %v1260 = vpop.f32.mrb[0].mxu0
        %1261 = vmatprep.mubr.f32.mxu0 0.0
        %1262 = vmatmul.mubr.f32.gmra.mrb[0].mxu0 %v606
        %v1263 = vpop.f32.mrb[0].mxu0
        %v1264 = vadd.f32 %v1159, %v1263
        %v1265 = vpop.f32.mrb[0].mxu0
        %1266 = vmatprep.mubr.f32.mxu0 0.0
        %1267 = vmatmul.mubr.f32.gmra.mrb[0].mxu0 %v607
        %v1268 = vpop.f32.mrb[0].mxu0
        %v1269 = vadd.f32 %v1164, %v1268
        %v1270 = vpop.f32.mrb[0].mxu0
        %1271 = vmatprep.mubr.f32.mxu0 0.0
        %1272 = vmatmul.mubr.f32.gmra.mrb[0].mxu0 %v608
        %v1273 = vpop.f32.mrb[0].mxu0
        %v1274 = vadd.f32 %v1169, %v1273
        %v1275 = vpop.f32.mrb[0].mxu0
        %1276 = vmatprep.mubr.f32.mxu0 0.0
        %1277 = vmatmul.mubr.f32.gmra.mrb[0].mxu0 %v609
        %v1278 = vpop.f32.mrb[0].mxu0
        %v1279 = vadd.f32 %v1174, %v1278
        %v1280 = vpop.f32.mrb[0].mxu0
        %1281 = vmatprep.mubr.f32.mxu0 0.0
        %1282 = vmatmul.mubr.f32.gmra.mrb[0].mxu0 %v610
        %v1283 = vpop.f32.mrb[0].mxu0
        %v1284 = vadd.f32 %v1179, %v1283
        %v1285 = vpop.f32.mrb[0].mxu0
        %1286 = vdwg.mxu0
        %v1287 = vadd.f32 %v1249, %v1254
        %v1288 = vadd.f32 %v1287, %v1259
        %v1289 = vadd.f32 %v1288, %v1264
        %v1290 = vadd.f32 %v1289, %v1269
        %v1291 = vadd.f32 %v1290, %v1274
        %v1292 = vadd.f32 %v1291, %v1279
        %v1293 = vadd.f32 %v1292, %v1284
        %v1294 = vrot.slane %v1293, 4
        %v1295 = vadd.f32 %v1293, %v1294
        %v1296 = vrot.slane %v1295, 2
        %v1297 = vadd.f32 %v1295, %v1296
        %v1298 = vrot.slane %v1297, 1
        %v1299 = vadd.f32 %v1297, %v1298
        %v1300 = vmul.f32 %v1249, %v1249
        %v1301 = vmul.f32 %v1254, %v1254
        %v1302 = vmul.f32 %v1259, %v1259
        %v1303 = vmul.f32 %v1264, %v1264
        %v1304 = vmul.f32 %v1269, %v1269
        %v1305 = vmul.f32 %v1274, %v1274
        %v1306 = vmul.f32 %v1279, %v1279
        %v1307 = vmul.f32 %v1284, %v1284
        %v1308 = vadd.f32 %v1300, %v1301
        %v1309 = vadd.f32 %v1308, %v1302
        %v1310 = vadd.f32 %v1309, %v1303
        %v1311 = vadd.f32 %v1310, %v1304
        %v1312 = vadd.f32 %v1311, %v1305
        %v1313 = vadd.f32 %v1312, %v1306
        %v1314 = vadd.f32 %v1313, %v1307
        %v1315 = vrot.slane %v1314, 4
        %v1316 = vadd.f32 %v1314, %v1315
        %v1317 = vrot.slane %v1316, 2
        %v1318 = vadd.f32 %v1316, %v1317
        %v1319 = vrot.slane %v1318, 1
        %v1320 = vadd.f32 %v1318, %v1319
        %1321 = vmatprep.subr.mxu0 0.0
        %1322 = vmatpush1.msra.mxu0 %v493
        %1323 = vmatprep.subr.mxu0 0.0
        %1324 = vmatpush1.msra.mxu0 %v494
        %1325 = vmatprep.subr.mxu0 0.0
        %1326 = vmatpush1.msra.mxu0 %v495
        %1327 = vmatprep.subr.mxu0 0.0
        %1328 = vmatpush1.msra.mxu0 %v496
        %1329 = vmatprep.subr.mxu0 0.0
        %1330 = vmatpush1.msra.mxu0 %v497
        %1331 = vmatprep.subr.mxu0 0.0
        %1332 = vmatpush1.msra.mxu0 %v498
        %1333 = vmatprep.subr.mxu0 0.0
        %1334 = vmatpush1.msra.mxu0 %v499
        %1335 = vmatprep.subr.mxu0 0.0
        %1336 = vmatpush1.msra.mxu0 %v500
        %1337 = vmatprep.subr.mxu0 0.0
        %1338 = vmatpush1.msra.mxu0 %v501
        %1339 = vmatprep.subr.mxu0 0.0
        %1340 = vmatpush1.msra.mxu0 %v502
        %1341 = vmatprep.subr.mxu0 0.0
        %1342 = vmatpush1.msra.mxu0 %v503
        %1343 = vmatprep.subr.mxu0 0.0
        %1344 = vmatpush1.msra.mxu0 %v504
        %1345 = vmatprep.subr.mxu0 0.0
        %1346 = vmatpush1.msra.mxu0 %v505
        %1347 = vmatprep.subr.mxu0 0.0
        %1348 = vmatpush1.msra.mxu0 %v506
        %1349 = vmatprep.subr.mxu0 0.0
        %1350 = vmatpush1.msra.mxu0 %v507
        %1351 = vmatprep.subr.mxu0 0.0
        %1352 = vmatpush1.msra.mxu0 %v508
        %1353 = vmatprep.subr.mxu0 0.0
        %1354 = vmatpush1.msra.mxu0 0.0
        %1355 = vmatprep.subr.mxu0 0.0
        %1356 = vmatpush1.msra.mxu0 0.0
        %1357 = vmatprep.subr.mxu0 0.0
        %1358 = vmatpush1.msra.mxu0 0.0
        %1359 = vmatprep.subr.mxu0 0.0
        %1360 = vmatpush1.msra.mxu0 0.0
        %1361 = vmatprep.subr.mxu0 0.0
        %1362 = vmatpush1.msra.mxu0 0.0
        %1363 = vmatprep.subr.mxu0 0.0
        %1364 = vmatpush1.msra.mxu0 0.0
        %1365 = vmatprep.subr.mxu0 0.0
        %1366 = vmatpush1.msra.mxu0 0.0
        %1367 = vmatprep.subr.mxu0 0.0
        %1368 = vmatpush1.msra.mxu0 0.0
        %1369 = vmatprep.subr.mxu0 0.0
        %1370 = vmatpush1.msra.mxu0 0.0
        %1371 = vmatprep.subr.mxu0 0.0
        %1372 = vmatpush1.msra.mxu0 0.0
        %1373 = vmatprep.subr.mxu0 0.0
        %1374 = vmatpush1.msra.mxu0 0.0
        %1375 = vmatprep.subr.mxu0 0.0
        %1376 = vmatpush1.msra.mxu0 0.0
        %1377 = vmatprep.subr.mxu0 0.0
        %1378 = vmatpush1.msra.mxu0 0.0
        %1379 = vmatprep.subr.mxu0 0.0
        %1380 = vmatpush1.msra.mxu0 0.0
        %1381 = vmatprep.subr.mxu0 0.0
        %1382 = vmatpush1.msra.mxu0 0.0
        %1383 = vmatprep.subr.mxu0 0.0
        %1384 = vmatpush1.msra.mxu0 0.0
        %1385 = vmatprep.mubr.f32.mxu0 0.0
        %1386 = vmatmul.mubr.f32.gmra.mrb[0].mxu0 %v1299
        %v1387 = vpop.f32.mrb[0].mxu0
        %v1388 = vadd.f32 0.0, %v1387
        %v1389 = vpop.f32.mrb[0].mxu0
        %1390 = vdwg.mxu0
        %v1391 = vmul.f32 %v1388, 0.00048828125
        %1392 = vmatprep.subr.mxu0 0.0
        %1393 = vmatpush1.msra.mxu0 %v493
        %1394 = vmatprep.subr.mxu0 0.0
        %1395 = vmatpush1.msra.mxu0 %v494
        %1396 = vmatprep.subr.mxu0 0.0
        %1397 = vmatpush1.msra.mxu0 %v495
        %1398 = vmatprep.subr.mxu0 0.0
        %1399 = vmatpush1.msra.mxu0 %v496
        %1400 = vmatprep.subr.mxu0 0.0
        %1401 = vmatpush1.msra.mxu0 %v497
        %1402 = vmatprep.subr.mxu0 0.0
        %1403 = vmatpush1.msra.mxu0 %v498
        %1404 = vmatprep.subr.mxu0 0.0
        %1405 = vmatpush1.msra.mxu0 %v499
        %1406 = vmatprep.subr.mxu0 0.0
        %1407 = vmatpush1.msra.mxu0 %v500
        %1408 = vmatprep.subr.mxu0 0.0
        %1409 = vmatpush1.msra.mxu0 %v501
        %1410 = vmatprep.subr.mxu0 0.0
        %1411 = vmatpush1.msra.mxu0 %v502
        %1412 = vmatprep.subr.mxu0 0.0
        %1413 = vmatpush1.msra.mxu0 %v503
        %1414 = vmatprep.subr.mxu0 0.0
        %1415 = vmatpush1.msra.mxu0 %v504
        %1416 = vmatprep.subr.mxu0 0.0
        %1417 = vmatpush1.msra.mxu0 %v505
        %1418 = vmatprep.subr.mxu0 0.0
        %1419 = vmatpush1.msra.mxu0 %v506
        %1420 = vmatprep.subr.mxu0 0.0
        %1421 = vmatpush1.msra.mxu0 %v507
        %1422 = vmatprep.subr.mxu0 0.0
        %1423 = vmatpush1.msra.mxu0 %v508
        %1424 = vmatprep.subr.mxu0 0.0
        %1425 = vmatpush1.msra.mxu0 0.0
        %1426 = vmatprep.subr.mxu0 0.0
        %1427 = vmatpush1.msra.mxu0 0.0
        %1428 = vmatprep.subr.mxu0 0.0
        %1429 = vmatpush1.msra.mxu0 0.0
        %1430 = vmatprep.subr.mxu0 0.0
        %1431 = vmatpush1.msra.mxu0 0.0
        %1432 = vmatprep.subr.mxu0 0.0
        %1433 = vmatpush1.msra.mxu0 0.0
        %1434 = vmatprep.subr.mxu0 0.0
        %1435 = vmatpush1.msra.mxu0 0.0
        %1436 = vmatprep.subr.mxu0 0.0
        %1437 = vmatpush1.msra.mxu0 0.0
        %1438 = vmatprep.subr.mxu0 0.0
        %1439 = vmatpush1.msra.mxu0 0.0
        %1440 = vmatprep.subr.mxu0 0.0
        %1441 = vmatpush1.msra.mxu0 0.0
        %1442 = vmatprep.subr.mxu0 0.0
        %1443 = vmatpush1.msra.mxu0 0.0
        %1444 = vmatprep.subr.mxu0 0.0
        %1445 = vmatpush1.msra.mxu0 0.0
        %1446 = vmatprep.subr.mxu0 0.0
        %1447 = vmatpush1.msra.mxu0 0.0
        %1448 = vmatprep.subr.mxu0 0.0
        %1449 = vmatpush1.msra.mxu0 0.0
        %1450 = vmatprep.subr.mxu0 0.0
        %1451 = vmatpush1.msra.mxu0 0.0
        %1452 = vmatprep.subr.mxu0 0.0
        %1453 = vmatpush1.msra.mxu0 0.0
        %1454 = vmatprep.subr.mxu0 0.0
        %1455 = vmatpush1.msra.mxu0 0.0
        %1456 = vmatprep.mubr.f32.mxu0 0.0
        %1457 = vmatmul.mubr.f32.gmra.mrb[0].mxu0 %v1320
        %v1458 = vpop.f32.mrb[0].mxu0
        %v1459 = vadd.f32 0.0, %v1458
        %v1460 = vpop.f32.mrb[0].mxu0
        %1461 = vdwg.mxu0
        %v1462 = vmul.f32 %v1459, 0.00048828125
        %v1463 = vmul.f32 %v1391, %v1391
        %v1464 = vsub.f32 %v1462, %v1463
        %v1465 = vlaneseq
        %v1466 = vshrl.u32 %v1465, 7
        %v1467 = vsub.s32 0, %v1466
        %v1468 = vrot.slane %v1391, %v1467
        %v1469 = vsub.f32 %v1249, %v1468
        %v1470 = vsub.f32 %v1254, %v1468
        %v1471 = vsub.f32 %v1259, %v1468
        %v1472 = vsub.f32 %v1264, %v1468
        %v1473 = vsub.f32 %v1269, %v1468
        %v1474 = vsub.f32 %v1274, %v1468
        %v1475 = vsub.f32 %v1279, %v1468
        %v1476 = vsub.f32 %v1284, %v1468
        %v1477 = vadd.f32 %v1464, 1e-05
        %v1478 = vrsqrt.pop %v1477
        %v1479 = vlaneseq
        %v1480 = vshrl.u32 %v1479, 7
        %v1481 = vsub.s32 0, %v1480
        %v1482 = vrot.slane %v1478, %v1481
        %v1483 = vmul.f32 %v1469, %v1482
        %v1484 = vmul.f32 %v1470, %v1482
        %v1485 = vmul.f32 %v1471, %v1482
        %v1486 = vmul.f32 %v1472, %v1482
        %v1487 = vmul.f32 %v1473, %v1482
        %v1488 = vmul.f32 %v1474, %v1482
        %v1489 = vmul.f32 %v1475, %v1482
        %v1490 = vmul.f32 %v1476, %v1482
        %v1491 = vld [vmem:[%s4] sm:$0x1]
        %v1493 = vlaneseq
        %v1494 = vshrl.u32 %v1493, 7
        %v1495 = vsub.s32 0, %v1494
        %v1496 = vrot.slane %v1491, %v1495
        %v1498 = vmul.f32 %v1483, %v1496
        %v1499 = vmul.f32 %v1484, %v1496
        %v1500 = vmul.f32 %v1485, %v1496
        %v1501 = vmul.f32 %v1486, %v1496
        %v1502 = vmul.f32 %v1487, %v1496
        %v1503 = vmul.f32 %v1488, %v1496
        %v1504 = vmul.f32 %v1489, %v1496
        %v1505 = vmul.f32 %v1490, %v1496
        %v1506 = vld [vmem:[%s5] sm:$0x1]
        %v1508 = vlaneseq
        %v1509 = vshrl.u32 %v1508, 7
        %v1510 = vsub.s32 0, %v1509
        %v1511 = vrot.slane %v1506, %v1510
        %v1513 = vadd.f32 %v1498, %v1511
        %v1514 = vadd.f32 %v1499, %v1511
        %v1515 = vadd.f32 %v1500, %v1511
        %v1516 = vadd.f32 %v1501, %v1511
        %v1517 = vadd.f32 %v1502, %v1511
        %v1518 = vadd.f32 %v1503, %v1511
        %v1519 = vadd.f32 %v1504, %v1511
        %v1520 = vadd.f32 %v1505, %v1511
        %v1521 = vxor.u32 %v1513, 2147483648
        %v1522 = vxor.u32 %v1514, 2147483648
        %v1523 = vxor.u32 %v1515, 2147483648
        %v1524 = vxor.u32 %v1516, 2147483648
        %v1525 = vxor.u32 %v1517, 2147483648
        %v1526 = vxor.u32 %v1518, 2147483648
        %v1527 = vxor.u32 %v1519, 2147483648
        %v1528 = vxor.u32 %v1520, 2147483648
        %v1529 = vmul.f32 %v1521, 1.442695
        %v1530 = vpow.pop %v1529
        %v1531 = vmul.f32 %v1522, 1.442695
        %v1532 = vpow.pop %v1531
        %v1533 = vmul.f32 %v1523, 1.442695
        %v1534 = vpow.pop %v1533
        %v1535 = vmul.f32 %v1524, 1.442695
        %v1536 = vpow.pop %v1535
        %v1537 = vmul.f32 %v1525, 1.442695
        %v1538 = vpow.pop %v1537
        %v1539 = vmul.f32 %v1526, 1.442695
        %v1540 = vpow.pop %v1539
        %v1541 = vmul.f32 %v1527, 1.442695
        %v1542 = vpow.pop %v1541
        %v1543 = vmul.f32 %v1528, 1.442695
        %v1544 = vpow.pop %v1543
        %v1545 = vadd.f32 %v1530, 1.0
        %v1546 = vadd.f32 %v1532, 1.0
        %v1547 = vadd.f32 %v1534, 1.0
        %v1548 = vadd.f32 %v1536, 1.0
        %v1549 = vadd.f32 %v1538, 1.0
        %v1550 = vadd.f32 %v1540, 1.0
        %v1551 = vadd.f32 %v1542, 1.0
        %v1552 = vadd.f32 %v1544, 1.0
        %v1553 = vrcp.pop %v1545
        %v1554 = vmul.f32 1.0, %v1553
        %v1555 = vrcp.pop %v1546
        %v1556 = vmul.f32 1.0, %v1555
        %v1557 = vrcp.pop %v1547
        %v1558 = vmul.f32 1.0, %v1557
        %v1559 = vrcp.pop %v1548
        %v1560 = vmul.f32 1.0, %v1559
        %v1561 = vrcp.pop %v1549
        %v1562 = vmul.f32 1.0, %v1561
        %v1563 = vrcp.pop %v1550
        %v1564 = vmul.f32 1.0, %v1563
        %v1565 = vrcp.pop %v1551
        %v1566 = vmul.f32 1.0, %v1565
        %v1567 = vrcp.pop %v1552
        %v1568 = vmul.f32 1.0, %v1567
        %v1569 = vmul.f32 %v1513, %v1554
        %v1570 = vmul.f32 %v1514, %v1556
        %v1571 = vmul.f32 %v1515, %v1558
        %v1572 = vmul.f32 %v1516, %v1560
        %v1573 = vmul.f32 %v1517, %v1562
        %v1574 = vmul.f32 %v1518, %v1564
        %v1575 = vmul.f32 %v1519, %v1566
        %v1576 = vmul.f32 %v1520, %v1568
        %v1577 = vld [vmem:[%s479] sm:$0x1]
        %v1578 = vxor.u32 %v1577, 2147483648
        %v1579 = vmul.f32 %v1578, 1.442695
        %v1580 = vpow.pop %v1579
        %v1581 = vadd.f32 %v1580, 1.0
        %v1582 = vrcp.pop %v1581
        %v1583 = vmul.f32 1.0, %v1582
        %v1584 = vmul.f32 %v1577, %v1583
        %v1585 = vld [vmem:[%s6] sm:$0xff]
        %v1586 = vld [vmem:[%s6 + $0x8] sm:$0xff]
        %v1587 = vld [vmem:[%s6 + $0x10] sm:$0xff]
        %v1588 = vld [vmem:[%s6 + $0x18] sm:$0xff]
        %v1589 = vld [vmem:[%s7] sm:$0x1]
        %vm1590 = vcmask 261120
        %v1592 = vsel %vm1590, %v1584, 0
        %1594 = vmatprep.subr.mxu0 0.0
        %1595 = vmatpush1.msra.mxu0 %v1585
        %1596 = vmatprep.subr.mxu0 0.0
        %1597 = vmatpush1.msra.mxu0 %v1586
        %1598 = vmatprep.subr.mxu0 0.0
        %1599 = vmatpush1.msra.mxu0 %v1587
        %1600 = vmatprep.subr.mxu0 0.0
        %1601 = vmatpush1.msra.mxu0 %v1588
        %1602 = vmatprep.subr.mxu0 0.0
        %1603 = vmatpush1.msra.mxu0 0.0
        %1604 = vmatprep.subr.mxu0 0.0
        %1605 = vmatpush1.msra.mxu0 0.0
        %1606 = vmatprep.subr.mxu0 0.0
        %1607 = vmatpush1.msra.mxu0 0.0
        %1608 = vmatprep.subr.mxu0 0.0
        %1609 = vmatpush1.msra.mxu0 0.0
        %1610 = vmatprep.subr.mxu0 0.0
        %1611 = vmatpush1.msra.mxu0 0.0
        %1612 = vmatprep.subr.mxu0 0.0
        %1613 = vmatpush1.msra.mxu0 0.0
        %1614 = vmatprep.subr.mxu0 0.0
        %1615 = vmatpush1.msra.mxu0 0.0
        %1616 = vmatprep.subr.mxu0 0.0
        %1617 = vmatpush1.msra.mxu0 0.0
        %1618 = vmatprep.subr.mxu0 0.0
        %1619 = vmatpush1.msra.mxu0 0.0
        %1620 = vmatprep.subr.mxu0 0.0
        %1621 = vmatpush1.msra.mxu0 0.0
        %1622 = vmatprep.subr.mxu0 0.0
        %1623 = vmatpush1.msra.mxu0 0.0
        %1624 = vmatprep.subr.mxu0 0.0
        %1625 = vmatpush1.msra.mxu0 0.0
        %1626 = vmatprep.subr.mxu0 0.0
        %1627 = vmatpush1.msra.mxu0 0.0
        %1628 = vmatprep.subr.mxu0 0.0
        %1629 = vmatpush1.msra.mxu0 0.0
        %1630 = vmatprep.subr.mxu0 0.0
        %1631 = vmatpush1.msra.mxu0 0.0
        %1632 = vmatprep.subr.mxu0 0.0
        %1633 = vmatpush1.msra.mxu0 0.0
        %1634 = vmatprep.subr.mxu0 0.0
        %1635 = vmatpush1.msra.mxu0 0.0
        %1636 = vmatprep.subr.mxu0 0.0
        %1637 = vmatpush1.msra.mxu0 0.0
        %1638 = vmatprep.subr.mxu0 0.0
        %1639 = vmatpush1.msra.mxu0 0.0
        %1640 = vmatprep.subr.mxu0 0.0
        %1641 = vmatpush1.msra.mxu0 0.0
        %1642 = vmatprep.subr.mxu0 0.0
        %1643 = vmatpush1.msra.mxu0 0.0
        %1644 = vmatprep.subr.mxu0 0.0
        %1645 = vmatpush1.msra.mxu0 0.0
        %1646 = vmatprep.subr.mxu0 0.0
        %1647 = vmatpush1.msra.mxu0 0.0
        %1648 = vmatprep.subr.mxu0 0.0
        %1649 = vmatpush1.msra.mxu0 0.0
        %1650 = vmatprep.subr.mxu0 0.0
        %1651 = vmatpush1.msra.mxu0 0.0
        %1652 = vmatprep.subr.mxu0 0.0
        %1653 = vmatpush1.msra.mxu0 0.0
        %1654 = vmatprep.subr.mxu0 0.0
        %1655 = vmatpush1.msra.mxu0 0.0
        %1656 = vmatprep.subr.mxu0 0.0
        %1657 = vmatpush1.msra.mxu0 0.0
        %1658 = vmatprep.mubr.f32.mxu0 0.0
        %1659 = vmatmul.mubr.f32.gmra.mrb[0].mxu0 %v1592
        %v1660 = vpop.f32.mrb[0].mxu0
        %v1661 = vadd.f32 %v1589, %v1660
        %v1662 = vpop.f32.mrb[0].mxu0
        %1663 = vdwg.mxu0
        %v1664 = vlaneseq
        %v1665 = vshrl.u32 %v1664, 7
        %v1666 = vsub.s32 0, %v1665
        %v1667 = vrot.slane %v1661, %v1666
        %v1668 = vadd.f32 %v1569, %v1667
        %v1669 = vadd.f32 %v1570, %v1667
        %v1670 = vadd.f32 %v1571, %v1667
        %v1671 = vadd.f32 %v1572, %v1667
        %v1672 = vadd.f32 %v1573, %v1667
        %v1673 = vadd.f32 %v1574, %v1667
        %v1674 = vadd.f32 %v1575, %v1667
        %v1675 = vadd.f32 %v1576, %v1667
        %1676 = vst [vmem:[%s529 + $0x1] sm:$0xff] %v1668
        %1677 = vst [vmem:[%s529 + $0x11] sm:$0xff] %v1669
        %1678 = vst [vmem:[%s529 + $0x21] sm:$0xff] %v1670
        %1679 = vst [vmem:[%s529 + $0x31] sm:$0xff] %v1671
        %1680 = vst [vmem:[%s529 + $0x41] sm:$0xff] %v1672
        %1681 = vst [vmem:[%s529 + $0x51] sm:$0xff] %v1673
        %1682 = vst [vmem:[%s529 + $0x61] sm:$0xff] %v1674
        %1683 = vst [vmem:[%s529 + $0x71] sm:$0xff] %v1675
        %v1684 = vld [vmem:[#allocation2] sm:$0xff]
        %v1685 = vld [vmem:[#allocation2 + $0x10] sm:$0xff]
        %v1686 = vld [vmem:[#allocation2 + $0x20] sm:$0xff]
        %v1687 = vld [vmem:[#allocation2 + $0x30] sm:$0xff]
        %v1688 = vld [vmem:[#allocation2 + $0x40] sm:$0xff]
        %v1689 = vld [vmem:[#allocation2 + $0x50] sm:$0xff]
        %v1690 = vld [vmem:[#allocation2 + $0x60] sm:$0xff]
        %v1691 = vld [vmem:[#allocation2 + $0x70] sm:$0xff]
        %v1692 = vld [vmem:[#allocation2 + $0x1] sm:$0xff]
        %v1693 = vld [vmem:[#allocation2 + $0x11] sm:$0xff]
        %v1694 = vld [vmem:[#allocation2 + $0x21] sm:$0xff]
        %v1695 = vld [vmem:[#allocation2 + $0x31] sm:$0xff]
        %v1696 = vld [vmem:[#allocation2 + $0x41] sm:$0xff]
        %v1697 = vld [vmem:[#allocation2 + $0x51] sm:$0xff]
        %v1698 = vld [vmem:[#allocation2 + $0x61] sm:$0xff]
        %v1699 = vld [vmem:[#allocation2 + $0x71] sm:$0xff]
        %v1700 = vld [vmem:[#allocation2 + $0x2] sm:$0xff]
        %v1701 = vld [vmem:[#allocation2 + $0x12] sm:$0xff]
        %v1702 = vld [vmem:[#allocation2 + $0x22] sm:$0xff]
        %v1703 = vld [vmem:[#allocation2 + $0x32] sm:$0xff]
        %v1704 = vld [vmem:[#allocation2 + $0x42] sm:$0xff]
        %v1705 = vld [vmem:[#allocation2 + $0x52] sm:$0xff]
        %v1706 = vld [vmem:[#allocation2 + $0x62] sm:$0xff]
        %v1707 = vld [vmem:[#allocation2 + $0x72] sm:$0xff]
        %v1708 = vld [vmem:[%s529] sm:$0xff]
        %v1709 = vld [vmem:[%s529 + $0x10] sm:$0xff]
        %v1710 = vld [vmem:[%s529 + $0x20] sm:$0xff]
        %v1711 = vld [vmem:[%s529 + $0x30] sm:$0xff]
        %v1712 = vld [vmem:[%s529 + $0x40] sm:$0xff]
        %v1713 = vld [vmem:[%s529 + $0x50] sm:$0xff]
        %v1714 = vld [vmem:[%s529 + $0x60] sm:$0xff]
        %v1715 = vld [vmem:[%s529 + $0x70] sm:$0xff]
        %v1716 = vld [vmem:[%s529 + $0x1] sm:$0xff]
        %v1717 = vld [vmem:[%s529 + $0x11] sm:$0xff]
        %v1718 = vld [vmem:[%s529 + $0x21] sm:$0xff]
        %v1719 = vld [vmem:[%s529 + $0x31] sm:$0xff]
        %v1720 = vld [vmem:[%s529 + $0x41] sm:$0xff]
        %v1721 = vld [vmem:[%s529 + $0x51] sm:$0xff]
        %v1722 = vld [vmem:[%s529 + $0x61] sm:$0xff]
        %v1723 = vld [vmem:[%s529 + $0x71] sm:$0xff]
        %v1724 = vld [vmem:[%s529 + $0x2] sm:$0xff]
        %v1725 = vld [vmem:[%s529 + $0x12] sm:$0xff]
        %v1726 = vld [vmem:[%s529 + $0x22] sm:$0xff]
        %v1727 = vld [vmem:[%s529 + $0x32] sm:$0xff]
        %v1728 = vld [vmem:[%s529 + $0x42] sm:$0xff]
        %v1729 = vld [vmem:[%s529 + $0x52] sm:$0xff]
        %v1730 = vld [vmem:[%s529 + $0x62] sm:$0xff]
        %v1731 = vld [vmem:[%s529 + $0x72] sm:$0xff]
        %v1732 = vld [vmem:[%s586] sm:$0xff]
        %v1733 = vld [vmem:[%s586 + $0x10] sm:$0xff]
        %v1734 = vld [vmem:[%s586 + $0x20] sm:$0xff]
        %v1735 = vld [vmem:[%s586 + $0x30] sm:$0xff]
        %v1736 = vld [vmem:[%s586 + $0x40] sm:$0xff]
        %v1737 = vld [vmem:[%s586 + $0x50] sm:$0xff]
        %v1738 = vld [vmem:[%s586 + $0x60] sm:$0xff]
        %v1739 = vld [vmem:[%s586 + $0x70] sm:$0xff]
        %v1740 = vld [vmem:[%s586 + $0x1] sm:$0xff]
        %v1741 = vld [vmem:[%s586 + $0x11] sm:$0xff]
        %v1742 = vld [vmem:[%s586 + $0x21] sm:$0xff]
        %v1743 = vld [vmem:[%s586 + $0x31] sm:$0xff]
        %v1744 = vld [vmem:[%s586 + $0x41] sm:$0xff]
        %v1745 = vld [vmem:[%s586 + $0x51] sm:$0xff]
        %v1746 = vld [vmem:[%s586 + $0x61] sm:$0xff]
        %v1747 = vld [vmem:[%s586 + $0x71] sm:$0xff]
        %v1748 = vld [vmem:[%s586 + $0x2] sm:$0xff]
        %v1749 = vld [vmem:[%s586 + $0x12] sm:$0xff]
        %v1750 = vld [vmem:[%s586 + $0x22] sm:$0xff]
        %v1751 = vld [vmem:[%s586 + $0x32] sm:$0xff]
        %v1752 = vld [vmem:[%s586 + $0x42] sm:$0xff]
        %v1753 = vld [vmem:[%s586 + $0x52] sm:$0xff]
        %v1754 = vld [vmem:[%s586 + $0x62] sm:$0xff]
        %v1755 = vld [vmem:[%s586 + $0x72] sm:$0xff]
        %v1756 = vld [vmem:[#allocation5] sm:$0xff]
        %v1757 = vld [vmem:[#allocation5 + $0x8] sm:$0xff]
        %v1758 = vld [vmem:[#allocation5 + $0x10] sm:$0xff]
        %v1759 = vld [vmem:[#allocation5 + $0x18] sm:$0xff]
        %v1760 = vld [vmem:[#allocation5 + $0x20] sm:$0xff]
        %v1761 = vld [vmem:[#allocation5 + $0x28] sm:$0xff]
        %v1762 = vld [vmem:[#allocation5 + $0x30] sm:$0xff]
        %v1763 = vld [vmem:[#allocation5 + $0x38] sm:$0xff]
        %v1764 = vld [vmem:[#allocation5 + $0x40] sm:$0xff]
        %v1765 = vld [vmem:[#allocation5 + $0x48] sm:$0xff]
        %v1766 = vld [vmem:[#allocation5 + $0x50] sm:$0xff]
        %v1767 = vld [vmem:[#allocation5 + $0x58] sm:$0xff]
        %v1768 = vld [vmem:[#allocation5 + $0x60] sm:$0xff]
        %v1769 = vld [vmem:[#allocation5 + $0x68] sm:$0xff]
        %v1770 = vld [vmem:[#allocation5 + $0x70] sm:$0xff]
        %v1771 = vld [vmem:[#allocation5 + $0x78] sm:$0xff]
        %v1772 = vld [vmem:[#allocation5 + $0x80] sm:$0xff]
        %v1773 = vld [vmem:[#allocation5 + $0x88] sm:$0xff]
        %v1774 = vld [vmem:[#allocation5 + $0x90] sm:$0xff]
        %v1775 = vld [vmem:[#allocation5 + $0x98] sm:$0xff]
        %v1776 = vld [vmem:[#allocation5 + $0xa0] sm:$0xff]
        %v1777 = vld [vmem:[#allocation5 + $0xa8] sm:$0xff]
        %v1778 = vld [vmem:[#allocation5 + $0xb0] sm:$0xff]
        %v1779 = vld [vmem:[#allocation5 + $0xb8] sm:$0xff]
        %v1780 = vld [vmem:[#allocation5 + $0xc0] sm:$0xff]
        %v1781 = vld [vmem:[#allocation5 + $0xc8] sm:$0xff]
        %v1782 = vld [vmem:[#allocation5 + $0xd0] sm:$0xff]
        %v1783 = vld [vmem:[#allocation5 + $0xd8] sm:$0xff]
        %v1784 = vld [vmem:[#allocation5 + $0xe0] sm:$0xff]
        %v1785 = vld [vmem:[#allocation5 + $0xe8] sm:$0xff]
        %v1786 = vld [vmem:[#allocation5 + $0xf0] sm:$0xff]
        %v1787 = vld [vmem:[#allocation5 + $0xf8] sm:$0xff]
        %v1788 = vld [vmem:[#allocation5 + $0x100] sm:$0xff]
        %v1789 = vld [vmem:[#allocation5 + $0x108] sm:$0xff]
        %v1790 = vld [vmem:[#allocation5 + $0x110] sm:$0xff]
        %v1791 = vld [vmem:[#allocation5 + $0x118] sm:$0xff]
        %v1792 = vld [vmem:[#allocation5 + $0x120] sm:$0xff]
        %v1793 = vld [vmem:[#allocation5 + $0x128] sm:$0xff]
        %v1794 = vld [vmem:[#allocation5 + $0x130] sm:$0xff]
        %v1795 = vld [vmem:[#allocation5 + $0x138] sm:$0xff]
        %v1796 = vld [vmem:[#allocation5 + $0x140] sm:$0xff]
        %v1797 = vld [vmem:[#allocation5 + $0x148] sm:$0xff]
        %v1798 = vld [vmem:[#allocation5 + $0x150] sm:$0xff]
        %v1799 = vld [vmem:[#allocation5 + $0x158] sm:$0xff]
        %v1800 = vld [vmem:[#allocation5 + $0x160] sm:$0xff]
        %v1801 = vld [vmem:[#allocation5 + $0x168] sm:$0xff]
        %v1802 = vld [vmem:[#allocation5 + $0x170] sm:$0xff]
        %v1803 = vld [vmem:[#allocation5 + $0x178] sm:$0xff]
        %v1804 = vld [vmem:[#allocation5 + $0x180] sm:$0xff]
        %v1805 = vld [vmem:[#allocation5 + $0x188] sm:$0xff]
        %v1806 = vld [vmem:[#allocation5 + $0x190] sm:$0xff]
        %v1807 = vld [vmem:[#allocation5 + $0x198] sm:$0xff]
        %v1808 = vld [vmem:[#allocation5 + $0x1a0] sm:$0xff]
        %v1809 = vld [vmem:[#allocation5 + $0x1a8] sm:$0xff]
        %v1810 = vld [vmem:[#allocation5 + $0x1b0] sm:$0xff]
        %v1811 = vld [vmem:[#allocation5 + $0x1b8] sm:$0xff]
        %v1812 = vld [vmem:[#allocation5 + $0x1c0] sm:$0xff]
        %v1813 = vld [vmem:[#allocation5 + $0x1c8] sm:$0xff]
        %v1814 = vld [vmem:[#allocation5 + $0x1d0] sm:$0xff]
        %v1815 = vld [vmem:[#allocation5 + $0x1d8] sm:$0xff]
        %v1816 = vld [vmem:[#allocation5 + $0x1e0] sm:$0xff]
        %v1817 = vld [vmem:[#allocation5 + $0x1e8] sm:$0xff]
        %v1818 = vld [vmem:[#allocation5 + $0x1f0] sm:$0xff]
        %v1819 = vld [vmem:[#allocation5 + $0x1f8] sm:$0xff]
        %v1820 = vld [vmem:[#allocation5 + $0x200] sm:$0xff]
        %v1821 = vld [vmem:[#allocation5 + $0x208] sm:$0xff]
        %v1822 = vld [vmem:[#allocation5 + $0x210] sm:$0xff]
        %v1823 = vld [vmem:[#allocation5 + $0x218] sm:$0xff]
        %v1824 = vld [vmem:[#allocation5 + $0x220] sm:$0xff]
        %v1825 = vld [vmem:[#allocation5 + $0x228] sm:$0xff]
        %v1826 = vld [vmem:[#allocation5 + $0x230] sm:$0xff]
        %v1827 = vld [vmem:[#allocation5 + $0x238] sm:$0xff]
        %v1828 = vld [vmem:[#allocation5 + $0x240] sm:$0xff]
        %v1829 = vld [vmem:[#allocation5 + $0x248] sm:$0xff]
        %v1830 = vld [vmem:[#allocation5 + $0x250] sm:$0xff]
        %v1831 = vld [vmem:[#allocation5 + $0x258] sm:$0xff]
        %v1832 = vld [vmem:[#allocation5 + $0x260] sm:$0xff]
        %v1833 = vld [vmem:[#allocation5 + $0x268] sm:$0xff]
        %v1834 = vld [vmem:[#allocation5 + $0x270] sm:$0xff]
        %v1835 = vld [vmem:[#allocation5 + $0x278] sm:$0xff]
        %v1836 = vld [vmem:[#allocation5 + $0x280] sm:$0xff]
        %v1837 = vld [vmem:[#allocation5 + $0x288] sm:$0xff]
        %v1838 = vld [vmem:[#allocation5 + $0x290] sm:$0xff]
        %v1839 = vld [vmem:[#allocation5 + $0x298] sm:$0xff]
        %v1840 = vld [vmem:[#allocation5 + $0x2a0] sm:$0xff]
        %v1841 = vld [vmem:[#allocation5 + $0x2a8] sm:$0xff]
        %v1842 = vld [vmem:[#allocation5 + $0x2b0] sm:$0xff]
        %v1843 = vld [vmem:[#allocation5 + $0x2b8] sm:$0xff]
        %v1844 = vld [vmem:[#allocation5 + $0x2c0] sm:$0xff]
        %v1845 = vld [vmem:[#allocation5 + $0x2c8] sm:$0xff]
        %v1846 = vld [vmem:[#allocation5 + $0x2d0] sm:$0xff]
        %v1847 = vld [vmem:[#allocation5 + $0x2d8] sm:$0xff]
        %v1848 = vld [vmem:[#allocation5 + $0x2e0] sm:$0xff]
        %v1849 = vld [vmem:[#allocation5 + $0x2e8] sm:$0xff]
        %v1850 = vld [vmem:[#allocation5 + $0x2f0] sm:$0xff]
        %v1851 = vld [vmem:[#allocation5 + $0x2f8] sm:$0xff]
        %v1852 = vld [vmem:[#allocation5 + $0x300] sm:$0xff]
        %v1853 = vld [vmem:[#allocation5 + $0x308] sm:$0xff]
        %v1854 = vld [vmem:[#allocation5 + $0x310] sm:$0xff]
        %v1855 = vld [vmem:[#allocation5 + $0x318] sm:$0xff]
        %v1856 = vld [vmem:[#allocation5 + $0x320] sm:$0xff]
        %v1857 = vld [vmem:[#allocation5 + $0x328] sm:$0xff]
        %v1858 = vld [vmem:[#allocation5 + $0x330] sm:$0xff]
        %v1859 = vld [vmem:[#allocation5 + $0x338] sm:$0xff]
        %v1860 = vld [vmem:[#allocation5 + $0x340] sm:$0xff]
        %v1861 = vld [vmem:[#allocation5 + $0x348] sm:$0xff]
        %v1862 = vld [vmem:[#allocation5 + $0x350] sm:$0xff]
        %v1863 = vld [vmem:[#allocation5 + $0x358] sm:$0xff]
        %v1864 = vld [vmem:[#allocation5 + $0x360] sm:$0xff]
        %v1865 = vld [vmem:[#allocation5 + $0x368] sm:$0xff]
        %v1866 = vld [vmem:[#allocation5 + $0x370] sm:$0xff]
        %v1867 = vld [vmem:[#allocation5 + $0x378] sm:$0xff]
        %v1868 = vld [vmem:[#allocation5 + $0x380] sm:$0xff]
        %v1869 = vld [vmem:[#allocation5 + $0x388] sm:$0xff]
        %v1870 = vld [vmem:[#allocation5 + $0x390] sm:$0xff]
        %v1871 = vld [vmem:[#allocation5 + $0x398] sm:$0xff]
        %v1872 = vld [vmem:[#allocation5 + $0x3a0] sm:$0xff]
        %v1873 = vld [vmem:[#allocation5 + $0x3a8] sm:$0xff]
        %v1874 = vld [vmem:[#allocation5 + $0x3b0] sm:$0xff]
        %v1875 = vld [vmem:[#allocation5 + $0x3b8] sm:$0xff]
        %v1876 = vld [vmem:[#allocation5 + $0x3c0] sm:$0xff]
        %v1877 = vld [vmem:[#allocation5 + $0x3c8] sm:$0xff]
        %v1878 = vld [vmem:[#allocation5 + $0x3d0] sm:$0xff]
        %v1879 = vld [vmem:[#allocation5 + $0x3d8] sm:$0xff]
        %v1880 = vld [vmem:[#allocation5 + $0x3e0] sm:$0xff]
        %v1881 = vld [vmem:[#allocation5 + $0x3e8] sm:$0xff]
        %v1882 = vld [vmem:[#allocation5 + $0x3f0] sm:$0xff]
        %v1883 = vld [vmem:[#allocation5 + $0x3f8] sm:$0xff]
        %v1884 = vld [vmem:[#allocation5 + $0x400] sm:$0xff]
        %v1885 = vld [vmem:[#allocation5 + $0x408] sm:$0xff]
        %v1886 = vld [vmem:[#allocation5 + $0x410] sm:$0xff]
        %v1887 = vld [vmem:[#allocation5 + $0x418] sm:$0xff]
        %v1888 = vld [vmem:[#allocation5 + $0x420] sm:$0xff]
        %v1889 = vld [vmem:[#allocation5 + $0x428] sm:$0xff]
        %v1890 = vld [vmem:[#allocation5 + $0x430] sm:$0xff]
        %v1891 = vld [vmem:[#allocation5 + $0x438] sm:$0xff]
        %v1892 = vld [vmem:[#allocation5 + $0x440] sm:$0xff]
        %v1893 = vld [vmem:[#allocation5 + $0x448] sm:$0xff]
        %v1894 = vld [vmem:[#allocation5 + $0x450] sm:$0xff]
        %v1895 = vld [vmem:[#allocation5 + $0x458] sm:$0xff]
        %v1896 = vld [vmem:[#allocation5 + $0x460] sm:$0xff]
        %v1897 = vld [vmem:[#allocation5 + $0x468] sm:$0xff]
        %v1898 = vld [vmem:[#allocation5 + $0x470] sm:$0xff]
        %v1899 = vld [vmem:[#allocation5 + $0x478] sm:$0xff]
        %v1900 = vld [vmem:[%s9] sm:$0x1]
        %v1902 = vlaneseq
        %v1903 = vshrl.u32 %v1902, 7
        %v1904 = vsub.s32 0, %v1903
        %v1905 = vrot.slane %v1900, %v1904
        %1907 = vmatprep.subr.mxu0 0.0
        %1908 = vmatpush1.msra.mxu0 %v1756
        %1909 = vmatprep.subr.mxu0 0.0
        %1910 = vmatpush1.msra.mxu0 %v1757
        %1911 = vmatprep.subr.mxu0 0.0
        %1912 = vmatpush1.msra.mxu0 %v1758
        %1913 = vmatprep.subr.mxu0 0.0
        %1914 = vmatpush1.msra.mxu0 %v1759
        %1915 = vmatprep.subr.mxu0 0.0
        %1916 = vmatpush1.msra.mxu0 %v1760
        %1917 = vmatprep.subr.mxu0 0.0
        %1918 = vmatpush1.msra.mxu0 %v1761
        %1919 = vmatprep.subr.mxu0 0.0
        %1920 = vmatpush1.msra.mxu0 %v1762
        %1921 = vmatprep.subr.mxu0 0.0
        %1922 = vmatpush1.msra.mxu0 %v1763
        %1923 = vmatprep.subr.mxu0 0.0
        %1924 = vmatpush1.msra.mxu0 %v1764
        %1925 = vmatprep.subr.mxu0 0.0
        %1926 = vmatpush1.msra.mxu0 %v1765
        %1927 = vmatprep.subr.mxu0 0.0
        %1928 = vmatpush1.msra.mxu0 %v1766
        %1929 = vmatprep.subr.mxu0 0.0
        %1930 = vmatpush1.msra.mxu0 %v1767
        %1931 = vmatprep.subr.mxu0 0.0
        %1932 = vmatpush1.msra.mxu0 %v1768
        %1933 = vmatprep.subr.mxu0 0.0
        %1934 = vmatpush1.msra.mxu0 %v1769
        %1935 = vmatprep.subr.mxu0 0.0
        %1936 = vmatpush1.msra.mxu0 %v1770
        %1937 = vmatprep.subr.mxu0 0.0
        %1938 = vmatpush1.msra.mxu0 %v1771
        %1939 = vmatprep.subr.mxu0 0.0
        %1940 = vmatpush1.msra.mxu0 %v1772
        %1941 = vmatprep.subr.mxu0 0.0
        %1942 = vmatpush1.msra.mxu0 %v1773
        %1943 = vmatprep.subr.mxu0 0.0
        %1944 = vmatpush1.msra.mxu0 %v1774
        %1945 = vmatprep.subr.mxu0 0.0
        %1946 = vmatpush1.msra.mxu0 %v1775
        %1947 = vmatprep.subr.mxu0 0.0
        %1948 = vmatpush1.msra.mxu0 %v1776
        %1949 = vmatprep.subr.mxu0 0.0
        %1950 = vmatpush1.msra.mxu0 %v1777
        %1951 = vmatprep.subr.mxu0 0.0
        %1952 = vmatpush1.msra.mxu0 %v1778
        %1953 = vmatprep.subr.mxu0 0.0
        %1954 = vmatpush1.msra.mxu0 %v1779
        %1955 = vmatprep.subr.mxu0 0.0
        %1956 = vmatpush1.msra.mxu0 %v1780
        %1957 = vmatprep.subr.mxu0 0.0
        %1958 = vmatpush1.msra.mxu0 %v1781
        %1959 = vmatprep.subr.mxu0 0.0
        %1960 = vmatpush1.msra.mxu0 %v1782
        %1961 = vmatprep.subr.mxu0 0.0
        %1962 = vmatpush1.msra.mxu0 %v1783
        %1963 = vmatprep.subr.mxu0 0.0
        %1964 = vmatpush1.msra.mxu0 %v1784
        %1965 = vmatprep.subr.mxu0 0.0
        %1966 = vmatpush1.msra.mxu0 %v1785
        %1967 = vmatprep.subr.mxu0 0.0
        %1968 = vmatpush1.msra.mxu0 %v1786
        %1969 = vmatprep.subr.mxu0 0.0
        %1970 = vmatpush1.msra.mxu0 %v1787
        %1971 = vmatprep.mubr.f32.mxu0 %v1692
        %1972 = vmatmul.mubr.f32.gmra.mrb[0].mxu0 %v1684
        %v1973 = vpop.f32.mrb[0].mxu0
        %v1974 = vadd.f32 %v1905, %v1973
        %v1975 = vpop.f32.mrb[0].mxu0
        %1976 = vmatprep.mubr.f32.mxu0 %v1693
        %1977 = vmatmul.mubr.f32.gmra.mrb[0].mxu0 %v1685
        %v1978 = vpop.f32.mrb[0].mxu0
        %v1979 = vadd.f32 %v1905, %v1978
        %v1980 = vpop.f32.mrb[0].mxu0
        %1981 = vmatprep.mubr.f32.mxu0 %v1694
        %1982 = vmatmul.mubr.f32.gmra.mrb[0].mxu0 %v1686
        %v1983 = vpop.f32.mrb[0].mxu0
        %v1984 = vadd.f32 %v1905, %v1983
        %v1985 = vpop.f32.mrb[0].mxu0
        %1986 = vmatprep.mubr.f32.mxu0 %v1695
        %1987 = vmatmul.mubr.f32.gmra.mrb[0].mxu0 %v1687
        %v1988 = vpop.f32.mrb[0].mxu0
        %v1989 = vadd.f32 %v1905, %v1988
        %v1990 = vpop.f32.mrb[0].mxu0
        %1991 = vmatprep.mubr.f32.mxu0 %v1696
        %1992 = vmatmul.mubr.f32.gmra.mrb[0].mxu0 %v1688
        %v1993 = vpop.f32.mrb[0].mxu0
        %v1994 = vadd.f32 %v1905, %v1993
        %v1995 = vpop.f32.mrb[0].mxu0
        %1996 = vmatprep.mubr.f32.mxu0 %v1697
        %1997 = vmatmul.mubr.f32.gmra.mrb[0].mxu0 %v1689
        %v1998 = vpop.f32.mrb[0].mxu0
        %v1999 = vadd.f32 %v1905, %v1998
        %v2000 = vpop.f32.mrb[0].mxu0
        %2001 = vmatprep.mubr.f32.mxu0 %v1698
        %2002 = vmatmul.mubr.f32.gmra.mrb[0].mxu0 %v1690
        %v2003 = vpop.f32.mrb[0].mxu0
        %v2004 = vadd.f32 %v1905, %v2003
        %v2005 = vpop.f32.mrb[0].mxu0
        %2006 = vmatprep.mubr.f32.mxu0 %v1699
        %2007 = vmatmul.mubr.f32.gmra.mrb[0].mxu0 %v1691
        %v2008 = vpop.f32.mrb[0].mxu0
        %v2009 = vadd.f32 %v1905, %v2008
        %v2010 = vpop.f32.mrb[0].mxu0
        %2011 = vdwg.mxu0
        %2012 = vmatprep.subr.mxu0 0.0
        %2013 = vmatpush1.msra.mxu0 %v1788
        %2014 = vmatprep.subr.mxu0 0.0
        %2015 = vmatpush1.msra.mxu0 %v1789
        %2016 = vmatprep.subr.mxu0 0.0
        %2017 = vmatpush1.msra.mxu0 %v1790
        %2018 = vmatprep.subr.mxu0 0.0
        %2019 = vmatpush1.msra.mxu0 %v1791
        %2020 = vmatprep.subr.mxu0 0.0
        %2021 = vmatpush1.msra.mxu0 %v1792
        %2022 = vmatprep.subr.mxu0 0.0
        %2023 = vmatpush1.msra.mxu0 %v1793
        %2024 = vmatprep.subr.mxu0 0.0
        %2025 = vmatpush1.msra.mxu0 %v1794
        %2026 = vmatprep.subr.mxu0 0.0
        %2027 = vmatpush1.msra.mxu0 %v1795
        %2028 = vmatprep.subr.mxu0 0.0
        %2029 = vmatpush1.msra.mxu0 %v1796
        %2030 = vmatprep.subr.mxu0 0.0
        %2031 = vmatpush1.msra.mxu0 %v1797
        %2032 = vmatprep.subr.mxu0 0.0
        %2033 = vmatpush1.msra.mxu0 %v1798
        %2034 = vmatprep.subr.mxu0 0.0
        %2035 = vmatpush1.msra.mxu0 %v1799
        %2036 = vmatprep.subr.mxu0 0.0
        %2037 = vmatpush1.msra.mxu0 %v1800
        %2038 = vmatprep.subr.mxu0 0.0
        %2039 = vmatpush1.msra.mxu0 %v1801
        %2040 = vmatprep.subr.mxu0 0.0
        %2041 = vmatpush1.msra.mxu0 %v1802
        %2042 = vmatprep.subr.mxu0 0.0
        %2043 = vmatpush1.msra.mxu0 %v1803
        %2044 = vmatprep.subr.mxu0 0.0
        %2045 = vmatpush1.msra.mxu0 %v1804
        %2046 = vmatprep.subr.mxu0 0.0
        %2047 = vmatpush1.msra.mxu0 %v1805
        %2048 = vmatprep.subr.mxu0 0.0
        %2049 = vmatpush1.msra.mxu0 %v1806
        %2050 = vmatprep.subr.mxu0 0.0
        %2051 = vmatpush1.msra.mxu0 %v1807
        %2052 = vmatprep.subr.mxu0 0.0
        %2053 = vmatpush1.msra.mxu0 %v1808
        %2054 = vmatprep.subr.mxu0 0.0
        %2055 = vmatpush1.msra.mxu0 %v1809
        %2056 = vmatprep.subr.mxu0 0.0
        %2057 = vmatpush1.msra.mxu0 %v1810
        %2058 = vmatprep.subr.mxu0 0.0
        %2059 = vmatpush1.msra.mxu0 %v1811
        %2060 = vmatprep.subr.mxu0 0.0
        %2061 = vmatpush1.msra.mxu0 %v1812
        %2062 = vmatprep.subr.mxu0 0.0
        %2063 = vmatpush1.msra.mxu0 %v1813
        %2064 = vmatprep.subr.mxu0 0.0
        %2065 = vmatpush1.msra.mxu0 %v1814
        %2066 = vmatprep.subr.mxu0 0.0
        %2067 = vmatpush1.msra.mxu0 %v1815
        %2068 = vmatprep.subr.mxu0 0.0
        %2069 = vmatpush1.msra.mxu0 %v1816
        %2070 = vmatprep.subr.mxu0 0.0
        %2071 = vmatpush1.msra.mxu0 %v1817
        %2072 = vmatprep.subr.mxu0 0.0
        %2073 = vmatpush1.msra.mxu0 %v1818
        %2074 = vmatprep.subr.mxu0 0.0
        %2075 = vmatpush1.msra.mxu0 %v1819
        %2076 = vmatprep.mubr.f32.mxu0 %v1708
        %2077 = vmatmul.mubr.f32.gmra.mrb[0].mxu0 %v1700
        %v2078 = vpop.f32.mrb[0].mxu0
        %v2079 = vadd.f32 %v1974, %v2078
        %v2080 = vpop.f32.mrb[0].mxu0
        %2081 = vmatprep.mubr.f32.mxu0 %v1709
        %2082 = vmatmul.mubr.f32.gmra.mrb[0].mxu0 %v1701
        %v2083 = vpop.f32.mrb[0].mxu0
        %v2084 = vadd.f32 %v1979, %v2083
        %v2085 = vpop.f32.mrb[0].mxu0
        %2086 = vmatprep.mubr.f32.mxu0 %v1710
        %2087 = vmatmul.mubr.f32.gmra.mrb[0].mxu0 %v1702
        %v2088 = vpop.f32.mrb[0].mxu0
        %v2089 = vadd.f32 %v1984, %v2088
        %v2090 = vpop.f32.mrb[0].mxu0
        %2091 = vmatprep.mubr.f32.mxu0 %v1711
        %2092 = vmatmul.mubr.f32.gmra.mrb[0].mxu0 %v1703
        %v2093 = vpop.f32.mrb[0].mxu0
        %v2094 = vadd.f32 %v1989, %v2093
        %v2095 = vpop.f32.mrb[0].mxu0
        %2096 = vmatprep.mubr.f32.mxu0 %v1712
        %2097 = vmatmul.mubr.f32.gmra.mrb[0].mxu0 %v1704
        %v2098 = vpop.f32.mrb[0].mxu0
        %v2099 = vadd.f32 %v1994, %v2098
        %v2100 = vpop.f32.mrb[0].mxu0
        %2101 = vmatprep.mubr.f32.mxu0 %v1713
        %2102 = vmatmul.mubr.f32.gmra.mrb[0].mxu0 %v1705
        %v2103 = vpop.f32.mrb[0].mxu0
        %v2104 = vadd.f32 %v1999, %v2103
        %v2105 = vpop.f32.mrb[0].mxu0
        %2106 = vmatprep.mubr.f32.mxu0 %v1714
        %2107 = vmatmul.mubr.f32.gmra.mrb[0].mxu0 %v1706
        %v2108 = vpop.f32.mrb[0].mxu0
        %v2109 = vadd.f32 %v2004, %v2108
        %v2110 = vpop.f32.mrb[0].mxu0
        %2111 = vmatprep.mubr.f32.mxu0 %v1715
        %2112 = vmatmul.mubr.f32.gmra.mrb[0].mxu0 %v1707
        %v2113 = vpop.f32.mrb[0].mxu0
        %v2114 = vadd.f32 %v2009, %v2113
        %v2115 = vpop.f32.mrb[0].mxu0
        %2116 = vdwg.mxu0
        %2117 = vmatprep.subr.mxu0 0.0
        %2118 = vmatpush1.msra.mxu0 %v1820
        %2119 = vmatprep.subr.mxu0 0.0
        %2120 = vmatpush1.msra.mxu0 %v1821
        %2121 = vmatprep.subr.mxu0 0.0
        %2122 = vmatpush1.msra.mxu0 %v1822
        %2123 = vmatprep.subr.mxu0 0.0
        %2124 = vmatpush1.msra.mxu0 %v1823
        %2125 = vmatprep.subr.mxu0 0.0
        %2126 = vmatpush1.msra.mxu0 %v1824
        %2127 = vmatprep.subr.mxu0 0.0
        %2128 = vmatpush1.msra.mxu0 %v1825
        %2129 = vmatprep.subr.mxu0 0.0
        %2130 = vmatpush1.msra.mxu0 %v1826
        %2131 = vmatprep.subr.mxu0 0.0
        %2132 = vmatpush1.msra.mxu0 %v1827
        %2133 = vmatprep.subr.mxu0 0.0
        %2134 = vmatpush1.msra.mxu0 %v1828
        %2135 = vmatprep.subr.mxu0 0.0
        %2136 = vmatpush1.msra.mxu0 %v1829
        %2137 = vmatprep.subr.mxu0 0.0
        %2138 = vmatpush1.msra.mxu0 %v1830
        %2139 = vmatprep.subr.mxu0 0.0
        %2140 = vmatpush1.msra.mxu0 %v1831
        %2141 = vmatprep.subr.mxu0 0.0
        %2142 = vmatpush1.msra.mxu0 %v1832
        %2143 = vmatprep.subr.mxu0 0.0
        %2144 = vmatpush1.msra.mxu0 %v1833
        %2145 = vmatprep.subr.mxu0 0.0
        %2146 = vmatpush1.msra.mxu0 %v1834
        %2147 = vmatprep.subr.mxu0 0.0
        %2148 = vmatpush1.msra.mxu0 %v1835
        %2149 = vmatprep.subr.mxu0 0.0
        %2150 = vmatpush1.msra.mxu0 %v1836
        %2151 = vmatprep.subr.mxu0 0.0
        %2152 = vmatpush1.msra.mxu0 %v1837
        %2153 = vmatprep.subr.mxu0 0.0
        %2154 = vmatpush1.msra.mxu0 %v1838
        %2155 = vmatprep.subr.mxu0 0.0
        %2156 = vmatpush1.msra.mxu0 %v1839
        %2157 = vmatprep.subr.mxu0 0.0
        %2158 = vmatpush1.msra.mxu0 %v1840
        %2159 = vmatprep.subr.mxu0 0.0
        %2160 = vmatpush1.msra.mxu0 %v1841
        %2161 = vmatprep.subr.mxu0 0.0
        %2162 = vmatpush1.msra.mxu0 %v1842
        %2163 = vmatprep.subr.mxu0 0.0
        %2164 = vmatpush1.msra.mxu0 %v1843
        %2165 = vmatprep.subr.mxu0 0.0
        %2166 = vmatpush1.msra.mxu0 %v1844
        %2167 = vmatprep.subr.mxu0 0.0
        %2168 = vmatpush1.msra.mxu0 %v1845
        %2169 = vmatprep.subr.mxu0 0.0
        %2170 = vmatpush1.msra.mxu0 %v1846
        %2171 = vmatprep.subr.mxu0 0.0
        %2172 = vmatpush1.msra.mxu0 %v1847
        %2173 = vmatprep.subr.mxu0 0.0
        %2174 = vmatpush1.msra.mxu0 %v1848
        %2175 = vmatprep.subr.mxu0 0.0
        %2176 = vmatpush1.msra.mxu0 %v1849
        %2177 = vmatprep.subr.mxu0 0.0
        %2178 = vmatpush1.msra.mxu0 %v1850
        %2179 = vmatprep.subr.mxu0 0.0
        %2180 = vmatpush1.msra.mxu0 %v1851
        %2181 = vmatprep.mubr.f32.mxu0 %v1724
        %2182 = vmatmul.mubr.f32.gmra.mrb[0].mxu0 %v1716
        %v2183 = vpop.f32.mrb[0].mxu0
        %v2184 = vadd.f32 %v2079, %v2183
        %v2185 = vpop.f32.mrb[0].mxu0
        %2186 = vmatprep.mubr.f32.mxu0 %v1725
        %2187 = vmatmul.mubr.f32.gmra.mrb[0].mxu0 %v1717
        %v2188 = vpop.f32.mrb[0].mxu0
        %v2189 = vadd.f32 %v2084, %v2188
        %v2190 = vpop.f32.mrb[0].mxu0
        %2191 = vmatprep.mubr.f32.mxu0 %v1726
        %2192 = vmatmul.mubr.f32.gmra.mrb[0].mxu0 %v1718
        %v2193 = vpop.f32.mrb[0].mxu0
        %v2194 = vadd.f32 %v2089, %v2193
        %v2195 = vpop.f32.mrb[0].mxu0
        %2196 = vmatprep.mubr.f32.mxu0 %v1727
        %2197 = vmatmul.mubr.f32.gmra.mrb[0].mxu0 %v1719
        %v2198 = vpop.f32.mrb[0].mxu0
        %v2199 = vadd.f32 %v2094, %v2198
        %v2200 = vpop.f32.mrb[0].mxu0
        %2201 = vmatprep.mubr.f32.mxu0 %v1728
        %2202 = vmatmul.mubr.f32.gmra.mrb[0].mxu0 %v1720
        %v2203 = vpop.f32.mrb[0].mxu0
        %v2204 = vadd.f32 %v2099, %v2203
        %v2205 = vpop.f32.mrb[0].mxu0
        %2206 = vmatprep.mubr.f32.mxu0 %v1729
        %2207 = vmatmul.mubr.f32.gmra.mrb[0].mxu0 %v1721
        %v2208 = vpop.f32.mrb[0].mxu0
        %v2209 = vadd.f32 %v2104, %v2208
        %v2210 = vpop.f32.mrb[0].mxu0
        %2211 = vmatprep.mubr.f32.mxu0 %v1730
        %2212 = vmatmul.mubr.f32.gmra.mrb[0].mxu0 %v1722
        %v2213 = vpop.f32.mrb[0].mxu0
        %v2214 = vadd.f32 %v2109, %v2213
        %v2215 = vpop.f32.mrb[0].mxu0
        %2216 = vmatprep.mubr.f32.mxu0 %v1731
        %2217 = vmatmul.mubr.f32.gmra.mrb[0].mxu0 %v1723
        %v2218 = vpop.f32.mrb[0].mxu0
        %v2219 = vadd.f32 %v2114, %v2218
        %v2220 = vpop.f32.mrb[0].mxu0
        %2221 = vdwg.mxu0
        %2222 = vmatprep.subr.mxu0 0.0
        %2223 = vmatpush1.msra.mxu0 %v1852
        %2224 = vmatprep.subr.mxu0 0.0
        %2225 = vmatpush1.msra.mxu0 %v1853
        %2226 = vmatprep.subr.mxu0 0.0
        %2227 = vmatpush1.msra.mxu0 %v1854
        %2228 = vmatprep.subr.mxu0 0.0
        %2229 = vmatpush1.msra.mxu0 %v1855
        %2230 = vmatprep.subr.mxu0 0.0
        %2231 = vmatpush1.msra.mxu0 %v1856
        %2232 = vmatprep.subr.mxu0 0.0
        %2233 = vmatpush1.msra.mxu0 %v1857
        %2234 = vmatprep.subr.mxu0 0.0
        %2235 = vmatpush1.msra.mxu0 %v1858
        %2236 = vmatprep.subr.mxu0 0.0
        %2237 = vmatpush1.msra.mxu0 %v1859
        %2238 = vmatprep.subr.mxu0 0.0
        %2239 = vmatpush1.msra.mxu0 %v1860
        %2240 = vmatprep.subr.mxu0 0.0
        %2241 = vmatpush1.msra.mxu0 %v1861
        %2242 = vmatprep.subr.mxu0 0.0
        %2243 = vmatpush1.msra.mxu0 %v1862
        %2244 = vmatprep.subr.mxu0 0.0
        %2245 = vmatpush1.msra.mxu0 %v1863
        %2246 = vmatprep.subr.mxu0 0.0
        %2247 = vmatpush1.msra.mxu0 %v1864
        %2248 = vmatprep.subr.mxu0 0.0
        %2249 = vmatpush1.msra.mxu0 %v1865
        %2250 = vmatprep.subr.mxu0 0.0
        %2251 = vmatpush1.msra.mxu0 %v1866
        %2252 = vmatprep.subr.mxu0 0.0
        %2253 = vmatpush1.msra.mxu0 %v1867
        %2254 = vmatprep.subr.mxu0 0.0
        %2255 = vmatpush1.msra.mxu0 %v1868
        %2256 = vmatprep.subr.mxu0 0.0
        %2257 = vmatpush1.msra.mxu0 %v1869
        %2258 = vmatprep.subr.mxu0 0.0
        %2259 = vmatpush1.msra.mxu0 %v1870
        %2260 = vmatprep.subr.mxu0 0.0
        %2261 = vmatpush1.msra.mxu0 %v1871
        %2262 = vmatprep.subr.mxu0 0.0
        %2263 = vmatpush1.msra.mxu0 %v1872
        %2264 = vmatprep.subr.mxu0 0.0
        %2265 = vmatpush1.msra.mxu0 %v1873
        %2266 = vmatprep.subr.mxu0 0.0
        %2267 = vmatpush1.msra.mxu0 %v1874
        %2268 = vmatprep.subr.mxu0 0.0
        %2269 = vmatpush1.msra.mxu0 %v1875
        %2270 = vmatprep.subr.mxu0 0.0
        %2271 = vmatpush1.msra.mxu0 %v1876
        %2272 = vmatprep.subr.mxu0 0.0
        %2273 = vmatpush1.msra.mxu0 %v1877
        %2274 = vmatprep.subr.mxu0 0.0
        %2275 = vmatpush1.msra.mxu0 %v1878
        %2276 = vmatprep.subr.mxu0 0.0
        %2277 = vmatpush1.msra.mxu0 %v1879
        %2278 = vmatprep.subr.mxu0 0.0
        %2279 = vmatpush1.msra.mxu0 %v1880
        %2280 = vmatprep.subr.mxu0 0.0
        %2281 = vmatpush1.msra.mxu0 %v1881
        %2282 = vmatprep.subr.mxu0 0.0
        %2283 = vmatpush1.msra.mxu0 %v1882
        %2284 = vmatprep.subr.mxu0 0.0
        %2285 = vmatpush1.msra.mxu0 %v1883
        %2286 = vmatprep.mubr.f32.mxu0 %v1740
        %2287 = vmatmul.mubr.f32.gmra.mrb[0].mxu0 %v1732
        %v2288 = vpop.f32.mrb[0].mxu0
        %v2289 = vadd.f32 %v2184, %v2288
        %v2290 = vpop.f32.mrb[0].mxu0
        %2291 = vmatprep.mubr.f32.mxu0 %v1741
        %2292 = vmatmul.mubr.f32.gmra.mrb[0].mxu0 %v1733
        %v2293 = vpop.f32.mrb[0].mxu0
        %v2294 = vadd.f32 %v2189, %v2293
        %v2295 = vpop.f32.mrb[0].mxu0
        %2296 = vmatprep.mubr.f32.mxu0 %v1742
        %2297 = vmatmul.mubr.f32.gmra.mrb[0].mxu0 %v1734
        %v2298 = vpop.f32.mrb[0].mxu0
        %v2299 = vadd.f32 %v2194, %v2298
        %v2300 = vpop.f32.mrb[0].mxu0
        %2301 = vmatprep.mubr.f32.mxu0 %v1743
        %2302 = vmatmul.mubr.f32.gmra.mrb[0].mxu0 %v1735
        %v2303 = vpop.f32.mrb[0].mxu0
        %v2304 = vadd.f32 %v2199, %v2303
        %v2305 = vpop.f32.mrb[0].mxu0
        %2306 = vmatprep.mubr.f32.mxu0 %v1744
        %2307 = vmatmul.mubr.f32.gmra.mrb[0].mxu0 %v1736
        %v2308 = vpop.f32.mrb[0].mxu0
        %v2309 = vadd.f32 %v2204, %v2308
        %v2310 = vpop.f32.mrb[0].mxu0
        %2311 = vmatprep.mubr.f32.mxu0 %v1745
        %2312 = vmatmul.mubr.f32.gmra.mrb[0].mxu0 %v1737
        %v2313 = vpop.f32.mrb[0].mxu0
        %v2314 = vadd.f32 %v2209, %v2313
        %v2315 = vpop.f32.mrb[0].mxu0
        %2316 = vmatprep.mubr.f32.mxu0 %v1746
        %2317 = vmatmul.mubr.f32.gmra.mrb[0].mxu0 %v1738
        %v2318 = vpop.f32.mrb[0].mxu0
        %v2319 = vadd.f32 %v2214, %v2318
        %v2320 = vpop.f32.mrb[0].mxu0
        %2321 = vmatprep.mubr.f32.mxu0 %v1747
        %2322 = vmatmul.mubr.f32.gmra.mrb[0].mxu0 %v1739
        %v2323 = vpop.f32.mrb[0].mxu0
        %v2324 = vadd.f32 %v2219, %v2323
        %v2325 = vpop.f32.mrb[0].mxu0
        %2326 = vdwg.mxu0
        %2327 = vmatprep.subr.mxu0 0.0
        %2328 = vmatpush1.msra.mxu0 %v1884
        %2329 = vmatprep.subr.mxu0 0.0
        %2330 = vmatpush1.msra.mxu0 %v1885
        %2331 = vmatprep.subr.mxu0 0.0
        %2332 = vmatpush1.msra.mxu0 %v1886
        %2333 = vmatprep.subr.mxu0 0.0
        %2334 = vmatpush1.msra.mxu0 %v1887
        %2335 = vmatprep.subr.mxu0 0.0
        %2336 = vmatpush1.msra.mxu0 %v1888
        %2337 = vmatprep.subr.mxu0 0.0
        %2338 = vmatpush1.msra.mxu0 %v1889
        %2339 = vmatprep.subr.mxu0 0.0
        %2340 = vmatpush1.msra.mxu0 %v1890
        %2341 = vmatprep.subr.mxu0 0.0
        %2342 = vmatpush1.msra.mxu0 %v1891
        %2343 = vmatprep.subr.mxu0 0.0
        %2344 = vmatpush1.msra.mxu0 %v1892
        %2345 = vmatprep.subr.mxu0 0.0
        %2346 = vmatpush1.msra.mxu0 %v1893
        %2347 = vmatprep.subr.mxu0 0.0
        %2348 = vmatpush1.msra.mxu0 %v1894
        %2349 = vmatprep.subr.mxu0 0.0
        %2350 = vmatpush1.msra.mxu0 %v1895
        %2351 = vmatprep.subr.mxu0 0.0
        %2352 = vmatpush1.msra.mxu0 %v1896
        %2353 = vmatprep.subr.mxu0 0.0
        %2354 = vmatpush1.msra.mxu0 %v1897
        %2355 = vmatprep.subr.mxu0 0.0
        %2356 = vmatpush1.msra.mxu0 %v1898
        %2357 = vmatprep.subr.mxu0 0.0
        %2358 = vmatpush1.msra.mxu0 %v1899
        %2359 = vmatprep.subr.mxu0 0.0
        %2360 = vmatpush1.msra.mxu0 0.0
        %2361 = vmatprep.subr.mxu0 0.0
        %2362 = vmatpush1.msra.mxu0 0.0
        %2363 = vmatprep.subr.mxu0 0.0
        %2364 = vmatpush1.msra.mxu0 0.0
        %2365 = vmatprep.subr.mxu0 0.0
        %2366 = vmatpush1.msra.mxu0 0.0
        %2367 = vmatprep.subr.mxu0 0.0
        %2368 = vmatpush1.msra.mxu0 0.0
        %2369 = vmatprep.subr.mxu0 0.0
        %2370 = vmatpush1.msra.mxu0 0.0
        %2371 = vmatprep.subr.mxu0 0.0
        %2372 = vmatpush1.msra.mxu0 0.0
        %2373 = vmatprep.subr.mxu0 0.0
        %2374 = vmatpush1.msra.mxu0 0.0
        %2375 = vmatprep.subr.mxu0 0.0
        %2376 = vmatpush1.msra.mxu0 0.0
        %2377 = vmatprep.subr.mxu0 0.0
        %2378 = vmatpush1.msra.mxu0 0.0
        %2379 = vmatprep.subr.mxu0 0.0
        %2380 = vmatpush1.msra.mxu0 0.0
        %2381 = vmatprep.subr.mxu0 0.0
        %2382 = vmatpush1.msra.mxu0 0.0
        %2383 = vmatprep.subr.mxu0 0.0
        %2384 = vmatpush1.msra.mxu0 0.0
        %2385 = vmatprep.subr.mxu0 0.0
        %2386 = vmatpush1.msra.mxu0 0.0
        %2387 = vmatprep.subr.mxu0 0.0
        %2388 = vmatpush1.msra.mxu0 0.0
        %2389 = vmatprep.subr.mxu0 0.0
        %2390 = vmatpush1.msra.mxu0 0.0
        %2391 = vmatprep.mubr.f32.mxu0 0.0
        %2392 = vmatmul.mubr.f32.gmra.mrb[0].mxu0 %v1748
        %v2393 = vpop.f32.mrb[0].mxu0
        %v2394 = vadd.f32 %v2289, %v2393
        %v2395 = vpop.f32.mrb[0].mxu0
        %2396 = vmatprep.mubr.f32.mxu0 0.0
        %2397 = vmatmul.mubr.f32.gmra.mrb[0].mxu0 %v1749
        %v2398 = vpop.f32.mrb[0].mxu0
        %v2399 = vadd.f32 %v2294, %v2398
        %v2400 = vpop.f32.mrb[0].mxu0
        %2401 = vmatprep.mubr.f32.mxu0 0.0
        %2402 = vmatmul.mubr.f32.gmra.mrb[0].mxu0 %v1750
        %v2403 = vpop.f32.mrb[0].mxu0
        %v2404 = vadd.f32 %v2299, %v2403
        %v2405 = vpop.f32.mrb[0].mxu0
        %2406 = vmatprep.mubr.f32.mxu0 0.0
        %2407 = vmatmul.mubr.f32.gmra.mrb[0].mxu0 %v1751
        %v2408 = vpop.f32.mrb[0].mxu0
        %v2409 = vadd.f32 %v2304, %v2408
        %v2410 = vpop.f32.mrb[0].mxu0
        %2411 = vmatprep.mubr.f32.mxu0 0.0
        %2412 = vmatmul.mubr.f32.gmra.mrb[0].mxu0 %v1752
        %v2413 = vpop.f32.mrb[0].mxu0
        %v2414 = vadd.f32 %v2309, %v2413
        %v2415 = vpop.f32.mrb[0].mxu0
        %2416 = vmatprep.mubr.f32.mxu0 0.0
        %2417 = vmatmul.mubr.f32.gmra.mrb[0].mxu0 %v1753
        %v2418 = vpop.f32.mrb[0].mxu0
        %v2419 = vadd.f32 %v2314, %v2418
        %v2420 = vpop.f32.mrb[0].mxu0
        %2421 = vmatprep.mubr.f32.mxu0 0.0
        %2422 = vmatmul.mubr.f32.gmra.mrb[0].mxu0 %v1754
        %v2423 = vpop.f32.mrb[0].mxu0
        %v2424 = vadd.f32 %v2319, %v2423
        %v2425 = vpop.f32.mrb[0].mxu0
        %2426 = vmatprep.mubr.f32.mxu0 0.0
        %2427 = vmatmul.mubr.f32.gmra.mrb[0].mxu0 %v1755
        %v2428 = vpop.f32.mrb[0].mxu0
        %v2429 = vadd.f32 %v2324, %v2428
        %v2430 = vpop.f32.mrb[0].mxu0
        %2431 = vdwg.mxu0
        %v2432 = vadd.f32 %v2394, %v2399
        %v2433 = vadd.f32 %v2432, %v2404
        %v2434 = vadd.f32 %v2433, %v2409
        %v2435 = vadd.f32 %v2434, %v2414
        %v2436 = vadd.f32 %v2435, %v2419
        %v2437 = vadd.f32 %v2436, %v2424
        %v2438 = vadd.f32 %v2437, %v2429
        %v2439 = vrot.slane %v2438, 4
        %v2440 = vadd.f32 %v2438, %v2439
        %v2441 = vrot.slane %v2440, 2
        %v2442 = vadd.f32 %v2440, %v2441
        %v2443 = vrot.slane %v2442, 1
        %v2444 = vadd.f32 %v2442, %v2443
        %v2445 = vmul.f32 %v2394, %v2394
        %v2446 = vmul.f32 %v2399, %v2399
        %v2447 = vmul.f32 %v2404, %v2404
        %v2448 = vmul.f32 %v2409, %v2409
        %v2449 = vmul.f32 %v2414, %v2414
        %v2450 = vmul.f32 %v2419, %v2419
        %v2451 = vmul.f32 %v2424, %v2424
        %v2452 = vmul.f32 %v2429, %v2429
        %v2453 = vadd.f32 %v2445, %v2446
        %v2454 = vadd.f32 %v2453, %v2447
        %v2455 = vadd.f32 %v2454, %v2448
        %v2456 = vadd.f32 %v2455, %v2449
        %v2457 = vadd.f32 %v2456, %v2450
        %v2458 = vadd.f32 %v2457, %v2451
        %v2459 = vadd.f32 %v2458, %v2452
        %v2460 = vrot.slane %v2459, 4
        %v2461 = vadd.f32 %v2459, %v2460
        %v2462 = vrot.slane %v2461, 2
        %v2463 = vadd.f32 %v2461, %v2462
        %v2464 = vrot.slane %v2463, 1
        %v2465 = vadd.f32 %v2463, %v2464
        %2466 = vmatprep.subr.mxu0 0.0
        %2467 = vmatpush1.msra.mxu0 %v493
        %2468 = vmatprep.subr.mxu0 0.0
        %2469 = vmatpush1.msra.mxu0 %v494
        %2470 = vmatprep.subr.mxu0 0.0
        %2471 = vmatpush1.msra.mxu0 %v495
        %2472 = vmatprep.subr.mxu0 0.0
        %2473 = vmatpush1.msra.mxu0 %v496
        %2474 = vmatprep.subr.mxu0 0.0
        %2475 = vmatpush1.msra.mxu0 %v497
        %2476 = vmatprep.subr.mxu0 0.0
        %2477 = vmatpush1.msra.mxu0 %v498
        %2478 = vmatprep.subr.mxu0 0.0
        %2479 = vmatpush1.msra.mxu0 %v499
        %2480 = vmatprep.subr.mxu0 0.0
        %2481 = vmatpush1.msra.mxu0 %v500
        %2482 = vmatprep.subr.mxu0 0.0
        %2483 = vmatpush1.msra.mxu0 %v501
        %2484 = vmatprep.subr.mxu0 0.0
        %2485 = vmatpush1.msra.mxu0 %v502
        %2486 = vmatprep.subr.mxu0 0.0
        %2487 = vmatpush1.msra.mxu0 %v503
        %2488 = vmatprep.subr.mxu0 0.0
        %2489 = vmatpush1.msra.mxu0 %v504
        %2490 = vmatprep.subr.mxu0 0.0
        %2491 = vmatpush1.msra.mxu0 %v505
        %2492 = vmatprep.subr.mxu0 0.0
        %2493 = vmatpush1.msra.mxu0 %v506
        %2494 = vmatprep.subr.mxu0 0.0
        %2495 = vmatpush1.msra.mxu0 %v507
        %2496 = vmatprep.subr.mxu0 0.0
        %2497 = vmatpush1.msra.mxu0 %v508
        %2498 = vmatprep.subr.mxu0 0.0
        %2499 = vmatpush1.msra.mxu0 0.0
        %2500 = vmatprep.subr.mxu0 0.0
        %2501 = vmatpush1.msra.mxu0 0.0
        %2502 = vmatprep.subr.mxu0 0.0
        %2503 = vmatpush1.msra.mxu0 0.0
        %2504 = vmatprep.subr.mxu0 0.0
        %2505 = vmatpush1.msra.mxu0 0.0
        %2506 = vmatprep.subr.mxu0 0.0
        %2507 = vmatpush1.msra.mxu0 0.0
        %2508 = vmatprep.subr.mxu0 0.0
        %2509 = vmatpush1.msra.mxu0 0.0
        %2510 = vmatprep.subr.mxu0 0.0
        %2511 = vmatpush1.msra.mxu0 0.0
        %2512 = vmatprep.subr.mxu0 0.0
        %2513 = vmatpush1.msra.mxu0 0.0
        %2514 = vmatprep.subr.mxu0 0.0
        %2515 = vmatpush1.msra.mxu0 0.0
        %2516 = vmatprep.subr.mxu0 0.0
        %2517 = vmatpush1.msra.mxu0 0.0
        %2518 = vmatprep.subr.mxu0 0.0
        %2519 = vmatpush1.msra.mxu0 0.0
        %2520 = vmatprep.subr.mxu0 0.0
        %2521 = vmatpush1.msra.mxu0 0.0
        %2522 = vmatprep.subr.mxu0 0.0
        %2523 = vmatpush1.msra.mxu0 0.0
        %2524 = vmatprep.subr.mxu0 0.0
        %2525 = vmatpush1.msra.mxu0 0.0
        %2526 = vmatprep.subr.mxu0 0.0
        %2527 = vmatpush1.msra.mxu0 0.0
        %2528 = vmatprep.subr.mxu0 0.0
        %2529 = vmatpush1.msra.mxu0 0.0
        %2530 = vmatprep.mubr.f32.mxu0 0.0
        %2531 = vmatmul.mubr.f32.gmra.mrb[0].mxu0 %v2444
        %v2532 = vpop.f32.mrb[0].mxu0
        %v2533 = vadd.f32 0.0, %v2532
        %v2534 = vpop.f32.mrb[0].mxu0
        %2535 = vdwg.mxu0
        %v2536 = vmul.f32 %v2533, 0.00048828125
        %2537 = vmatprep.subr.mxu0 0.0
        %2538 = vmatpush1.msra.mxu0 %v493
        %2539 = vmatprep.subr.mxu0 0.0
        %2540 = vmatpush1.msra.mxu0 %v494
        %2541 = vmatprep.subr.mxu0 0.0
        %2542 = vmatpush1.msra.mxu0 %v495
        %2543 = vmatprep.subr.mxu0 0.0
        %2544 = vmatpush1.msra.mxu0 %v496
        %2545 = vmatprep.subr.mxu0 0.0
        %2546 = vmatpush1.msra.mxu0 %v497
        %2547 = vmatprep.subr.mxu0 0.0
        %2548 = vmatpush1.msra.mxu0 %v498
        %2549 = vmatprep.subr.mxu0 0.0
        %2550 = vmatpush1.msra.mxu0 %v499
        %2551 = vmatprep.subr.mxu0 0.0
        %2552 = vmatpush1.msra.mxu0 %v500
        %2553 = vmatprep.subr.mxu0 0.0
        %2554 = vmatpush1.msra.mxu0 %v501
        %2555 = vmatprep.subr.mxu0 0.0
        %2556 = vmatpush1.msra.mxu0 %v502
        %2557 = vmatprep.subr.mxu0 0.0
        %2558 = vmatpush1.msra.mxu0 %v503
        %2559 = vmatprep.subr.mxu0 0.0
        %2560 = vmatpush1.msra.mxu0 %v504
        %2561 = vmatprep.subr.mxu0 0.0
        %2562 = vmatpush1.msra.mxu0 %v505
        %2563 = vmatprep.subr.mxu0 0.0
        %2564 = vmatpush1.msra.mxu0 %v506
        %2565 = vmatprep.subr.mxu0 0.0
        %2566 = vmatpush1.msra.mxu0 %v507
        %2567 = vmatprep.subr.mxu0 0.0
        %2568 = vmatpush1.msra.mxu0 %v508
        %2569 = vmatprep.subr.mxu0 0.0
        %2570 = vmatpush1.msra.mxu0 0.0
        %2571 = vmatprep.subr.mxu0 0.0
        %2572 = vmatpush1.msra.mxu0 0.0
        %2573 = vmatprep.subr.mxu0 0.0
        %2574 = vmatpush1.msra.mxu0 0.0
        %2575 = vmatprep.subr.mxu0 0.0
        %2576 = vmatpush1.msra.mxu0 0.0
        %2577 = vmatprep.subr.mxu0 0.0
        %2578 = vmatpush1.msra.mxu0 0.0
        %2579 = vmatprep.subr.mxu0 0.0
        %2580 = vmatpush1.msra.mxu0 0.0
        %2581 = vmatprep.subr.mxu0 0.0
        %2582 = vmatpush1.msra.mxu0 0.0
        %2583 = vmatprep.subr.mxu0 0.0
        %2584 = vmatpush1.msra.mxu0 0.0
        %2585 = vmatprep.subr.mxu0 0.0
        %2586 = vmatpush1.msra.mxu0 0.0
        %2587 = vmatprep.subr.mxu0 0.0
        %2588 = vmatpush1.msra.mxu0 0.0
        %2589 = vmatprep.subr.mxu0 0.0
        %2590 = vmatpush1.msra.mxu0 0.0
        %2591 = vmatprep.subr.mxu0 0.0
        %2592 = vmatpush1.msra.mxu0 0.0
        %2593 = vmatprep.subr.mxu0 0.0
        %2594 = vmatpush1.msra.mxu0 0.0
        %2595 = vmatprep.subr.mxu0 0.0
        %2596 = vmatpush1.msra.mxu0 0.0
        %2597 = vmatprep.subr.mxu0 0.0
        %2598 = vmatpush1.msra.mxu0 0.0
        %2599 = vmatprep.subr.mxu0 0.0
        %2600 = vmatpush1.msra.mxu0 0.0
        %2601 = vmatprep.mubr.f32.mxu0 0.0
        %2602 = vmatmul.mubr.f32.gmra.mrb[0].mxu0 %v2465
        %v2603 = vpop.f32.mrb[0].mxu0
        %v2604 = vadd.f32 0.0, %v2603
        %v2605 = vpop.f32.mrb[0].mxu0
        %2606 = vdwg.mxu0
        %v2607 = vmul.f32 %v2604, 0.00048828125
        %v2608 = vmul.f32 %v2536, %v2536
        %v2609 = vsub.f32 %v2607, %v2608
        %v2610 = vlaneseq
        %v2611 = vshrl.u32 %v2610, 7
        %v2612 = vsub.s32 0, %v2611
        %v2613 = vrot.slane %v2536, %v2612
        %v2614 = vsub.f32 %v2394, %v2613
        %v2615 = vsub.f32 %v2399, %v2613
        %v2616 = vsub.f32 %v2404, %v2613
        %v2617 = vsub.f32 %v2409, %v2613
        %v2618 = vsub.f32 %v2414, %v2613
        %v2619 = vsub.f32 %v2419, %v2613
        %v2620 = vsub.f32 %v2424, %v2613
        %v2621 = vsub.f32 %v2429, %v2613
        %v2622 = vadd.f32 %v2609, 1e-05
        %v2623 = vrsqrt.pop %v2622
        %v2624 = vlaneseq
        %v2625 = vshrl.u32 %v2624, 7
        %v2626 = vsub.s32 0, %v2625
        %v2627 = vrot.slane %v2623, %v2626
        %v2628 = vmul.f32 %v2614, %v2627
        %v2629 = vmul.f32 %v2615, %v2627
        %v2630 = vmul.f32 %v2616, %v2627
        %v2631 = vmul.f32 %v2617, %v2627
        %v2632 = vmul.f32 %v2618, %v2627
        %v2633 = vmul.f32 %v2619, %v2627
        %v2634 = vmul.f32 %v2620, %v2627
        %v2635 = vmul.f32 %v2621, %v2627
        %v2636 = vld [vmem:[%s10] sm:$0x1]
        %v2638 = vlaneseq
        %v2639 = vshrl.u32 %v2638, 7
        %v2640 = vsub.s32 0, %v2639
        %v2641 = vrot.slane %v2636, %v2640
        %v2643 = vmul.f32 %v2628, %v2641
        %v2644 = vmul.f32 %v2629, %v2641
        %v2645 = vmul.f32 %v2630, %v2641
        %v2646 = vmul.f32 %v2631, %v2641
        %v2647 = vmul.f32 %v2632, %v2641
        %v2648 = vmul.f32 %v2633, %v2641
        %v2649 = vmul.f32 %v2634, %v2641
        %v2650 = vmul.f32 %v2635, %v2641
        %v2651 = vld [vmem:[%s11] sm:$0x1]
        %v2653 = vlaneseq
        %v2654 = vshrl.u32 %v2653, 7
        %v2655 = vsub.s32 0, %v2654
        %v2656 = vrot.slane %v2651, %v2655
        %v2658 = vadd.f32 %v2643, %v2656
        %v2659 = vadd.f32 %v2644, %v2656
        %v2660 = vadd.f32 %v2645, %v2656
        %v2661 = vadd.f32 %v2646, %v2656
        %v2662 = vadd.f32 %v2647, %v2656
        %v2663 = vadd.f32 %v2648, %v2656
        %v2664 = vadd.f32 %v2649, %v2656
        %v2665 = vadd.f32 %v2650, %v2656
        %v2666 = vxor.u32 %v2658, 2147483648
        %v2667 = vxor.u32 %v2659, 2147483648
        %v2668 = vxor.u32 %v2660, 2147483648
        %v2669 = vxor.u32 %v2661, 2147483648
        %v2670 = vxor.u32 %v2662, 2147483648
        %v2671 = vxor.u32 %v2663, 2147483648
        %v2672 = vxor.u32 %v2664, 2147483648
        %v2673 = vxor.u32 %v2665, 2147483648
        %v2674 = vmul.f32 %v2666, 1.442695
        %v2675 = vpow.pop %v2674
        %v2676 = vmul.f32 %v2667, 1.442695
        %v2677 = vpow.pop %v2676
        %v2678 = vmul.f32 %v2668, 1.442695
        %v2679 = vpow.pop %v2678
        %v2680 = vmul.f32 %v2669, 1.442695
        %v2681 = vpow.pop %v2680
        %v2682 = vmul.f32 %v2670, 1.442695
        %v2683 = vpow.pop %v2682
        %v2684 = vmul.f32 %v2671, 1.442695
        %v2685 = vpow.pop %v2684
        %v2686 = vmul.f32 %v2672, 1.442695
        %v2687 = vpow.pop %v2686
        %v2688 = vmul.f32 %v2673, 1.442695
        %v2689 = vpow.pop %v2688
        %v2690 = vadd.f32 %v2675, 1.0
        %v2691 = vadd.f32 %v2677, 1.0
        %v2692 = vadd.f32 %v2679, 1.0
        %v2693 = vadd.f32 %v2681, 1.0
        %v2694 = vadd.f32 %v2683, 1.0
        %v2695 = vadd.f32 %v2685, 1.0
        %v2696 = vadd.f32 %v2687, 1.0
        %v2697 = vadd.f32 %v2689, 1.0
        %v2698 = vrcp.pop %v2690
        %v2699 = vmul.f32 1.0, %v2698
        %v2700 = vrcp.pop %v2691
        %v2701 = vmul.f32 1.0, %v2700
        %v2702 = vrcp.pop %v2692
        %v2703 = vmul.f32 1.0, %v2702
        %v2704 = vrcp.pop %v2693
        %v2705 = vmul.f32 1.0, %v2704
        %v2706 = vrcp.pop %v2694
        %v2707 = vmul.f32 1.0, %v2706
        %v2708 = vrcp.pop %v2695
        %v2709 = vmul.f32 1.0, %v2708
        %v2710 = vrcp.pop %v2696
        %v2711 = vmul.f32 1.0, %v2710
        %v2712 = vrcp.pop %v2697
        %v2713 = vmul.f32 1.0, %v2712
        %v2714 = vmul.f32 %v2658, %v2699
        %v2715 = vmul.f32 %v2659, %v2701
        %v2716 = vmul.f32 %v2660, %v2703
        %v2717 = vmul.f32 %v2661, %v2705
        %v2718 = vmul.f32 %v2662, %v2707
        %v2719 = vmul.f32 %v2663, %v2709
        %v2720 = vmul.f32 %v2664, %v2711
        %v2721 = vmul.f32 %v2665, %v2713
        %v2722 = vadd.f32 %v485, %v2714
        %v2723 = vadd.f32 %v486, %v2715
        %v2724 = vadd.f32 %v487, %v2716
        %v2725 = vadd.f32 %v488, %v2717
        %v2726 = vadd.f32 %v489, %v2718
        %v2727 = vadd.f32 %v490, %v2719
        %v2728 = vadd.f32 %v491, %v2720
        %v2729 = vadd.f32 %v492, %v2721
        %2730 = vst [vmem:[%s484] sm:$0xff] %v2722
        %2731 = vst [vmem:[%s484 + $0x8] sm:$0xff] %v2723
        %2732 = vst [vmem:[%s484 + $0x10] sm:$0xff] %v2724
        %2733 = vst [vmem:[%s484 + $0x18] sm:$0xff] %v2725
        %2734 = vst [vmem:[%s484 + $0x20] sm:$0xff] %v2726
        %2735 = vst [vmem:[%s484 + $0x28] sm:$0xff] %v2727
        %2736 = vst [vmem:[%s484 + $0x30] sm:$0xff] %v2728
        %2737 = vst [vmem:[%s484 + $0x38] sm:$0xff] %v2729
        %p2738 = scmp.lt.s32.totalorder %s26, 1
        %s2739 = scalar_select %p2738, %s26, 1
        %s2740 = smul.addr %s2739, 8
        %s2741 = smul.addr %s2740, 8
        %s2742 = scalar_lea.vmem %s13, %s2741
        // Predicated region
        $region81: #{midblock_forward.3} parent=71 // pred_check
          %p2743 = pneg %p327
        $region82: #{midblock_forward.3} parent=71 // pred_check_branch
          %2745 = sbr.rel (%p2743) target = $region84
        $region83: #{midblock_forward.3} parent=71 // pred_region
          _
        $region84: #{midblock_forward.3} parent=71 // pred_fallthru
          _
      $region72: #{midblock_forward.3} parent=5 // pred_fallthru
        _
      %p2746 = scmp.le.s32.totalorder 2, %s21
      // Predicated region
      $region85: #{midblock_forward.3} parent=5 // pred_check
        %p2747 = pneg %p2746
      $region86: #{midblock_forward.3} parent=5 // pred_check_branch
        %2749 = sbr.rel (%p2747) target = $region88
      $region87: #{midblock_forward.3} parent=5 // pred_region
        %s2750 = ssub.s32 %s21, 2
        // Predicated region
        $region89: #{midblock_forward.3} parent=87 // pred_check
          %p2751 = pneg %p333
        $region90: #{midblock_forward.3} parent=87 // pred_check_branch
          %2753 = sbr.rel (%p2751) target = $region92
        $region91: #{midblock_forward.3} parent=87 // pred_region
          %p2754 = scmp.lt.s32.totalorder %s27, 1
          %s2755 = scalar_select %p2754, %s27, 1
          %s2756 = smul.addr %s2755, 8
          %s2757 = smul.addr %s2756, 8
          %s2758 = scalar_lea.vmem %s13, %s2757
        $region92: #{midblock_forward.3} parent=87 // pred_fallthru
          _
      $region88: #{midblock_forward.3} parent=5 // pred_fallthru
        _
    $region6: #{midblock_forward.3} parent=1 // loop_footer
      %s25 = sadd.s32 1, %s21
    $region7: #{midblock_forward.3} parent=1 // loop_footer_branch
      %20 = sbr.rel target = $region3
    $region8: #{midblock_forward.3} parent=1 // loop_exit
      _
    %2759 = vsyncpa [#allocation4], 1
    %s2760 = scalar_lea.sflag [#allocation4], 1
    %2761 = vsyncpa %s2760, 1
    %2762 = vsyncpa [#allocation6], 1

// kernel: midblock_forward.5
$region0: #{midblock_forward.5}
  #allocation0 [shape = 'u32[]', space=smem, size = 0x4, offset = 0x4, fixed_abs, tag = 'smem constant byte address 0x4 - core index']
  #allocation1 [shape = 'u32[144,128]{1,0:T(1,128)}', space=vmem, size = 0x12000, scoped, tag = 'internal scratch']
  #allocation2 [shape = 'f32[10,10,128]{2,1,0:T(8,128)}', space=vmem, size = 0x14000, scoped, tag = 'scratch operand']
  %s0 = inlined_call_operand.vmem [shape: f32[2,64,128], index: 0, kind: input, shape index: {}]
  %s1 = inlined_call_operand.vmem [shape: f32[2,1,32], index: 1, kind: input, shape index: {}]
  %s2 = inlined_call_operand.vmem [shape: f32[1152,128], index: 2, kind: input, shape index: {}]
  %s3 = inlined_call_operand.vmem [shape: f32[1,128], index: 3, kind: input, shape index: {}]
  %s4 = inlined_call_operand.vmem [shape: f32[1,128], index: 4, kind: input, shape index: {}]
  %s5 = inlined_call_operand.vmem [shape: f32[1,128], index: 5, kind: input, shape index: {}]
  %s6 = inlined_call_operand.vmem [shape: f32[32,128], index: 6, kind: input, shape index: {}]
  %s7 = inlined_call_operand.vmem [shape: f32[1,128], index: 7, kind: input, shape index: {}]
  %s8 = inlined_call_operand.vmem [shape: f32[1152,128], index: 8, kind: input, shape index: {}]
  %s9 = inlined_call_operand.vmem [shape: f32[1,128], index: 9, kind: input, shape index: {}]
  %s10 = inlined_call_operand.vmem [shape: f32[1,128], index: 10, kind: input, shape index: {}]
  %s11 = inlined_call_operand.vmem [shape: f32[1,128], index: 11, kind: input, shape index: {}]
  %s12 = inlined_call_operand.vmem [shape: f32[128,128], index: 12, kind: input, shape index: {}]
  %s13 = inlined_call_operand.hbm [shape: f32[2,64,128], index: 13, kind: output, shape index: {}]
  %s14 = sld [smem:[#allocation0]]
  $region85: #{midblock_forward.5} parent=0
    _
  %s16 = ssub.s32 1, %s14
  %s17 = scalar_select 0, %s16, %s14
  $region1: #{midblock_forward.5} parent=0
    #allocation3 [shape = 'u8[65536]{0}', space=vmem, size = 0x10000, scoped, tag = 'output window, operand 0']
    #allocation4 [shape = 's32[2]{0}', space=sflag, size = 0x8, scoped, tag = 'scoped memory for midblock_forward.5']
    %18 = vsyncpa [#allocation4], 0
    %s19 = scalar_lea.sflag [#allocation4], 1
    %20 = vsyncpa %s19, 0
    loop: start=0, step=1, limit=4
    $region2: #{midblock_forward.5} parent=1 // loop_pre_header
      _
    $region3: #{midblock_forward.5} parent=1 // loop_header
      %s22 = sphi 0, %s26
      %p23 = scmp.ge.s32.totalorder %s22, 4
      %s32 = sphi 0, %s34
      %s35 = sphi 0, %s32
      %s36 = sphi 0, %s35
      %s52 = sphi 0, %s36
      %s58 = sphi 0, %s60
      %s61 = sphi 0, %s58
      %s62 = sphi 0, %s61
      %s78 = sphi 0, %s62
      %s82 = sphi 0, %s82
      %s84 = sphi 0, %s82
      %s85 = sphi 0, %s84
      %s99 = sphi 0, %s85
      %s103 = sphi 0, %s103
      %s105 = sphi 0, %s103
      %s106 = sphi 0, %s105
      %s120 = sphi 0, %s106
      %s124 = sphi 0, %s124
      %s126 = sphi 0, %s124
      %s127 = sphi 0, %s126
      %s141 = sphi 0, %s127
      %s145 = sphi 0, %s145
      %s147 = sphi 0, %s145
      %s148 = sphi 0, %s147
      %s162 = sphi 0, %s148
      %s166 = sphi 0, %s166
      %s168 = sphi 0, %s166
      %s169 = sphi 0, %s168
      %s183 = sphi 0, %s169
      %s187 = sphi 0, %s187
      %s189 = sphi 0, %s187
      %s190 = sphi 0, %s189
      %s204 = sphi 0, %s190
      %s208 = sphi 0, %s208
      %s210 = sphi 0, %s208
      %s211 = sphi 0, %s210
      %s225 = sphi 0, %s211
      %s229 = sphi 0, %s229
      %s231 = sphi 0, %s229
      %s232 = sphi 0, %s231
      %s246 = sphi 0, %s232
      %s250 = sphi 0, %s250
      %s252 = sphi 0, %s250
      %s253 = sphi 0, %s252
      %s267 = sphi 0, %s253
      %s271 = sphi 0, %s271
      %s273 = sphi 0, %s271
      %s274 = sphi 0, %s273
      %s288 = sphi 0, %s274
      %s292 = sphi 0, %s292
      %s294 = sphi 0, %s292
      %s295 = sphi 0, %s294
      %s309 = sphi 0, %s295
      %s315 = sphi 0, %s317
      %s318 = sphi 0, %s315
      %s319 = sphi 0, %s318
      %s335 = sphi 0, %s319
    $region4: #{midblock_forward.5} parent=1 // loop_header_branch
      %25 = sbr.rel (%p23) target = $region8
    $region5: #{midblock_forward.5} parent=1 // loop_body
      %s27 = ssub.s32 %s22, 1
      %s28 = ssub.s32 %s22, 2
      %s29 = sadd.s32 %s22, 1
      %s30 = ssub.s32 %s22, %s29
      %p31 = scmp.eq.s32.totalorder %s30, 0
      %s33 = sadd.s32 %s32, 1
      %s34 = scalar_select %p31, %s32, %s33
      %p37 = pneg %p31
      %p38 = scmp.eq.s32.totalorder %s22, 1
      %p39 = por %p37, %p38
      %p40 = scmp.ne.s32.totalorder %s32, %s35
      %p41 = scmp.eq.s32.totalorder %s22, 0
      %p42 = por %p40, %p41
      %p43 = scmp.ne.s32.totalorder %s32, %s35
      %p44 = scmp.eq.s32.totalorder %s27, 1
      %p45 = por %p43, %p44
      %p46 = scmp.ne.s32.totalorder %s35, %s36
      %p47 = scmp.eq.s32.totalorder %s27, 0
      %p48 = por %p46, %p47
      %p49 = scmp.ne.s32.totalorder %s35, %s36
      %p50 = scmp.eq.s32.totalorder %s28, 1
      %p51 = por %p49, %p50
      %p53 = scmp.ne.s32.totalorder %s36, %s52
      %p54 = scmp.eq.s32.totalorder %s28, 0
      %p55 = por %p53, %p54
      %s56 = ssub.s32 %s22, %s29
      %p57 = scmp.eq.s32.totalorder %s56, 0
      %s59 = sadd.s32 %s58, 1
      %s60 = scalar_select %p57, %s58, %s59
      %p63 = pneg %p57
      %p64 = scmp.eq.s32.totalorder %s22, 1
      %p65 = por %p63, %p64
      %p66 = scmp.ne.s32.totalorder %s58, %s61
      %p67 = scmp.eq.s32.totalorder %s22, 0
      %p68 = por %p66, %p67
      %p69 = scmp.ne.s32.totalorder %s58, %s61
      %p70 = scmp.eq.s32.totalorder %s27, 1
      %p71 = por %p69, %p70
      %p72 = scmp.ne.s32.totalorder %s61, %s62
      %p73 = scmp.eq.s32.totalorder %s27, 0
      %p74 = por %p72, %p73
      %p75 = scmp.ne.s32.totalorder %s61, %s62
      %p76 = scmp.eq.s32.totalorder %s28, 1
      %p77 = por %p75, %p76
      %p79 = scmp.ne.s32.totalorder %s62, %s78
      %p80 = scmp.eq.s32.totalorder %s28, 0
      %p81 = por %p79, %p80
      %s83 = sadd.s32 %s82, 1
      %p86 = scmp.eq.s32.totalorder %s22, 1
      %p87 = scmp.ne.s32.totalorder %s82, %s84
      %p88 = scmp.eq.s32.totalorder %s22, 0
      %p89 = por %p87, %p88
      %p90 = scmp.ne.s32.totalorder %s82, %s84
      %p91 = scmp.eq.s32.totalorder %s27, 1
      %p92 = por %p90, %p91
      %p93 = scmp.ne.s32.totalorder %s84, %s85
      %p94 = scmp.eq.s32.totalorder %s27, 0
      %p95 = por %p93, %p94
      %p96 = scmp.ne.s32.totalorder %s84, %s85
      %p97 = scmp.eq.s32.totalorder %s28, 1
      %p98 = por %p96, %p97
      %p100 = scmp.ne.s32.totalorder %s85, %s99
      %p101 = scmp.eq.s32.totalorder %s28, 0
      %p102 = por %p100, %p101
      %s104 = sadd.s32 %s103, 1
      %p107 = scmp.eq.s32.totalorder %s22, 1
      %p108 = scmp.ne.s32.totalorder %s103, %s105
      %p109 = scmp.eq.s32.totalorder %s22, 0
      %p110 = por %p108, %p109
      %p111 = scmp.ne.s32.totalorder %s103, %s105
      %p112 = scmp.eq.s32.totalorder %s27, 1
      %p113 = por %p111, %p112
      %p114 = scmp.ne.s32.totalorder %s105, %s106
      %p115 = scmp.eq.s32.totalorder %s27, 0
      %p116 = por %p114, %p115
      %p117 = scmp.ne.s32.totalorder %s105, %s106
      %p118 = scmp.eq.s32.totalorder %s28, 1
      %p119 = por %p117, %p118
      %p121 = scmp.ne.s32.totalorder %s106, %s120
      %p122 = scmp.eq.s32.totalorder %s28, 0
      %p123 = por %p121, %p122
      %s125 = sadd.s32 %s124, 1
      %p128 = scmp.eq.s32.totalorder %s22, 1
      %p129 = scmp.ne.s32.totalorder %s124, %s126
      %p130 = scmp.eq.s32.totalorder %s22, 0
      %p131 = por %p129, %p130
      %p132 = scmp.ne.s32.totalorder %s124, %s126
      %p133 = scmp.eq.s32.totalorder %s27, 1
      %p134 = por %p132, %p133
      %p135 = scmp.ne.s32.totalorder %s126, %s127
      %p136 = scmp.eq.s32.totalorder %s27, 0
      %p137 = por %p135, %p136
      %p138 = scmp.ne.s32.totalorder %s126, %s127
      %p139 = scmp.eq.s32.totalorder %s28, 1
      %p140 = por %p138, %p139
      %p142 = scmp.ne.s32.totalorder %s127, %s141
      %p143 = scmp.eq.s32.totalorder %s28, 0
      %p144 = por %p142, %p143
      %s146 = sadd.s32 %s145, 1
      %p149 = scmp.eq.s32.totalorder %s22, 1
      %p150 = scmp.ne.s32.totalorder %s145, %s147
      %p151 = scmp.eq.s32.totalorder %s22, 0
      %p152 = por %p150, %p151
      %p153 = scmp.ne.s32.totalorder %s145, %s147
      %p154 = scmp.eq.s32.totalorder %s27, 1
      %p155 = por %p153, %p154
      %p156 = scmp.ne.s32.totalorder %s147, %s148
      %p157 = scmp.eq.s32.totalorder %s27, 0
      %p158 = por %p156, %p157
      %p159 = scmp.ne.s32.totalorder %s147, %s148
      %p160 = scmp.eq.s32.totalorder %s28, 1
      %p161 = por %p159, %p160
      %p163 = scmp.ne.s32.totalorder %s148, %s162
      %p164 = scmp.eq.s32.totalorder %s28, 0
      %p165 = por %p163, %p164
      %s167 = sadd.s32 %s166, 1
      %p170 = scmp.eq.s32.totalorder %s22, 1
      %p171 = scmp.ne.s32.totalorder %s166, %s168
      %p172 = scmp.eq.s32.totalorder %s22, 0
      %p173 = por %p171, %p172
      %p174 = scmp.ne.s32.totalorder %s166, %s168
      %p175 = scmp.eq.s32.totalorder %s27, 1
      %p176 = por %p174, %p175
      %p177 = scmp.ne.s32.totalorder %s168, %s169
      %p178 = scmp.eq.s32.totalorder %s27, 0
      %p179 = por %p177, %p178
      %p180 = scmp.ne.s32.totalorder %s168, %s169
      %p181 = scmp.eq.s32.totalorder %s28, 1
      %p182 = por %p180, %p181
      %p184 = scmp.ne.s32.totalorder %s169, %s183
      %p185 = scmp.eq.s32.totalorder %s28, 0
      %p186 = por %p184, %p185
      %s188 = sadd.s32 %s187, 1
      %p191 = scmp.eq.s32.totalorder %s22, 1
      %p192 = scmp.ne.s32.totalorder %s187, %s189
      %p193 = scmp.eq.s32.totalorder %s22, 0
      %p194 = por %p192, %p193
      %p195 = scmp.ne.s32.totalorder %s187, %s189
      %p196 = scmp.eq.s32.totalorder %s27, 1
      %p197 = por %p195, %p196
      %p198 = scmp.ne.s32.totalorder %s189, %s190
      %p199 = scmp.eq.s32.totalorder %s27, 0
      %p200 = por %p198, %p199
      %p201 = scmp.ne.s32.totalorder %s189, %s190
      %p202 = scmp.eq.s32.totalorder %s28, 1
      %p203 = por %p201, %p202
      %p205 = scmp.ne.s32.totalorder %s190, %s204
      %p206 = scmp.eq.s32.totalorder %s28, 0
      %p207 = por %p205, %p206
      %s209 = sadd.s32 %s208, 1
      %p212 = scmp.eq.s32.totalorder %s22, 1
      %p213 = scmp.ne.s32.totalorder %s208, %s210
      %p214 = scmp.eq.s32.totalorder %s22, 0
      %p215 = por %p213, %p214
      %p216 = scmp.ne.s32.totalorder %s208, %s210
      %p217 = scmp.eq.s32.totalorder %s27, 1
      %p218 = por %p216, %p217
      %p219 = scmp.ne.s32.totalorder %s210, %s211
      %p220 = scmp.eq.s32.totalorder %s27, 0
      %p221 = por %p219, %p220
      %p222 = scmp.ne.s32.totalorder %s210, %s211
      %p223 = scmp.eq.s32.totalorder %s28, 1
      %p224 = por %p222, %p223
      %p226 = scmp.ne.s32.totalorder %s211, %s225
      %p227 = scmp.eq.s32.totalorder %s28, 0
      %p228 = por %p226, %p227
      %s230 = sadd.s32 %s229, 1
      %p233 = scmp.eq.s32.totalorder %s22, 1
      %p234 = scmp.ne.s32.totalorder %s229, %s231
      %p235 = scmp.eq.s32.totalorder %s22, 0
      %p236 = por %p234, %p235
      %p237 = scmp.ne.s32.totalorder %s229, %s231
      %p238 = scmp.eq.s32.totalorder %s27, 1
      %p239 = por %p237, %p238
      %p240 = scmp.ne.s32.totalorder %s231, %s232
      %p241 = scmp.eq.s32.totalorder %s27, 0
      %p242 = por %p240, %p241
      %p243 = scmp.ne.s32.totalorder %s231, %s232
      %p244 = scmp.eq.s32.totalorder %s28, 1
      %p245 = por %p243, %p244
      %p247 = scmp.ne.s32.totalorder %s232, %s246
      %p248 = scmp.eq.s32.totalorder %s28, 0
      %p249 = por %p247, %p248
      %s251 = sadd.s32 %s250, 1
      %p254 = scmp.eq.s32.totalorder %s22, 1
      %p255 = scmp.ne.s32.totalorder %s250, %s252
      %p256 = scmp.eq.s32.totalorder %s22, 0
      %p257 = por %p255, %p256
      %p258 = scmp.ne.s32.totalorder %s250, %s252
      %p259 = scmp.eq.s32.totalorder %s27, 1
      %p260 = por %p258, %p259
      %p261 = scmp.ne.s32.totalorder %s252, %s253
      %p262 = scmp.eq.s32.totalorder %s27, 0
      %p263 = por %p261, %p262
      %p264 = scmp.ne.s32.totalorder %s252, %s253
      %p265 = scmp.eq.s32.totalorder %s28, 1
      %p266 = por %p264, %p265
      %p268 = scmp.ne.s32.totalorder %s253, %s267
      %p269 = scmp.eq.s32.totalorder %s28, 0
      %p270 = por %p268, %p269
      %s272 = sadd.s32 %s271, 1
      %p275 = scmp.eq.s32.totalorder %s22, 1
      %p276 = scmp.ne.s32.totalorder %s271, %s273
      %p277 = scmp.eq.s32.totalorder %s22, 0
      %p278 = por %p276, %p277
      %p279 = scmp.ne.s32.totalorder %s271, %s273
      %p280 = scmp.eq.s32.totalorder %s27, 1
      %p281 = por %p279, %p280
      %p282 = scmp.ne.s32.totalorder %s273, %s274
      %p283 = scmp.eq.s32.totalorder %s27, 0
      %p284 = por %p282, %p283
      %p285 = scmp.ne.s32.totalorder %s273, %s274
      %p286 = scmp.eq.s32.totalorder %s28, 1
      %p287 = por %p285, %p286
      %p289 = scmp.ne.s32.totalorder %s274, %s288
      %p290 = scmp.eq.s32.totalorder %s28, 0
      %p291 = por %p289, %p290
      %s293 = sadd.s32 %s292, 1
      %p296 = scmp.eq.s32.totalorder %s22, 1
      %p297 = scmp.ne.s32.totalorder %s292, %s294
      %p298 = scmp.eq.s32.totalorder %s22, 0
      %p299 = por %p297, %p298
      %p300 = scmp.ne.s32.totalorder %s292, %s294
      %p301 = scmp.eq.s32.totalorder %s27, 1
      %p302 = por %p300, %p301
      %p303 = scmp.ne.s32.totalorder %s294, %s295
      %p304 = scmp.eq.s32.totalorder %s27, 0
      %p305 = por %p303, %p304
      %p306 = scmp.ne.s32.totalorder %s294, %s295
      %p307 = scmp.eq.s32.totalorder %s28, 1
      %p308 = por %p306, %p307
      %p310 = scmp.ne.s32.totalorder %s295, %s309
      %p311 = scmp.eq.s32.totalorder %s28, 0
      %p312 = por %p310, %p311
      %s313 = ssub.s32 %s22, %s29
      %p314 = scmp.eq.s32.totalorder %s313, 0
      %s316 = sadd.s32 %s315, 1
      %s317 = scalar_select %p314, %s315, %s316
      %p320 = pneg %p314
      %p321 = scmp.eq.s32.totalorder %s22, 1
      %p322 = por %p320, %p321
      %p323 = scmp.ne.s32.totalorder %s315, %s318
      %p324 = scmp.eq.s32.totalorder %s22, 0
      %p325 = por %p323, %p324
      %p326 = scmp.ne.s32.totalorder %s315, %s318
      %p327 = scmp.eq.s32.totalorder %s27, 1
      %p328 = por %p326, %p327
      %p329 = scmp.ne.s32.totalorder %s318, %s319
      %p330 = scmp.eq.s32.totalorder %s27, 0
      %p331 = por %p329, %p330
      %p332 = scmp.ne.s32.totalorder %s318, %s319
      %p333 = scmp.eq.s32.totalorder %s28, 1
      %p334 = por %p332, %p333
      %p336 = scmp.ne.s32.totalorder %s319, %s335
      %p337 = scmp.eq.s32.totalorder %s28, 0
      %p338 = por %p336, %p337
      %p339 = scmp.le.s32.totalorder 1, %s22
      %p340 = scmp.lt.s32.totalorder %s22, 3
      %p341 = pnand %p339, %p340
      %p342 = pneg %p341
      // Predicated region
      $region9: #{midblock_forward.5} parent=5 // pred_check
        _
      $region10: #{midblock_forward.5} parent=5 // pred_check_branch
        %344 = sbr.rel (%p341) target = $region12
      $region11: #{midblock_forward.5} parent=5 // pred_region
        %s345 = ssub.s32 %s22, 1
        // Predicated region
        $region13: #{midblock_forward.5} parent=11 // pred_check
          %p346 = pneg %p95
        $region14: #{midblock_forward.5} parent=11 // pred_check_branch
          %348 = sbr.rel (%p346) target = $region16
        $region15: #{midblock_forward.5} parent=11 // pred_region
          _
        $region16: #{midblock_forward.5} parent=11 // pred_fallthru
          _
        // Predicated region
        $region17: #{midblock_forward.5} parent=11 // pred_check
          %p349 = pneg %p116
        $region18: #{midblock_forward.5} parent=11 // pred_check_branch
          %351 = sbr.rel (%p349) target = $region20
        $region19: #{midblock_forward.5} parent=11 // pred_region
          _
        $region20: #{midblock_forward.5} parent=11 // pred_fallthru
          _
        // Predicated region
        $region21: #{midblock_forward.5} parent=11 // pred_check
          %p352 = pneg %p137
        $region22: #{midblock_forward.5} parent=11 // pred_check_branch
          %354 = sbr.rel (%p352) target = $region24
        $region23: #{midblock_forward.5} parent=11 // pred_region
          _
        $region24: #{midblock_forward.5} parent=11 // pred_fallthru
          _
        // Predicated region
        $region25: #{midblock_forward.5} parent=11 // pred_check
          %p355 = pneg %p158
        $region26: #{midblock_forward.5} parent=11 // pred_check_branch
          %357 = sbr.rel (%p355) target = $region28
        $region27: #{midblock_forward.5} parent=11 // pred_region
          _
        $region28: #{midblock_forward.5} parent=11 // pred_fallthru
          _
        // Predicated region
        $region29: #{midblock_forward.5} parent=11 // pred_check
          %p358 = pneg %p179
        $region30: #{midblock_forward.5} parent=11 // pred_check_branch
          %360 = sbr.rel (%p358) target = $region32
        $region31: #{midblock_forward.5} parent=11 // pred_region
          _
        $region32: #{midblock_forward.5} parent=11 // pred_fallthru
          _
        // Predicated region
        $region33: #{midblock_forward.5} parent=11 // pred_check
          %p361 = pneg %p200
        $region34: #{midblock_forward.5} parent=11 // pred_check_branch
          %363 = sbr.rel (%p361) target = $region36
        $region35: #{midblock_forward.5} parent=11 // pred_region
          _
        $region36: #{midblock_forward.5} parent=11 // pred_fallthru
          _
        // Predicated region
        $region37: #{midblock_forward.5} parent=11 // pred_check
          %p364 = pneg %p221
        $region38: #{midblock_forward.5} parent=11 // pred_check_branch
          %366 = sbr.rel (%p364) target = $region40
        $region39: #{midblock_forward.5} parent=11 // pred_region
          _
        $region40: #{midblock_forward.5} parent=11 // pred_fallthru
          _
        // Predicated region
        $region41: #{midblock_forward.5} parent=11 // pred_check
          %p367 = pneg %p242
        $region42: #{midblock_forward.5} parent=11 // pred_check_branch
          %369 = sbr.rel (%p367) target = $region44
        $region43: #{midblock_forward.5} parent=11 // pred_region
          _
        $region44: #{midblock_forward.5} parent=11 // pred_fallthru
          _
        // Predicated region
        $region45: #{midblock_forward.5} parent=11 // pred_check
          %p370 = pneg %p263
        $region46: #{midblock_forward.5} parent=11 // pred_check_branch
          %372 = sbr.rel (%p370) target = $region48
        $region47: #{midblock_forward.5} parent=11 // pred_region
          _
        $region48: #{midblock_forward.5} parent=11 // pred_fallthru
          _
        // Predicated region
        $region49: #{midblock_forward.5} parent=11 // pred_check
          %p373 = pneg %p284
        $region50: #{midblock_forward.5} parent=11 // pred_check_branch
          %375 = sbr.rel (%p373) target = $region52
        $region51: #{midblock_forward.5} parent=11 // pred_region
          _
        $region52: #{midblock_forward.5} parent=11 // pred_fallthru
          _
        // Predicated region
        $region53: #{midblock_forward.5} parent=11 // pred_check
          %p376 = pneg %p305
        $region54: #{midblock_forward.5} parent=11 // pred_check_branch
          %378 = sbr.rel (%p376) target = $region56
        $region55: #{midblock_forward.5} parent=11 // pred_region
          _
        $region56: #{midblock_forward.5} parent=11 // pred_fallthru
          _
      $region12: #{midblock_forward.5} parent=5 // pred_fallthru
        _
      %p379 = scmp.lt.s32.totalorder %s22, 2
      // Predicated region
      $region57: #{midblock_forward.5} parent=5 // pred_check
        %p380 = pneg %p379
      $region58: #{midblock_forward.5} parent=5 // pred_check_branch
        %382 = sbr.rel (%p380) target = $region60
      $region59: #{midblock_forward.5} parent=5 // pred_region
        // Predicated region
        $region61: #{midblock_forward.5} parent=59 // pred_check
          %p383 = pneg %p42
        $region62: #{midblock_forward.5} parent=59 // pred_check_branch
          %385 = sbr.rel (%p383) target = $region64
        $region63: #{midblock_forward.5} parent=59 // pred_region
          %p386 = scmp.lt.s32.totalorder %s22, 1
          %s387 = scalar_select %p386, %s22, 1
          %s388 = smul.addr %s387, 8
          %s389 = smul.addr %s388, 8
          %s390 = scalar_lea.vmem %s0, %s389
        $region64: #{midblock_forward.5} parent=59 // pred_fallthru
          _
        // Predicated region
        $region65: #{midblock_forward.5} parent=59 // pred_check
          %p391 = pneg %p68
        $region66: #{midblock_forward.5} parent=59 // pred_check_branch
          %393 = sbr.rel (%p391) target = $region68
        $region67: #{midblock_forward.5} parent=59 // pred_region
          %p394 = scmp.lt.s32.totalorder %s22, 1
          %s395 = scalar_select %p394, %s22, 1
          %s396 = scalar_lea.vmem %s1, %s395
        $region68: #{midblock_forward.5} parent=59 // pred_fallthru
          _
      $region60: #{midblock_forward.5} parent=5 // pred_fallthru
        _
      %p397 = scmp.le.s32.totalorder 1, %s22
      %p398 = scmp.lt.s32.totalorder %s22, 3
      %p399 = pnand %p397, %p398
      %p400 = pneg %p399
      // Predicated region
      $region69: #{midblock_forward.5} parent=5 // pred_check
        _
      $region70: #{midblock_forward.5} parent=5 // pred_check_branch
        %402 = sbr.rel (%p399) target = $region72
      $region71: #{midblock_forward.5} parent=5 // pred_region
        %s403 = ssub.s32 %s22, 1
        %p404 = scmp.lt.s32.totalorder %s27, 1
        %s405 = scalar_select %p404, %s27, 1
        %s406 = smul.addr %s405, 8
        %s407 = smul.addr %s406, 8
        %s408 = scalar_lea.vmem %s0, %s407
        %p409 = pneg %p48
        %p410 = pneg %p45
        %p411 = scmp.lt.s32.totalorder %s27, 1
        %s412 = scalar_select %p411, %s27, 1
        %s413 = scalar_lea.vmem %s1, %s412
        %p414 = pneg %p74
        %p415 = pneg %p71
        %p416 = pneg %p95
        %p417 = pneg %p92
        %p418 = pneg %p116
        %p419 = pneg %p113
        %p420 = pneg %p137
        %p421 = pneg %p134
        %p422 = pneg %p158
        %p423 = pneg %p155
        %p424 = pneg %p179
        %p425 = pneg %p176
        %p426 = pneg %p200
        %p427 = pneg %p197
        %p428 = pneg %p221
        %p429 = pneg %p218
        %p430 = pneg %p242
        %p431 = pneg %p239
        %p432 = pneg %p263
        %p433 = pneg %p260
        %p434 = pneg %p284
        %p435 = pneg %p281
        %p436 = pneg %p305
        %p437 = pneg %p302
        %p438 = pneg %p331
        %p439 = pneg %p328
        %s440 = sand.u32 %s318, 1
        %s441 = scalar_lea.sflag [#allocation4], %s440
        %s442 = sand.u32 %s318, 1
        %s443 = smul.addr %s442, 64
        %s444 = scalar_lea.vmem [#allocation3], %s443
        %p445 = scmp.lt.s32.totalorder %s27, 1
        %s446 = scalar_select %p445, %s27, 1
        %s447 = smul.addr %s446, 8
        %s448 = smul.addr %s447, 8
        %s449 = scalar_lea.vmem %s0, %s448
        %p450 = scmp.lt.s32.totalorder %s27, 1
        %s451 = scalar_select %p450, %s27, 1
        %s452 = scalar_lea.vmem %s1, %s451
        %v453 = vld [vmem:[%s449] sm:$0xff]
        %v454 = vld [vmem:[%s449 + $0x8] sm:$0xff]
        %v455 = vld [vmem:[%s449 + $0x10] sm:$0xff]
        %v456 = vld [vmem:[%s449 + $0x18] sm:$0xff]
        %v457 = vld [vmem:[%s449 + $0x20] sm:$0xff]
        %v458 = vld [vmem:[%s449 + $0x28] sm:$0xff]
        %v459 = vld [vmem:[%s449 + $0x30] sm:$0xff]
        %v460 = vld [vmem:[%s449 + $0x38] sm:$0xff]
        %v461 = vld [vmem:[%s12] sm:$0xff]
        %v462 = vld [vmem:[%s12 + $0x8] sm:$0xff]
        %v463 = vld [vmem:[%s12 + $0x10] sm:$0xff]
        %v464 = vld [vmem:[%s12 + $0x18] sm:$0xff]
        %v465 = vld [vmem:[%s12 + $0x20] sm:$0xff]
        %v466 = vld [vmem:[%s12 + $0x28] sm:$0xff]
        %v467 = vld [vmem:[%s12 + $0x30] sm:$0xff]
        %v468 = vld [vmem:[%s12 + $0x38] sm:$0xff]
        %v469 = vld [vmem:[%s12 + $0x40] sm:$0xff]
        %v470 = vld [vmem:[%s12 + $0x48] sm:$0xff]
        %v471 = vld [vmem:[%s12 + $0x50] sm:$0xff]
        %v472 = vld [vmem:[%s12 + $0x58] sm:$0xff]
        %v473 = vld [vmem:[%s12 + $0x60] sm:$0xff]
        %v474 = vld [vmem:[%s12 + $0x68] sm:$0xff]
        %v475 = vld [vmem:[%s12 + $0x70] sm:$0xff]
        %v476 = vld [vmem:[%s12 + $0x78] sm:$0xff]
        %477 = vst [vmem:[#allocation2] sm:$0xff] 0.0
        %478 = vst [vmem:[#allocation2 + $0x8] sm:$0x3] 0.0
        %479 = vst [vmem:[#allocation2 + $0x10] sm:$0xff] 0.0
        %480 = vst [vmem:[#allocation2 + $0x18] sm:$0x3] 0.0
        %481 = vst [vmem:[#allocation2 + $0x20] sm:$0xff] 0.0
        %482 = vst [vmem:[#allocation2 + $0x28] sm:$0x3] 0.0
        %483 = vst [vmem:[#allocation2 + $0x30] sm:$0xff] 0.0
        %484 = vst [vmem:[#allocation2 + $0x38] sm:$0x3] 0.0
        %485 = vst [vmem:[#allocation2 + $0x40] sm:$0xff] 0.0
        %486 = vst [vmem:[#allocation2 + $0x48] sm:$0x3] 0.0
        %487 = vst [vmem:[#allocation2 + $0x50] sm:$0xff] 0.0
        %488 = vst [vmem:[#allocation2 + $0x58] sm:$0x3] 0.0
        %489 = vst [vmem:[#allocation2 + $0x60] sm:$0xff] 0.0
        %490 = vst [vmem:[#allocation2 + $0x68] sm:$0x3] 0.0
        %491 = vst [vmem:[#allocation2 + $0x70] sm:$0xff] 0.0
        %492 = vst [vmem:[#allocation2 + $0x78] sm:$0x3] 0.0
        %493 = vst [vmem:[#allocation2 + $0x80] sm:$0xff] 0.0
        %494 = vst [vmem:[#allocation2 + $0x88] sm:$0x3] 0.0
        %495 = vst [vmem:[#allocation2 + $0x90] sm:$0xff] 0.0
        %496 = vst [vmem:[#allocation2 + $0x98] sm:$0x3] 0.0
        %s497 = scalar_lea.vmem [#allocation2], 16
        %498 = vst [vmem:[%s497 + $0x1] sm:$0xff] %v453
        %499 = vst [vmem:[%s497 + $0x11] sm:$0xff] %v454
        %500 = vst [vmem:[%s497 + $0x21] sm:$0xff] %v455
        %501 = vst [vmem:[%s497 + $0x31] sm:$0xff] %v456
        %502 = vst [vmem:[%s497 + $0x41] sm:$0xff] %v457
        %503 = vst [vmem:[%s497 + $0x51] sm:$0xff] %v458
        %504 = vst [vmem:[%s497 + $0x61] sm:$0xff] %v459
        %505 = vst [vmem:[%s497 + $0x71] sm:$0xff] %v460
        %v506 = vld [vmem:[#allocation2] sm:$0xff]
        %v507 = vld [vmem:[#allocation2 + $0x10] sm:$0xff]
        %v508 = vld [vmem:[#allocation2 + $0x20] sm:$0xff]
        %v509 = vld [vmem:[#allocation2 + $0x30] sm:$0xff]
        %v510 = vld [vmem:[#allocation2 + $0x40] sm:$0xff]
        %v511 = vld [vmem:[#allocation2 + $0x50] sm:$0xff]
        %v512 = vld [vmem:[#allocation2 + $0x60] sm:$0xff]
        %v513 = vld [vmem:[#allocation2 + $0x70] sm:$0xff]
        %v514 = vld [vmem:[#allocation2 + $0x1] sm:$0xff]
        %v515 = vld [vmem:[#allocation2 + $0x11] sm:$0xff]
        %v516 = vld [vmem:[#allocation2 + $0x21] sm:$0xff]
        %v517 = vld [vmem:[#allocation2 + $0x31] sm:$0xff]
        %v518 = vld [vmem:[#allocation2 + $0x41] sm:$0xff]
        %v519 = vld [vmem:[#allocation2 + $0x51] sm:$0xff]
        %v520 = vld [vmem:[#allocation2 + $0x61] sm:$0xff]
        %v521 = vld [vmem:[#allocation2 + $0x71] sm:$0xff]
        %v522 = vld [vmem:[#allocation2 + $0x2] sm:$0xff]
        %v523 = vld [vmem:[#allocation2 + $0x12] sm:$0xff]
        %v524 = vld [vmem:[#allocation2 + $0x22] sm:$0xff]
        %v525 = vld [vmem:[#allocation2 + $0x32] sm:$0xff]
        %v526 = vld [vmem:[#allocation2 + $0x42] sm:$0xff]
        %v527 = vld [vmem:[#allocation2 + $0x52] sm:$0xff]
        %v528 = vld [vmem:[#allocation2 + $0x62] sm:$0xff]
        %v529 = vld [vmem:[#allocation2 + $0x72] sm:$0xff]
        %v530 = vld [vmem:[%s497] sm:$0xff]
        %v531 = vld [vmem:[%s497 + $0x10] sm:$0xff]
        %v532 = vld [vmem:[%s497 + $0x20] sm:$0xff]
        %v533 = vld [vmem:[%s497 + $0x30] sm:$0xff]
        %v534 = vld [vmem:[%s497 + $0x40] sm:$0xff]
        %v535 = vld [vmem:[%s497 + $0x50] sm:$0xff]
        %v536 = vld [vmem:[%s497 + $0x60] sm:$0xff]
        %v537 = vld [vmem:[%s497 + $0x70] sm:$0xff]
        %v538 = vld [vmem:[%s497 + $0x1] sm:$0xff]
        %v539 = vld [vmem:[%s497 + $0x11] sm:$0xff]
        %v540 = vld [vmem:[%s497 + $0x21] sm:$0xff]
        %v541 = vld [vmem:[%s497 + $0x31] sm:$0xff]
        %v542 = vld [vmem:[%s497 + $0x41] sm:$0xff]
        %v543 = vld [vmem:[%s497 + $0x51] sm:$0xff]
        %v544 = vld [vmem:[%s497 + $0x61] sm:$0xff]
        %v545 = vld [vmem:[%s497 + $0x71] sm:$0xff]
        %v546 = vld [vmem:[%s497 + $0x2] sm:$0xff]
        %v547 = vld [vmem:[%s497 + $0x12] sm:$0xff]
        %v548 = vld [vmem:[%s497 + $0x22] sm:$0xff]
        %v549 = vld [vmem:[%s497 + $0x32] sm:$0xff]
        %v550 = vld [vmem:[%s497 + $0x42] sm:$0xff]
        %v551 = vld [vmem:[%s497 + $0x52] sm:$0xff]
        %v552 = vld [vmem:[%s497 + $0x62] sm:$0xff]
        %v553 = vld [vmem:[%s497 + $0x72] sm:$0xff]
        %s554 = scalar_lea.vmem [#allocation2], 32
        %v555 = vld [vmem:[%s554] sm:$0xff]
        %v556 = vld [vmem:[%s554 + $0x10] sm:$0xff]
        %v557 = vld [vmem:[%s554 + $0x20] sm:$0xff]
        %v558 = vld [vmem:[%s554 + $0x30] sm:$0xff]
        %v559 = vld [vmem:[%s554 + $0x40] sm:$0xff]
        %v560 = vld [vmem:[%s554 + $0x50] sm:$0xff]
        %v561 = vld [vmem:[%s554 + $0x60] sm:$0xff]
        %v562 = vld [vmem:[%s554 + $0x70] sm:$0xff]
        %v563 = vld [vmem:[%s554 + $0x1] sm:$0xff]
        %v564 = vld [vmem:[%s554 + $0x11] sm:$0xff]
        %v565 = vld [vmem:[%s554 + $0x21] sm:$0xff]
        %v566 = vld [vmem:[%s554 + $0x31] sm:$0xff]
        %v567 = vld [vmem:[%s554 + $0x41] sm:$0xff]
        %v568 = vld [vmem:[%s554 + $0x51] sm:$0xff]
        %v569 = vld [vmem:[%s554 + $0x61] sm:$0xff]
        %v570 = vld [vmem:[%s554 + $0x71] sm:$0xff]
        %v571 = vld [vmem:[%s554 + $0x2] sm:$0xff]
        %v572 = vld [vmem:[%s554 + $0x12] sm:$0xff]
        %v573 = vld [vmem:[%s554 + $0x22] sm:$0xff]
        %v574 = vld [vmem:[%s554 + $0x32] sm:$0xff]
        %v575 = vld [vmem:[%s554 + $0x42] sm:$0xff]
        %v576 = vld [vmem:[%s554 + $0x52] sm:$0xff]
        %v577 = vld [vmem:[%s554 + $0x62] sm:$0xff]
        %v578 = vld [vmem:[%s554 + $0x72] sm:$0xff]
        %v579 = vld [vmem:[%s2] sm:$0xff]
        %v580 = vld [vmem:[%s2 + $0x8] sm:$0xff]
        %v581 = vld [vmem:[%s2 + $0x10] sm:$0xff]
        %v582 = vld [vmem:[%s2 + $0x18] sm:$0xff]
        %v583 = vld [vmem:[%s2 + $0x20] sm:$0xff]
        %v584 = vld [vmem:[%s2 + $0x28] sm:$0xff]
        %v585 = vld [vmem:[%s2 + $0x30] sm:$0xff]
        %v586 = vld [vmem:[%s2 + $0x38] sm:$0xff]
        %v587 = vld [vmem:[%s2 + $0x40] sm:$0xff]
        %v588 = vld [vmem:[%s2 + $0x48] sm:$0xff]
        %v589 = vld [vmem:[%s2 + $0x50] sm:$0xff]
        %v590 = vld [vmem:[%s2 + $0x58] sm:$0xff]
        %v591 = vld [vmem:[%s2 + $0x60] sm:$0xff]
        %v592 = vld [vmem:[%s2 + $0x68] sm:$0xff]
        %v593 = vld [vmem:[%s2 + $0x70] sm:$0xff]
        %v594 = vld [vmem:[%s2 + $0x78] sm:$0xff]
        %v595 = vld [vmem:[%s2 + $0x80] sm:$0xff]
        %v596 = vld [vmem:[%s2 + $0x88] sm:$0xff]
        %v597 = vld [vmem:[%s2 + $0x90] sm:$0xff]
        %v598 = vld [vmem:[%s2 + $0x98] sm:$0xff]
        %v599 = vld [vmem:[%s2 + $0xa0] sm:$0xff]
        %v600 = vld [vmem:[%s2 + $0xa8] sm:$0xff]
        %v601 = vld [vmem:[%s2 + $0xb0] sm:$0xff]
        %v602 = vld [vmem:[%s2 + $0xb8] sm:$0xff]
        %v603 = vld [vmem:[%s2 + $0xc0] sm:$0xff]
        %v604 = vld [vmem:[%s2 + $0xc8] sm:$0xff]
        %v605 = vld [vmem:[%s2 + $0xd0] sm:$0xff]
        %v606 = vld [vmem:[%s2 + $0xd8] sm:$0xff]
        %v607 = vld [vmem:[%s2 + $0xe0] sm:$0xff]
        %v608 = vld [vmem:[%s2 + $0xe8] sm:$0xff]
        %v609 = vld [vmem:[%s2 + $0xf0] sm:$0xff]
        %v610 = vld [vmem:[%s2 + $0xf8] sm:$0xff]
        %v611 = vld [vmem:[%s2 + $0x100] sm:$0xff]
        %v612 = vld [vmem:[%s2 + $0x108] sm:$0xff]
        %v613 = vld [vmem:[%s2 + $0x110] sm:$0xff]
        %v614 = vld [vmem:[%s2 + $0x118] sm:$0xff]
        %v615 = vld [vmem:[%s2 + $0x120] sm:$0xff]
        %v616 = vld [vmem:[%s2 + $0x128] sm:$0xff]
        %v617 = vld [vmem:[%s2 + $0x130] sm:$0xff]
        %v618 = vld [vmem:[%s2 + $0x138] sm:$0xff]
        %v619 = vld [vmem:[%s2 + $0x140] sm:$0xff]
        %v620 = vld [vmem:[%s2 + $0x148] sm:$0xff]
        %v621 = vld [vmem:[%s2 + $0x150] sm:$0xff]
        %v622 = vld [vmem:[%s2 + $0x158] sm:$0xff]
        %v623 = vld [vmem:[%s2 + $0x160] sm:$0xff]
        %v624 = vld [vmem:[%s2 + $0x168] sm:$0xff]
        %v625 = vld [vmem:[%s2 + $0x170] sm:$0xff]
        %v626 = vld [vmem:[%s2 + $0x178] sm:$0xff]
        %v627 = vld [vmem:[%s2 + $0x180] sm:$0xff]
        %v628 = vld [vmem:[%s2 + $0x188] sm:$0xff]
        %v629 = vld [vmem:[%s2 + $0x190] sm:$0xff]
        %v630 = vld [vmem:[%s2 + $0x198] sm:$0xff]
        %v631 = vld [vmem:[%s2 + $0x1a0] sm:$0xff]
        %v632 = vld [vmem:[%s2 + $0x1a8] sm:$0xff]
        %v633 = vld [vmem:[%s2 + $0x1b0] sm:$0xff]
        %v634 = vld [vmem:[%s2 + $0x1b8] sm:$0xff]
        %v635 = vld [vmem:[%s2 + $0x1c0] sm:$0xff]
        %v636 = vld [vmem:[%s2 + $0x1c8] sm:$0xff]
        %v637 = vld [vmem:[%s2 + $0x1d0] sm:$0xff]
        %v638 = vld [vmem:[%s2 + $0x1d8] sm:$0xff]
        %v639 = vld [vmem:[%s2 + $0x1e0] sm:$0xff]
        %v640 = vld [vmem:[%s2 + $0x1e8] sm:$0xff]
        %v641 = vld [vmem:[%s2 + $0x1f0] sm:$0xff]
        %v642 = vld [vmem:[%s2 + $0x1f8] sm:$0xff]
        %v643 = vld [vmem:[%s2 + $0x200] sm:$0xff]
        %v644 = vld [vmem:[%s2 + $0x208] sm:$0xff]
        %v645 = vld [vmem:[%s2 + $0x210] sm:$0xff]
        %v646 = vld [vmem:[%s2 + $0x218] sm:$0xff]
        %v647 = vld [vmem:[%s2 + $0x220] sm:$0xff]
        %v648 = vld [vmem:[%s2 + $0x228] sm:$0xff]
        %v649 = vld [vmem:[%s2 + $0x230] sm:$0xff]
        %v650 = vld [vmem:[%s2 + $0x238] sm:$0xff]
        %v651 = vld [vmem:[%s2 + $0x240] sm:$0xff]
        %v652 = vld [vmem:[%s2 + $0x248] sm:$0xff]
        %v653 = vld [vmem:[%s2 + $0x250] sm:$0xff]
        %v654 = vld [vmem:[%s2 + $0x258] sm:$0xff]
        %v655 = vld [vmem:[%s2 + $0x260] sm:$0xff]
        %v656 = vld [vmem:[%s2 + $0x268] sm:$0xff]
        %v657 = vld [vmem:[%s2 + $0x270] sm:$0xff]
        %v658 = vld [vmem:[%s2 + $0x278] sm:$0xff]
        %v659 = vld [vmem:[%s2 + $0x280] sm:$0xff]
        %v660 = vld [vmem:[%s2 + $0x288] sm:$0xff]
        %v661 = vld [vmem:[%s2 + $0x290] sm:$0xff]
        %v662 = vld [vmem:[%s2 + $0x298] sm:$0xff]
        %v663 = vld [vmem:[%s2 + $0x2a0] sm:$0xff]
        %v664 = vld [vmem:[%s2 + $0x2a8] sm:$0xff]
        %v665 = vld [vmem:[%s2 + $0x2b0] sm:$0xff]
        %v666 = vld [vmem:[%s2 + $0x2b8] sm:$0xff]
        %v667 = vld [vmem:[%s2 + $0x2c0] sm:$0xff]
        %v668 = vld [vmem:[%s2 + $0x2c8] sm:$0xff]
        %v669 = vld [vmem:[%s2 + $0x2d0] sm:$0xff]
        %v670 = vld [vmem:[%s2 + $0x2d8] sm:$0xff]
        %v671 = vld [vmem:[%s2 + $0x2e0] sm:$0xff]
        %v672 = vld [vmem:[%s2 + $0x2e8] sm:$0xff]
        %v673 = vld [vmem:[%s2 + $0x2f0] sm:$0xff]
        %v674 = vld [vmem:[%s2 + $0x2f8] sm:$0xff]
        %v675 = vld [vmem:[%s2 + $0x300] sm:$0xff]
        %v676 = vld [vmem:[%s2 + $0x308] sm:$0xff]
        %v677 = vld [vmem:[%s2 + $0x310] sm:$0xff]
        %v678 = vld [vmem:[%s2 + $0x318] sm:$0xff]
        %v679 = vld [vmem:[%s2 + $0x320] sm:$0xff]
        %v680 = vld [vmem:[%s2 + $0x328] sm:$0xff]
        %v681 = vld [vmem:[%s2 + $0x330] sm:$0xff]
        %v682 = vld [vmem:[%s2 + $0x338] sm:$0xff]
        %v683 = vld [vmem:[%s2 + $0x340] sm:$0xff]
        %v684 = vld [vmem:[%s2 + $0x348] sm:$0xff]
        %v685 = vld [vmem:[%s2 + $0x350] sm:$0xff]
        %v686 = vld [vmem:[%s2 + $0x358] sm:$0xff]
        %v687 = vld [vmem:[%s2 + $0x360] sm:$0xff]
        %v688 = vld [vmem:[%s2 + $0x368] sm:$0xff]
        %v689 = vld [vmem:[%s2 + $0x370] sm:$0xff]
        %v690 = vld [vmem:[%s2 + $0x378] sm:$0xff]
        %v691 = vld [vmem:[%s2 + $0x380] sm:$0xff]
        %v692 = vld [vmem:[%s2 + $0x388] sm:$0xff]
        %v693 = vld [vmem:[%s2 + $0x390] sm:$0xff]
        %v694 = vld [vmem:[%s2 + $0x398] sm:$0xff]
        %v695 = vld [vmem:[%s2 + $0x3a0] sm:$0xff]
        %v696 = vld [vmem:[%s2 + $0x3a8] sm:$0xff]
        %v697 = vld [vmem:[%s2 + $0x3b0] sm:$0xff]
        %v698 = vld [vmem:[%s2 + $0x3b8] sm:$0xff]
        %v699 = vld [vmem:[%s2 + $0x3c0] sm:$0xff]
        %v700 = vld [vmem:[%s2 + $0x3c8] sm:$0xff]
        %v701 = vld [vmem:[%s2 + $0x3d0] sm:$0xff]
        %v702 = vld [vmem:[%s2 + $0x3d8] sm:$0xff]
        %v703 = vld [vmem:[%s2 + $0x3e0] sm:$0xff]
        %v704 = vld [vmem:[%s2 + $0x3e8] sm:$0xff]
        %v705 = vld [vmem:[%s2 + $0x3f0] sm:$0xff]
        %v706 = vld [vmem:[%s2 + $0x3f8] sm:$0xff]
        %v707 = vld [vmem:[%s2 + $0x400] sm:$0xff]
        %v708 = vld [vmem:[%s2 + $0x408] sm:$0xff]
        %v709 = vld [vmem:[%s2 + $0x410] sm:$0xff]
        %v710 = vld [vmem:[%s2 + $0x418] sm:$0xff]
        %v711 = vld [vmem:[%s2 + $0x420] sm:$0xff]
        %v712 = vld [vmem:[%s2 + $0x428] sm:$0xff]
        %v713 = vld [vmem:[%s2 + $0x430] sm:$0xff]
        %v714 = vld [vmem:[%s2 + $0x438] sm:$0xff]
        %v715 = vld [vmem:[%s2 + $0x440] sm:$0xff]
        %v716 = vld [vmem:[%s2 + $0x448] sm:$0xff]
        %v717 = vld [vmem:[%s2 + $0x450] sm:$0xff]
        %v718 = vld [vmem:[%s2 + $0x458] sm:$0xff]
        %v719 = vld [vmem:[%s2 + $0x460] sm:$0xff]
        %v720 = vld [vmem:[%s2 + $0x468] sm:$0xff]
        %v721 = vld [vmem:[%s2 + $0x470] sm:$0xff]
        %v722 = vld [vmem:[%s2 + $0x478] sm:$0xff]
        %v723 = vld [vmem:[%s3] sm:$0x1]
        %v725 = vlaneseq
        %v726 = vshrl.u32 %v725, 7
        %v727 = vsub.s32 0, %v726
        %v728 = vrot.slane %v723, %v727
        %730 = vmatprep.subr.mxu0 0.0
        %731 = vmatpush1.msra.mxu0 %v579
        %732 = vmatprep.subr.mxu0 0.0
        %733 = vmatpush1.msra.mxu0 %v580
        %734 = vmatprep.subr.mxu0 0.0
        %735 = vmatpush1.msra.mxu0 %v581
        %736 = vmatprep.subr.mxu0 0.0
        %737 = vmatpush1.msra.mxu0 %v582
        %738 = vmatprep.subr.mxu0 0.0
        %739 = vmatpush1.msra.mxu0 %v583
        %740 = vmatprep.subr.mxu0 0.0
        %741 = vmatpush1.msra.mxu0 %v584
        %742 = vmatprep.subr.mxu0 0.0
        %743 = vmatpush1.msra.mxu0 %v585
        %744 = vmatprep.subr.mxu0 0.0
        %745 = vmatpush1.msra.mxu0 %v586
        %746 = vmatprep.subr.mxu0 0.0
        %747 = vmatpush1.msra.mxu0 %v587
        %748 = vmatprep.subr.mxu0 0.0
        %749 = vmatpush1.msra.mxu0 %v588
        %750 = vmatprep.subr.mxu0 0.0
        %751 = vmatpush1.msra.mxu0 %v589
        %752 = vmatprep.subr.mxu0 0.0
        %753 = vmatpush1.msra.mxu0 %v590
        %754 = vmatprep.subr.mxu0 0.0
        %755 = vmatpush1.msra.mxu0 %v591
        %756 = vmatprep.subr.mxu0 0.0
        %757 = vmatpush1.msra.mxu0 %v592
        %758 = vmatprep.subr.mxu0 0.0
        %759 = vmatpush1.msra.mxu0 %v593
        %760 = vmatprep.subr.mxu0 0.0
        %761 = vmatpush1.msra.mxu0 %v594
        %762 = vmatprep.subr.mxu0 0.0
        %763 = vmatpush1.msra.mxu0 %v595
        %764 = vmatprep.subr.mxu0 0.0
        %765 = vmatpush1.msra.mxu0 %v596
        %766 = vmatprep.subr.mxu0 0.0
        %767 = vmatpush1.msra.mxu0 %v597
        %768 = vmatprep.subr.mxu0 0.0
        %769 = vmatpush1.msra.mxu0 %v598
        %770 = vmatprep.subr.mxu0 0.0
        %771 = vmatpush1.msra.mxu0 %v599
        %772 = vmatprep.subr.mxu0 0.0
        %773 = vmatpush1.msra.mxu0 %v600
        %774 = vmatprep.subr.mxu0 0.0
        %775 = vmatpush1.msra.mxu0 %v601
        %776 = vmatprep.subr.mxu0 0.0
        %777 = vmatpush1.msra.mxu0 %v602
        %778 = vmatprep.subr.mxu0 0.0
        %779 = vmatpush1.msra.mxu0 %v603
        %780 = vmatprep.subr.mxu0 0.0
        %781 = vmatpush1.msra.mxu0 %v604
        %782 = vmatprep.subr.mxu0 0.0
        %783 = vmatpush1.msra.mxu0 %v605
        %784 = vmatprep.subr.mxu0 0.0
        %785 = vmatpush1.msra.mxu0 %v606
        %786 = vmatprep.subr.mxu0 0.0
        %787 = vmatpush1.msra.mxu0 %v607
        %788 = vmatprep.subr.mxu0 0.0
        %789 = vmatpush1.msra.mxu0 %v608
        %790 = vmatprep.subr.mxu0 0.0
        %791 = vmatpush1.msra.mxu0 %v609
        %792 = vmatprep.subr.mxu0 0.0
        %793 = vmatpush1.msra.mxu0 %v610
        %794 = vmatprep.mubr.f32.mxu0 %v514
        %795 = vmatmul.mubr.f32.gmra.mrb[0].mxu0 %v506
        %v796 = vpop.f32.mrb[0].mxu0
        %v797 = vadd.f32 %v728, %v796
        %v798 = vpop.f32.mrb[0].mxu0
        %799 = vmatprep.mubr.f32.mxu0 %v515
        %800 = vmatmul.mubr.f32.gmra.mrb[0].mxu0 %v507
        %v801 = vpop.f32.mrb[0].mxu0
        %v802 = vadd.f32 %v728, %v801
        %v803 = vpop.f32.mrb[0].mxu0
        %804 = vmatprep.mubr.f32.mxu0 %v516
        %805 = vmatmul.mubr.f32.gmra.mrb[0].mxu0 %v508
        %v806 = vpop.f32.mrb[0].mxu0
        %v807 = vadd.f32 %v728, %v806
        %v808 = vpop.f32.mrb[0].mxu0
        %809 = vmatprep.mubr.f32.mxu0 %v517
        %810 = vmatmul.mubr.f32.gmra.mrb[0].mxu0 %v509
        %v811 = vpop.f32.mrb[0].mxu0
        %v812 = vadd.f32 %v728, %v811
        %v813 = vpop.f32.mrb[0].mxu0
        %814 = vmatprep.mubr.f32.mxu0 %v518
        %815 = vmatmul.mubr.f32.gmra.mrb[0].mxu0 %v510
        %v816 = vpop.f32.mrb[0].mxu0
        %v817 = vadd.f32 %v728, %v816
        %v818 = vpop.f32.mrb[0].mxu0
        %819 = vmatprep.mubr.f32.mxu0 %v519
        %820 = vmatmul.mubr.f32.gmra.mrb[0].mxu0 %v511
        %v821 = vpop.f32.mrb[0].mxu0
        %v822 = vadd.f32 %v728, %v821
        %v823 = vpop.f32.mrb[0].mxu0
        %824 = vmatprep.mubr.f32.mxu0 %v520
        %825 = vmatmul.mubr.f32.gmra.mrb[0].mxu0 %v512
        %v826 = vpop.f32.mrb[0].mxu0
        %v827 = vadd.f32 %v728, %v826
        %v828 = vpop.f32.mrb[0].mxu0
        %829 = vmatprep.mubr.f32.mxu0 %v521
        %830 = vmatmul.mubr.f32.gmra.mrb[0].mxu0 %v513
        %v831 = vpop.f32.mrb[0].mxu0
        %v832 = vadd.f32 %v728, %v831
        %v833 = vpop.f32.mrb[0].mxu0
        %834 = vdwg.mxu0
        %835 = vmatprep.subr.mxu0 0.0
        %836 = vmatpush1.msra.mxu0 %v611
        %837 = vmatprep.subr.mxu0 0.0
        %838 = vmatpush1.msra.mxu0 %v612
        %839 = vmatprep.subr.mxu0 0.0
        %840 = vmatpush1.msra.mxu0 %v613
        %841 = vmatprep.subr.mxu0 0.0
        %842 = vmatpush1.msra.mxu0 %v614
        %843 = vmatprep.subr.mxu0 0.0
        %844 = vmatpush1.msra.mxu0 %v615
        %845 = vmatprep.subr.mxu0 0.0
        %846 = vmatpush1.msra.mxu0 %v616
        %847 = vmatprep.subr.mxu0 0.0
        %848 = vmatpush1.msra.mxu0 %v617
        %849 = vmatprep.subr.mxu0 0.0
        %850 = vmatpush1.msra.mxu0 %v618
        %851 = vmatprep.subr.mxu0 0.0
        %852 = vmatpush1.msra.mxu0 %v619
        %853 = vmatprep.subr.mxu0 0.0
        %854 = vmatpush1.msra.mxu0 %v620
        %855 = vmatprep.subr.mxu0 0.0
        %856 = vmatpush1.msra.mxu0 %v621
        %857 = vmatprep.subr.mxu0 0.0
        %858 = vmatpush1.msra.mxu0 %v622
        %859 = vmatprep.subr.mxu0 0.0
        %860 = vmatpush1.msra.mxu0 %v623
        %861 = vmatprep.subr.mxu0 0.0
        %862 = vmatpush1.msra.mxu0 %v624
        %863 = vmatprep.subr.mxu0 0.0
        %864 = vmatpush1.msra.mxu0 %v625
        %865 = vmatprep.subr.mxu0 0.0
        %866 = vmatpush1.msra.mxu0 %v626
        %867 = vmatprep.subr.mxu0 0.0
        %868 = vmatpush1.msra.mxu0 %v627
        %869 = vmatprep.subr.mxu0 0.0
        %870 = vmatpush1.msra.mxu0 %v628
        %871 = vmatprep.subr.mxu0 0.0
        %872 = vmatpush1.msra.mxu0 %v629
        %873 = vmatprep.subr.mxu0 0.0
        %874 = vmatpush1.msra.mxu0 %v630
        %875 = vmatprep.subr.mxu0 0.0
        %876 = vmatpush1.msra.mxu0 %v631
        %877 = vmatprep.subr.mxu0 0.0
        %878 = vmatpush1.msra.mxu0 %v632
        %879 = vmatprep.subr.mxu0 0.0
        %880 = vmatpush1.msra.mxu0 %v633
        %881 = vmatprep.subr.mxu0 0.0
        %882 = vmatpush1.msra.mxu0 %v634
        %883 = vmatprep.subr.mxu0 0.0
        %884 = vmatpush1.msra.mxu0 %v635
        %885 = vmatprep.subr.mxu0 0.0
        %886 = vmatpush1.msra.mxu0 %v636
        %887 = vmatprep.subr.mxu0 0.0
        %888 = vmatpush1.msra.mxu0 %v637
        %889 = vmatprep.subr.mxu0 0.0
        %890 = vmatpush1.msra.mxu0 %v638
        %891 = vmatprep.subr.mxu0 0.0
        %892 = vmatpush1.msra.mxu0 %v639
        %893 = vmatprep.subr.mxu0 0.0
        %894 = vmatpush1.msra.mxu0 %v640
        %895 = vmatprep.subr.mxu0 0.0
        %896 = vmatpush1.msra.mxu0 %v641
        %897 = vmatprep.subr.mxu0 0.0
        %898 = vmatpush1.msra.mxu0 %v642
        %899 = vmatprep.mubr.f32.mxu0 %v530
        %900 = vmatmul.mubr.f32.gmra.mrb[0].mxu0 %v522
        %v901 = vpop.f32.mrb[0].mxu0
        %v902 = vadd.f32 %v797, %v901
        %v903 = vpop.f32.mrb[0].mxu0
        %904 = vmatprep.mubr.f32.mxu0 %v531
        %905 = vmatmul.mubr.f32.gmra.mrb[0].mxu0 %v523
        %v906 = vpop.f32.mrb[0].mxu0
        %v907 = vadd.f32 %v802, %v906
        %v908 = vpop.f32.mrb[0].mxu0
        %909 = vmatprep.mubr.f32.mxu0 %v532
        %910 = vmatmul.mubr.f32.gmra.mrb[0].mxu0 %v524
        %v911 = vpop.f32.mrb[0].mxu0
        %v912 = vadd.f32 %v807, %v911
        %v913 = vpop.f32.mrb[0].mxu0
        %914 = vmatprep.mubr.f32.mxu0 %v533
        %915 = vmatmul.mubr.f32.gmra.mrb[0].mxu0 %v525
        %v916 = vpop.f32.mrb[0].mxu0
        %v917 = vadd.f32 %v812, %v916
        %v918 = vpop.f32.mrb[0].mxu0
        %919 = vmatprep.mubr.f32.mxu0 %v534
        %920 = vmatmul.mubr.f32.gmra.mrb[0].mxu0 %v526
        %v921 = vpop.f32.mrb[0].mxu0
        %v922 = vadd.f32 %v817, %v921
        %v923 = vpop.f32.mrb[0].mxu0
        %924 = vmatprep.mubr.f32.mxu0 %v535
        %925 = vmatmul.mubr.f32.gmra.mrb[0].mxu0 %v527
        %v926 = vpop.f32.mrb[0].mxu0
        %v927 = vadd.f32 %v822, %v926
        %v928 = vpop.f32.mrb[0].mxu0
        %929 = vmatprep.mubr.f32.mxu0 %v536
        %930 = vmatmul.mubr.f32.gmra.mrb[0].mxu0 %v528
        %v931 = vpop.f32.mrb[0].mxu0
        %v932 = vadd.f32 %v827, %v931
        %v933 = vpop.f32.mrb[0].mxu0
        %934 = vmatprep.mubr.f32.mxu0 %v537
        %935 = vmatmul.mubr.f32.gmra.mrb[0].mxu0 %v529
        %v936 = vpop.f32.mrb[0].mxu0
        %v937 = vadd.f32 %v832, %v936
        %v938 = vpop.f32.mrb[0].mxu0
        %939 = vdwg.mxu0
        %940 = vmatprep.subr.mxu0 0.0
        %941 = vmatpush1.msra.mxu0 %v643
        %942 = vmatprep.subr.mxu0 0.0
        %943 = vmatpush1.msra.mxu0 %v644
        %944 = vmatprep.subr.mxu0 0.0
        %945 = vmatpush1.msra.mxu0 %v645
        %946 = vmatprep.subr.mxu0 0.0
        %947 = vmatpush1.msra.mxu0 %v646
        %948 = vmatprep.subr.mxu0 0.0
        %949 = vmatpush1.msra.mxu0 %v647
        %950 = vmatprep.subr.mxu0 0.0
        %951 = vmatpush1.msra.mxu0 %v648
        %952 = vmatprep.subr.mxu0 0.0
        %953 = vmatpush1.msra.mxu0 %v649
        %954 = vmatprep.subr.mxu0 0.0
        %955 = vmatpush1.msra.mxu0 %v650
        %956 = vmatprep.subr.mxu0 0.0
        %957 = vmatpush1.msra.mxu0 %v651
        %958 = vmatprep.subr.mxu0 0.0
        %959 = vmatpush1.msra.mxu0 %v652
        %960 = vmatprep.subr.mxu0 0.0
        %961 = vmatpush1.msra.mxu0 %v653
        %962 = vmatprep.subr.mxu0 0.0
        %963 = vmatpush1.msra.mxu0 %v654
        %964 = vmatprep.subr.mxu0 0.0
        %965 = vmatpush1.msra.mxu0 %v655
        %966 = vmatprep.subr.mxu0 0.0
        %967 = vmatpush1.msra.mxu0 %v656
        %968 = vmatprep.subr.mxu0 0.0
        %969 = vmatpush1.msra.mxu0 %v657
        %970 = vmatprep.subr.mxu0 0.0
        %971 = vmatpush1.msra.mxu0 %v658
        %972 = vmatprep.subr.mxu0 0.0
        %973 = vmatpush1.msra.mxu0 %v659
        %974 = vmatprep.subr.mxu0 0.0
        %975 = vmatpush1.msra.mxu0 %v660
        %976 = vmatprep.subr.mxu0 0.0
        %977 = vmatpush1.msra.mxu0 %v661
        %978 = vmatprep.subr.mxu0 0.0
        %979 = vmatpush1.msra.mxu0 %v662
        %980 = vmatprep.subr.mxu0 0.0
        %981 = vmatpush1.msra.mxu0 %v663
        %982 = vmatprep.subr.mxu0 0.0
        %983 = vmatpush1.msra.mxu0 %v664
        %984 = vmatprep.subr.mxu0 0.0
        %985 = vmatpush1.msra.mxu0 %v665
        %986 = vmatprep.subr.mxu0 0.0
        %987 = vmatpush1.msra.mxu0 %v666
        %988 = vmatprep.subr.mxu0 0.0
        %989 = vmatpush1.msra.mxu0 %v667
        %990 = vmatprep.subr.mxu0 0.0
        %991 = vmatpush1.msra.mxu0 %v668
        %992 = vmatprep.subr.mxu0 0.0
        %993 = vmatpush1.msra.mxu0 %v669
        %994 = vmatprep.subr.mxu0 0.0
        %995 = vmatpush1.msra.mxu0 %v670
        %996 = vmatprep.subr.mxu0 0.0
        %997 = vmatpush1.msra.mxu0 %v671
        %998 = vmatprep.subr.mxu0 0.0
        %999 = vmatpush1.msra.mxu0 %v672
        %1000 = vmatprep.subr.mxu0 0.0
        %1001 = vmatpush1.msra.mxu0 %v673
        %1002 = vmatprep.subr.mxu0 0.0
        %1003 = vmatpush1.msra.mxu0 %v674
        %1004 = vmatprep.mubr.f32.mxu0 %v546
        %1005 = vmatmul.mubr.f32.gmra.mrb[0].mxu0 %v538
        %v1006 = vpop.f32.mrb[0].mxu0
        %v1007 = vadd.f32 %v902, %v1006
        %v1008 = vpop.f32.mrb[0].mxu0
        %1009 = vmatprep.mubr.f32.mxu0 %v547
        %1010 = vmatmul.mubr.f32.gmra.mrb[0].mxu0 %v539
        %v1011 = vpop.f32.mrb[0].mxu0
        %v1012 = vadd.f32 %v907, %v1011
        %v1013 = vpop.f32.mrb[0].mxu0
        %1014 = vmatprep.mubr.f32.mxu0 %v548
        %1015 = vmatmul.mubr.f32.gmra.mrb[0].mxu0 %v540
        %v1016 = vpop.f32.mrb[0].mxu0
        %v1017 = vadd.f32 %v912, %v1016
        %v1018 = vpop.f32.mrb[0].mxu0
        %1019 = vmatprep.mubr.f32.mxu0 %v549
        %1020 = vmatmul.mubr.f32.gmra.mrb[0].mxu0 %v541
        %v1021 = vpop.f32.mrb[0].mxu0
        %v1022 = vadd.f32 %v917, %v1021
        %v1023 = vpop.f32.mrb[0].mxu0
        %1024 = vmatprep.mubr.f32.mxu0 %v550
        %1025 = vmatmul.mubr.f32.gmra.mrb[0].mxu0 %v542
        %v1026 = vpop.f32.mrb[0].mxu0
        %v1027 = vadd.f32 %v922, %v1026
        %v1028 = vpop.f32.mrb[0].mxu0
        %1029 = vmatprep.mubr.f32.mxu0 %v551
        %1030 = vmatmul.mubr.f32.gmra.mrb[0].mxu0 %v543
        %v1031 = vpop.f32.mrb[0].mxu0
        %v1032 = vadd.f32 %v927, %v1031
        %v1033 = vpop.f32.mrb[0].mxu0
        %1034 = vmatprep.mubr.f32.mxu0 %v552
        %1035 = vmatmul.mubr.f32.gmra.mrb[0].mxu0 %v544
        %v1036 = vpop.f32.mrb[0].mxu0
        %v1037 = vadd.f32 %v932, %v1036
        %v1038 = vpop.f32.mrb[0].mxu0
        %1039 = vmatprep.mubr.f32.mxu0 %v553
        %1040 = vmatmul.mubr.f32.gmra.mrb[0].mxu0 %v545
        %v1041 = vpop.f32.mrb[0].mxu0
        %v1042 = vadd.f32 %v937, %v1041
        %v1043 = vpop.f32.mrb[0].mxu0
        %1044 = vdwg.mxu0
        %1045 = vmatprep.subr.mxu0 0.0
        %1046 = vmatpush1.msra.mxu0 %v675
        %1047 = vmatprep.subr.mxu0 0.0
        %1048 = vmatpush1.msra.mxu0 %v676
        %1049 = vmatprep.subr.mxu0 0.0
        %1050 = vmatpush1.msra.mxu0 %v677
        %1051 = vmatprep.subr.mxu0 0.0
        %1052 = vmatpush1.msra.mxu0 %v678
        %1053 = vmatprep.subr.mxu0 0.0
        %1054 = vmatpush1.msra.mxu0 %v679
        %1055 = vmatprep.subr.mxu0 0.0
        %1056 = vmatpush1.msra.mxu0 %v680
        %1057 = vmatprep.subr.mxu0 0.0
        %1058 = vmatpush1.msra.mxu0 %v681
        %1059 = vmatprep.subr.mxu0 0.0
        %1060 = vmatpush1.msra.mxu0 %v682
        %1061 = vmatprep.subr.mxu0 0.0
        %1062 = vmatpush1.msra.mxu0 %v683
        %1063 = vmatprep.subr.mxu0 0.0
        %1064 = vmatpush1.msra.mxu0 %v684
        %1065 = vmatprep.subr.mxu0 0.0
        %1066 = vmatpush1.msra.mxu0 %v685
        %1067 = vmatprep.subr.mxu0 0.0
        %1068 = vmatpush1.msra.mxu0 %v686
        %1069 = vmatprep.subr.mxu0 0.0
        %1070 = vmatpush1.msra.mxu0 %v687
        %1071 = vmatprep.subr.mxu0 0.0
        %1072 = vmatpush1.msra.mxu0 %v688
        %1073 = vmatprep.subr.mxu0 0.0
        %1074 = vmatpush1.msra.mxu0 %v689
        %1075 = vmatprep.subr.mxu0 0.0
        %1076 = vmatpush1.msra.mxu0 %v690
        %1077 = vmatprep.subr.mxu0 0.0
        %1078 = vmatpush1.msra.mxu0 %v691
        %1079 = vmatprep.subr.mxu0 0.0
        %1080 = vmatpush1.msra.mxu0 %v692
        %1081 = vmatprep.subr.mxu0 0.0
        %1082 = vmatpush1.msra.mxu0 %v693
        %1083 = vmatprep.subr.mxu0 0.0
        %1084 = vmatpush1.msra.mxu0 %v694
        %1085 = vmatprep.subr.mxu0 0.0
        %1086 = vmatpush1.msra.mxu0 %v695
        %1087 = vmatprep.subr.mxu0 0.0
        %1088 = vmatpush1.msra.mxu0 %v696
        %1089 = vmatprep.subr.mxu0 0.0
        %1090 = vmatpush1.msra.mxu0 %v697
        %1091 = vmatprep.subr.mxu0 0.0
        %1092 = vmatpush1.msra.mxu0 %v698
        %1093 = vmatprep.subr.mxu0 0.0
        %1094 = vmatpush1.msra.mxu0 %v699
        %1095 = vmatprep.subr.mxu0 0.0
        %1096 = vmatpush1.msra.mxu0 %v700
        %1097 = vmatprep.subr.mxu0 0.0
        %1098 = vmatpush1.msra.mxu0 %v701
        %1099 = vmatprep.subr.mxu0 0.0
        %1100 = vmatpush1.msra.mxu0 %v702
        %1101 = vmatprep.subr.mxu0 0.0
        %1102 = vmatpush1.msra.mxu0 %v703
        %1103 = vmatprep.subr.mxu0 0.0
        %1104 = vmatpush1.msra.mxu0 %v704
        %1105 = vmatprep.subr.mxu0 0.0
        %1106 = vmatpush1.msra.mxu0 %v705
        %1107 = vmatprep.subr.mxu0 0.0
        %1108 = vmatpush1.msra.mxu0 %v706
        %1109 = vmatprep.mubr.f32.mxu0 %v563
        %1110 = vmatmul.mubr.f32.gmra.mrb[0].mxu0 %v555
        %v1111 = vpop.f32.mrb[0].mxu0
        %v1112 = vadd.f32 %v1007, %v1111
        %v1113 = vpop.f32.mrb[0].mxu0
        %1114 = vmatprep.mubr.f32.mxu0 %v564
        %1115 = vmatmul.mubr.f32.gmra.mrb[0].mxu0 %v556
        %v1116 = vpop.f32.mrb[0].mxu0
        %v1117 = vadd.f32 %v1012, %v1116
        %v1118 = vpop.f32.mrb[0].mxu0
        %1119 = vmatprep.mubr.f32.mxu0 %v565
        %1120 = vmatmul.mubr.f32.gmra.mrb[0].mxu0 %v557
        %v1121 = vpop.f32.mrb[0].mxu0
        %v1122 = vadd.f32 %v1017, %v1121
        %v1123 = vpop.f32.mrb[0].mxu0
        %1124 = vmatprep.mubr.f32.mxu0 %v566
        %1125 = vmatmul.mubr.f32.gmra.mrb[0].mxu0 %v558
        %v1126 = vpop.f32.mrb[0].mxu0
        %v1127 = vadd.f32 %v1022, %v1126
        %v1128 = vpop.f32.mrb[0].mxu0
        %1129 = vmatprep.mubr.f32.mxu0 %v567
        %1130 = vmatmul.mubr.f32.gmra.mrb[0].mxu0 %v559
        %v1131 = vpop.f32.mrb[0].mxu0
        %v1132 = vadd.f32 %v1027, %v1131
        %v1133 = vpop.f32.mrb[0].mxu0
        %1134 = vmatprep.mubr.f32.mxu0 %v568
        %1135 = vmatmul.mubr.f32.gmra.mrb[0].mxu0 %v560
        %v1136 = vpop.f32.mrb[0].mxu0
        %v1137 = vadd.f32 %v1032, %v1136
        %v1138 = vpop.f32.mrb[0].mxu0
        %1139 = vmatprep.mubr.f32.mxu0 %v569
        %1140 = vmatmul.mubr.f32.gmra.mrb[0].mxu0 %v561
        %v1141 = vpop.f32.mrb[0].mxu0
        %v1142 = vadd.f32 %v1037, %v1141
        %v1143 = vpop.f32.mrb[0].mxu0
        %1144 = vmatprep.mubr.f32.mxu0 %v570
        %1145 = vmatmul.mubr.f32.gmra.mrb[0].mxu0 %v562
        %v1146 = vpop.f32.mrb[0].mxu0
        %v1147 = vadd.f32 %v1042, %v1146
        %v1148 = vpop.f32.mrb[0].mxu0
        %1149 = vdwg.mxu0
        %1150 = vmatprep.subr.mxu0 0.0
        %1151 = vmatpush1.msra.mxu0 %v707
        %1152 = vmatprep.subr.mxu0 0.0
        %1153 = vmatpush1.msra.mxu0 %v708
        %1154 = vmatprep.subr.mxu0 0.0
        %1155 = vmatpush1.msra.mxu0 %v709
        %1156 = vmatprep.subr.mxu0 0.0
        %1157 = vmatpush1.msra.mxu0 %v710
        %1158 = vmatprep.subr.mxu0 0.0
        %1159 = vmatpush1.msra.mxu0 %v711
        %1160 = vmatprep.subr.mxu0 0.0
        %1161 = vmatpush1.msra.mxu0 %v712
        %1162 = vmatprep.subr.mxu0 0.0
        %1163 = vmatpush1.msra.mxu0 %v713
        %1164 = vmatprep.subr.mxu0 0.0
        %1165 = vmatpush1.msra.mxu0 %v714
        %1166 = vmatprep.subr.mxu0 0.0
        %1167 = vmatpush1.msra.mxu0 %v715
        %1168 = vmatprep.subr.mxu0 0.0
        %1169 = vmatpush1.msra.mxu0 %v716
        %1170 = vmatprep.subr.mxu0 0.0
        %1171 = vmatpush1.msra.mxu0 %v717
        %1172 = vmatprep.subr.mxu0 0.0
        %1173 = vmatpush1.msra.mxu0 %v718
        %1174 = vmatprep.subr.mxu0 0.0
        %1175 = vmatpush1.msra.mxu0 %v719
        %1176 = vmatprep.subr.mxu0 0.0
        %1177 = vmatpush1.msra.mxu0 %v720
        %1178 = vmatprep.subr.mxu0 0.0
        %1179 = vmatpush1.msra.mxu0 %v721
        %1180 = vmatprep.subr.mxu0 0.0
        %1181 = vmatpush1.msra.mxu0 %v722
        %1182 = vmatprep.subr.mxu0 0.0
        %1183 = vmatpush1.msra.mxu0 0.0
        %1184 = vmatprep.subr.mxu0 0.0
        %1185 = vmatpush1.msra.mxu0 0.0
        %1186 = vmatprep.subr.mxu0 0.0
        %1187 = vmatpush1.msra.mxu0 0.0
        %1188 = vmatprep.subr.mxu0 0.0
        %1189 = vmatpush1.msra.mxu0 0.0
        %1190 = vmatprep.subr.mxu0 0.0
        %1191 = vmatpush1.msra.mxu0 0.0
        %1192 = vmatprep.subr.mxu0 0.0
        %1193 = vmatpush1.msra.mxu0 0.0
        %1194 = vmatprep.subr.mxu0 0.0
        %1195 = vmatpush1.msra.mxu0 0.0
        %1196 = vmatprep.subr.mxu0 0.0
        %1197 = vmatpush1.msra.mxu0 0.0
        %1198 = vmatprep.subr.mxu0 0.0
        %1199 = vmatpush1.msra.mxu0 0.0
        %1200 = vmatprep.subr.mxu0 0.0
        %1201 = vmatpush1.msra.mxu0 0.0
        %1202 = vmatprep.subr.mxu0 0.0
        %1203 = vmatpush1.msra.mxu0 0.0
        %1204 = vmatprep.subr.mxu0 0.0
        %1205 = vmatpush1.msra.mxu0 0.0
        %1206 = vmatprep.subr.mxu0 0.0
        %1207 = vmatpush1.msra.mxu0 0.0
        %1208 = vmatprep.subr.mxu0 0.0
        %1209 = vmatpush1.msra.mxu0 0.0
        %1210 = vmatprep.subr.mxu0 0.0
        %1211 = vmatpush1.msra.mxu0 0.0
        %1212 = vmatprep.subr.mxu0 0.0
        %1213 = vmatpush1.msra.mxu0 0.0
        %1214 = vmatprep.mubr.f32.mxu0 0.0
        %1215 = vmatmul.mubr.f32.gmra.mrb[0].mxu0 %v571
        %v1216 = vpop.f32.mrb[0].mxu0
        %v1217 = vadd.f32 %v1112, %v1216
        %v1218 = vpop.f32.mrb[0].mxu0
        %1219 = vmatprep.mubr.f32.mxu0 0.0
        %1220 = vmatmul.mubr.f32.gmra.mrb[0].mxu0 %v572
        %v1221 = vpop.f32.mrb[0].mxu0
        %v1222 = vadd.f32 %v1117, %v1221
        %v1223 = vpop.f32.mrb[0].mxu0
        %1224 = vmatprep.mubr.f32.mxu0 0.0
        %1225 = vmatmul.mubr.f32.gmra.mrb[0].mxu0 %v573
        %v1226 = vpop.f32.mrb[0].mxu0
        %v1227 = vadd.f32 %v1122, %v1226
        %v1228 = vpop.f32.mrb[0].mxu0
        %1229 = vmatprep.mubr.f32.mxu0 0.0
        %1230 = vmatmul.mubr.f32.gmra.mrb[0].mxu0 %v574
        %v1231 = vpop.f32.mrb[0].mxu0
        %v1232 = vadd.f32 %v1127, %v1231
        %v1233 = vpop.f32.mrb[0].mxu0
        %1234 = vmatprep.mubr.f32.mxu0 0.0
        %1235 = vmatmul.mubr.f32.gmra.mrb[0].mxu0 %v575
        %v1236 = vpop.f32.mrb[0].mxu0
        %v1237 = vadd.f32 %v1132, %v1236
        %v1238 = vpop.f32.mrb[0].mxu0
        %1239 = vmatprep.mubr.f32.mxu0 0.0
        %1240 = vmatmul.mubr.f32.gmra.mrb[0].mxu0 %v576
        %v1241 = vpop.f32.mrb[0].mxu0
        %v1242 = vadd.f32 %v1137, %v1241
        %v1243 = vpop.f32.mrb[0].mxu0
        %1244 = vmatprep.mubr.f32.mxu0 0.0
        %1245 = vmatmul.mubr.f32.gmra.mrb[0].mxu0 %v577
        %v1246 = vpop.f32.mrb[0].mxu0
        %v1247 = vadd.f32 %v1142, %v1246
        %v1248 = vpop.f32.mrb[0].mxu0
        %1249 = vmatprep.mubr.f32.mxu0 0.0
        %1250 = vmatmul.mubr.f32.gmra.mrb[0].mxu0 %v578
        %v1251 = vpop.f32.mrb[0].mxu0
        %v1252 = vadd.f32 %v1147, %v1251
        %v1253 = vpop.f32.mrb[0].mxu0
        %1254 = vdwg.mxu0
        %v1255 = vadd.f32 %v1217, %v1222
        %v1256 = vadd.f32 %v1255, %v1227
        %v1257 = vadd.f32 %v1256, %v1232
        %v1258 = vadd.f32 %v1257, %v1237
        %v1259 = vadd.f32 %v1258, %v1242
        %v1260 = vadd.f32 %v1259, %v1247
        %v1261 = vadd.f32 %v1260, %v1252
        %v1262 = vrot.slane %v1261, 4
        %v1263 = vadd.f32 %v1261, %v1262
        %v1264 = vrot.slane %v1263, 2
        %v1265 = vadd.f32 %v1263, %v1264
        %v1266 = vrot.slane %v1265, 1
        %v1267 = vadd.f32 %v1265, %v1266
        %v1268 = vmul.f32 %v1217, %v1217
        %v1269 = vmul.f32 %v1222, %v1222
        %v1270 = vmul.f32 %v1227, %v1227
        %v1271 = vmul.f32 %v1232, %v1232
        %v1272 = vmul.f32 %v1237, %v1237
        %v1273 = vmul.f32 %v1242, %v1242
        %v1274 = vmul.f32 %v1247, %v1247
        %v1275 = vmul.f32 %v1252, %v1252
        %v1276 = vadd.f32 %v1268, %v1269
        %v1277 = vadd.f32 %v1276, %v1270
        %v1278 = vadd.f32 %v1277, %v1271
        %v1279 = vadd.f32 %v1278, %v1272
        %v1280 = vadd.f32 %v1279, %v1273
        %v1281 = vadd.f32 %v1280, %v1274
        %v1282 = vadd.f32 %v1281, %v1275
        %v1283 = vrot.slane %v1282, 4
        %v1284 = vadd.f32 %v1282, %v1283
        %v1285 = vrot.slane %v1284, 2
        %v1286 = vadd.f32 %v1284, %v1285
        %v1287 = vrot.slane %v1286, 1
        %v1288 = vadd.f32 %v1286, %v1287
        %1289 = vmatprep.subr.mxu0 0.0
        %1290 = vmatpush1.msra.mxu0 %v461
        %1291 = vmatprep.subr.mxu0 0.0
        %1292 = vmatpush1.msra.mxu0 %v462
        %1293 = vmatprep.subr.mxu0 0.0
        %1294 = vmatpush1.msra.mxu0 %v463
        %1295 = vmatprep.subr.mxu0 0.0
        %1296 = vmatpush1.msra.mxu0 %v464
        %1297 = vmatprep.subr.mxu0 0.0
        %1298 = vmatpush1.msra.mxu0 %v465
        %1299 = vmatprep.subr.mxu0 0.0
        %1300 = vmatpush1.msra.mxu0 %v466
        %1301 = vmatprep.subr.mxu0 0.0
        %1302 = vmatpush1.msra.mxu0 %v467
        %1303 = vmatprep.subr.mxu0 0.0
        %1304 = vmatpush1.msra.mxu0 %v468
        %1305 = vmatprep.subr.mxu0 0.0
        %1306 = vmatpush1.msra.mxu0 %v469
        %1307 = vmatprep.subr.mxu0 0.0
        %1308 = vmatpush1.msra.mxu0 %v470
        %1309 = vmatprep.subr.mxu0 0.0
        %1310 = vmatpush1.msra.mxu0 %v471
        %1311 = vmatprep.subr.mxu0 0.0
        %1312 = vmatpush1.msra.mxu0 %v472
        %1313 = vmatprep.subr.mxu0 0.0
        %1314 = vmatpush1.msra.mxu0 %v473
        %1315 = vmatprep.subr.mxu0 0.0
        %1316 = vmatpush1.msra.mxu0 %v474
        %1317 = vmatprep.subr.mxu0 0.0
        %1318 = vmatpush1.msra.mxu0 %v475
        %1319 = vmatprep.subr.mxu0 0.0
        %1320 = vmatpush1.msra.mxu0 %v476
        %1321 = vmatprep.subr.mxu0 0.0
        %1322 = vmatpush1.msra.mxu0 0.0
        %1323 = vmatprep.subr.mxu0 0.0
        %1324 = vmatpush1.msra.mxu0 0.0
        %1325 = vmatprep.subr.mxu0 0.0
        %1326 = vmatpush1.msra.mxu0 0.0
        %1327 = vmatprep.subr.mxu0 0.0
        %1328 = vmatpush1.msra.mxu0 0.0
        %1329 = vmatprep.subr.mxu0 0.0
        %1330 = vmatpush1.msra.mxu0 0.0
        %1331 = vmatprep.subr.mxu0 0.0
        %1332 = vmatpush1.msra.mxu0 0.0
        %1333 = vmatprep.subr.mxu0 0.0
        %1334 = vmatpush1.msra.mxu0 0.0
        %1335 = vmatprep.subr.mxu0 0.0
        %1336 = vmatpush1.msra.mxu0 0.0
        %1337 = vmatprep.subr.mxu0 0.0
        %1338 = vmatpush1.msra.mxu0 0.0
        %1339 = vmatprep.subr.mxu0 0.0
        %1340 = vmatpush1.msra.mxu0 0.0
        %1341 = vmatprep.subr.mxu0 0.0
        %1342 = vmatpush1.msra.mxu0 0.0
        %1343 = vmatprep.subr.mxu0 0.0
        %1344 = vmatpush1.msra.mxu0 0.0
        %1345 = vmatprep.subr.mxu0 0.0
        %1346 = vmatpush1.msra.mxu0 0.0
        %1347 = vmatprep.subr.mxu0 0.0
        %1348 = vmatpush1.msra.mxu0 0.0
        %1349 = vmatprep.subr.mxu0 0.0
        %1350 = vmatpush1.msra.mxu0 0.0
        %1351 = vmatprep.subr.mxu0 0.0
        %1352 = vmatpush1.msra.mxu0 0.0
        %1353 = vmatprep.mubr.f32.mxu0 0.0
        %1354 = vmatmul.mubr.f32.gmra.mrb[0].mxu0 %v1267
        %v1355 = vpop.f32.mrb[0].mxu0
        %v1356 = vadd.f32 0.0, %v1355
        %v1357 = vpop.f32.mrb[0].mxu0
        %1358 = vdwg.mxu0
        %v1359 = vmul.f32 %v1356, 0.00048828125
        %1360 = vmatprep.subr.mxu0 0.0
        %1361 = vmatpush1.msra.mxu0 %v461
        %1362 = vmatprep.subr.mxu0 0.0
        %1363 = vmatpush1.msra.mxu0 %v462
        %1364 = vmatprep.subr.mxu0 0.0
        %1365 = vmatpush1.msra.mxu0 %v463
        %1366 = vmatprep.subr.mxu0 0.0
        %1367 = vmatpush1.msra.mxu0 %v464
        %1368 = vmatprep.subr.mxu0 0.0
        %1369 = vmatpush1.msra.mxu0 %v465
        %1370 = vmatprep.subr.mxu0 0.0
        %1371 = vmatpush1.msra.mxu0 %v466
        %1372 = vmatprep.subr.mxu0 0.0
        %1373 = vmatpush1.msra.mxu0 %v467
        %1374 = vmatprep.subr.mxu0 0.0
        %1375 = vmatpush1.msra.mxu0 %v468
        %1376 = vmatprep.subr.mxu0 0.0
        %1377 = vmatpush1.msra.mxu0 %v469
        %1378 = vmatprep.subr.mxu0 0.0
        %1379 = vmatpush1.msra.mxu0 %v470
        %1380 = vmatprep.subr.mxu0 0.0
        %1381 = vmatpush1.msra.mxu0 %v471
        %1382 = vmatprep.subr.mxu0 0.0
        %1383 = vmatpush1.msra.mxu0 %v472
        %1384 = vmatprep.subr.mxu0 0.0
        %1385 = vmatpush1.msra.mxu0 %v473
        %1386 = vmatprep.subr.mxu0 0.0
        %1387 = vmatpush1.msra.mxu0 %v474
        %1388 = vmatprep.subr.mxu0 0.0
        %1389 = vmatpush1.msra.mxu0 %v475
        %1390 = vmatprep.subr.mxu0 0.0
        %1391 = vmatpush1.msra.mxu0 %v476
        %1392 = vmatprep.subr.mxu0 0.0
        %1393 = vmatpush1.msra.mxu0 0.0
        %1394 = vmatprep.subr.mxu0 0.0
        %1395 = vmatpush1.msra.mxu0 0.0
        %1396 = vmatprep.subr.mxu0 0.0
        %1397 = vmatpush1.msra.mxu0 0.0
        %1398 = vmatprep.subr.mxu0 0.0
        %1399 = vmatpush1.msra.mxu0 0.0
        %1400 = vmatprep.subr.mxu0 0.0
        %1401 = vmatpush1.msra.mxu0 0.0
        %1402 = vmatprep.subr.mxu0 0.0
        %1403 = vmatpush1.msra.mxu0 0.0
        %1404 = vmatprep.subr.mxu0 0.0
        %1405 = vmatpush1.msra.mxu0 0.0
        %1406 = vmatprep.subr.mxu0 0.0
        %1407 = vmatpush1.msra.mxu0 0.0
        %1408 = vmatprep.subr.mxu0 0.0
        %1409 = vmatpush1.msra.mxu0 0.0
        %1410 = vmatprep.subr.mxu0 0.0
        %1411 = vmatpush1.msra.mxu0 0.0
        %1412 = vmatprep.subr.mxu0 0.0
        %1413 = vmatpush1.msra.mxu0 0.0
        %1414 = vmatprep.subr.mxu0 0.0
        %1415 = vmatpush1.msra.mxu0 0.0
        %1416 = vmatprep.subr.mxu0 0.0
        %1417 = vmatpush1.msra.mxu0 0.0
        %1418 = vmatprep.subr.mxu0 0.0
        %1419 = vmatpush1.msra.mxu0 0.0
        %1420 = vmatprep.subr.mxu0 0.0
        %1421 = vmatpush1.msra.mxu0 0.0
        %1422 = vmatprep.subr.mxu0 0.0
        %1423 = vmatpush1.msra.mxu0 0.0
        %1424 = vmatprep.mubr.f32.mxu0 0.0
        %1425 = vmatmul.mubr.f32.gmra.mrb[0].mxu0 %v1288
        %v1426 = vpop.f32.mrb[0].mxu0
        %v1427 = vadd.f32 0.0, %v1426
        %v1428 = vpop.f32.mrb[0].mxu0
        %1429 = vdwg.mxu0
        %v1430 = vmul.f32 %v1427, 0.00048828125
        %v1431 = vmul.f32 %v1359, %v1359
        %v1432 = vsub.f32 %v1430, %v1431
        %v1433 = vlaneseq
        %v1434 = vshrl.u32 %v1433, 7
        %v1435 = vsub.s32 0, %v1434
        %v1436 = vrot.slane %v1359, %v1435
        %v1437 = vsub.f32 %v1217, %v1436
        %v1438 = vsub.f32 %v1222, %v1436
        %v1439 = vsub.f32 %v1227, %v1436
        %v1440 = vsub.f32 %v1232, %v1436
        %v1441 = vsub.f32 %v1237, %v1436
        %v1442 = vsub.f32 %v1242, %v1436
        %v1443 = vsub.f32 %v1247, %v1436
        %v1444 = vsub.f32 %v1252, %v1436
        %v1445 = vadd.f32 %v1432, 1e-05
        %v1446 = vrsqrt.pop %v1445
        %v1447 = vlaneseq
        %v1448 = vshrl.u32 %v1447, 7
        %v1449 = vsub.s32 0, %v1448
        %v1450 = vrot.slane %v1446, %v1449
        %v1451 = vmul.f32 %v1437, %v1450
        %v1452 = vmul.f32 %v1438, %v1450
        %v1453 = vmul.f32 %v1439, %v1450
        %v1454 = vmul.f32 %v1440, %v1450
        %v1455 = vmul.f32 %v1441, %v1450
        %v1456 = vmul.f32 %v1442, %v1450
        %v1457 = vmul.f32 %v1443, %v1450
        %v1458 = vmul.f32 %v1444, %v1450
        %v1459 = vld [vmem:[%s4] sm:$0x1]
        %v1461 = vlaneseq
        %v1462 = vshrl.u32 %v1461, 7
        %v1463 = vsub.s32 0, %v1462
        %v1464 = vrot.slane %v1459, %v1463
        %v1466 = vmul.f32 %v1451, %v1464
        %v1467 = vmul.f32 %v1452, %v1464
        %v1468 = vmul.f32 %v1453, %v1464
        %v1469 = vmul.f32 %v1454, %v1464
        %v1470 = vmul.f32 %v1455, %v1464
        %v1471 = vmul.f32 %v1456, %v1464
        %v1472 = vmul.f32 %v1457, %v1464
        %v1473 = vmul.f32 %v1458, %v1464
        %v1474 = vld [vmem:[%s5] sm:$0x1]
        %v1476 = vlaneseq
        %v1477 = vshrl.u32 %v1476, 7
        %v1478 = vsub.s32 0, %v1477
        %v1479 = vrot.slane %v1474, %v1478
        %v1481 = vadd.f32 %v1466, %v1479
        %v1482 = vadd.f32 %v1467, %v1479
        %v1483 = vadd.f32 %v1468, %v1479
        %v1484 = vadd.f32 %v1469, %v1479
        %v1485 = vadd.f32 %v1470, %v1479
        %v1486 = vadd.f32 %v1471, %v1479
        %v1487 = vadd.f32 %v1472, %v1479
        %v1488 = vadd.f32 %v1473, %v1479
        %v1489 = vxor.u32 %v1481, 2147483648
        %v1490 = vxor.u32 %v1482, 2147483648
        %v1491 = vxor.u32 %v1483, 2147483648
        %v1492 = vxor.u32 %v1484, 2147483648
        %v1493 = vxor.u32 %v1485, 2147483648
        %v1494 = vxor.u32 %v1486, 2147483648
        %v1495 = vxor.u32 %v1487, 2147483648
        %v1496 = vxor.u32 %v1488, 2147483648
        %v1497 = vmul.f32 %v1489, 1.442695
        %v1498 = vpow.pop %v1497
        %v1499 = vmul.f32 %v1490, 1.442695
        %v1500 = vpow.pop %v1499
        %v1501 = vmul.f32 %v1491, 1.442695
        %v1502 = vpow.pop %v1501
        %v1503 = vmul.f32 %v1492, 1.442695
        %v1504 = vpow.pop %v1503
        %v1505 = vmul.f32 %v1493, 1.442695
        %v1506 = vpow.pop %v1505
        %v1507 = vmul.f32 %v1494, 1.442695
        %v1508 = vpow.pop %v1507
        %v1509 = vmul.f32 %v1495, 1.442695
        %v1510 = vpow.pop %v1509
        %v1511 = vmul.f32 %v1496, 1.442695
        %v1512 = vpow.pop %v1511
        %v1513 = vadd.f32 %v1498, 1.0
        %v1514 = vadd.f32 %v1500, 1.0
        %v1515 = vadd.f32 %v1502, 1.0
        %v1516 = vadd.f32 %v1504, 1.0
        %v1517 = vadd.f32 %v1506, 1.0
        %v1518 = vadd.f32 %v1508, 1.0
        %v1519 = vadd.f32 %v1510, 1.0
        %v1520 = vadd.f32 %v1512, 1.0
        %v1521 = vrcp.pop %v1513
        %v1522 = vmul.f32 1.0, %v1521
        %v1523 = vrcp.pop %v1514
        %v1524 = vmul.f32 1.0, %v1523
        %v1525 = vrcp.pop %v1515
        %v1526 = vmul.f32 1.0, %v1525
        %v1527 = vrcp.pop %v1516
        %v1528 = vmul.f32 1.0, %v1527
        %v1529 = vrcp.pop %v1517
        %v1530 = vmul.f32 1.0, %v1529
        %v1531 = vrcp.pop %v1518
        %v1532 = vmul.f32 1.0, %v1531
        %v1533 = vrcp.pop %v1519
        %v1534 = vmul.f32 1.0, %v1533
        %v1535 = vrcp.pop %v1520
        %v1536 = vmul.f32 1.0, %v1535
        %v1537 = vmul.f32 %v1481, %v1522
        %v1538 = vmul.f32 %v1482, %v1524
        %v1539 = vmul.f32 %v1483, %v1526
        %v1540 = vmul.f32 %v1484, %v1528
        %v1541 = vmul.f32 %v1485, %v1530
        %v1542 = vmul.f32 %v1486, %v1532
        %v1543 = vmul.f32 %v1487, %v1534
        %v1544 = vmul.f32 %v1488, %v1536
        %v1545 = vld [vmem:[%s452] sm:$0x1]
        %v1546 = vxor.u32 %v1545, 2147483648
        %v1547 = vmul.f32 %v1546, 1.442695
        %v1548 = vpow.pop %v1547
        %v1549 = vadd.f32 %v1548, 1.0
        %v1550 = vrcp.pop %v1549
        %v1551 = vmul.f32 1.0, %v1550
        %v1552 = vmul.f32 %v1545, %v1551
        %v1553 = vld [vmem:[%s6] sm:$0xff]
        %v1554 = vld [vmem:[%s6 + $0x8] sm:$0xff]
        %v1555 = vld [vmem:[%s6 + $0x10] sm:$0xff]
        %v1556 = vld [vmem:[%s6 + $0x18] sm:$0xff]
        %v1557 = vld [vmem:[%s7] sm:$0x1]
        %vm1558 = vcmask 261120
        %v1560 = vsel %vm1558, %v1552, 0
        %1562 = vmatprep.subr.mxu0 0.0
        %1563 = vmatpush1.msra.mxu0 %v1553
        %1564 = vmatprep.subr.mxu0 0.0
        %1565 = vmatpush1.msra.mxu0 %v1554
        %1566 = vmatprep.subr.mxu0 0.0
        %1567 = vmatpush1.msra.mxu0 %v1555
        %1568 = vmatprep.subr.mxu0 0.0
        %1569 = vmatpush1.msra.mxu0 %v1556
        %1570 = vmatprep.subr.mxu0 0.0
        %1571 = vmatpush1.msra.mxu0 0.0
        %1572 = vmatprep.subr.mxu0 0.0
        %1573 = vmatpush1.msra.mxu0 0.0
        %1574 = vmatprep.subr.mxu0 0.0
        %1575 = vmatpush1.msra.mxu0 0.0
        %1576 = vmatprep.subr.mxu0 0.0
        %1577 = vmatpush1.msra.mxu0 0.0
        %1578 = vmatprep.subr.mxu0 0.0
        %1579 = vmatpush1.msra.mxu0 0.0
        %1580 = vmatprep.subr.mxu0 0.0
        %1581 = vmatpush1.msra.mxu0 0.0
        %1582 = vmatprep.subr.mxu0 0.0
        %1583 = vmatpush1.msra.mxu0 0.0
        %1584 = vmatprep.subr.mxu0 0.0
        %1585 = vmatpush1.msra.mxu0 0.0
        %1586 = vmatprep.subr.mxu0 0.0
        %1587 = vmatpush1.msra.mxu0 0.0
        %1588 = vmatprep.subr.mxu0 0.0
        %1589 = vmatpush1.msra.mxu0 0.0
        %1590 = vmatprep.subr.mxu0 0.0
        %1591 = vmatpush1.msra.mxu0 0.0
        %1592 = vmatprep.subr.mxu0 0.0
        %1593 = vmatpush1.msra.mxu0 0.0
        %1594 = vmatprep.subr.mxu0 0.0
        %1595 = vmatpush1.msra.mxu0 0.0
        %1596 = vmatprep.subr.mxu0 0.0
        %1597 = vmatpush1.msra.mxu0 0.0
        %1598 = vmatprep.subr.mxu0 0.0
        %1599 = vmatpush1.msra.mxu0 0.0
        %1600 = vmatprep.subr.mxu0 0.0
        %1601 = vmatpush1.msra.mxu0 0.0
        %1602 = vmatprep.subr.mxu0 0.0
        %1603 = vmatpush1.msra.mxu0 0.0
        %1604 = vmatprep.subr.mxu0 0.0
        %1605 = vmatpush1.msra.mxu0 0.0
        %1606 = vmatprep.subr.mxu0 0.0
        %1607 = vmatpush1.msra.mxu0 0.0
        %1608 = vmatprep.subr.mxu0 0.0
        %1609 = vmatpush1.msra.mxu0 0.0
        %1610 = vmatprep.subr.mxu0 0.0
        %1611 = vmatpush1.msra.mxu0 0.0
        %1612 = vmatprep.subr.mxu0 0.0
        %1613 = vmatpush1.msra.mxu0 0.0
        %1614 = vmatprep.subr.mxu0 0.0
        %1615 = vmatpush1.msra.mxu0 0.0
        %1616 = vmatprep.subr.mxu0 0.0
        %1617 = vmatpush1.msra.mxu0 0.0
        %1618 = vmatprep.subr.mxu0 0.0
        %1619 = vmatpush1.msra.mxu0 0.0
        %1620 = vmatprep.subr.mxu0 0.0
        %1621 = vmatpush1.msra.mxu0 0.0
        %1622 = vmatprep.subr.mxu0 0.0
        %1623 = vmatpush1.msra.mxu0 0.0
        %1624 = vmatprep.subr.mxu0 0.0
        %1625 = vmatpush1.msra.mxu0 0.0
        %1626 = vmatprep.mubr.f32.mxu0 0.0
        %1627 = vmatmul.mubr.f32.gmra.mrb[0].mxu0 %v1560
        %v1628 = vpop.f32.mrb[0].mxu0
        %v1629 = vadd.f32 %v1557, %v1628
        %v1630 = vpop.f32.mrb[0].mxu0
        %1631 = vdwg.mxu0
        %v1632 = vlaneseq
        %v1633 = vshrl.u32 %v1632, 7
        %v1634 = vsub.s32 0, %v1633
        %v1635 = vrot.slane %v1629, %v1634
        %v1636 = vadd.f32 %v1537, %v1635
        %v1637 = vadd.f32 %v1538, %v1635
        %v1638 = vadd.f32 %v1539, %v1635
        %v1639 = vadd.f32 %v1540, %v1635
        %v1640 = vadd.f32 %v1541, %v1635
        %v1641 = vadd.f32 %v1542, %v1635
        %v1642 = vadd.f32 %v1543, %v1635
        %v1643 = vadd.f32 %v1544, %v1635
        %1644 = vst [vmem:[%s497 + $0x1] sm:$0xff] %v1636
        %1645 = vst [vmem:[%s497 + $0x11] sm:$0xff] %v1637
        %1646 = vst [vmem:[%s497 + $0x21] sm:$0xff] %v1638
        %1647 = vst [vmem:[%s497 + $0x31] sm:$0xff] %v1639
        %1648 = vst [vmem:[%s497 + $0x41] sm:$0xff] %v1640
        %1649 = vst [vmem:[%s497 + $0x51] sm:$0xff] %v1641
        %1650 = vst [vmem:[%s497 + $0x61] sm:$0xff] %v1642
        %1651 = vst [vmem:[%s497 + $0x71] sm:$0xff] %v1643
        %v1652 = vld [vmem:[#allocation2] sm:$0xff]
        %v1653 = vld [vmem:[#allocation2 + $0x10] sm:$0xff]
        %v1654 = vld [vmem:[#allocation2 + $0x20] sm:$0xff]
        %v1655 = vld [vmem:[#allocation2 + $0x30] sm:$0xff]
        %v1656 = vld [vmem:[#allocation2 + $0x40] sm:$0xff]
        %v1657 = vld [vmem:[#allocation2 + $0x50] sm:$0xff]
        %v1658 = vld [vmem:[#allocation2 + $0x60] sm:$0xff]
        %v1659 = vld [vmem:[#allocation2 + $0x70] sm:$0xff]
        %v1660 = vld [vmem:[#allocation2 + $0x1] sm:$0xff]
        %v1661 = vld [vmem:[#allocation2 + $0x11] sm:$0xff]
        %v1662 = vld [vmem:[#allocation2 + $0x21] sm:$0xff]
        %v1663 = vld [vmem:[#allocation2 + $0x31] sm:$0xff]
        %v1664 = vld [vmem:[#allocation2 + $0x41] sm:$0xff]
        %v1665 = vld [vmem:[#allocation2 + $0x51] sm:$0xff]
        %v1666 = vld [vmem:[#allocation2 + $0x61] sm:$0xff]
        %v1667 = vld [vmem:[#allocation2 + $0x71] sm:$0xff]
        %v1668 = vld [vmem:[#allocation2 + $0x2] sm:$0xff]
        %v1669 = vld [vmem:[#allocation2 + $0x12] sm:$0xff]
        %v1670 = vld [vmem:[#allocation2 + $0x22] sm:$0xff]
        %v1671 = vld [vmem:[#allocation2 + $0x32] sm:$0xff]
        %v1672 = vld [vmem:[#allocation2 + $0x42] sm:$0xff]
        %v1673 = vld [vmem:[#allocation2 + $0x52] sm:$0xff]
        %v1674 = vld [vmem:[#allocation2 + $0x62] sm:$0xff]
        %v1675 = vld [vmem:[#allocation2 + $0x72] sm:$0xff]
        %v1676 = vld [vmem:[%s497] sm:$0xff]
        %v1677 = vld [vmem:[%s497 + $0x10] sm:$0xff]
        %v1678 = vld [vmem:[%s497 + $0x20] sm:$0xff]
        %v1679 = vld [vmem:[%s497 + $0x30] sm:$0xff]
        %v1680 = vld [vmem:[%s497 + $0x40] sm:$0xff]
        %v1681 = vld [vmem:[%s497 + $0x50] sm:$0xff]
        %v1682 = vld [vmem:[%s497 + $0x60] sm:$0xff]
        %v1683 = vld [vmem:[%s497 + $0x70] sm:$0xff]
        %v1684 = vld [vmem:[%s497 + $0x1] sm:$0xff]
        %v1685 = vld [vmem:[%s497 + $0x11] sm:$0xff]
        %v1686 = vld [vmem:[%s497 + $0x21] sm:$0xff]
        %v1687 = vld [vmem:[%s497 + $0x31] sm:$0xff]
        %v1688 = vld [vmem:[%s497 + $0x41] sm:$0xff]
        %v1689 = vld [vmem:[%s497 + $0x51] sm:$0xff]
        %v1690 = vld [vmem:[%s497 + $0x61] sm:$0xff]
        %v1691 = vld [vmem:[%s497 + $0x71] sm:$0xff]
        %v1692 = vld [vmem:[%s497 + $0x2] sm:$0xff]
        %v1693 = vld [vmem:[%s497 + $0x12] sm:$0xff]
        %v1694 = vld [vmem:[%s497 + $0x22] sm:$0xff]
        %v1695 = vld [vmem:[%s497 + $0x32] sm:$0xff]
        %v1696 = vld [vmem:[%s497 + $0x42] sm:$0xff]
        %v1697 = vld [vmem:[%s497 + $0x52] sm:$0xff]
        %v1698 = vld [vmem:[%s497 + $0x62] sm:$0xff]
        %v1699 = vld [vmem:[%s497 + $0x72] sm:$0xff]
        %v1700 = vld [vmem:[%s554] sm:$0xff]
        %v1701 = vld [vmem:[%s554 + $0x10] sm:$0xff]
        %v1702 = vld [vmem:[%s554 + $0x20] sm:$0xff]
        %v1703 = vld [vmem:[%s554 + $0x30] sm:$0xff]
        %v1704 = vld [vmem:[%s554 + $0x40] sm:$0xff]
        %v1705 = vld [vmem:[%s554 + $0x50] sm:$0xff]
        %v1706 = vld [vmem:[%s554 + $0x60] sm:$0xff]
        %v1707 = vld [vmem:[%s554 + $0x70] sm:$0xff]
        %v1708 = vld [vmem:[%s554 + $0x1] sm:$0xff]
        %v1709 = vld [vmem:[%s554 + $0x11] sm:$0xff]
        %v1710 = vld [vmem:[%s554 + $0x21] sm:$0xff]
        %v1711 = vld [vmem:[%s554 + $0x31] sm:$0xff]
        %v1712 = vld [vmem:[%s554 + $0x41] sm:$0xff]
        %v1713 = vld [vmem:[%s554 + $0x51] sm:$0xff]
        %v1714 = vld [vmem:[%s554 + $0x61] sm:$0xff]
        %v1715 = vld [vmem:[%s554 + $0x71] sm:$0xff]
        %v1716 = vld [vmem:[%s554 + $0x2] sm:$0xff]
        %v1717 = vld [vmem:[%s554 + $0x12] sm:$0xff]
        %v1718 = vld [vmem:[%s554 + $0x22] sm:$0xff]
        %v1719 = vld [vmem:[%s554 + $0x32] sm:$0xff]
        %v1720 = vld [vmem:[%s554 + $0x42] sm:$0xff]
        %v1721 = vld [vmem:[%s554 + $0x52] sm:$0xff]
        %v1722 = vld [vmem:[%s554 + $0x62] sm:$0xff]
        %v1723 = vld [vmem:[%s554 + $0x72] sm:$0xff]
        %v1724 = vld [vmem:[%s8] sm:$0xff]
        %v1725 = vld [vmem:[%s8 + $0x8] sm:$0xff]
        %v1726 = vld [vmem:[%s8 + $0x10] sm:$0xff]
        %v1727 = vld [vmem:[%s8 + $0x18] sm:$0xff]
        %v1728 = vld [vmem:[%s8 + $0x20] sm:$0xff]
        %v1729 = vld [vmem:[%s8 + $0x28] sm:$0xff]
        %v1730 = vld [vmem:[%s8 + $0x30] sm:$0xff]
        %v1731 = vld [vmem:[%s8 + $0x38] sm:$0xff]
        %v1732 = vld [vmem:[%s8 + $0x40] sm:$0xff]
        %v1733 = vld [vmem:[%s8 + $0x48] sm:$0xff]
        %v1734 = vld [vmem:[%s8 + $0x50] sm:$0xff]
        %v1735 = vld [vmem:[%s8 + $0x58] sm:$0xff]
        %v1736 = vld [vmem:[%s8 + $0x60] sm:$0xff]
        %v1737 = vld [vmem:[%s8 + $0x68] sm:$0xff]
        %v1738 = vld [vmem:[%s8 + $0x70] sm:$0xff]
        %v1739 = vld [vmem:[%s8 + $0x78] sm:$0xff]
        %v1740 = vld [vmem:[%s8 + $0x80] sm:$0xff]
        %v1741 = vld [vmem:[%s8 + $0x88] sm:$0xff]
        %v1742 = vld [vmem:[%s8 + $0x90] sm:$0xff]
        %v1743 = vld [vmem:[%s8 + $0x98] sm:$0xff]
        %v1744 = vld [vmem:[%s8 + $0xa0] sm:$0xff]
        %v1745 = vld [vmem:[%s8 + $0xa8] sm:$0xff]
        %v1746 = vld [vmem:[%s8 + $0xb0] sm:$0xff]
        %v1747 = vld [vmem:[%s8 + $0xb8] sm:$0xff]
        %v1748 = vld [vmem:[%s8 + $0xc0] sm:$0xff]
        %v1749 = vld [vmem:[%s8 + $0xc8] sm:$0xff]
        %v1750 = vld [vmem:[%s8 + $0xd0] sm:$0xff]
        %v1751 = vld [vmem:[%s8 + $0xd8] sm:$0xff]
        %v1752 = vld [vmem:[%s8 + $0xe0] sm:$0xff]
        %v1753 = vld [vmem:[%s8 + $0xe8] sm:$0xff]
        %v1754 = vld [vmem:[%s8 + $0xf0] sm:$0xff]
        %v1755 = vld [vmem:[%s8 + $0xf8] sm:$0xff]
        %v1756 = vld [vmem:[%s8 + $0x100] sm:$0xff]
        %v1757 = vld [vmem:[%s8 + $0x108] sm:$0xff]
        %v1758 = vld [vmem:[%s8 + $0x110] sm:$0xff]
        %v1759 = vld [vmem:[%s8 + $0x118] sm:$0xff]
        %v1760 = vld [vmem:[%s8 + $0x120] sm:$0xff]
        %v1761 = vld [vmem:[%s8 + $0x128] sm:$0xff]
        %v1762 = vld [vmem:[%s8 + $0x130] sm:$0xff]
        %v1763 = vld [vmem:[%s8 + $0x138] sm:$0xff]
        %v1764 = vld [vmem:[%s8 + $0x140] sm:$0xff]
        %v1765 = vld [vmem:[%s8 + $0x148] sm:$0xff]
        %v1766 = vld [vmem:[%s8 + $0x150] sm:$0xff]
        %v1767 = vld [vmem:[%s8 + $0x158] sm:$0xff]
        %v1768 = vld [vmem:[%s8 + $0x160] sm:$0xff]
        %v1769 = vld [vmem:[%s8 + $0x168] sm:$0xff]
        %v1770 = vld [vmem:[%s8 + $0x170] sm:$0xff]
        %v1771 = vld [vmem:[%s8 + $0x178] sm:$0xff]
        %v1772 = vld [vmem:[%s8 + $0x180] sm:$0xff]
        %v1773 = vld [vmem:[%s8 + $0x188] sm:$0xff]
        %v1774 = vld [vmem:[%s8 + $0x190] sm:$0xff]
        %v1775 = vld [vmem:[%s8 + $0x198] sm:$0xff]
        %v1776 = vld [vmem:[%s8 + $0x1a0] sm:$0xff]
        %v1777 = vld [vmem:[%s8 + $0x1a8] sm:$0xff]
        %v1778 = vld [vmem:[%s8 + $0x1b0] sm:$0xff]
        %v1779 = vld [vmem:[%s8 + $0x1b8] sm:$0xff]
        %v1780 = vld [vmem:[%s8 + $0x1c0] sm:$0xff]
        %v1781 = vld [vmem:[%s8 + $0x1c8] sm:$0xff]
        %v1782 = vld [vmem:[%s8 + $0x1d0] sm:$0xff]
        %v1783 = vld [vmem:[%s8 + $0x1d8] sm:$0xff]
        %v1784 = vld [vmem:[%s8 + $0x1e0] sm:$0xff]
        %v1785 = vld [vmem:[%s8 + $0x1e8] sm:$0xff]
        %v1786 = vld [vmem:[%s8 + $0x1f0] sm:$0xff]
        %v1787 = vld [vmem:[%s8 + $0x1f8] sm:$0xff]
        %v1788 = vld [vmem:[%s8 + $0x200] sm:$0xff]
        %v1789 = vld [vmem:[%s8 + $0x208] sm:$0xff]
        %v1790 = vld [vmem:[%s8 + $0x210] sm:$0xff]
        %v1791 = vld [vmem:[%s8 + $0x218] sm:$0xff]
        %v1792 = vld [vmem:[%s8 + $0x220] sm:$0xff]
        %v1793 = vld [vmem:[%s8 + $0x228] sm:$0xff]
        %v1794 = vld [vmem:[%s8 + $0x230] sm:$0xff]
        %v1795 = vld [vmem:[%s8 + $0x238] sm:$0xff]
        %v1796 = vld [vmem:[%s8 + $0x240] sm:$0xff]
        %v1797 = vld [vmem:[%s8 + $0x248] sm:$0xff]
        %v1798 = vld [vmem:[%s8 + $0x250] sm:$0xff]
        %v1799 = vld [vmem:[%s8 + $0x258] sm:$0xff]
        %v1800 = vld [vmem:[%s8 + $0x260] sm:$0xff]
        %v1801 = vld [vmem:[%s8 + $0x268] sm:$0xff]
        %v1802 = vld [vmem:[%s8 + $0x270] sm:$0xff]
        %v1803 = vld [vmem:[%s8 + $0x278] sm:$0xff]
        %v1804 = vld [vmem:[%s8 + $0x280] sm:$0xff]
        %v1805 = vld [vmem:[%s8 + $0x288] sm:$0xff]
        %v1806 = vld [vmem:[%s8 + $0x290] sm:$0xff]
        %v1807 = vld [vmem:[%s8 + $0x298] sm:$0xff]
        %v1808 = vld [vmem:[%s8 + $0x2a0] sm:$0xff]
        %v1809 = vld [vmem:[%s8 + $0x2a8] sm:$0xff]
        %v1810 = vld [vmem:[%s8 + $0x2b0] sm:$0xff]
        %v1811 = vld [vmem:[%s8 + $0x2b8] sm:$0xff]
        %v1812 = vld [vmem:[%s8 + $0x2c0] sm:$0xff]
        %v1813 = vld [vmem:[%s8 + $0x2c8] sm:$0xff]
        %v1814 = vld [vmem:[%s8 + $0x2d0] sm:$0xff]
        %v1815 = vld [vmem:[%s8 + $0x2d8] sm:$0xff]
        %v1816 = vld [vmem:[%s8 + $0x2e0] sm:$0xff]
        %v1817 = vld [vmem:[%s8 + $0x2e8] sm:$0xff]
        %v1818 = vld [vmem:[%s8 + $0x2f0] sm:$0xff]
        %v1819 = vld [vmem:[%s8 + $0x2f8] sm:$0xff]
        %v1820 = vld [vmem:[%s8 + $0x300] sm:$0xff]
        %v1821 = vld [vmem:[%s8 + $0x308] sm:$0xff]
        %v1822 = vld [vmem:[%s8 + $0x310] sm:$0xff]
        %v1823 = vld [vmem:[%s8 + $0x318] sm:$0xff]
        %v1824 = vld [vmem:[%s8 + $0x320] sm:$0xff]
        %v1825 = vld [vmem:[%s8 + $0x328] sm:$0xff]
        %v1826 = vld [vmem:[%s8 + $0x330] sm:$0xff]
        %v1827 = vld [vmem:[%s8 + $0x338] sm:$0xff]
        %v1828 = vld [vmem:[%s8 + $0x340] sm:$0xff]
        %v1829 = vld [vmem:[%s8 + $0x348] sm:$0xff]
        %v1830 = vld [vmem:[%s8 + $0x350] sm:$0xff]
        %v1831 = vld [vmem:[%s8 + $0x358] sm:$0xff]
        %v1832 = vld [vmem:[%s8 + $0x360] sm:$0xff]
        %v1833 = vld [vmem:[%s8 + $0x368] sm:$0xff]
        %v1834 = vld [vmem:[%s8 + $0x370] sm:$0xff]
        %v1835 = vld [vmem:[%s8 + $0x378] sm:$0xff]
        %v1836 = vld [vmem:[%s8 + $0x380] sm:$0xff]
        %v1837 = vld [vmem:[%s8 + $0x388] sm:$0xff]
        %v1838 = vld [vmem:[%s8 + $0x390] sm:$0xff]
        %v1839 = vld [vmem:[%s8 + $0x398] sm:$0xff]
        %v1840 = vld [vmem:[%s8 + $0x3a0] sm:$0xff]
        %v1841 = vld [vmem:[%s8 + $0x3a8] sm:$0xff]
        %v1842 = vld [vmem:[%s8 + $0x3b0] sm:$0xff]
        %v1843 = vld [vmem:[%s8 + $0x3b8] sm:$0xff]
        %v1844 = vld [vmem:[%s8 + $0x3c0] sm:$0xff]
        %v1845 = vld [vmem:[%s8 + $0x3c8] sm:$0xff]
        %v1846 = vld [vmem:[%s8 + $0x3d0] sm:$0xff]
        %v1847 = vld [vmem:[%s8 + $0x3d8] sm:$0xff]
        %v1848 = vld [vmem:[%s8 + $0x3e0] sm:$0xff]
        %v1849 = vld [vmem:[%s8 + $0x3e8] sm:$0xff]
        %v1850 = vld [vmem:[%s8 + $0x3f0] sm:$0xff]
        %v1851 = vld [vmem:[%s8 + $0x3f8] sm:$0xff]
        %v1852 = vld [vmem:[%s8 + $0x400] sm:$0xff]
        %v1853 = vld [vmem:[%s8 + $0x408] sm:$0xff]
        %v1854 = vld [vmem:[%s8 + $0x410] sm:$0xff]
        %v1855 = vld [vmem:[%s8 + $0x418] sm:$0xff]
        %v1856 = vld [vmem:[%s8 + $0x420] sm:$0xff]
        %v1857 = vld [vmem:[%s8 + $0x428] sm:$0xff]
        %v1858 = vld [vmem:[%s8 + $0x430] sm:$0xff]
        %v1859 = vld [vmem:[%s8 + $0x438] sm:$0xff]
        %v1860 = vld [vmem:[%s8 + $0x440] sm:$0xff]
        %v1861 = vld [vmem:[%s8 + $0x448] sm:$0xff]
        %v1862 = vld [vmem:[%s8 + $0x450] sm:$0xff]
        %v1863 = vld [vmem:[%s8 + $0x458] sm:$0xff]
        %v1864 = vld [vmem:[%s8 + $0x460] sm:$0xff]
        %v1865 = vld [vmem:[%s8 + $0x468] sm:$0xff]
        %v1866 = vld [vmem:[%s8 + $0x470] sm:$0xff]
        %v1867 = vld [vmem:[%s8 + $0x478] sm:$0xff]
        %v1868 = vld [vmem:[%s9] sm:$0x1]
        %v1870 = vlaneseq
        %v1871 = vshrl.u32 %v1870, 7
        %v1872 = vsub.s32 0, %v1871
        %v1873 = vrot.slane %v1868, %v1872
        %1875 = vmatprep.subr.mxu0 0.0
        %1876 = vmatpush1.msra.mxu0 %v1724
        %1877 = vmatprep.subr.mxu0 0.0
        %1878 = vmatpush1.msra.mxu0 %v1725
        %1879 = vmatprep.subr.mxu0 0.0
        %1880 = vmatpush1.msra.mxu0 %v1726
        %1881 = vmatprep.subr.mxu0 0.0
        %1882 = vmatpush1.msra.mxu0 %v1727
        %1883 = vmatprep.subr.mxu0 0.0
        %1884 = vmatpush1.msra.mxu0 %v1728
        %1885 = vmatprep.subr.mxu0 0.0
        %1886 = vmatpush1.msra.mxu0 %v1729
        %1887 = vmatprep.subr.mxu0 0.0
        %1888 = vmatpush1.msra.mxu0 %v1730
        %1889 = vmatprep.subr.mxu0 0.0
        %1890 = vmatpush1.msra.mxu0 %v1731
        %1891 = vmatprep.subr.mxu0 0.0
        %1892 = vmatpush1.msra.mxu0 %v1732
        %1893 = vmatprep.subr.mxu0 0.0
        %1894 = vmatpush1.msra.mxu0 %v1733
        %1895 = vmatprep.subr.mxu0 0.0
        %1896 = vmatpush1.msra.mxu0 %v1734
        %1897 = vmatprep.subr.mxu0 0.0
        %1898 = vmatpush1.msra.mxu0 %v1735
        %1899 = vmatprep.subr.mxu0 0.0
        %1900 = vmatpush1.msra.mxu0 %v1736
        %1901 = vmatprep.subr.mxu0 0.0
        %1902 = vmatpush1.msra.mxu0 %v1737
        %1903 = vmatprep.subr.mxu0 0.0
        %1904 = vmatpush1.msra.mxu0 %v1738
        %1905 = vmatprep.subr.mxu0 0.0
        %1906 = vmatpush1.msra.mxu0 %v1739
        %1907 = vmatprep.subr.mxu0 0.0
        %1908 = vmatpush1.msra.mxu0 %v1740
        %1909 = vmatprep.subr.mxu0 0.0
        %1910 = vmatpush1.msra.mxu0 %v1741
        %1911 = vmatprep.subr.mxu0 0.0
        %1912 = vmatpush1.msra.mxu0 %v1742
        %1913 = vmatprep.subr.mxu0 0.0
        %1914 = vmatpush1.msra.mxu0 %v1743
        %1915 = vmatprep.subr.mxu0 0.0
        %1916 = vmatpush1.msra.mxu0 %v1744
        %1917 = vmatprep.subr.mxu0 0.0
        %1918 = vmatpush1.msra.mxu0 %v1745
        %1919 = vmatprep.subr.mxu0 0.0
        %1920 = vmatpush1.msra.mxu0 %v1746
        %1921 = vmatprep.subr.mxu0 0.0
        %1922 = vmatpush1.msra.mxu0 %v1747
        %1923 = vmatprep.subr.mxu0 0.0
        %1924 = vmatpush1.msra.mxu0 %v1748
        %1925 = vmatprep.subr.mxu0 0.0
        %1926 = vmatpush1.msra.mxu0 %v1749
        %1927 = vmatprep.subr.mxu0 0.0
        %1928 = vmatpush1.msra.mxu0 %v1750
        %1929 = vmatprep.subr.mxu0 0.0
        %1930 = vmatpush1.msra.mxu0 %v1751
        %1931 = vmatprep.subr.mxu0 0.0
        %1932 = vmatpush1.msra.mxu0 %v1752
        %1933 = vmatprep.subr.mxu0 0.0
        %1934 = vmatpush1.msra.mxu0 %v1753
        %1935 = vmatprep.subr.mxu0 0.0
        %1936 = vmatpush1.msra.mxu0 %v1754
        %1937 = vmatprep.subr.mxu0 0.0
        %1938 = vmatpush1.msra.mxu0 %v1755
        %1939 = vmatprep.mubr.f32.mxu0 %v1660
        %1940 = vmatmul.mubr.f32.gmra.mrb[0].mxu0 %v1652
        %v1941 = vpop.f32.mrb[0].mxu0
        %v1942 = vadd.f32 %v1873, %v1941
        %v1943 = vpop.f32.mrb[0].mxu0
        %1944 = vmatprep.mubr.f32.mxu0 %v1661
        %1945 = vmatmul.mubr.f32.gmra.mrb[0].mxu0 %v1653
        %v1946 = vpop.f32.mrb[0].mxu0
        %v1947 = vadd.f32 %v1873, %v1946
        %v1948 = vpop.f32.mrb[0].mxu0
        %1949 = vmatprep.mubr.f32.mxu0 %v1662
        %1950 = vmatmul.mubr.f32.gmra.mrb[0].mxu0 %v1654
        %v1951 = vpop.f32.mrb[0].mxu0
        %v1952 = vadd.f32 %v1873, %v1951
        %v1953 = vpop.f32.mrb[0].mxu0
        %1954 = vmatprep.mubr.f32.mxu0 %v1663
        %1955 = vmatmul.mubr.f32.gmra.mrb[0].mxu0 %v1655
        %v1956 = vpop.f32.mrb[0].mxu0
        %v1957 = vadd.f32 %v1873, %v1956
        %v1958 = vpop.f32.mrb[0].mxu0
        %1959 = vmatprep.mubr.f32.mxu0 %v1664
        %1960 = vmatmul.mubr.f32.gmra.mrb[0].mxu0 %v1656
        %v1961 = vpop.f32.mrb[0].mxu0
        %v1962 = vadd.f32 %v1873, %v1961
        %v1963 = vpop.f32.mrb[0].mxu0
        %1964 = vmatprep.mubr.f32.mxu0 %v1665
        %1965 = vmatmul.mubr.f32.gmra.mrb[0].mxu0 %v1657
        %v1966 = vpop.f32.mrb[0].mxu0
        %v1967 = vadd.f32 %v1873, %v1966
        %v1968 = vpop.f32.mrb[0].mxu0
        %1969 = vmatprep.mubr.f32.mxu0 %v1666
        %1970 = vmatmul.mubr.f32.gmra.mrb[0].mxu0 %v1658
        %v1971 = vpop.f32.mrb[0].mxu0
        %v1972 = vadd.f32 %v1873, %v1971
        %v1973 = vpop.f32.mrb[0].mxu0
        %1974 = vmatprep.mubr.f32.mxu0 %v1667
        %1975 = vmatmul.mubr.f32.gmra.mrb[0].mxu0 %v1659
        %v1976 = vpop.f32.mrb[0].mxu0
        %v1977 = vadd.f32 %v1873, %v1976
        %v1978 = vpop.f32.mrb[0].mxu0
        %1979 = vdwg.mxu0
        %1980 = vmatprep.subr.mxu0 0.0
        %1981 = vmatpush1.msra.mxu0 %v1756
        %1982 = vmatprep.subr.mxu0 0.0
        %1983 = vmatpush1.msra.mxu0 %v1757
        %1984 = vmatprep.subr.mxu0 0.0
        %1985 = vmatpush1.msra.mxu0 %v1758
        %1986 = vmatprep.subr.mxu0 0.0
        %1987 = vmatpush1.msra.mxu0 %v1759
        %1988 = vmatprep.subr.mxu0 0.0
        %1989 = vmatpush1.msra.mxu0 %v1760
        %1990 = vmatprep.subr.mxu0 0.0
        %1991 = vmatpush1.msra.mxu0 %v1761
        %1992 = vmatprep.subr.mxu0 0.0
        %1993 = vmatpush1.msra.mxu0 %v1762
        %1994 = vmatprep.subr.mxu0 0.0
        %1995 = vmatpush1.msra.mxu0 %v1763
        %1996 = vmatprep.subr.mxu0 0.0
        %1997 = vmatpush1.msra.mxu0 %v1764
        %1998 = vmatprep.subr.mxu0 0.0
        %1999 = vmatpush1.msra.mxu0 %v1765
        %2000 = vmatprep.subr.mxu0 0.0
        %2001 = vmatpush1.msra.mxu0 %v1766
        %2002 = vmatprep.subr.mxu0 0.0
        %2003 = vmatpush1.msra.mxu0 %v1767
        %2004 = vmatprep.subr.mxu0 0.0
        %2005 = vmatpush1.msra.mxu0 %v1768
        %2006 = vmatprep.subr.mxu0 0.0
        %2007 = vmatpush1.msra.mxu0 %v1769
        %2008 = vmatprep.subr.mxu0 0.0
        %2009 = vmatpush1.msra.mxu0 %v1770
        %2010 = vmatprep.subr.mxu0 0.0
        %2011 = vmatpush1.msra.mxu0 %v1771
        %2012 = vmatprep.subr.mxu0 0.0
        %2013 = vmatpush1.msra.mxu0 %v1772
        %2014 = vmatprep.subr.mxu0 0.0
        %2015 = vmatpush1.msra.mxu0 %v1773
        %2016 = vmatprep.subr.mxu0 0.0
        %2017 = vmatpush1.msra.mxu0 %v1774
        %2018 = vmatprep.subr.mxu0 0.0
        %2019 = vmatpush1.msra.mxu0 %v1775
        %2020 = vmatprep.subr.mxu0 0.0
        %2021 = vmatpush1.msra.mxu0 %v1776
        %2022 = vmatprep.subr.mxu0 0.0
        %2023 = vmatpush1.msra.mxu0 %v1777
        %2024 = vmatprep.subr.mxu0 0.0
        %2025 = vmatpush1.msra.mxu0 %v1778
        %2026 = vmatprep.subr.mxu0 0.0
        %2027 = vmatpush1.msra.mxu0 %v1779
        %2028 = vmatprep.subr.mxu0 0.0
        %2029 = vmatpush1.msra.mxu0 %v1780
        %2030 = vmatprep.subr.mxu0 0.0
        %2031 = vmatpush1.msra.mxu0 %v1781
        %2032 = vmatprep.subr.mxu0 0.0
        %2033 = vmatpush1.msra.mxu0 %v1782
        %2034 = vmatprep.subr.mxu0 0.0
        %2035 = vmatpush1.msra.mxu0 %v1783
        %2036 = vmatprep.subr.mxu0 0.0
        %2037 = vmatpush1.msra.mxu0 %v1784
        %2038 = vmatprep.subr.mxu0 0.0
        %2039 = vmatpush1.msra.mxu0 %v1785
        %2040 = vmatprep.subr.mxu0 0.0
        %2041 = vmatpush1.msra.mxu0 %v1786
        %2042 = vmatprep.subr.mxu0 0.0
        %2043 = vmatpush1.msra.mxu0 %v1787
        %2044 = vmatprep.mubr.f32.mxu0 %v1676
        %2045 = vmatmul.mubr.f32.gmra.mrb[0].mxu0 %v1668
        %v2046 = vpop.f32.mrb[0].mxu0
        %v2047 = vadd.f32 %v1942, %v2046
        %v2048 = vpop.f32.mrb[0].mxu0
        %2049 = vmatprep.mubr.f32.mxu0 %v1677
        %2050 = vmatmul.mubr.f32.gmra.mrb[0].mxu0 %v1669
        %v2051 = vpop.f32.mrb[0].mxu0
        %v2052 = vadd.f32 %v1947, %v2051
        %v2053 = vpop.f32.mrb[0].mxu0
        %2054 = vmatprep.mubr.f32.mxu0 %v1678
        %2055 = vmatmul.mubr.f32.gmra.mrb[0].mxu0 %v1670
        %v2056 = vpop.f32.mrb[0].mxu0
        %v2057 = vadd.f32 %v1952, %v2056
        %v2058 = vpop.f32.mrb[0].mxu0
        %2059 = vmatprep.mubr.f32.mxu0 %v1679
        %2060 = vmatmul.mubr.f32.gmra.mrb[0].mxu0 %v1671
        %v2061 = vpop.f32.mrb[0].mxu0
        %v2062 = vadd.f32 %v1957, %v2061
        %v2063 = vpop.f32.mrb[0].mxu0
        %2064 = vmatprep.mubr.f32.mxu0 %v1680
        %2065 = vmatmul.mubr.f32.gmra.mrb[0].mxu0 %v1672
        %v2066 = vpop.f32.mrb[0].mxu0
        %v2067 = vadd.f32 %v1962, %v2066
        %v2068 = vpop.f32.mrb[0].mxu0
        %2069 = vmatprep.mubr.f32.mxu0 %v1681
        %2070 = vmatmul.mubr.f32.gmra.mrb[0].mxu0 %v1673
        %v2071 = vpop.f32.mrb[0].mxu0
        %v2072 = vadd.f32 %v1967, %v2071
        %v2073 = vpop.f32.mrb[0].mxu0
        %2074 = vmatprep.mubr.f32.mxu0 %v1682
        %2075 = vmatmul.mubr.f32.gmra.mrb[0].mxu0 %v1674
        %v2076 = vpop.f32.mrb[0].mxu0
        %v2077 = vadd.f32 %v1972, %v2076
        %v2078 = vpop.f32.mrb[0].mxu0
        %2079 = vmatprep.mubr.f32.mxu0 %v1683
        %2080 = vmatmul.mubr.f32.gmra.mrb[0].mxu0 %v1675
        %v2081 = vpop.f32.mrb[0].mxu0
        %v2082 = vadd.f32 %v1977, %v2081
        %v2083 = vpop.f32.mrb[0].mxu0
        %2084 = vdwg.mxu0
        %2085 = vmatprep.subr.mxu0 0.0
        %2086 = vmatpush1.msra.mxu0 %v1788
        %2087 = vmatprep.subr.mxu0 0.0
        %2088 = vmatpush1.msra.mxu0 %v1789
        %2089 = vmatprep.subr.mxu0 0.0
        %2090 = vmatpush1.msra.mxu0 %v1790
        %2091 = vmatprep.subr.mxu0 0.0
        %2092 = vmatpush1.msra.mxu0 %v1791
        %2093 = vmatprep.subr.mxu0 0.0
        %2094 = vmatpush1.msra.mxu0 %v1792
        %2095 = vmatprep.subr.mxu0 0.0
        %2096 = vmatpush1.msra.mxu0 %v1793
        %2097 = vmatprep.subr.mxu0 0.0
        %2098 = vmatpush1.msra.mxu0 %v1794
        %2099 = vmatprep.subr.mxu0 0.0
        %2100 = vmatpush1.msra.mxu0 %v1795
        %2101 = vmatprep.subr.mxu0 0.0
        %2102 = vmatpush1.msra.mxu0 %v1796
        %2103 = vmatprep.subr.mxu0 0.0
        %2104 = vmatpush1.msra.mxu0 %v1797
        %2105 = vmatprep.subr.mxu0 0.0
        %2106 = vmatpush1.msra.mxu0 %v1798
        %2107 = vmatprep.subr.mxu0 0.0
        %2108 = vmatpush1.msra.mxu0 %v1799
        %2109 = vmatprep.subr.mxu0 0.0
        %2110 = vmatpush1.msra.mxu0 %v1800
        %2111 = vmatprep.subr.mxu0 0.0
        %2112 = vmatpush1.msra.mxu0 %v1801
        %2113 = vmatprep.subr.mxu0 0.0
        %2114 = vmatpush1.msra.mxu0 %v1802
        %2115 = vmatprep.subr.mxu0 0.0
        %2116 = vmatpush1.msra.mxu0 %v1803
        %2117 = vmatprep.subr.mxu0 0.0
        %2118 = vmatpush1.msra.mxu0 %v1804
        %2119 = vmatprep.subr.mxu0 0.0
        %2120 = vmatpush1.msra.mxu0 %v1805
        %2121 = vmatprep.subr.mxu0 0.0
        %2122 = vmatpush1.msra.mxu0 %v1806
        %2123 = vmatprep.subr.mxu0 0.0
        %2124 = vmatpush1.msra.mxu0 %v1807
        %2125 = vmatprep.subr.mxu0 0.0
        %2126 = vmatpush1.msra.mxu0 %v1808
        %2127 = vmatprep.subr.mxu0 0.0
        %2128 = vmatpush1.msra.mxu0 %v1809
        %2129 = vmatprep.subr.mxu0 0.0
        %2130 = vmatpush1.msra.mxu0 %v1810
        %2131 = vmatprep.subr.mxu0 0.0
        %2132 = vmatpush1.msra.mxu0 %v1811
        %2133 = vmatprep.subr.mxu0 0.0
        %2134 = vmatpush1.msra.mxu0 %v1812
        %2135 = vmatprep.subr.mxu0 0.0
        %2136 = vmatpush1.msra.mxu0 %v1813
        %2137 = vmatprep.subr.mxu0 0.0
        %2138 = vmatpush1.msra.mxu0 %v1814
        %2139 = vmatprep.subr.mxu0 0.0
        %2140 = vmatpush1.msra.mxu0 %v1815
        %2141 = vmatprep.subr.mxu0 0.0
        %2142 = vmatpush1.msra.mxu0 %v1816
        %2143 = vmatprep.subr.mxu0 0.0
        %2144 = vmatpush1.msra.mxu0 %v1817
        %2145 = vmatprep.subr.mxu0 0.0
        %2146 = vmatpush1.msra.mxu0 %v1818
        %2147 = vmatprep.subr.mxu0 0.0
        %2148 = vmatpush1.msra.mxu0 %v1819
        %2149 = vmatprep.mubr.f32.mxu0 %v1692
        %2150 = vmatmul.mubr.f32.gmra.mrb[0].mxu0 %v1684
        %v2151 = vpop.f32.mrb[0].mxu0
        %v2152 = vadd.f32 %v2047, %v2151
        %v2153 = vpop.f32.mrb[0].mxu0
        %2154 = vmatprep.mubr.f32.mxu0 %v1693
        %2155 = vmatmul.mubr.f32.gmra.mrb[0].mxu0 %v1685
        %v2156 = vpop.f32.mrb[0].mxu0
        %v2157 = vadd.f32 %v2052, %v2156
        %v2158 = vpop.f32.mrb[0].mxu0
        %2159 = vmatprep.mubr.f32.mxu0 %v1694
        %2160 = vmatmul.mubr.f32.gmra.mrb[0].mxu0 %v1686
        %v2161 = vpop.f32.mrb[0].mxu0
        %v2162 = vadd.f32 %v2057, %v2161
        %v2163 = vpop.f32.mrb[0].mxu0
        %2164 = vmatprep.mubr.f32.mxu0 %v1695
        %2165 = vmatmul.mubr.f32.gmra.mrb[0].mxu0 %v1687
        %v2166 = vpop.f32.mrb[0].mxu0
        %v2167 = vadd.f32 %v2062, %v2166
        %v2168 = vpop.f32.mrb[0].mxu0
        %2169 = vmatprep.mubr.f32.mxu0 %v1696
        %2170 = vmatmul.mubr.f32.gmra.mrb[0].mxu0 %v1688
        %v2171 = vpop.f32.mrb[0].mxu0
        %v2172 = vadd.f32 %v2067, %v2171
        %v2173 = vpop.f32.mrb[0].mxu0
        %2174 = vmatprep.mubr.f32.mxu0 %v1697
        %2175 = vmatmul.mubr.f32.gmra.mrb[0].mxu0 %v1689
        %v2176 = vpop.f32.mrb[0].mxu0
        %v2177 = vadd.f32 %v2072, %v2176
        %v2178 = vpop.f32.mrb[0].mxu0
        %2179 = vmatprep.mubr.f32.mxu0 %v1698
        %2180 = vmatmul.mubr.f32.gmra.mrb[0].mxu0 %v1690
        %v2181 = vpop.f32.mrb[0].mxu0
        %v2182 = vadd.f32 %v2077, %v2181
        %v2183 = vpop.f32.mrb[0].mxu0
        %2184 = vmatprep.mubr.f32.mxu0 %v1699
        %2185 = vmatmul.mubr.f32.gmra.mrb[0].mxu0 %v1691
        %v2186 = vpop.f32.mrb[0].mxu0
        %v2187 = vadd.f32 %v2082, %v2186
        %v2188 = vpop.f32.mrb[0].mxu0
        %2189 = vdwg.mxu0
        %2190 = vmatprep.subr.mxu0 0.0
        %2191 = vmatpush1.msra.mxu0 %v1820
        %2192 = vmatprep.subr.mxu0 0.0
        %2193 = vmatpush1.msra.mxu0 %v1821
        %2194 = vmatprep.subr.mxu0 0.0
        %2195 = vmatpush1.msra.mxu0 %v1822
        %2196 = vmatprep.subr.mxu0 0.0
        %2197 = vmatpush1.msra.mxu0 %v1823
        %2198 = vmatprep.subr.mxu0 0.0
        %2199 = vmatpush1.msra.mxu0 %v1824
        %2200 = vmatprep.subr.mxu0 0.0
        %2201 = vmatpush1.msra.mxu0 %v1825
        %2202 = vmatprep.subr.mxu0 0.0
        %2203 = vmatpush1.msra.mxu0 %v1826
        %2204 = vmatprep.subr.mxu0 0.0
        %2205 = vmatpush1.msra.mxu0 %v1827
        %2206 = vmatprep.subr.mxu0 0.0
        %2207 = vmatpush1.msra.mxu0 %v1828
        %2208 = vmatprep.subr.mxu0 0.0
        %2209 = vmatpush1.msra.mxu0 %v1829
        %2210 = vmatprep.subr.mxu0 0.0
        %2211 = vmatpush1.msra.mxu0 %v1830
        %2212 = vmatprep.subr.mxu0 0.0
        %2213 = vmatpush1.msra.mxu0 %v1831
        %2214 = vmatprep.subr.mxu0 0.0
        %2215 = vmatpush1.msra.mxu0 %v1832
        %2216 = vmatprep.subr.mxu0 0.0
        %2217 = vmatpush1.msra.mxu0 %v1833
        %2218 = vmatprep.subr.mxu0 0.0
        %2219 = vmatpush1.msra.mxu0 %v1834
        %2220 = vmatprep.subr.mxu0 0.0
        %2221 = vmatpush1.msra.mxu0 %v1835
        %2222 = vmatprep.subr.mxu0 0.0
        %2223 = vmatpush1.msra.mxu0 %v1836
        %2224 = vmatprep.subr.mxu0 0.0
        %2225 = vmatpush1.msra.mxu0 %v1837
        %2226 = vmatprep.subr.mxu0 0.0
        %2227 = vmatpush1.msra.mxu0 %v1838
        %2228 = vmatprep.subr.mxu0 0.0
        %2229 = vmatpush1.msra.mxu0 %v1839
        %2230 = vmatprep.subr.mxu0 0.0
        %2231 = vmatpush1.msra.mxu0 %v1840
        %2232 = vmatprep.subr.mxu0 0.0
        %2233 = vmatpush1.msra.mxu0 %v1841
        %2234 = vmatprep.subr.mxu0 0.0
        %2235 = vmatpush1.msra.mxu0 %v1842
        %2236 = vmatprep.subr.mxu0 0.0
        %2237 = vmatpush1.msra.mxu0 %v1843
        %2238 = vmatprep.subr.mxu0 0.0
        %2239 = vmatpush1.msra.mxu0 %v1844
        %2240 = vmatprep.subr.mxu0 0.0
        %2241 = vmatpush1.msra.mxu0 %v1845
        %2242 = vmatprep.subr.mxu0 0.0
        %2243 = vmatpush1.msra.mxu0 %v1846
        %2244 = vmatprep.subr.mxu0 0.0
        %2245 = vmatpush1.msra.mxu0 %v1847
        %2246 = vmatprep.subr.mxu0 0.0
        %2247 = vmatpush1.msra.mxu0 %v1848
        %2248 = vmatprep.subr.mxu0 0.0
        %2249 = vmatpush1.msra.mxu0 %v1849
        %2250 = vmatprep.subr.mxu0 0.0
        %2251 = vmatpush1.msra.mxu0 %v1850
        %2252 = vmatprep.subr.mxu0 0.0
        %2253 = vmatpush1.msra.mxu0 %v1851
        %2254 = vmatprep.mubr.f32.mxu0 %v1708
        %2255 = vmatmul.mubr.f32.gmra.mrb[0].mxu0 %v1700
        %v2256 = vpop.f32.mrb[0].mxu0
        %v2257 = vadd.f32 %v2152, %v2256
        %v2258 = vpop.f32.mrb[0].mxu0
        %2259 = vmatprep.mubr.f32.mxu0 %v1709
        %2260 = vmatmul.mubr.f32.gmra.mrb[0].mxu0 %v1701
        %v2261 = vpop.f32.mrb[0].mxu0
        %v2262 = vadd.f32 %v2157, %v2261
        %v2263 = vpop.f32.mrb[0].mxu0
        %2264 = vmatprep.mubr.f32.mxu0 %v1710
        %2265 = vmatmul.mubr.f32.gmra.mrb[0].mxu0 %v1702
        %v2266 = vpop.f32.mrb[0].mxu0
        %v2267 = vadd.f32 %v2162, %v2266
        %v2268 = vpop.f32.mrb[0].mxu0
        %2269 = vmatprep.mubr.f32.mxu0 %v1711
        %2270 = vmatmul.mubr.f32.gmra.mrb[0].mxu0 %v1703
        %v2271 = vpop.f32.mrb[0].mxu0
        %v2272 = vadd.f32 %v2167, %v2271
        %v2273 = vpop.f32.mrb[0].mxu0
        %2274 = vmatprep.mubr.f32.mxu0 %v1712
        %2275 = vmatmul.mubr.f32.gmra.mrb[0].mxu0 %v1704
        %v2276 = vpop.f32.mrb[0].mxu0
        %v2277 = vadd.f32 %v2172, %v2276
        %v2278 = vpop.f32.mrb[0].mxu0
        %2279 = vmatprep.mubr.f32.mxu0 %v1713
        %2280 = vmatmul.mubr.f32.gmra.mrb[0].mxu0 %v1705
        %v2281 = vpop.f32.mrb[0].mxu0
        %v2282 = vadd.f32 %v2177, %v2281
        %v2283 = vpop.f32.mrb[0].mxu0
        %2284 = vmatprep.mubr.f32.mxu0 %v1714
        %2285 = vmatmul.mubr.f32.gmra.mrb[0].mxu0 %v1706
        %v2286 = vpop.f32.mrb[0].mxu0
        %v2287 = vadd.f32 %v2182, %v2286
        %v2288 = vpop.f32.mrb[0].mxu0
        %2289 = vmatprep.mubr.f32.mxu0 %v1715
        %2290 = vmatmul.mubr.f32.gmra.mrb[0].mxu0 %v1707
        %v2291 = vpop.f32.mrb[0].mxu0
        %v2292 = vadd.f32 %v2187, %v2291
        %v2293 = vpop.f32.mrb[0].mxu0
        %2294 = vdwg.mxu0
        %2295 = vmatprep.subr.mxu0 0.0
        %2296 = vmatpush1.msra.mxu0 %v1852
        %2297 = vmatprep.subr.mxu0 0.0
        %2298 = vmatpush1.msra.mxu0 %v1853
        %2299 = vmatprep.subr.mxu0 0.0
        %2300 = vmatpush1.msra.mxu0 %v1854
        %2301 = vmatprep.subr.mxu0 0.0
        %2302 = vmatpush1.msra.mxu0 %v1855
        %2303 = vmatprep.subr.mxu0 0.0
        %2304 = vmatpush1.msra.mxu0 %v1856
        %2305 = vmatprep.subr.mxu0 0.0
        %2306 = vmatpush1.msra.mxu0 %v1857
        %2307 = vmatprep.subr.mxu0 0.0
        %2308 = vmatpush1.msra.mxu0 %v1858
        %2309 = vmatprep.subr.mxu0 0.0
        %2310 = vmatpush1.msra.mxu0 %v1859
        %2311 = vmatprep.subr.mxu0 0.0
        %2312 = vmatpush1.msra.mxu0 %v1860
        %2313 = vmatprep.subr.mxu0 0.0
        %2314 = vmatpush1.msra.mxu0 %v1861
        %2315 = vmatprep.subr.mxu0 0.0
        %2316 = vmatpush1.msra.mxu0 %v1862
        %2317 = vmatprep.subr.mxu0 0.0
        %2318 = vmatpush1.msra.mxu0 %v1863
        %2319 = vmatprep.subr.mxu0 0.0
        %2320 = vmatpush1.msra.mxu0 %v1864
        %2321 = vmatprep.subr.mxu0 0.0
        %2322 = vmatpush1.msra.mxu0 %v1865
        %2323 = vmatprep.subr.mxu0 0.0
        %2324 = vmatpush1.msra.mxu0 %v1866
        %2325 = vmatprep.subr.mxu0 0.0
        %2326 = vmatpush1.msra.mxu0 %v1867
        %2327 = vmatprep.subr.mxu0 0.0
        %2328 = vmatpush1.msra.mxu0 0.0
        %2329 = vmatprep.subr.mxu0 0.0
        %2330 = vmatpush1.msra.mxu0 0.0
        %2331 = vmatprep.subr.mxu0 0.0
        %2332 = vmatpush1.msra.mxu0 0.0
        %2333 = vmatprep.subr.mxu0 0.0
        %2334 = vmatpush1.msra.mxu0 0.0
        %2335 = vmatprep.subr.mxu0 0.0
        %2336 = vmatpush1.msra.mxu0 0.0
        %2337 = vmatprep.subr.mxu0 0.0
        %2338 = vmatpush1.msra.mxu0 0.0
        %2339 = vmatprep.subr.mxu0 0.0
        %2340 = vmatpush1.msra.mxu0 0.0
        %2341 = vmatprep.subr.mxu0 0.0
        %2342 = vmatpush1.msra.mxu0 0.0
        %2343 = vmatprep.subr.mxu0 0.0
        %2344 = vmatpush1.msra.mxu0 0.0
        %2345 = vmatprep.subr.mxu0 0.0
        %2346 = vmatpush1.msra.mxu0 0.0
        %2347 = vmatprep.subr.mxu0 0.0
        %2348 = vmatpush1.msra.mxu0 0.0
        %2349 = vmatprep.subr.mxu0 0.0
        %2350 = vmatpush1.msra.mxu0 0.0
        %2351 = vmatprep.subr.mxu0 0.0
        %2352 = vmatpush1.msra.mxu0 0.0
        %2353 = vmatprep.subr.mxu0 0.0
        %2354 = vmatpush1.msra.mxu0 0.0
        %2355 = vmatprep.subr.mxu0 0.0
        %2356 = vmatpush1.msra.mxu0 0.0
        %2357 = vmatprep.subr.mxu0 0.0
        %2358 = vmatpush1.msra.mxu0 0.0
        %2359 = vmatprep.mubr.f32.mxu0 0.0
        %2360 = vmatmul.mubr.f32.gmra.mrb[0].mxu0 %v1716
        %v2361 = vpop.f32.mrb[0].mxu0
        %v2362 = vadd.f32 %v2257, %v2361
        %v2363 = vpop.f32.mrb[0].mxu0
        %2364 = vmatprep.mubr.f32.mxu0 0.0
        %2365 = vmatmul.mubr.f32.gmra.mrb[0].mxu0 %v1717
        %v2366 = vpop.f32.mrb[0].mxu0
        %v2367 = vadd.f32 %v2262, %v2366
        %v2368 = vpop.f32.mrb[0].mxu0
        %2369 = vmatprep.mubr.f32.mxu0 0.0
        %2370 = vmatmul.mubr.f32.gmra.mrb[0].mxu0 %v1718
        %v2371 = vpop.f32.mrb[0].mxu0
        %v2372 = vadd.f32 %v2267, %v2371
        %v2373 = vpop.f32.mrb[0].mxu0
        %2374 = vmatprep.mubr.f32.mxu0 0.0
        %2375 = vmatmul.mubr.f32.gmra.mrb[0].mxu0 %v1719
        %v2376 = vpop.f32.mrb[0].mxu0
        %v2377 = vadd.f32 %v2272, %v2376
        %v2378 = vpop.f32.mrb[0].mxu0
        %2379 = vmatprep.mubr.f32.mxu0 0.0
        %2380 = vmatmul.mubr.f32.gmra.mrb[0].mxu0 %v1720
        %v2381 = vpop.f32.mrb[0].mxu0
        %v2382 = vadd.f32 %v2277, %v2381
        %v2383 = vpop.f32.mrb[0].mxu0
        %2384 = vmatprep.mubr.f32.mxu0 0.0
        %2385 = vmatmul.mubr.f32.gmra.mrb[0].mxu0 %v1721
        %v2386 = vpop.f32.mrb[0].mxu0
        %v2387 = vadd.f32 %v2282, %v2386
        %v2388 = vpop.f32.mrb[0].mxu0
        %2389 = vmatprep.mubr.f32.mxu0 0.0
        %2390 = vmatmul.mubr.f32.gmra.mrb[0].mxu0 %v1722
        %v2391 = vpop.f32.mrb[0].mxu0
        %v2392 = vadd.f32 %v2287, %v2391
        %v2393 = vpop.f32.mrb[0].mxu0
        %2394 = vmatprep.mubr.f32.mxu0 0.0
        %2395 = vmatmul.mubr.f32.gmra.mrb[0].mxu0 %v1723
        %v2396 = vpop.f32.mrb[0].mxu0
        %v2397 = vadd.f32 %v2292, %v2396
        %v2398 = vpop.f32.mrb[0].mxu0
        %2399 = vdwg.mxu0
        %v2400 = vadd.f32 %v2362, %v2367
        %v2401 = vadd.f32 %v2400, %v2372
        %v2402 = vadd.f32 %v2401, %v2377
        %v2403 = vadd.f32 %v2402, %v2382
        %v2404 = vadd.f32 %v2403, %v2387
        %v2405 = vadd.f32 %v2404, %v2392
        %v2406 = vadd.f32 %v2405, %v2397
        %v2407 = vrot.slane %v2406, 4
        %v2408 = vadd.f32 %v2406, %v2407
        %v2409 = vrot.slane %v2408, 2
        %v2410 = vadd.f32 %v2408, %v2409
        %v2411 = vrot.slane %v2410, 1
        %v2412 = vadd.f32 %v2410, %v2411
        %v2413 = vmul.f32 %v2362, %v2362
        %v2414 = vmul.f32 %v2367, %v2367
        %v2415 = vmul.f32 %v2372, %v2372
        %v2416 = vmul.f32 %v2377, %v2377
        %v2417 = vmul.f32 %v2382, %v2382
        %v2418 = vmul.f32 %v2387, %v2387
        %v2419 = vmul.f32 %v2392, %v2392
        %v2420 = vmul.f32 %v2397, %v2397
        %v2421 = vadd.f32 %v2413, %v2414
        %v2422 = vadd.f32 %v2421, %v2415
        %v2423 = vadd.f32 %v2422, %v2416
        %v2424 = vadd.f32 %v2423, %v2417
        %v2425 = vadd.f32 %v2424, %v2418
        %v2426 = vadd.f32 %v2425, %v2419
        %v2427 = vadd.f32 %v2426, %v2420
        %v2428 = vrot.slane %v2427, 4
        %v2429 = vadd.f32 %v2427, %v2428
        %v2430 = vrot.slane %v2429, 2
        %v2431 = vadd.f32 %v2429, %v2430
        %v2432 = vrot.slane %v2431, 1
        %v2433 = vadd.f32 %v2431, %v2432
        %2434 = vmatprep.subr.mxu0 0.0
        %2435 = vmatpush1.msra.mxu0 %v461
        %2436 = vmatprep.subr.mxu0 0.0
        %2437 = vmatpush1.msra.mxu0 %v462
        %2438 = vmatprep.subr.mxu0 0.0
        %2439 = vmatpush1.msra.mxu0 %v463
        %2440 = vmatprep.subr.mxu0 0.0
        %2441 = vmatpush1.msra.mxu0 %v464
        %2442 = vmatprep.subr.mxu0 0.0
        %2443 = vmatpush1.msra.mxu0 %v465
        %2444 = vmatprep.subr.mxu0 0.0
        %2445 = vmatpush1.msra.mxu0 %v466
        %2446 = vmatprep.subr.mxu0 0.0
        %2447 = vmatpush1.msra.mxu0 %v467
        %2448 = vmatprep.subr.mxu0 0.0
        %2449 = vmatpush1.msra.mxu0 %v468
        %2450 = vmatprep.subr.mxu0 0.0
        %2451 = vmatpush1.msra.mxu0 %v469
        %2452 = vmatprep.subr.mxu0 0.0
        %2453 = vmatpush1.msra.mxu0 %v470
        %2454 = vmatprep.subr.mxu0 0.0
        %2455 = vmatpush1.msra.mxu0 %v471
        %2456 = vmatprep.subr.mxu0 0.0
        %2457 = vmatpush1.msra.mxu0 %v472
        %2458 = vmatprep.subr.mxu0 0.0
        %2459 = vmatpush1.msra.mxu0 %v473
        %2460 = vmatprep.subr.mxu0 0.0
        %2461 = vmatpush1.msra.mxu0 %v474
        %2462 = vmatprep.subr.mxu0 0.0
        %2463 = vmatpush1.msra.mxu0 %v475
        %2464 = vmatprep.subr.mxu0 0.0
        %2465 = vmatpush1.msra.mxu0 %v476
        %2466 = vmatprep.subr.mxu0 0.0
        %2467 = vmatpush1.msra.mxu0 0.0
        %2468 = vmatprep.subr.mxu0 0.0
        %2469 = vmatpush1.msra.mxu0 0.0
        %2470 = vmatprep.subr.mxu0 0.0
        %2471 = vmatpush1.msra.mxu0 0.0
        %2472 = vmatprep.subr.mxu0 0.0
        %2473 = vmatpush1.msra.mxu0 0.0
        %2474 = vmatprep.subr.mxu0 0.0
        %2475 = vmatpush1.msra.mxu0 0.0
        %2476 = vmatprep.subr.mxu0 0.0
        %2477 = vmatpush1.msra.mxu0 0.0
        %2478 = vmatprep.subr.mxu0 0.0
        %2479 = vmatpush1.msra.mxu0 0.0
        %2480 = vmatprep.subr.mxu0 0.0
        %2481 = vmatpush1.msra.mxu0 0.0
        %2482 = vmatprep.subr.mxu0 0.0
        %2483 = vmatpush1.msra.mxu0 0.0
        %2484 = vmatprep.subr.mxu0 0.0
        %2485 = vmatpush1.msra.mxu0 0.0
        %2486 = vmatprep.subr.mxu0 0.0
        %2487 = vmatpush1.msra.mxu0 0.0
        %2488 = vmatprep.subr.mxu0 0.0
        %2489 = vmatpush1.msra.mxu0 0.0
        %2490 = vmatprep.subr.mxu0 0.0
        %2491 = vmatpush1.msra.mxu0 0.0
        %2492 = vmatprep.subr.mxu0 0.0
        %2493 = vmatpush1.msra.mxu0 0.0
        %2494 = vmatprep.subr.mxu0 0.0
        %2495 = vmatpush1.msra.mxu0 0.0
        %2496 = vmatprep.subr.mxu0 0.0
        %2497 = vmatpush1.msra.mxu0 0.0
        %2498 = vmatprep.mubr.f32.mxu0 0.0
        %2499 = vmatmul.mubr.f32.gmra.mrb[0].mxu0 %v2412
        %v2500 = vpop.f32.mrb[0].mxu0
        %v2501 = vadd.f32 0.0, %v2500
        %v2502 = vpop.f32.mrb[0].mxu0
        %2503 = vdwg.mxu0
        %v2504 = vmul.f32 %v2501, 0.00048828125
        %2505 = vmatprep.subr.mxu0 0.0
        %2506 = vmatpush1.msra.mxu0 %v461
        %2507 = vmatprep.subr.mxu0 0.0
        %2508 = vmatpush1.msra.mxu0 %v462
        %2509 = vmatprep.subr.mxu0 0.0
        %2510 = vmatpush1.msra.mxu0 %v463
        %2511 = vmatprep.subr.mxu0 0.0
        %2512 = vmatpush1.msra.mxu0 %v464
        %2513 = vmatprep.subr.mxu0 0.0
        %2514 = vmatpush1.msra.mxu0 %v465
        %2515 = vmatprep.subr.mxu0 0.0
        %2516 = vmatpush1.msra.mxu0 %v466
        %2517 = vmatprep.subr.mxu0 0.0
        %2518 = vmatpush1.msra.mxu0 %v467
        %2519 = vmatprep.subr.mxu0 0.0
        %2520 = vmatpush1.msra.mxu0 %v468
        %2521 = vmatprep.subr.mxu0 0.0
        %2522 = vmatpush1.msra.mxu0 %v469
        %2523 = vmatprep.subr.mxu0 0.0
        %2524 = vmatpush1.msra.mxu0 %v470
        %2525 = vmatprep.subr.mxu0 0.0
        %2526 = vmatpush1.msra.mxu0 %v471
        %2527 = vmatprep.subr.mxu0 0.0
        %2528 = vmatpush1.msra.mxu0 %v472
        %2529 = vmatprep.subr.mxu0 0.0
        %2530 = vmatpush1.msra.mxu0 %v473
        %2531 = vmatprep.subr.mxu0 0.0
        %2532 = vmatpush1.msra.mxu0 %v474
        %2533 = vmatprep.subr.mxu0 0.0
        %2534 = vmatpush1.msra.mxu0 %v475
        %2535 = vmatprep.subr.mxu0 0.0
        %2536 = vmatpush1.msra.mxu0 %v476
        %2537 = vmatprep.subr.mxu0 0.0
        %2538 = vmatpush1.msra.mxu0 0.0
        %2539 = vmatprep.subr.mxu0 0.0
        %2540 = vmatpush1.msra.mxu0 0.0
        %2541 = vmatprep.subr.mxu0 0.0
        %2542 = vmatpush1.msra.mxu0 0.0
        %2543 = vmatprep.subr.mxu0 0.0
        %2544 = vmatpush1.msra.mxu0 0.0
        %2545 = vmatprep.subr.mxu0 0.0
        %2546 = vmatpush1.msra.mxu0 0.0
        %2547 = vmatprep.subr.mxu0 0.0
        %2548 = vmatpush1.msra.mxu0 0.0
        %2549 = vmatprep.subr.mxu0 0.0
        %2550 = vmatpush1.msra.mxu0 0.0
        %2551 = vmatprep.subr.mxu0 0.0
        %2552 = vmatpush1.msra.mxu0 0.0
        %2553 = vmatprep.subr.mxu0 0.0
        %2554 = vmatpush1.msra.mxu0 0.0
        %2555 = vmatprep.subr.mxu0 0.0
        %2556 = vmatpush1.msra.mxu0 0.0
        %2557 = vmatprep.subr.mxu0 0.0
        %2558 = vmatpush1.msra.mxu0 0.0
        %2559 = vmatprep.subr.mxu0 0.0
        %2560 = vmatpush1.msra.mxu0 0.0
        %2561 = vmatprep.subr.mxu0 0.0
        %2562 = vmatpush1.msra.mxu0 0.0
        %2563 = vmatprep.subr.mxu0 0.0
        %2564 = vmatpush1.msra.mxu0 0.0
        %2565 = vmatprep.subr.mxu0 0.0
        %2566 = vmatpush1.msra.mxu0 0.0
        %2567 = vmatprep.subr.mxu0 0.0
        %2568 = vmatpush1.msra.mxu0 0.0
        %2569 = vmatprep.mubr.f32.mxu0 0.0
        %2570 = vmatmul.mubr.f32.gmra.mrb[0].mxu0 %v2433
        %v2571 = vpop.f32.mrb[0].mxu0
        %v2572 = vadd.f32 0.0, %v2571
        %v2573 = vpop.f32.mrb[0].mxu0
        %2574 = vdwg.mxu0
        %v2575 = vmul.f32 %v2572, 0.00048828125
        %v2576 = vmul.f32 %v2504, %v2504
        %v2577 = vsub.f32 %v2575, %v2576
        %v2578 = vlaneseq
        %v2579 = vshrl.u32 %v2578, 7
        %v2580 = vsub.s32 0, %v2579
        %v2581 = vrot.slane %v2504, %v2580
        %v2582 = vsub.f32 %v2362, %v2581
        %v2583 = vsub.f32 %v2367, %v2581
        %v2584 = vsub.f32 %v2372, %v2581
        %v2585 = vsub.f32 %v2377, %v2581
        %v2586 = vsub.f32 %v2382, %v2581
        %v2587 = vsub.f32 %v2387, %v2581
        %v2588 = vsub.f32 %v2392, %v2581
        %v2589 = vsub.f32 %v2397, %v2581
        %v2590 = vadd.f32 %v2577, 1e-05
        %v2591 = vrsqrt.pop %v2590
        %v2592 = vlaneseq
        %v2593 = vshrl.u32 %v2592, 7
        %v2594 = vsub.s32 0, %v2593
        %v2595 = vrot.slane %v2591, %v2594
        %v2596 = vmul.f32 %v2582, %v2595
        %v2597 = vmul.f32 %v2583, %v2595
        %v2598 = vmul.f32 %v2584, %v2595
        %v2599 = vmul.f32 %v2585, %v2595
        %v2600 = vmul.f32 %v2586, %v2595
        %v2601 = vmul.f32 %v2587, %v2595
        %v2602 = vmul.f32 %v2588, %v2595
        %v2603 = vmul.f32 %v2589, %v2595
        %v2604 = vld [vmem:[%s10] sm:$0x1]
        %v2606 = vlaneseq
        %v2607 = vshrl.u32 %v2606, 7
        %v2608 = vsub.s32 0, %v2607
        %v2609 = vrot.slane %v2604, %v2608
        %v2611 = vmul.f32 %v2596, %v2609
        %v2612 = vmul.f32 %v2597, %v2609
        %v2613 = vmul.f32 %v2598, %v2609
        %v2614 = vmul.f32 %v2599, %v2609
        %v2615 = vmul.f32 %v2600, %v2609
        %v2616 = vmul.f32 %v2601, %v2609
        %v2617 = vmul.f32 %v2602, %v2609
        %v2618 = vmul.f32 %v2603, %v2609
        %v2619 = vld [vmem:[%s11] sm:$0x1]
        %v2621 = vlaneseq
        %v2622 = vshrl.u32 %v2621, 7
        %v2623 = vsub.s32 0, %v2622
        %v2624 = vrot.slane %v2619, %v2623
        %v2626 = vadd.f32 %v2611, %v2624
        %v2627 = vadd.f32 %v2612, %v2624
        %v2628 = vadd.f32 %v2613, %v2624
        %v2629 = vadd.f32 %v2614, %v2624
        %v2630 = vadd.f32 %v2615, %v2624
        %v2631 = vadd.f32 %v2616, %v2624
        %v2632 = vadd.f32 %v2617, %v2624
        %v2633 = vadd.f32 %v2618, %v2624
        %v2634 = vxor.u32 %v2626, 2147483648
        %v2635 = vxor.u32 %v2627, 2147483648
        %v2636 = vxor.u32 %v2628, 2147483648
        %v2637 = vxor.u32 %v2629, 2147483648
        %v2638 = vxor.u32 %v2630, 2147483648
        %v2639 = vxor.u32 %v2631, 2147483648
        %v2640 = vxor.u32 %v2632, 2147483648
        %v2641 = vxor.u32 %v2633, 2147483648
        %v2642 = vmul.f32 %v2634, 1.442695
        %v2643 = vpow.pop %v2642
        %v2644 = vmul.f32 %v2635, 1.442695
        %v2645 = vpow.pop %v2644
        %v2646 = vmul.f32 %v2636, 1.442695
        %v2647 = vpow.pop %v2646
        %v2648 = vmul.f32 %v2637, 1.442695
        %v2649 = vpow.pop %v2648
        %v2650 = vmul.f32 %v2638, 1.442695
        %v2651 = vpow.pop %v2650
        %v2652 = vmul.f32 %v2639, 1.442695
        %v2653 = vpow.pop %v2652
        %v2654 = vmul.f32 %v2640, 1.442695
        %v2655 = vpow.pop %v2654
        %v2656 = vmul.f32 %v2641, 1.442695
        %v2657 = vpow.pop %v2656
        %v2658 = vadd.f32 %v2643, 1.0
        %v2659 = vadd.f32 %v2645, 1.0
        %v2660 = vadd.f32 %v2647, 1.0
        %v2661 = vadd.f32 %v2649, 1.0
        %v2662 = vadd.f32 %v2651, 1.0
        %v2663 = vadd.f32 %v2653, 1.0
        %v2664 = vadd.f32 %v2655, 1.0
        %v2665 = vadd.f32 %v2657, 1.0
        %v2666 = vrcp.pop %v2658
        %v2667 = vmul.f32 1.0, %v2666
        %v2668 = vrcp.pop %v2659
        %v2669 = vmul.f32 1.0, %v2668
        %v2670 = vrcp.pop %v2660
        %v2671 = vmul.f32 1.0, %v2670
        %v2672 = vrcp.pop %v2661
        %v2673 = vmul.f32 1.0, %v2672
        %v2674 = vrcp.pop %v2662
        %v2675 = vmul.f32 1.0, %v2674
        %v2676 = vrcp.pop %v2663
        %v2677 = vmul.f32 1.0, %v2676
        %v2678 = vrcp.pop %v2664
        %v2679 = vmul.f32 1.0, %v2678
        %v2680 = vrcp.pop %v2665
        %v2681 = vmul.f32 1.0, %v2680
        %v2682 = vmul.f32 %v2626, %v2667
        %v2683 = vmul.f32 %v2627, %v2669
        %v2684 = vmul.f32 %v2628, %v2671
        %v2685 = vmul.f32 %v2629, %v2673
        %v2686 = vmul.f32 %v2630, %v2675
        %v2687 = vmul.f32 %v2631, %v2677
        %v2688 = vmul.f32 %v2632, %v2679
        %v2689 = vmul.f32 %v2633, %v2681
        %v2690 = vadd.f32 %v453, %v2682
        %v2691 = vadd.f32 %v454, %v2683
        %v2692 = vadd.f32 %v455, %v2684
        %v2693 = vadd.f32 %v456, %v2685
        %v2694 = vadd.f32 %v457, %v2686
        %v2695 = vadd.f32 %v458, %v2687
        %v2696 = vadd.f32 %v459, %v2688
        %v2697 = vadd.f32 %v460, %v2689
        %2698 = vst [vmem:[%s444] sm:$0xff] %v2690
        %2699 = vst [vmem:[%s444 + $0x8] sm:$0xff] %v2691
        %2700 = vst [vmem:[%s444 + $0x10] sm:$0xff] %v2692
        %2701 = vst [vmem:[%s444 + $0x18] sm:$0xff] %v2693
        %2702 = vst [vmem:[%s444 + $0x20] sm:$0xff] %v2694
        %2703 = vst [vmem:[%s444 + $0x28] sm:$0xff] %v2695
        %2704 = vst [vmem:[%s444 + $0x30] sm:$0xff] %v2696
        %2705 = vst [vmem:[%s444 + $0x38] sm:$0xff] %v2697
        %s2706 = sand.u32 %s318, 1
        %s2707 = scalar_lea.sflag [#allocation4], %s2706
        %s2708 = sand.u32 %s318, 1
        %s2709 = smul.addr %s2708, 64
        %s2710 = scalar_lea.vmem [#allocation3], %s2709
        // Predicated region
        $region73: #{midblock_forward.5} parent=71 // pred_check
          %p2711 = pneg %p328
        $region74: #{midblock_forward.5} parent=71 // pred_check_branch
          %2713 = sbr.rel (%p2711) target = $region76
        $region75: #{midblock_forward.5} parent=71 // pred_region
          %s2715 = ssub.s32 1024, 1024
          %2716 = vsyncadd %s2707, %s2715
          %s2717 = smul.addr %s27, 8
          %s2718 = smul.addr %s2717, 128
          %s2719 = scalar_lea.hbm %s13, %s2718
          %s2720 = sshll.u32 %s2710, 4
          %s2721 = int_to_ptr.vmem [resolvable:$true] %s2720
          %2726 = dma.vmem_to_hbm [thread:$0]  %s2721, 1024, %s2719, %s2707, 128, 128, 8
        $region76: #{midblock_forward.5} parent=71 // pred_fallthru
          _
      $region72: #{midblock_forward.5} parent=5 // pred_fallthru
        _
      %p2727 = scmp.le.s32.totalorder 2, %s22
      // Predicated region
      $region77: #{midblock_forward.5} parent=5 // pred_check
        %p2728 = pneg %p2727
      $region78: #{midblock_forward.5} parent=5 // pred_check_branch
        %2730 = sbr.rel (%p2728) target = $region80
      $region79: #{midblock_forward.5} parent=5 // pred_region
        %s2731 = ssub.s32 %s22, 2
        // Predicated region
        $region81: #{midblock_forward.5} parent=79 // pred_check
          %p2732 = pneg %p334
        $region82: #{midblock_forward.5} parent=79 // pred_check_branch
          %2734 = sbr.rel (%p2732) target = $region84
        $region83: #{midblock_forward.5} parent=79 // pred_region
          %s2735 = sand.u32 %s319, 1
          %s2736 = scalar_lea.sflag [#allocation4], %s2735
          %s2737 = sand.u32 %s319, 1
          %s2738 = smul.addr %s2737, 64
          %s2739 = scalar_lea.vmem [#allocation3], %s2738
          %2740 = dma.done %s2736, 1024
        $region84: #{midblock_forward.5} parent=79 // pred_fallthru
          _
      $region80: #{midblock_forward.5} parent=5 // pred_fallthru
        _
    $region6: #{midblock_forward.5} parent=1 // loop_footer
      %s26 = sadd.s32 1, %s22
    $region7: #{midblock_forward.5} parent=1 // loop_footer_branch
      %21 = sbr.rel target = $region3
    $region8: #{midblock_forward.5} parent=1 // loop_exit
      _
    %2741 = vsyncpa [#allocation4], 1
    %s2742 = scalar_lea.sflag [#allocation4], 1
    %2743 = vsyncpa %s2742, 1

</llo_original>
